<compile_context>
chip_gen: v6e
topology: v6e:2x2x1
jax: 0.10.0
libtpu: 0.0.40
codegen_flags: <defaults>
</compile_context>

<pallas_src>
import functools

import jax
import jax.numpy as jnp
from jax.experimental import pallas as pl
from jax.experimental.pallas import tpu as pltpu


# ----------------------------------------------------------------------------
# Stage 1: shared per-point MLP + online max-pool over point tiles.
# ----------------------------------------------------------------------------
def mlp_pool_kernel(t_ref, s_ref,
                    w1_ref, b1_ref, w2_ref, b2_ref, w3_ref,
                    g_ref, *, feat_chunks):
    k = pl.program_id(1)

    @pl.when(k == 0)
    def _():
        g_ref[...] = jnp.full(g_ref.shape, -jnp.inf, dtype=g_ref.dtype)

    tb, tn, cin = t_ref.shape
    # Per-batch normalization: xyz scaled by 10/half-extent, rgb untouched
    # (scale precomputed outside; the multiply stays in-kernel).
    x = (t_ref[...] * s_ref[...]).reshape(tb * tn, cin).astype(jnp.bfloat16)

    h = jnp.dot(x, w1_ref[...], preferred_element_type=jnp.float32) + b1_ref[...]
    h = jnp.maximum(h, 0.0).astype(jnp.bfloat16)                  # (M, 64)
    h = jnp.dot(h, w2_ref[...], preferred_element_type=jnp.float32) + b2_ref[...]
    h = jnp.maximum(h, 0.0).astype(jnp.bfloat16)                  # (M, 128)

    # Layer 3 (bn3 folded): NO bias here -- b3 is hoisted past the max-pool
    # (exact because layer 3 has no ReLU) and added once in the head kernel.
    # The 1024 output features are processed in lane-aligned column chunks so
    # the peak live f32 buffer is (M, chunk) instead of (M, 1024).
    feat = w3_ref.shape[1]
    chunk = feat // feat_chunks
    for c in range(feat_chunks):
        lo = c * chunk
        hc = jnp.dot(h, w3_ref[:, lo:lo + chunk],
                     preferred_element_type=jnp.float32)          # (M, chunk)
        tile_max = jnp.max(hc.reshape(tb, tn, chunk), axis=1)     # (tb, chunk)
        g_ref[:, lo:lo + chunk] = jnp.maximum(g_ref[:, lo:lo + chunk], tile_max)


# ----------------------------------------------------------------------------
# Stage 2: dense head over pooled rows.
# ----------------------------------------------------------------------------
def head_kernel(g_ref, b3_ref,
                w4_ref, b4_ref, w5_ref, b5_ref, w6_ref, b6_ref, out_ref):
    # b3 hoisted out of the stage-1 point loop: applied once on pooled rows.
    g = (g_ref[...] + b3_ref[...]).astype(jnp.bfloat16)           # (tbh, 1024)
    h = jnp.dot(g, w4_ref[...], preferred_element_type=jnp.float32) + b4_ref[...]
    h = jnp.maximum(h, 0.0).astype(jnp.bfloat16)                  # (tbh, 512)
    h = jnp.dot(h, w5_ref[...], preferred_element_type=jnp.float32) + b5_ref[...]
    h = jnp.maximum(h, 0.0).astype(jnp.bfloat16)                  # (tbh, 256)
    out_ref[...] = (jnp.dot(h, w6_ref[...], preferred_element_type=jnp.float32)
                    + b6_ref[...])                                # (tbh, 3+out_ch)


# ----------------------------------------------------------------------------
# Wrapper.
# ----------------------------------------------------------------------------
def _pick_tile(total, cap, multiple=8):
    """Largest divisor of `total` that is <= cap and a multiple of `multiple`;
    falls back to the full extent (which always satisfies the block rules)."""
    cap = max(1, min(total, cap))
    for t in range(cap, 0, -1):
        if total % t == 0 and t % multiple == 0:
            return t
    return total


def pointnet_forward(target, folded_params, *, tb=8, tn=512, tb_head=128,
                     feat_chunks=2):
    B, N, C_in = target.shape
    (w1, b1, w2, b2, w3, b3, w4, b4, w5, b5, w6, b6) = folded_params
    feat_dim = w3.shape[1]
    out_dim = w6.shape[1]

    # Block shapes must keep (sublane, lane) dims multiples of (8, 128) or the
    # full extent, so tiles are multiples of 8 (else the full dim).
    tb = _pick_tile(B, tb)
    tn = _pick_tile(N, tn)
    # Head tile: keep >= 2 programs on the batch axis when possible so both
    # v7x TensorCores get work; the head is cheap so small tiles are fine.
    tbh = _pick_tile(B, min(tb_head, max(8, B // 2)) if B >= 16 else B)

    # Lane-aligned feature chunking for layer 3 (fall back to no chunking).
    if feat_dim % feat_chunks or (feat_dim // feat_chunks) % 128:
        feat_chunks = 1

    # Per-batch normalization scale (global over N, so computed before the
    # point-tiled kernel).  length = (max - min) / 2, clamped at 1e-5.
    pts = target[..., :3]
    ext = (jnp.max(pts, axis=1, keepdims=True)
           - jnp.min(pts, axis=1, keepdims=True)) * 0.5           # (B, 1, 3)
    ext = jnp.maximum(ext, 1e-5)
    scale = jnp.concatenate(
        [10.0 / ext, jnp.ones((B, 1, C_in - 3), jnp.float32)], axis=-1)  # (B,1,C)

    mlp_weights = (w1, b1, w2, b2, w3)            # b3 hoisted to stage 2
    head_weights = (b3, w4, b4, w5, b5, w6, b6)

    def full_spec(a):
        nd = a.ndim
        return pl.BlockSpec(a.shape, lambda *_, _nd=nd: (0,) * _nd)

    # ---- Stage 1: per-point MLP + online max-pool -------------------------
    g = pl.pallas_call(
        functools.partial(mlp_pool_kernel, feat_chunks=feat_chunks),
        out_shape=jax.ShapeDtypeStruct((B, feat_dim), jnp.float32),
        grid=(B // tb, N // tn),
        in_specs=[pl.BlockSpec((tb, tn, C_in), lambda b, k: (b, k, 0)),
                  pl.BlockSpec((tb, 1, C_in), lambda b, k: (b, 0, 0))]
                 + [full_spec(a) for a in mlp_weights],
        out_specs=pl.BlockSpec((tb, feat_dim), lambda b, k: (b, 0)),
        compiler_params=pltpu.CompilerParams(
            dimension_semantics=("parallel", "arbitrary"),
            vmem_limit_bytes=48 * 1024 * 1024,
        ),
    )(target, scale, *mlp_weights)

    # ---- Stage 2: dense head, batched over pooled rows ---------------------
    out = pl.pallas_call(
        head_kernel,
        out_shape=jax.ShapeDtypeStruct((B, out_dim), jnp.float32),
        grid=(B // tbh,),
        in_specs=[pl.BlockSpec((tbh, feat_dim), lambda i: (i, 0))]
                 + [full_spec(a) for a in head_weights],
        out_specs=pl.BlockSpec((tbh, out_dim), lambda i: (i, 0)),
        compiler_params=pltpu.CompilerParams(
            dimension_semantics=("parallel",),
            vmem_limit_bytes=32 * 1024 * 1024,
        ),
    )(g, *head_weights)
    return out


# ----------------------------------------------------------------------------
# Deterministic parameter construction (xavier_uniform weights like __init__).
# ----------------------------------------------------------------------------
def make_params(key, input_channel=3, output_channel=1024):
    dims = [3 + input_channel, 64, 128, 1024, 512, 256, 3 + output_channel]

    def xavier(k, fan_in, fan_out):
        lim = (6.0 / (fan_in + fan_out)) ** 0.5
        # stored as (in, out) == transpose of the PyTorch (out, in[, 1]) weight
        return jax.random.uniform(k, (fan_in, fan_out), jnp.float32, -lim, lim)

    def bias(k, fan_in, fan_out):
        lim = 1.0 / (fan_in ** 0.5)
        return jax.random.uniform(k, (1, fan_out), jnp.float32, -lim, lim)

    def bn(k, c):
        kg, kb, km, kv = jax.random.split(k, 4)
        gamma = 1.0 + 0.1 * jax.random.normal(kg, (1, c), jnp.float32)
        beta = 0.1 * jax.random.normal(kb, (1, c), jnp.float32)
        mean = 0.05 * jax.random.normal(km, (1, c), jnp.float32)
        var = 0.5 + 0.5 * jnp.abs(jax.random.normal(kv, (1, c), jnp.float32))
        return gamma, beta, mean, var

    keys = jax.random.split(key, 32)
    raw = {}
    ki = 0
    for li in range(6):
        fi, fo = dims[li], dims[li + 1]
        raw[f"w{li+1}"] = xavier(keys[ki], fi, fo); ki += 1
        raw[f"b{li+1}"] = bias(keys[ki], fi, fo); ki += 1
    for li in range(5):  # bn1..bn5 (layers 1..5), dense3 has no BN
        raw[f"bn{li+1}"] = bn(keys[ki], dims[li + 1]); ki += 1

    # Fold eval-mode BatchNorm into the preceding layer's weight/bias and
    # cast weights to bf16 for the MXU (biases stay f32 for the VPU add).
    eps = 1e-5
    folded = []
    for li in range(6):
        w, b = raw[f"w{li+1}"], raw[f"b{li+1}"]
        if li < 5:
            gamma, beta, mean, var = raw[f"bn{li+1}"]
            s = gamma / jnp.sqrt(var + eps)          # (1, C_out)
            w = w * s                                # scale output channels
            b = (b - mean) * s + beta
        folded += [w.astype(jnp.bfloat16), b.astype(jnp.float32)]
    return raw, tuple(folded)


# ----------------------------------------------------------------------------
# Pure-JAX f32 reference mirroring the PyTorch forward (eval-mode BN).
# ----------------------------------------------------------------------------
def reference_forward(target, raw):
    eps = 1e-5

    def bn(z, p):
        gamma, beta, mean, var = p
        return (z - mean) / jnp.sqrt(var + eps) * gamma + beta

    pts = target[..., :3]
    cols = target[..., 3:]
    length = (jnp.max(pts, axis=1, keepdims=True)
              - jnp.min(pts, axis=1, keepdims=True)) / 2.0
    length = jnp.maximum(length, 1e-5)
    pts = pts * 10.0 / length
    x = jnp.concatenate([pts, cols], axis=-1)                     # (B, N, 6)

    h = jax.nn.relu(bn(x @ raw["w1"] + raw["b1"], raw["bn1"]))    # (B, N, 64)
    h = jax.nn.relu(bn(h @ raw["w2"] + raw["b2"], raw["bn2"]))    # (B, N, 128)
    h = bn(h @ raw["w3"] + raw["b3"], raw["bn3"])                 # (B, N, 1024)
    g = jnp.max(h, axis=1)                                        # (B, 1024)
    h = jax.nn.relu(bn(g @ raw["w4"] + raw["b4"], raw["bn4"]))    # (B, 512)
    h = jax.nn.relu(bn(h @ raw["w5"] + raw["b5"], raw["bn5"]))    # (B, 256)
    return h @ raw["w6"] + raw["b6"]                              # (B, 1027)


if __name__ == "__main__":
    key = jax.random.PRNGKey(0)
    k_data, k_params = jax.random.split(key)

    # Small shapes that still exercise batch blocking (tb=8 -> 2 batch tiles),
    # the online max-pool across two point tiles (tn=128), the hoisted b3 add,
    # and the 2-way layer-3 feature chunking.
    B, N = 16, 256
    target = jax.random.uniform(k_data, (B, N, 6), jnp.float32, -1.0, 1.0)

    raw, folded = make_params(k_params, input_channel=3, output_channel=1024)

    out = jax.block_until_ready(
        pointnet_forward(target, folded, tb=8, tn=128, feat_chunks=2))
    ref = jax.block_until_ready(reference_forward(target, raw))

    assert out.shape == (B, 3 + 1024), out.shape
    err = float(jnp.max(jnp.abs(out - ref)))
    ref_mag = float(jnp.max(jnp.abs(ref)))
    # bf16 MXU operands vs f32 reference: allow a few % of the output range.
    assert err <= 3e-2 * ref_mag + 5e-2, (err, ref_mag)

    print("KERNEL_OK")
</pallas_src>

<mosaic_0001>
module attributes {stable_mosaic.version = 11 : i64} {
  func.func @mlp_pool_kernel(%arg0: i32, %arg1: i32, %arg2: memref<8x128x6xf32, #tpu.memory_space<vmem>>, %arg3: memref<8x1x6xf32, #tpu.memory_space<vmem>>, %arg4: memref<6x64xbf16, #tpu.memory_space<vmem>>, %arg5: memref<1x64xf32, #tpu.memory_space<vmem>>, %arg6: memref<64x128xbf16, #tpu.memory_space<vmem>>, %arg7: memref<1x128xf32, #tpu.memory_space<vmem>>, %arg8: memref<128x1024xbf16, #tpu.memory_space<vmem>>, %arg9: memref<8x1024xf32, #tpu.memory_space<vmem>>) attributes {dimension_semantics = [#tpu.dimension_semantics<parallel>, #tpu.dimension_semantics<arbitrary>], iteration_bounds = array<i64: 2, 2>, scalar_prefetch = 0 : i64, scratch_operands = 0 : i64, tpu.core_type = #tpu.core_type<tc>, window_params = [{transform_indices = @transform_0, window_bounds = array<i64: 8, 128, 6>}, {transform_indices = @transform_1, window_bounds = array<i64: 8, 1, 6>}, {pipeline_mode = #tpu.pipeline_mode<synchronous>, transform_indices = @transform_2, window_bounds = array<i64: 6, 64>}, {pipeline_mode = #tpu.pipeline_mode<synchronous>, transform_indices = @transform_3, window_bounds = array<i64: 1, 64>}, {pipeline_mode = #tpu.pipeline_mode<synchronous>, transform_indices = @transform_4, window_bounds = array<i64: 64, 128>}, {pipeline_mode = #tpu.pipeline_mode<synchronous>, transform_indices = @transform_5, window_bounds = array<i64: 1, 128>}, {pipeline_mode = #tpu.pipeline_mode<synchronous>, transform_indices = @transform_6, window_bounds = array<i64: 128, 1024>}, {transform_indices = @transform_7, window_bounds = array<i64: 8, 1024>}]} {
    %c0_i32 = arith.constant 0 : i32
    %0 = arith.cmpi eq, %arg1, %c0_i32 : i32
    %1 = arith.extui %0 : i1 to i32
    %c0_i32_0 = arith.constant 0 : i32
    %2 = arith.cmpi ne, %1, %c0_i32_0 : i32
    scf.if %2 {
      %cst_32 = arith.constant 0xFF800000 : f32
      %39 = vector.broadcast %cst_32 : f32 to vector<8x1024xf32>
      %c0_33 = arith.constant 0 : index
      %c0_34 = arith.constant 0 : index
      %40 = vector.load %arg9[%c0_33, %c0_34] : memref<8x1024xf32, #tpu.memory_space<vmem>>, vector<8x1024xf32>
      tpu.vector_store %arg9[%c0_33, %c0_34], %39 {strides = array<i32>} : memref<8x1024xf32, #tpu.memory_space<vmem>>, vector<8x1024xf32>,
    } else {
    }
    %c0 = arith.constant 0 : index
    %c0_1 = arith.constant 0 : index
    %c0_2 = arith.constant 0 : index
    %3 = vector.load %arg2[%c0, %c0_1, %c0_2] : memref<8x128x6xf32, #tpu.memory_space<vmem>>, vector<8x128x6xf32>
    %c0_3 = arith.constant 0 : index
    %c0_4 = arith.constant 0 : index
    %c0_5 = arith.constant 0 : index
    %4 = vector.load %arg3[%c0_3, %c0_4, %c0_5] : memref<8x1x6xf32, #tpu.memory_space<vmem>>, vector<8x1x6xf32>
    %5 = vector.broadcast %4 : vector<8x1x6xf32> to vector<8x128x6xf32>
    %6 = arith.mulf %3, %5 : vector<8x128x6xf32>
    %7 = vector.shape_cast %6 : vector<8x128x6xf32> to vector<1024x6xf32>
    %8 = arith.truncf %7 : vector<1024x6xf32> to vector<1024x6xbf16>
    %c0_6 = arith.constant 0 : index
    %c0_7 = arith.constant 0 : index
    %9 = vector.load %arg4[%c0_6, %c0_7] : memref<6x64xbf16, #tpu.memory_space<vmem>>, vector<6x64xbf16>
    %cst = arith.constant dense<0.000000e+00> : vector<1024x64xf32>
    %10 = tpu.matmul %8, %9, %cst {dimension_numbers = #tpu.dot_dimension_numbers<[1], [0], [0], [1], [0, 0, 1, 1], [], []>} : vector<1024x6xbf16>, vector<6x64xbf16>, vector<1024x64xf32> -> vector<1024x64xf32>
    %c0_8 = arith.constant 0 : index
    %c0_9 = arith.constant 0 : index
    %11 = vector.load %arg5[%c0_8, %c0_9] : memref<1x64xf32, #tpu.memory_space<vmem>>, vector<1x64xf32>
    %12 = vector.broadcast %11 : vector<1x64xf32> to vector<1024x64xf32>
    %13 = arith.addf %10, %12 : vector<1024x64xf32>
    %cst_10 = arith.constant 0.000000e+00 : f32
    %14 = vector.broadcast %cst_10 : f32 to vector<1024x64xf32>
    %15 = arith.maximumf %13, %14 : vector<1024x64xf32>
    %16 = arith.truncf %15 : vector<1024x64xf32> to vector<1024x64xbf16>
    %c0_11 = arith.constant 0 : index
    %c0_12 = arith.constant 0 : index
    %17 = vector.load %arg6[%c0_11, %c0_12] : memref<64x128xbf16, #tpu.memory_space<vmem>>, vector<64x128xbf16>
    %cst_13 = arith.constant dense<0.000000e+00> : vector<1024x128xf32>
    %18 = tpu.matmul %16, %17, %cst_13 {dimension_numbers = #tpu.dot_dimension_numbers<[1], [0], [0], [1], [0, 0, 1, 1], [], []>} : vector<1024x64xbf16>, vector<64x128xbf16>, vector<1024x128xf32> -> vector<1024x128xf32>
    %c0_14 = arith.constant 0 : index
    %c0_15 = arith.constant 0 : index
    %19 = vector.load %arg7[%c0_14, %c0_15] : memref<1x128xf32, #tpu.memory_space<vmem>>, vector<1x128xf32>
    %20 = vector.broadcast %19 : vector<1x128xf32> to vector<1024x128xf32>
    %21 = arith.addf %18, %20 : vector<1024x128xf32>
    %cst_16 = arith.constant 0.000000e+00 : f32
    %22 = vector.broadcast %cst_16 : f32 to vector<1024x128xf32>
    %23 = arith.maximumf %21, %22 : vector<1024x128xf32>
    %24 = arith.truncf %23 : vector<1024x128xf32> to vector<1024x128xbf16>
    %c0_17 = arith.constant 0 : index
    %c0_18 = arith.constant 0 : index
    %25 = vector.load %arg8[%c0_17, %c0_18] : memref<128x1024xbf16, #tpu.memory_space<vmem>>, vector<128x512xbf16>
    %cst_19 = arith.constant dense<0.000000e+00> : vector<1024x512xf32>
    %26 = tpu.matmul %24, %25, %cst_19 {dimension_numbers = #tpu.dot_dimension_numbers<[1], [0], [0], [1], [0, 0, 1, 1], [], []>} : vector<1024x128xbf16>, vector<128x512xbf16>, vector<1024x512xf32> -> vector<1024x512xf32>
    %27 = vector.shape_cast %26 : vector<1024x512xf32> to vector<8x128x512xf32>
    %cst_20 = arith.constant dense<0xFF800000> : vector<8x512xf32>
    %28 = vector.multi_reduction <maximumf>, %27, %cst_20 [1] : vector<8x128x512xf32> to vector<8x512xf32>
    %c0_21 = arith.constant 0 : index
    %c0_22 = arith.constant 0 : index
    %29 = vector.load %arg9[%c0_21, %c0_22] : memref<8x1024xf32, #tpu.memory_space<vmem>>, vector<8x512xf32>
    %30 = arith.maximumf %29, %28 : vector<8x512xf32>
    %c0_23 = arith.constant 0 : index
    %c0_24 = arith.constant 0 : index
    %31 = vector.load %arg9[%c0_23, %c0_24] : memref<8x1024xf32, #tpu.memory_space<vmem>>, vector<8x512xf32>
    tpu.vector_store %arg9[%c0_23, %c0_24], %30 {strides = array<i32>} : memref<8x1024xf32, #tpu.memory_space<vmem>>, vector<8x512xf32>,
    %c0_25 = arith.constant 0 : index
    %c512 = arith.constant 512 : index
    %32 = vector.load %arg8[%c0_25, %c512] : memref<128x1024xbf16, #tpu.memory_space<vmem>>, vector<128x512xbf16>
    %cst_26 = arith.constant dense<0.000000e+00> : vector<1024x512xf32>
    %33 = tpu.matmul %24, %32, %cst_26 {dimension_numbers = #tpu.dot_dimension_numbers<[1], [0], [0], [1], [0, 0, 1, 1], [], []>} : vector<1024x128xbf16>, vector<128x512xbf16>, vector<1024x512xf32> -> vector<1024x512xf32>
    %34 = vector.shape_cast %33 : vector<1024x512xf32> to vector<8x128x512xf32>
    %cst_27 = arith.constant dense<0xFF800000> : vector<8x512xf32>
    %35 = vector.multi_reduction <maximumf>, %34, %cst_27 [1] : vector<8x128x512xf32> to vector<8x512xf32>
    %c0_28 = arith.constant 0 : index
    %c512_29 = arith.constant 512 : index
    %36 = vector.load %arg9[%c0_28, %c512_29] : memref<8x1024xf32, #tpu.memory_space<vmem>>, vector<8x512xf32>
    %37 = arith.maximumf %36, %35 : vector<8x512xf32>
    %c0_30 = arith.constant 0 : index
    %c512_31 = arith.constant 512 : index
    %38 = vector.load %arg9[%c0_30, %c512_31] : memref<8x1024xf32, #tpu.memory_space<vmem>>, vector<8x512xf32>
    tpu.vector_store %arg9[%c0_30, %c512_31], %37 {strides = array<i32>} : memref<8x1024xf32, #tpu.memory_space<vmem>>, vector<8x512xf32>,
    return
  }
  func.func @transform_0(%arg0: i32, %arg1: i32) -> (i32, i32, i32) {
    %c0_i32 = arith.constant 0 : i32
    %c0_i32_0 = arith.constant 0 : i32
    return %arg0, %arg1, %c0_i32 : i32, i32, i32
  }
  func.func @transform_1(%arg0: i32, %arg1: i32) -> (i32, i32, i32) {
    %c0_i32 = arith.constant 0 : i32
    %c0_i32_0 = arith.constant 0 : i32
    %c0_i32_1 = arith.constant 0 : i32
    return %arg0, %c0_i32, %c0_i32_0 : i32, i32, i32
  }
  func.func @transform_2(%arg0: i32, %arg1: i32) -> (i32, i32) {
    %c0_i32 = arith.constant 0 : i32
    %c0_i32_0 = arith.constant 0 : i32
    %c0_i32_1 = arith.constant 0 : i32
    return %c0_i32, %c0_i32_0 : i32, i32
  }
  func.func @transform_3(%arg0: i32, %arg1: i32) -> (i32, i32) {
    %c0_i32 = arith.constant 0 : i32
    %c0_i32_0 = arith.constant 0 : i32
    %c0_i32_1 = arith.constant 0 : i32
    return %c0_i32, %c0_i32_0 : i32, i32
  }
  func.func @transform_4(%arg0: i32, %arg1: i32) -> (i32, i32) {
    %c0_i32 = arith.constant 0 : i32
    %c0_i32_0 = arith.constant 0 : i32
    %c0_i32_1 = arith.constant 0 : i32
    return %c0_i32, %c0_i32_0 : i32, i32
  }
  func.func @transform_5(%arg0: i32, %arg1: i32) -> (i32, i32) {
    %c0_i32 = arith.constant 0 : i32
    %c0_i32_0 = arith.constant 0 : i32
    %c0_i32_1 = arith.constant 0 : i32
    return %c0_i32, %c0_i32_0 : i32, i32
  }
  func.func @transform_6(%arg0: i32, %arg1: i32) -> (i32, i32) {
    %c0_i32 = arith.constant 0 : i32
    %c0_i32_0 = arith.constant 0 : i32
    %c0_i32_1 = arith.constant 0 : i32
    return %c0_i32, %c0_i32_0 : i32, i32
  }
  func.func @transform_7(%arg0: i32, %arg1: i32) -> (i32, i32) {
    %c0_i32 = arith.constant 0 : i32
    %c0_i32_0 = arith.constant 0 : i32
    return %arg0, %c0_i32 : i32, i32
  }
}

</mosaic_0001>

<llo_original>
// kernel: tpu_custom_call.1
$region0: #{tpu_custom_call.1}
  #allocation0 [shape = 'u32[]', space=smem, size = 0x4, offset = 0x4, fixed_abs, tag = 'smem constant byte address 0x4 - core index']
  #allocation1 [shape = 'u32[144,128]{1,0:T(1,128)}', space=vmem, size = 0x12000, scoped, tag = 'internal scratch']
  %s0 = inlined_call_operand.vmem [shape: f32[16,256,6], index: 0, kind: input, shape index: {}]
  %s1 = inlined_call_operand.vmem [shape: f32[16,1,6], index: 1, kind: input, shape index: {}]
  %s2 = inlined_call_operand.vmem [shape: bf16[6,64], index: 2, kind: input, shape index: {}]
  %s3 = inlined_call_operand.vmem [shape: f32[1,64], index: 3, kind: input, shape index: {}]
  %s4 = inlined_call_operand.vmem [shape: bf16[64,128], index: 4, kind: input, shape index: {}]
  %s5 = inlined_call_operand.vmem [shape: f32[1,128], index: 5, kind: input, shape index: {}]
  %s6 = inlined_call_operand.vmem [shape: bf16[128,1024], index: 6, kind: input, shape index: {}]
  %s7 = inlined_call_operand.hbm [shape: f32[16,1024], index: 7, kind: output, shape index: {}]
  %s8 = sld [smem:[#allocation0]]
  $region103: #{tpu_custom_call.1} parent=0
    _
  %s10 = ssub.s32 1, %s8
  %s11 = scalar_select 0, %s10, %s8
  $region1: #{tpu_custom_call.1} parent=0
    #allocation2 [shape = 'u8[1048576]{0}', space=vmem, size = 0x100000, scoped, tag = 'input window, operand 0']
    #allocation3 [shape = 'u8[65536]{0}', space=vmem, size = 0x10000, scoped, tag = 'output window, operand 0']
    #allocation4 [shape = 's32[2]{0}', space=sflag, size = 0x8, scoped, tag = 'scoped memory for tpu_custom_call.1']
    %12 = vsyncpa [#allocation4], 0
    %s13 = scalar_lea.sflag [#allocation4], 1
    %14 = vsyncpa %s13, 0
    loop: start=0, step=1, limit=6
    $region2: #{tpu_custom_call.1} parent=1 // loop_pre_header
      _
    $region3: #{tpu_custom_call.1} parent=1 // loop_header
      %s16 = sphi 0, %s20
      %p17 = scmp.ge.s32.totalorder %s16, 6
      %s23 = sphi 0, %s35
      %s24 = sphi 0, %s31
      %s25 = sphi 0, %s23
      %s26 = sphi 0, %s24
      %s27 = sphi 0, %s25
      %s28 = sphi 0, %s26
      %s40 = sphi 0, %s42
      %s43 = sphi 0, %s40
      %s44 = sphi 0, %s43
      %s60 = sphi 0, %s44
      %s66 = sphi 0, %s68
      %s69 = sphi 0, %s66
      %s70 = sphi 0, %s69
      %s86 = sphi 0, %s70
      %s90 = sphi 0, %s90
      %s92 = sphi 0, %s90
      %s93 = sphi 0, %s92
      %s107 = sphi 0, %s93
      %s111 = sphi 0, %s111
      %s113 = sphi 0, %s111
      %s114 = sphi 0, %s113
      %s128 = sphi 0, %s114
      %s132 = sphi 0, %s132
      %s134 = sphi 0, %s132
      %s135 = sphi 0, %s134
      %s149 = sphi 0, %s135
      %s153 = sphi 0, %s153
      %s155 = sphi 0, %s153
      %s156 = sphi 0, %s155
      %s170 = sphi 0, %s156
      %s174 = sphi 0, %s174
      %s176 = sphi 0, %s174
      %s177 = sphi 0, %s176
      %s191 = sphi 0, %s177
      %s197 = sphi 0, %s199
      %s200 = sphi 0, %s197
      %s201 = sphi 0, %s200
      %s217 = sphi 0, %s201
    $region4: #{tpu_custom_call.1} parent=1 // loop_header_branch
      %19 = sbr.rel (%p17) target = $region8
    $region5: #{tpu_custom_call.1} parent=1 // loop_body
      %s21 = ssub.s32 %s16, 1
      %s22 = ssub.s32 %s16, 2
      %s29 = sadd.s32 1, %s24
      %p30 = scmp.ge.s32.totalorder %s29, 2
      %s31 = scalar_select %p30, 0, %s29
      %s32 = sadd.s32 1, %s23
      %s33 = scalar_select %p30, %s32, %s23
      %p34 = scmp.ge.s32.totalorder %s33, 2
      %s35 = scalar_select %p34, 0, %s33
      %s36 = ssub.s32 %s23, %s35
      %s37 = ssub.s32 %s24, %s31
      %s38 = sor.u32 %s36, %s37
      %p39 = scmp.eq.s32.totalorder %s38, 0
      %s41 = sadd.s32 %s40, 1
      %s42 = scalar_select %p39, %s40, %s41
      %p45 = pneg %p39
      %p46 = scmp.eq.s32.totalorder %s16, 3
      %p47 = por %p45, %p46
      %p48 = scmp.ne.s32.totalorder %s40, %s43
      %p49 = scmp.eq.s32.totalorder %s16, 0
      %p50 = por %p48, %p49
      %p51 = scmp.ne.s32.totalorder %s40, %s43
      %p52 = scmp.eq.s32.totalorder %s21, 3
      %p53 = por %p51, %p52
      %p54 = scmp.ne.s32.totalorder %s43, %s44
      %p55 = scmp.eq.s32.totalorder %s21, 0
      %p56 = por %p54, %p55
      %p57 = scmp.ne.s32.totalorder %s43, %s44
      %p58 = scmp.eq.s32.totalorder %s22, 3
      %p59 = por %p57, %p58
      %p61 = scmp.ne.s32.totalorder %s44, %s60
      %p62 = scmp.eq.s32.totalorder %s22, 0
      %p63 = por %p61, %p62
      %s64 = ssub.s32 %s23, %s35
      %p65 = scmp.eq.s32.totalorder %s64, 0
      %s67 = sadd.s32 %s66, 1
      %s68 = scalar_select %p65, %s66, %s67
      %p71 = pneg %p65
      %p72 = scmp.eq.s32.totalorder %s16, 3
      %p73 = por %p71, %p72
      %p74 = scmp.ne.s32.totalorder %s66, %s69
      %p75 = scmp.eq.s32.totalorder %s16, 0
      %p76 = por %p74, %p75
      %p77 = scmp.ne.s32.totalorder %s66, %s69
      %p78 = scmp.eq.s32.totalorder %s21, 3
      %p79 = por %p77, %p78
      %p80 = scmp.ne.s32.totalorder %s69, %s70
      %p81 = scmp.eq.s32.totalorder %s21, 0
      %p82 = por %p80, %p81
      %p83 = scmp.ne.s32.totalorder %s69, %s70
      %p84 = scmp.eq.s32.totalorder %s22, 3
      %p85 = por %p83, %p84
      %p87 = scmp.ne.s32.totalorder %s70, %s86
      %p88 = scmp.eq.s32.totalorder %s22, 0
      %p89 = por %p87, %p88
      %s91 = sadd.s32 %s90, 1
      %p94 = scmp.eq.s32.totalorder %s16, 3
      %p95 = scmp.ne.s32.totalorder %s90, %s92
      %p96 = scmp.eq.s32.totalorder %s16, 0
      %p97 = por %p95, %p96
      %p98 = scmp.ne.s32.totalorder %s90, %s92
      %p99 = scmp.eq.s32.totalorder %s21, 3
      %p100 = por %p98, %p99
      %p101 = scmp.ne.s32.totalorder %s92, %s93
      %p102 = scmp.eq.s32.totalorder %s21, 0
      %p103 = por %p101, %p102
      %p104 = scmp.ne.s32.totalorder %s92, %s93
      %p105 = scmp.eq.s32.totalorder %s22, 3
      %p106 = por %p104, %p105
      %p108 = scmp.ne.s32.totalorder %s93, %s107
      %p109 = scmp.eq.s32.totalorder %s22, 0
      %p110 = por %p108, %p109
      %s112 = sadd.s32 %s111, 1
      %p115 = scmp.eq.s32.totalorder %s16, 3
      %p116 = scmp.ne.s32.totalorder %s111, %s113
      %p117 = scmp.eq.s32.totalorder %s16, 0
      %p118 = por %p116, %p117
      %p119 = scmp.ne.s32.totalorder %s111, %s113
      %p120 = scmp.eq.s32.totalorder %s21, 3
      %p121 = por %p119, %p120
      %p122 = scmp.ne.s32.totalorder %s113, %s114
      %p123 = scmp.eq.s32.totalorder %s21, 0
      %p124 = por %p122, %p123
      %p125 = scmp.ne.s32.totalorder %s113, %s114
      %p126 = scmp.eq.s32.totalorder %s22, 3
      %p127 = por %p125, %p126
      %p129 = scmp.ne.s32.totalorder %s114, %s128
      %p130 = scmp.eq.s32.totalorder %s22, 0
      %p131 = por %p129, %p130
      %s133 = sadd.s32 %s132, 1
      %p136 = scmp.eq.s32.totalorder %s16, 3
      %p137 = scmp.ne.s32.totalorder %s132, %s134
      %p138 = scmp.eq.s32.totalorder %s16, 0
      %p139 = por %p137, %p138
      %p140 = scmp.ne.s32.totalorder %s132, %s134
      %p141 = scmp.eq.s32.totalorder %s21, 3
      %p142 = por %p140, %p141
      %p143 = scmp.ne.s32.totalorder %s134, %s135
      %p144 = scmp.eq.s32.totalorder %s21, 0
      %p145 = por %p143, %p144
      %p146 = scmp.ne.s32.totalorder %s134, %s135
      %p147 = scmp.eq.s32.totalorder %s22, 3
      %p148 = por %p146, %p147
      %p150 = scmp.ne.s32.totalorder %s135, %s149
      %p151 = scmp.eq.s32.totalorder %s22, 0
      %p152 = por %p150, %p151
      %s154 = sadd.s32 %s153, 1
      %p157 = scmp.eq.s32.totalorder %s16, 3
      %p158 = scmp.ne.s32.totalorder %s153, %s155
      %p159 = scmp.eq.s32.totalorder %s16, 0
      %p160 = por %p158, %p159
      %p161 = scmp.ne.s32.totalorder %s153, %s155
      %p162 = scmp.eq.s32.totalorder %s21, 3
      %p163 = por %p161, %p162
      %p164 = scmp.ne.s32.totalorder %s155, %s156
      %p165 = scmp.eq.s32.totalorder %s21, 0
      %p166 = por %p164, %p165
      %p167 = scmp.ne.s32.totalorder %s155, %s156
      %p168 = scmp.eq.s32.totalorder %s22, 3
      %p169 = por %p167, %p168
      %p171 = scmp.ne.s32.totalorder %s156, %s170
      %p172 = scmp.eq.s32.totalorder %s22, 0
      %p173 = por %p171, %p172
      %s175 = sadd.s32 %s174, 1
      %p178 = scmp.eq.s32.totalorder %s16, 3
      %p179 = scmp.ne.s32.totalorder %s174, %s176
      %p180 = scmp.eq.s32.totalorder %s16, 0
      %p181 = por %p179, %p180
      %p182 = scmp.ne.s32.totalorder %s174, %s176
      %p183 = scmp.eq.s32.totalorder %s21, 3
      %p184 = por %p182, %p183
      %p185 = scmp.ne.s32.totalorder %s176, %s177
      %p186 = scmp.eq.s32.totalorder %s21, 0
      %p187 = por %p185, %p186
      %p188 = scmp.ne.s32.totalorder %s176, %s177
      %p189 = scmp.eq.s32.totalorder %s22, 3
      %p190 = por %p188, %p189
      %p192 = scmp.ne.s32.totalorder %s177, %s191
      %p193 = scmp.eq.s32.totalorder %s22, 0
      %p194 = por %p192, %p193
      %s195 = ssub.s32 %s23, %s35
      %p196 = scmp.eq.s32.totalorder %s195, 0
      %s198 = sadd.s32 %s197, 1
      %s199 = scalar_select %p196, %s197, %s198
      %p202 = pneg %p196
      %p203 = scmp.eq.s32.totalorder %s16, 3
      %p204 = por %p202, %p203
      %p205 = scmp.ne.s32.totalorder %s197, %s200
      %p206 = scmp.eq.s32.totalorder %s16, 0
      %p207 = por %p205, %p206
      %p208 = scmp.ne.s32.totalorder %s197, %s200
      %p209 = scmp.eq.s32.totalorder %s21, 3
      %p210 = por %p208, %p209
      %p211 = scmp.ne.s32.totalorder %s200, %s201
      %p212 = scmp.eq.s32.totalorder %s21, 0
      %p213 = por %p211, %p212
      %p214 = scmp.ne.s32.totalorder %s200, %s201
      %p215 = scmp.eq.s32.totalorder %s22, 3
      %p216 = por %p214, %p215
      %p218 = scmp.ne.s32.totalorder %s201, %s217
      %p219 = scmp.eq.s32.totalorder %s22, 0
      %p220 = por %p218, %p219
      %p221 = scmp.le.s32.totalorder 1, %s16
      %p222 = scmp.lt.s32.totalorder %s16, 5
      %p223 = pnand %p221, %p222
      %p224 = pneg %p223
      // Predicated region
      $region9: #{tpu_custom_call.1} parent=5 // pred_check
        _
      $region10: #{tpu_custom_call.1} parent=5 // pred_check_branch
        %226 = sbr.rel (%p223) target = $region12
      $region11: #{tpu_custom_call.1} parent=5 // pred_region
        %s227 = ssub.s32 %s16, 1
        // Predicated region
        $region13: #{tpu_custom_call.1} parent=11 // pred_check
          %p228 = pneg %p103
        $region14: #{tpu_custom_call.1} parent=11 // pred_check_branch
          %230 = sbr.rel (%p228) target = $region16
        $region15: #{tpu_custom_call.1} parent=11 // pred_region
          _
        $region16: #{tpu_custom_call.1} parent=11 // pred_fallthru
          _
        // Predicated region
        $region17: #{tpu_custom_call.1} parent=11 // pred_check
          %p231 = pneg %p124
        $region18: #{tpu_custom_call.1} parent=11 // pred_check_branch
          %233 = sbr.rel (%p231) target = $region20
        $region19: #{tpu_custom_call.1} parent=11 // pred_region
          _
        $region20: #{tpu_custom_call.1} parent=11 // pred_fallthru
          _
        // Predicated region
        $region21: #{tpu_custom_call.1} parent=11 // pred_check
          %p234 = pneg %p145
        $region22: #{tpu_custom_call.1} parent=11 // pred_check_branch
          %236 = sbr.rel (%p234) target = $region24
        $region23: #{tpu_custom_call.1} parent=11 // pred_region
          _
        $region24: #{tpu_custom_call.1} parent=11 // pred_fallthru
          _
        // Predicated region
        $region25: #{tpu_custom_call.1} parent=11 // pred_check
          %p237 = pneg %p166
        $region26: #{tpu_custom_call.1} parent=11 // pred_check_branch
          %239 = sbr.rel (%p237) target = $region28
        $region27: #{tpu_custom_call.1} parent=11 // pred_region
          _
        $region28: #{tpu_custom_call.1} parent=11 // pred_fallthru
          _
        // Predicated region
        $region29: #{tpu_custom_call.1} parent=11 // pred_check
          %p240 = pneg %p187
        $region30: #{tpu_custom_call.1} parent=11 // pred_check_branch
          %242 = sbr.rel (%p240) target = $region32
        $region31: #{tpu_custom_call.1} parent=11 // pred_region
          _
        $region32: #{tpu_custom_call.1} parent=11 // pred_fallthru
          _
      $region12: #{tpu_custom_call.1} parent=5 // pred_fallthru
        _
      %p243 = scmp.lt.s32.totalorder %s16, 4
      // Predicated region
      $region33: #{tpu_custom_call.1} parent=5 // pred_check
        %p244 = pneg %p243
      $region34: #{tpu_custom_call.1} parent=5 // pred_check_branch
        %246 = sbr.rel (%p244) target = $region36
      $region35: #{tpu_custom_call.1} parent=5 // pred_region
        // Predicated region
        $region37: #{tpu_custom_call.1} parent=35 // pred_check
          %p247 = pneg %p50
        $region38: #{tpu_custom_call.1} parent=35 // pred_check_branch
          %249 = sbr.rel (%p247) target = $region40
        $region39: #{tpu_custom_call.1} parent=35 // pred_region
          %s250 = sand.u32 %s40, 1
          %s251 = sand.u32 %s40, 1
          %s252 = smul.addr %s251, 1024
          %s253 = scalar_lea.vmem [#allocation2], %s252
          %s254 = smul.u32 8, %s23
          %s255 = smul.u32 16, %s24
          %s256 = smul.addr %s254, 32
          %s257 = sadd.s32 %s255, %s256
          %s258 = smul.addr %s257, 8
          %s259 = scalar_lea.vmem %s0, %s258
          // Predicated region
          $region41: #{tpu_custom_call.1} parent=39 // pred_check
            _
          $region42: #{tpu_custom_call.1} parent=39 // pred_check_branch
            %261 = sbr.rel (0) target = $region44
          $region43: #{tpu_custom_call.1} parent=39 // pred_region
            // Predicated region
            $region45: #{tpu_custom_call.1} parent=43 // pred_check
              _
            $region46: #{tpu_custom_call.1} parent=43 // pred_check_branch
              %263 = sbr.rel (0) target = $region48
            $region47: #{tpu_custom_call.1} parent=43 // pred_region
              // Predicated region
              $region60: #{tpu_custom_call.1} parent=47 // pred_check
                _
              $region61: #{tpu_custom_call.1} parent=47 // pred_check_branch
                %533 = sbr.rel (0) target = $region63
              $region62: #{tpu_custom_call.1} parent=47 // pred_region
                loop: start=0, step=1, limit=1
                $region64: #{tpu_custom_call.1} parent=62 // loop_pre_header
                  _
                $region65: #{tpu_custom_call.1} parent=62 // loop_header
                  %s535 = sphi 0, %s539
                  %p536 = scmp.ge.s32.totalorder %s535, 1
                  %s540 = sphi %s259, %s259
                  %s541 = sphi %s253, %s253
                $region66: #{tpu_custom_call.1} parent=62 // loop_header_branch
                  %538 = sbr.rel (%p536) target = $region70
                $region67: #{tpu_custom_call.1} parent=62 // loop_body
                  %v542 = vld [vmem:[%s540] sm:$0xff]
                  %543 = vst [vmem:[%s541] sm:$0xff] %v542
                  %v544 = vld [vmem:[%s540 + $0x8] sm:$0xff]
                  %545 = vst [vmem:[%s541 + $0x8] sm:$0xff] %v544
                  %v546 = vld [vmem:[%s540 + $0x10] sm:$0xff]
                  %547 = vst [vmem:[%s541 + $0x10] sm:$0xff] %v546
                  %v548 = vld [vmem:[%s540 + $0x18] sm:$0xff]
                  %549 = vst [vmem:[%s541 + $0x18] sm:$0xff] %v548
                  %v550 = vld [vmem:[%s540 + $0x20] sm:$0xff]
                  %551 = vst [vmem:[%s541 + $0x20] sm:$0xff] %v550
                  %v552 = vld [vmem:[%s540 + $0x28] sm:$0xff]
                  %553 = vst [vmem:[%s541 + $0x28] sm:$0xff] %v552
                  %v554 = vld [vmem:[%s540 + $0x30] sm:$0xff]
                  %555 = vst [vmem:[%s541 + $0x30] sm:$0xff] %v554
                  %v556 = vld [vmem:[%s540 + $0x38] sm:$0xff]
                  %557 = vst [vmem:[%s541 + $0x38] sm:$0xff] %v556
                  %v558 = vld [vmem:[%s540 + $0x40] sm:$0xff]
                  %559 = vst [vmem:[%s541 + $0x40] sm:$0xff] %v558
                  %v560 = vld [vmem:[%s540 + $0x48] sm:$0xff]
                  %561 = vst [vmem:[%s541 + $0x48] sm:$0xff] %v560
                  %v562 = vld [vmem:[%s540 + $0x50] sm:$0xff]
                  %563 = vst [vmem:[%s541 + $0x50] sm:$0xff] %v562
                  %v564 = vld [vmem:[%s540 + $0x58] sm:$0xff]
                  %565 = vst [vmem:[%s541 + $0x58] sm:$0xff] %v564
                  %v566 = vld [vmem:[%s540 + $0x60] sm:$0xff]
                  %567 = vst [vmem:[%s541 + $0x60] sm:$0xff] %v566
                  %v568 = vld [vmem:[%s540 + $0x68] sm:$0xff]
                  %569 = vst [vmem:[%s541 + $0x68] sm:$0xff] %v568
                  %v570 = vld [vmem:[%s540 + $0x70] sm:$0xff]
                  %571 = vst [vmem:[%s541 + $0x70] sm:$0xff] %v570
                  %v572 = vld [vmem:[%s540 + $0x78] sm:$0xff]
                  %573 = vst [vmem:[%s541 + $0x78] sm:$0xff] %v572
                  %v574 = vld [vmem:[%s540 + $0x100] sm:$0xff]
                  %575 = vst [vmem:[%s541 + $0x80] sm:$0xff] %v574
                  %v576 = vld [vmem:[%s540 + $0x108] sm:$0xff]
                  %577 = vst [vmem:[%s541 + $0x88] sm:$0xff] %v576
                  %v578 = vld [vmem:[%s540 + $0x110] sm:$0xff]
                  %579 = vst [vmem:[%s541 + $0x90] sm:$0xff] %v578
                  %v580 = vld [vmem:[%s540 + $0x118] sm:$0xff]
                  %581 = vst [vmem:[%s541 + $0x98] sm:$0xff] %v580
                  %v582 = vld [vmem:[%s540 + $0x120] sm:$0xff]
                  %583 = vst [vmem:[%s541 + $0xa0] sm:$0xff] %v582
                  %v584 = vld [vmem:[%s540 + $0x128] sm:$0xff]
                  %585 = vst [vmem:[%s541 + $0xa8] sm:$0xff] %v584
                  %v586 = vld [vmem:[%s540 + $0x130] sm:$0xff]
                  %587 = vst [vmem:[%s541 + $0xb0] sm:$0xff] %v586
                  %v588 = vld [vmem:[%s540 + $0x138] sm:$0xff]
                  %589 = vst [vmem:[%s541 + $0xb8] sm:$0xff] %v588
                  %v590 = vld [vmem:[%s540 + $0x140] sm:$0xff]
                  %591 = vst [vmem:[%s541 + $0xc0] sm:$0xff] %v590
                  %v592 = vld [vmem:[%s540 + $0x148] sm:$0xff]
                  %593 = vst [vmem:[%s541 + $0xc8] sm:$0xff] %v592
                  %v594 = vld [vmem:[%s540 + $0x150] sm:$0xff]
                  %595 = vst [vmem:[%s541 + $0xd0] sm:$0xff] %v594
                  %v596 = vld [vmem:[%s540 + $0x158] sm:$0xff]
                  %597 = vst [vmem:[%s541 + $0xd8] sm:$0xff] %v596
                  %v598 = vld [vmem:[%s540 + $0x160] sm:$0xff]
                  %599 = vst [vmem:[%s541 + $0xe0] sm:$0xff] %v598
                  %v600 = vld [vmem:[%s540 + $0x168] sm:$0xff]
                  %601 = vst [vmem:[%s541 + $0xe8] sm:$0xff] %v600
                  %v602 = vld [vmem:[%s540 + $0x170] sm:$0xff]
                  %603 = vst [vmem:[%s541 + $0xf0] sm:$0xff] %v602
                  %v604 = vld [vmem:[%s540 + $0x178] sm:$0xff]
                  %605 = vst [vmem:[%s541 + $0xf8] sm:$0xff] %v604
                  %v606 = vld [vmem:[%s540 + $0x200] sm:$0xff]
                  %607 = vst [vmem:[%s541 + $0x100] sm:$0xff] %v606
                  %v608 = vld [vmem:[%s540 + $0x208] sm:$0xff]
                  %609 = vst [vmem:[%s541 + $0x108] sm:$0xff] %v608
                  %v610 = vld [vmem:[%s540 + $0x210] sm:$0xff]
                  %611 = vst [vmem:[%s541 + $0x110] sm:$0xff] %v610
                  %v612 = vld [vmem:[%s540 + $0x218] sm:$0xff]
                  %613 = vst [vmem:[%s541 + $0x118] sm:$0xff] %v612
                  %v614 = vld [vmem:[%s540 + $0x220] sm:$0xff]
                  %615 = vst [vmem:[%s541 + $0x120] sm:$0xff] %v614
                  %v616 = vld [vmem:[%s540 + $0x228] sm:$0xff]
                  %617 = vst [vmem:[%s541 + $0x128] sm:$0xff] %v616
                  %v618 = vld [vmem:[%s540 + $0x230] sm:$0xff]
                  %619 = vst [vmem:[%s541 + $0x130] sm:$0xff] %v618
                  %v620 = vld [vmem:[%s540 + $0x238] sm:$0xff]
                  %621 = vst [vmem:[%s541 + $0x138] sm:$0xff] %v620
                  %v622 = vld [vmem:[%s540 + $0x240] sm:$0xff]
                  %623 = vst [vmem:[%s541 + $0x140] sm:$0xff] %v622
                  %v624 = vld [vmem:[%s540 + $0x248] sm:$0xff]
                  %625 = vst [vmem:[%s541 + $0x148] sm:$0xff] %v624
                  %v626 = vld [vmem:[%s540 + $0x250] sm:$0xff]
                  %627 = vst [vmem:[%s541 + $0x150] sm:$0xff] %v626
                  %v628 = vld [vmem:[%s540 + $0x258] sm:$0xff]
                  %629 = vst [vmem:[%s541 + $0x158] sm:$0xff] %v628
                  %v630 = vld [vmem:[%s540 + $0x260] sm:$0xff]
                  %631 = vst [vmem:[%s541 + $0x160] sm:$0xff] %v630
                  %v632 = vld [vmem:[%s540 + $0x268] sm:$0xff]
                  %633 = vst [vmem:[%s541 + $0x168] sm:$0xff] %v632
                  %v634 = vld [vmem:[%s540 + $0x270] sm:$0xff]
                  %635 = vst [vmem:[%s541 + $0x170] sm:$0xff] %v634
                  %v636 = vld [vmem:[%s540 + $0x278] sm:$0xff]
                  %637 = vst [vmem:[%s541 + $0x178] sm:$0xff] %v636
                  %v638 = vld [vmem:[%s540 + $0x300] sm:$0xff]
                  %639 = vst [vmem:[%s541 + $0x180] sm:$0xff] %v638
                  %v640 = vld [vmem:[%s540 + $0x308] sm:$0xff]
                  %641 = vst [vmem:[%s541 + $0x188] sm:$0xff] %v640
                  %v642 = vld [vmem:[%s540 + $0x310] sm:$0xff]
                  %643 = vst [vmem:[%s541 + $0x190] sm:$0xff] %v642
                  %v644 = vld [vmem:[%s540 + $0x318] sm:$0xff]
                  %645 = vst [vmem:[%s541 + $0x198] sm:$0xff] %v644
                  %v646 = vld [vmem:[%s540 + $0x320] sm:$0xff]
                  %647 = vst [vmem:[%s541 + $0x1a0] sm:$0xff] %v646
                  %v648 = vld [vmem:[%s540 + $0x328] sm:$0xff]
                  %649 = vst [vmem:[%s541 + $0x1a8] sm:$0xff] %v648
                  %v650 = vld [vmem:[%s540 + $0x330] sm:$0xff]
                  %651 = vst [vmem:[%s541 + $0x1b0] sm:$0xff] %v650
                  %v652 = vld [vmem:[%s540 + $0x338] sm:$0xff]
                  %653 = vst [vmem:[%s541 + $0x1b8] sm:$0xff] %v652
                  %v654 = vld [vmem:[%s540 + $0x340] sm:$0xff]
                  %655 = vst [vmem:[%s541 + $0x1c0] sm:$0xff] %v654
                  %v656 = vld [vmem:[%s540 + $0x348] sm:$0xff]
                  %657 = vst [vmem:[%s541 + $0x1c8] sm:$0xff] %v656
                  %v658 = vld [vmem:[%s540 + $0x350] sm:$0xff]
                  %659 = vst [vmem:[%s541 + $0x1d0] sm:$0xff] %v658
                  %v660 = vld [vmem:[%s540 + $0x358] sm:$0xff]
                  %661 = vst [vmem:[%s541 + $0x1d8] sm:$0xff] %v660
                  %v662 = vld [vmem:[%s540 + $0x360] sm:$0xff]
                  %663 = vst [vmem:[%s541 + $0x1e0] sm:$0xff] %v662
                  %v664 = vld [vmem:[%s540 + $0x368] sm:$0xff]
                  %665 = vst [vmem:[%s541 + $0x1e8] sm:$0xff] %v664
                  %v666 = vld [vmem:[%s540 + $0x370] sm:$0xff]
                  %667 = vst [vmem:[%s541 + $0x1f0] sm:$0xff] %v666
                  %v668 = vld [vmem:[%s540 + $0x378] sm:$0xff]
                  %669 = vst [vmem:[%s541 + $0x1f8] sm:$0xff] %v668
                  %v670 = vld [vmem:[%s540 + $0x400] sm:$0xff]
                  %671 = vst [vmem:[%s541 + $0x200] sm:$0xff] %v670
                  %v672 = vld [vmem:[%s540 + $0x408] sm:$0xff]
                  %673 = vst [vmem:[%s541 + $0x208] sm:$0xff] %v672
                  %v674 = vld [vmem:[%s540 + $0x410] sm:$0xff]
                  %675 = vst [vmem:[%s541 + $0x210] sm:$0xff] %v674
                  %v676 = vld [vmem:[%s540 + $0x418] sm:$0xff]
                  %677 = vst [vmem:[%s541 + $0x218] sm:$0xff] %v676
                  %v678 = vld [vmem:[%s540 + $0x420] sm:$0xff]
                  %679 = vst [vmem:[%s541 + $0x220] sm:$0xff] %v678
                  %v680 = vld [vmem:[%s540 + $0x428] sm:$0xff]
                  %681 = vst [vmem:[%s541 + $0x228] sm:$0xff] %v680
                  %v682 = vld [vmem:[%s540 + $0x430] sm:$0xff]
                  %683 = vst [vmem:[%s541 + $0x230] sm:$0xff] %v682
                  %v684 = vld [vmem:[%s540 + $0x438] sm:$0xff]
                  %685 = vst [vmem:[%s541 + $0x238] sm:$0xff] %v684
                  %v686 = vld [vmem:[%s540 + $0x440] sm:$0xff]
                  %687 = vst [vmem:[%s541 + $0x240] sm:$0xff] %v686
                  %v688 = vld [vmem:[%s540 + $0x448] sm:$0xff]
                  %689 = vst [vmem:[%s541 + $0x248] sm:$0xff] %v688
                  %v690 = vld [vmem:[%s540 + $0x450] sm:$0xff]
                  %691 = vst [vmem:[%s541 + $0x250] sm:$0xff] %v690
                  %v692 = vld [vmem:[%s540 + $0x458] sm:$0xff]
                  %693 = vst [vmem:[%s541 + $0x258] sm:$0xff] %v692
                  %v694 = vld [vmem:[%s540 + $0x460] sm:$0xff]
                  %695 = vst [vmem:[%s541 + $0x260] sm:$0xff] %v694
                  %v696 = vld [vmem:[%s540 + $0x468] sm:$0xff]
                  %697 = vst [vmem:[%s541 + $0x268] sm:$0xff] %v696
                  %v698 = vld [vmem:[%s540 + $0x470] sm:$0xff]
                  %699 = vst [vmem:[%s541 + $0x270] sm:$0xff] %v698
                  %v700 = vld [vmem:[%s540 + $0x478] sm:$0xff]
                  %701 = vst [vmem:[%s541 + $0x278] sm:$0xff] %v700
                  %v702 = vld [vmem:[%s540 + $0x500] sm:$0xff]
                  %703 = vst [vmem:[%s541 + $0x280] sm:$0xff] %v702
                  %v704 = vld [vmem:[%s540 + $0x508] sm:$0xff]
                  %705 = vst [vmem:[%s541 + $0x288] sm:$0xff] %v704
                  %v706 = vld [vmem:[%s540 + $0x510] sm:$0xff]
                  %707 = vst [vmem:[%s541 + $0x290] sm:$0xff] %v706
                  %v708 = vld [vmem:[%s540 + $0x518] sm:$0xff]
                  %709 = vst [vmem:[%s541 + $0x298] sm:$0xff] %v708
                  %v710 = vld [vmem:[%s540 + $0x520] sm:$0xff]
                  %711 = vst [vmem:[%s541 + $0x2a0] sm:$0xff] %v710
                  %v712 = vld [vmem:[%s540 + $0x528] sm:$0xff]
                  %713 = vst [vmem:[%s541 + $0x2a8] sm:$0xff] %v712
                  %v714 = vld [vmem:[%s540 + $0x530] sm:$0xff]
                  %715 = vst [vmem:[%s541 + $0x2b0] sm:$0xff] %v714
                  %v716 = vld [vmem:[%s540 + $0x538] sm:$0xff]
                  %717 = vst [vmem:[%s541 + $0x2b8] sm:$0xff] %v716
                  %v718 = vld [vmem:[%s540 + $0x540] sm:$0xff]
                  %719 = vst [vmem:[%s541 + $0x2c0] sm:$0xff] %v718
                  %v720 = vld [vmem:[%s540 + $0x548] sm:$0xff]
                  %721 = vst [vmem:[%s541 + $0x2c8] sm:$0xff] %v720
                  %v722 = vld [vmem:[%s540 + $0x550] sm:$0xff]
                  %723 = vst [vmem:[%s541 + $0x2d0] sm:$0xff] %v722
                  %v724 = vld [vmem:[%s540 + $0x558] sm:$0xff]
                  %725 = vst [vmem:[%s541 + $0x2d8] sm:$0xff] %v724
                  %v726 = vld [vmem:[%s540 + $0x560] sm:$0xff]
                  %727 = vst [vmem:[%s541 + $0x2e0] sm:$0xff] %v726
                  %v728 = vld [vmem:[%s540 + $0x568] sm:$0xff]
                  %729 = vst [vmem:[%s541 + $0x2e8] sm:$0xff] %v728
                  %v730 = vld [vmem:[%s540 + $0x570] sm:$0xff]
                  %731 = vst [vmem:[%s541 + $0x2f0] sm:$0xff] %v730
                  %v732 = vld [vmem:[%s540 + $0x578] sm:$0xff]
                  %733 = vst [vmem:[%s541 + $0x2f8] sm:$0xff] %v732
                  %v734 = vld [vmem:[%s540 + $0x600] sm:$0xff]
                  %735 = vst [vmem:[%s541 + $0x300] sm:$0xff] %v734
                  %v736 = vld [vmem:[%s540 + $0x608] sm:$0xff]
                  %737 = vst [vmem:[%s541 + $0x308] sm:$0xff] %v736
                  %v738 = vld [vmem:[%s540 + $0x610] sm:$0xff]
                  %739 = vst [vmem:[%s541 + $0x310] sm:$0xff] %v738
                  %v740 = vld [vmem:[%s540 + $0x618] sm:$0xff]
                  %741 = vst [vmem:[%s541 + $0x318] sm:$0xff] %v740
                  %v742 = vld [vmem:[%s540 + $0x620] sm:$0xff]
                  %743 = vst [vmem:[%s541 + $0x320] sm:$0xff] %v742
                  %v744 = vld [vmem:[%s540 + $0x628] sm:$0xff]
                  %745 = vst [vmem:[%s541 + $0x328] sm:$0xff] %v744
                  %v746 = vld [vmem:[%s540 + $0x630] sm:$0xff]
                  %747 = vst [vmem:[%s541 + $0x330] sm:$0xff] %v746
                  %v748 = vld [vmem:[%s540 + $0x638] sm:$0xff]
                  %749 = vst [vmem:[%s541 + $0x338] sm:$0xff] %v748
                  %v750 = vld [vmem:[%s540 + $0x640] sm:$0xff]
                  %751 = vst [vmem:[%s541 + $0x340] sm:$0xff] %v750
                  %v752 = vld [vmem:[%s540 + $0x648] sm:$0xff]
                  %753 = vst [vmem:[%s541 + $0x348] sm:$0xff] %v752
                  %v754 = vld [vmem:[%s540 + $0x650] sm:$0xff]
                  %755 = vst [vmem:[%s541 + $0x350] sm:$0xff] %v754
                  %v756 = vld [vmem:[%s540 + $0x658] sm:$0xff]
                  %757 = vst [vmem:[%s541 + $0x358] sm:$0xff] %v756
                  %v758 = vld [vmem:[%s540 + $0x660] sm:$0xff]
                  %759 = vst [vmem:[%s541 + $0x360] sm:$0xff] %v758
                  %v760 = vld [vmem:[%s540 + $0x668] sm:$0xff]
                  %761 = vst [vmem:[%s541 + $0x368] sm:$0xff] %v760
                  %v762 = vld [vmem:[%s540 + $0x670] sm:$0xff]
                  %763 = vst [vmem:[%s541 + $0x370] sm:$0xff] %v762
                  %v764 = vld [vmem:[%s540 + $0x678] sm:$0xff]
                  %765 = vst [vmem:[%s541 + $0x378] sm:$0xff] %v764
                  %v766 = vld [vmem:[%s540 + $0x700] sm:$0xff]
                  %767 = vst [vmem:[%s541 + $0x380] sm:$0xff] %v766
                  %v768 = vld [vmem:[%s540 + $0x708] sm:$0xff]
                  %769 = vst [vmem:[%s541 + $0x388] sm:$0xff] %v768
                  %v770 = vld [vmem:[%s540 + $0x710] sm:$0xff]
                  %771 = vst [vmem:[%s541 + $0x390] sm:$0xff] %v770
                  %v772 = vld [vmem:[%s540 + $0x718] sm:$0xff]
                  %773 = vst [vmem:[%s541 + $0x398] sm:$0xff] %v772
                  %v774 = vld [vmem:[%s540 + $0x720] sm:$0xff]
                  %775 = vst [vmem:[%s541 + $0x3a0] sm:$0xff] %v774
                  %v776 = vld [vmem:[%s540 + $0x728] sm:$0xff]
                  %777 = vst [vmem:[%s541 + $0x3a8] sm:$0xff] %v776
                  %v778 = vld [vmem:[%s540 + $0x730] sm:$0xff]
                  %779 = vst [vmem:[%s541 + $0x3b0] sm:$0xff] %v778
                  %v780 = vld [vmem:[%s540 + $0x738] sm:$0xff]
                  %781 = vst [vmem:[%s541 + $0x3b8] sm:$0xff] %v780
                  %v782 = vld [vmem:[%s540 + $0x740] sm:$0xff]
                  %783 = vst [vmem:[%s541 + $0x3c0] sm:$0xff] %v782
                  %v784 = vld [vmem:[%s540 + $0x748] sm:$0xff]
                  %785 = vst [vmem:[%s541 + $0x3c8] sm:$0xff] %v784
                  %v786 = vld [vmem:[%s540 + $0x750] sm:$0xff]
                  %787 = vst [vmem:[%s541 + $0x3d0] sm:$0xff] %v786
                  %v788 = vld [vmem:[%s540 + $0x758] sm:$0xff]
                  %789 = vst [vmem:[%s541 + $0x3d8] sm:$0xff] %v788
                  %v790 = vld [vmem:[%s540 + $0x760] sm:$0xff]
                  %791 = vst [vmem:[%s541 + $0x3e0] sm:$0xff] %v790
                  %v792 = vld [vmem:[%s540 + $0x768] sm:$0xff]
                  %793 = vst [vmem:[%s541 + $0x3e8] sm:$0xff] %v792
                  %v794 = vld [vmem:[%s540 + $0x770] sm:$0xff]
                  %795 = vst [vmem:[%s541 + $0x3f0] sm:$0xff] %v794
                  %v796 = vld [vmem:[%s540 + $0x778] sm:$0xff]
                  %797 = vst [vmem:[%s541 + $0x3f8] sm:$0xff] %v796
                $region68: #{tpu_custom_call.1} parent=62 // loop_footer
                  %s539 = sadd.s32 1, %s535
                $region69: #{tpu_custom_call.1} parent=62 // loop_footer_branch
                  %534 = sbr.rel target = $region65
                $region70: #{tpu_custom_call.1} parent=62 // loop_exit
                  _
              $region63: #{tpu_custom_call.1} parent=47 // pred_fallthru
                _
              // Predicated region
              $region71: #{tpu_custom_call.1} parent=47 // pred_check
                _
              $region72: #{tpu_custom_call.1} parent=47 // pred_check_branch
                %799 = sbr.rel target = $region74
              $region73: #{tpu_custom_call.1} parent=47 // pred_region
                _
              $region74: #{tpu_custom_call.1} parent=47 // pred_fallthru
                _
            $region48: #{tpu_custom_call.1} parent=43 // pred_fallthru
              _
            // Predicated region
            $region49: #{tpu_custom_call.1} parent=43 // pred_check
              _
            $region50: #{tpu_custom_call.1} parent=43 // pred_check_branch
              %265 = sbr.rel target = $region52
            $region51: #{tpu_custom_call.1} parent=43 // pred_region
              %s267 = ssub.s32 256, 1
              loop: start=0, step=1, limit=1
              $region53: #{tpu_custom_call.1} parent=51 // loop_pre_header
                _
              $region54: #{tpu_custom_call.1} parent=51 // loop_header
                %s269 = sphi 0, %s273
                %p270 = scmp.ge.s32.totalorder %s269, 1
                %s274 = sphi %s259, %s259
                %s275 = sphi %s253, %s253
              $region55: #{tpu_custom_call.1} parent=51 // loop_header_branch
                %272 = sbr.rel (%p270) target = $region59
              $region56: #{tpu_custom_call.1} parent=51 // loop_body
                %v276 = vld [vmem:[%s274] sm:%s267]
                %277 = vst [vmem:[%s275] sm:%s267] %v276
                %v278 = vld [vmem:[%s274 + $0x8] sm:%s267]
                %279 = vst [vmem:[%s275 + $0x8] sm:%s267] %v278
                %v280 = vld [vmem:[%s274 + $0x10] sm:%s267]
                %281 = vst [vmem:[%s275 + $0x10] sm:%s267] %v280
                %v282 = vld [vmem:[%s274 + $0x18] sm:%s267]
                %283 = vst [vmem:[%s275 + $0x18] sm:%s267] %v282
                %v284 = vld [vmem:[%s274 + $0x20] sm:%s267]
                %285 = vst [vmem:[%s275 + $0x20] sm:%s267] %v284
                %v286 = vld [vmem:[%s274 + $0x28] sm:%s267]
                %287 = vst [vmem:[%s275 + $0x28] sm:%s267] %v286
                %v288 = vld [vmem:[%s274 + $0x30] sm:%s267]
                %289 = vst [vmem:[%s275 + $0x30] sm:%s267] %v288
                %v290 = vld [vmem:[%s274 + $0x38] sm:%s267]
                %291 = vst [vmem:[%s275 + $0x38] sm:%s267] %v290
                %v292 = vld [vmem:[%s274 + $0x40] sm:%s267]
                %293 = vst [vmem:[%s275 + $0x40] sm:%s267] %v292
                %v294 = vld [vmem:[%s274 + $0x48] sm:%s267]
                %295 = vst [vmem:[%s275 + $0x48] sm:%s267] %v294
                %v296 = vld [vmem:[%s274 + $0x50] sm:%s267]
                %297 = vst [vmem:[%s275 + $0x50] sm:%s267] %v296
                %v298 = vld [vmem:[%s274 + $0x58] sm:%s267]
                %299 = vst [vmem:[%s275 + $0x58] sm:%s267] %v298
                %v300 = vld [vmem:[%s274 + $0x60] sm:%s267]
                %301 = vst [vmem:[%s275 + $0x60] sm:%s267] %v300
                %v302 = vld [vmem:[%s274 + $0x68] sm:%s267]
                %303 = vst [vmem:[%s275 + $0x68] sm:%s267] %v302
                %v304 = vld [vmem:[%s274 + $0x70] sm:%s267]
                %305 = vst [vmem:[%s275 + $0x70] sm:%s267] %v304
                %v306 = vld [vmem:[%s274 + $0x78] sm:%s267]
                %307 = vst [vmem:[%s275 + $0x78] sm:%s267] %v306
                %v308 = vld [vmem:[%s274 + $0x100] sm:%s267]
                %309 = vst [vmem:[%s275 + $0x80] sm:%s267] %v308
                %v310 = vld [vmem:[%s274 + $0x108] sm:%s267]
                %311 = vst [vmem:[%s275 + $0x88] sm:%s267] %v310
                %v312 = vld [vmem:[%s274 + $0x110] sm:%s267]
                %313 = vst [vmem:[%s275 + $0x90] sm:%s267] %v312
                %v314 = vld [vmem:[%s274 + $0x118] sm:%s267]
                %315 = vst [vmem:[%s275 + $0x98] sm:%s267] %v314
                %v316 = vld [vmem:[%s274 + $0x120] sm:%s267]
                %317 = vst [vmem:[%s275 + $0xa0] sm:%s267] %v316
                %v318 = vld [vmem:[%s274 + $0x128] sm:%s267]
                %319 = vst [vmem:[%s275 + $0xa8] sm:%s267] %v318
                %v320 = vld [vmem:[%s274 + $0x130] sm:%s267]
                %321 = vst [vmem:[%s275 + $0xb0] sm:%s267] %v320
                %v322 = vld [vmem:[%s274 + $0x138] sm:%s267]
                %323 = vst [vmem:[%s275 + $0xb8] sm:%s267] %v322
                %v324 = vld [vmem:[%s274 + $0x140] sm:%s267]
                %325 = vst [vmem:[%s275 + $0xc0] sm:%s267] %v324
                %v326 = vld [vmem:[%s274 + $0x148] sm:%s267]
                %327 = vst [vmem:[%s275 + $0xc8] sm:%s267] %v326
                %v328 = vld [vmem:[%s274 + $0x150] sm:%s267]
                %329 = vst [vmem:[%s275 + $0xd0] sm:%s267] %v328
                %v330 = vld [vmem:[%s274 + $0x158] sm:%s267]
                %331 = vst [vmem:[%s275 + $0xd8] sm:%s267] %v330
                %v332 = vld [vmem:[%s274 + $0x160] sm:%s267]
                %333 = vst [vmem:[%s275 + $0xe0] sm:%s267] %v332
                %v334 = vld [vmem:[%s274 + $0x168] sm:%s267]
                %335 = vst [vmem:[%s275 + $0xe8] sm:%s267] %v334
                %v336 = vld [vmem:[%s274 + $0x170] sm:%s267]
                %337 = vst [vmem:[%s275 + $0xf0] sm:%s267] %v336
                %v338 = vld [vmem:[%s274 + $0x178] sm:%s267]
                %339 = vst [vmem:[%s275 + $0xf8] sm:%s267] %v338
                %v340 = vld [vmem:[%s274 + $0x200] sm:%s267]
                %341 = vst [vmem:[%s275 + $0x100] sm:%s267] %v340
                %v342 = vld [vmem:[%s274 + $0x208] sm:%s267]
                %343 = vst [vmem:[%s275 + $0x108] sm:%s267] %v342
                %v344 = vld [vmem:[%s274 + $0x210] sm:%s267]
                %345 = vst [vmem:[%s275 + $0x110] sm:%s267] %v344
                %v346 = vld [vmem:[%s274 + $0x218] sm:%s267]
                %347 = vst [vmem:[%s275 + $0x118] sm:%s267] %v346
                %v348 = vld [vmem:[%s274 + $0x220] sm:%s267]
                %349 = vst [vmem:[%s275 + $0x120] sm:%s267] %v348
                %v350 = vld [vmem:[%s274 + $0x228] sm:%s267]
                %351 = vst [vmem:[%s275 + $0x128] sm:%s267] %v350
                %v352 = vld [vmem:[%s274 + $0x230] sm:%s267]
                %353 = vst [vmem:[%s275 + $0x130] sm:%s267] %v352
                %v354 = vld [vmem:[%s274 + $0x238] sm:%s267]
                %355 = vst [vmem:[%s275 + $0x138] sm:%s267] %v354
                %v356 = vld [vmem:[%s274 + $0x240] sm:%s267]
                %357 = vst [vmem:[%s275 + $0x140] sm:%s267] %v356
                %v358 = vld [vmem:[%s274 + $0x248] sm:%s267]
                %359 = vst [vmem:[%s275 + $0x148] sm:%s267] %v358
                %v360 = vld [vmem:[%s274 + $0x250] sm:%s267]
                %361 = vst [vmem:[%s275 + $0x150] sm:%s267] %v360
                %v362 = vld [vmem:[%s274 + $0x258] sm:%s267]
                %363 = vst [vmem:[%s275 + $0x158] sm:%s267] %v362
                %v364 = vld [vmem:[%s274 + $0x260] sm:%s267]
                %365 = vst [vmem:[%s275 + $0x160] sm:%s267] %v364
                %v366 = vld [vmem:[%s274 + $0x268] sm:%s267]
                %367 = vst [vmem:[%s275 + $0x168] sm:%s267] %v366
                %v368 = vld [vmem:[%s274 + $0x270] sm:%s267]
                %369 = vst [vmem:[%s275 + $0x170] sm:%s267] %v368
                %v370 = vld [vmem:[%s274 + $0x278] sm:%s267]
                %371 = vst [vmem:[%s275 + $0x178] sm:%s267] %v370
                %v372 = vld [vmem:[%s274 + $0x300] sm:%s267]
                %373 = vst [vmem:[%s275 + $0x180] sm:%s267] %v372
                %v374 = vld [vmem:[%s274 + $0x308] sm:%s267]
                %375 = vst [vmem:[%s275 + $0x188] sm:%s267] %v374
                %v376 = vld [vmem:[%s274 + $0x310] sm:%s267]
                %377 = vst [vmem:[%s275 + $0x190] sm:%s267] %v376
                %v378 = vld [vmem:[%s274 + $0x318] sm:%s267]
                %379 = vst [vmem:[%s275 + $0x198] sm:%s267] %v378
                %v380 = vld [vmem:[%s274 + $0x320] sm:%s267]
                %381 = vst [vmem:[%s275 + $0x1a0] sm:%s267] %v380
                %v382 = vld [vmem:[%s274 + $0x328] sm:%s267]
                %383 = vst [vmem:[%s275 + $0x1a8] sm:%s267] %v382
                %v384 = vld [vmem:[%s274 + $0x330] sm:%s267]
                %385 = vst [vmem:[%s275 + $0x1b0] sm:%s267] %v384
                %v386 = vld [vmem:[%s274 + $0x338] sm:%s267]
                %387 = vst [vmem:[%s275 + $0x1b8] sm:%s267] %v386
                %v388 = vld [vmem:[%s274 + $0x340] sm:%s267]
                %389 = vst [vmem:[%s275 + $0x1c0] sm:%s267] %v388
                %v390 = vld [vmem:[%s274 + $0x348] sm:%s267]
                %391 = vst [vmem:[%s275 + $0x1c8] sm:%s267] %v390
                %v392 = vld [vmem:[%s274 + $0x350] sm:%s267]
                %393 = vst [vmem:[%s275 + $0x1d0] sm:%s267] %v392
                %v394 = vld [vmem:[%s274 + $0x358] sm:%s267]
                %395 = vst [vmem:[%s275 + $0x1d8] sm:%s267] %v394
                %v396 = vld [vmem:[%s274 + $0x360] sm:%s267]
                %397 = vst [vmem:[%s275 + $0x1e0] sm:%s267] %v396
                %v398 = vld [vmem:[%s274 + $0x368] sm:%s267]
                %399 = vst [vmem:[%s275 + $0x1e8] sm:%s267] %v398
                %v400 = vld [vmem:[%s274 + $0x370] sm:%s267]
                %401 = vst [vmem:[%s275 + $0x1f0] sm:%s267] %v400
                %v402 = vld [vmem:[%s274 + $0x378] sm:%s267]
                %403 = vst [vmem:[%s275 + $0x1f8] sm:%s267] %v402
                %v404 = vld [vmem:[%s274 + $0x400] sm:%s267]
                %405 = vst [vmem:[%s275 + $0x200] sm:%s267] %v404
                %v406 = vld [vmem:[%s274 + $0x408] sm:%s267]
                %407 = vst [vmem:[%s275 + $0x208] sm:%s267] %v406
                %v408 = vld [vmem:[%s274 + $0x410] sm:%s267]
                %409 = vst [vmem:[%s275 + $0x210] sm:%s267] %v408
                %v410 = vld [vmem:[%s274 + $0x418] sm:%s267]
                %411 = vst [vmem:[%s275 + $0x218] sm:%s267] %v410
                %v412 = vld [vmem:[%s274 + $0x420] sm:%s267]
                %413 = vst [vmem:[%s275 + $0x220] sm:%s267] %v412
                %v414 = vld [vmem:[%s274 + $0x428] sm:%s267]
                %415 = vst [vmem:[%s275 + $0x228] sm:%s267] %v414
                %v416 = vld [vmem:[%s274 + $0x430] sm:%s267]
                %417 = vst [vmem:[%s275 + $0x230] sm:%s267] %v416
                %v418 = vld [vmem:[%s274 + $0x438] sm:%s267]
                %419 = vst [vmem:[%s275 + $0x238] sm:%s267] %v418
                %v420 = vld [vmem:[%s274 + $0x440] sm:%s267]
                %421 = vst [vmem:[%s275 + $0x240] sm:%s267] %v420
                %v422 = vld [vmem:[%s274 + $0x448] sm:%s267]
                %423 = vst [vmem:[%s275 + $0x248] sm:%s267] %v422
                %v424 = vld [vmem:[%s274 + $0x450] sm:%s267]
                %425 = vst [vmem:[%s275 + $0x250] sm:%s267] %v424
                %v426 = vld [vmem:[%s274 + $0x458] sm:%s267]
                %427 = vst [vmem:[%s275 + $0x258] sm:%s267] %v426
                %v428 = vld [vmem:[%s274 + $0x460] sm:%s267]
                %429 = vst [vmem:[%s275 + $0x260] sm:%s267] %v428
                %v430 = vld [vmem:[%s274 + $0x468] sm:%s267]
                %431 = vst [vmem:[%s275 + $0x268] sm:%s267] %v430
                %v432 = vld [vmem:[%s274 + $0x470] sm:%s267]
                %433 = vst [vmem:[%s275 + $0x270] sm:%s267] %v432
                %v434 = vld [vmem:[%s274 + $0x478] sm:%s267]
                %435 = vst [vmem:[%s275 + $0x278] sm:%s267] %v434
                %v436 = vld [vmem:[%s274 + $0x500] sm:%s267]
                %437 = vst [vmem:[%s275 + $0x280] sm:%s267] %v436
                %v438 = vld [vmem:[%s274 + $0x508] sm:%s267]
                %439 = vst [vmem:[%s275 + $0x288] sm:%s267] %v438
                %v440 = vld [vmem:[%s274 + $0x510] sm:%s267]
                %441 = vst [vmem:[%s275 + $0x290] sm:%s267] %v440
                %v442 = vld [vmem:[%s274 + $0x518] sm:%s267]
                %443 = vst [vmem:[%s275 + $0x298] sm:%s267] %v442
                %v444 = vld [vmem:[%s274 + $0x520] sm:%s267]
                %445 = vst [vmem:[%s275 + $0x2a0] sm:%s267] %v444
                %v446 = vld [vmem:[%s274 + $0x528] sm:%s267]
                %447 = vst [vmem:[%s275 + $0x2a8] sm:%s267] %v446
                %v448 = vld [vmem:[%s274 + $0x530] sm:%s267]
                %449 = vst [vmem:[%s275 + $0x2b0] sm:%s267] %v448
                %v450 = vld [vmem:[%s274 + $0x538] sm:%s267]
                %451 = vst [vmem:[%s275 + $0x2b8] sm:%s267] %v450
                %v452 = vld [vmem:[%s274 + $0x540] sm:%s267]
                %453 = vst [vmem:[%s275 + $0x2c0] sm:%s267] %v452
                %v454 = vld [vmem:[%s274 + $0x548] sm:%s267]
                %455 = vst [vmem:[%s275 + $0x2c8] sm:%s267] %v454
                %v456 = vld [vmem:[%s274 + $0x550] sm:%s267]
                %457 = vst [vmem:[%s275 + $0x2d0] sm:%s267] %v456
                %v458 = vld [vmem:[%s274 + $0x558] sm:%s267]
                %459 = vst [vmem:[%s275 + $0x2d8] sm:%s267] %v458
                %v460 = vld [vmem:[%s274 + $0x560] sm:%s267]
                %461 = vst [vmem:[%s275 + $0x2e0] sm:%s267] %v460
                %v462 = vld [vmem:[%s274 + $0x568] sm:%s267]
                %463 = vst [vmem:[%s275 + $0x2e8] sm:%s267] %v462
                %v464 = vld [vmem:[%s274 + $0x570] sm:%s267]
                %465 = vst [vmem:[%s275 + $0x2f0] sm:%s267] %v464
                %v466 = vld [vmem:[%s274 + $0x578] sm:%s267]
                %467 = vst [vmem:[%s275 + $0x2f8] sm:%s267] %v466
                %v468 = vld [vmem:[%s274 + $0x600] sm:%s267]
                %469 = vst [vmem:[%s275 + $0x300] sm:%s267] %v468
                %v470 = vld [vmem:[%s274 + $0x608] sm:%s267]
                %471 = vst [vmem:[%s275 + $0x308] sm:%s267] %v470
                %v472 = vld [vmem:[%s274 + $0x610] sm:%s267]
                %473 = vst [vmem:[%s275 + $0x310] sm:%s267] %v472
                %v474 = vld [vmem:[%s274 + $0x618] sm:%s267]
                %475 = vst [vmem:[%s275 + $0x318] sm:%s267] %v474
                %v476 = vld [vmem:[%s274 + $0x620] sm:%s267]
                %477 = vst [vmem:[%s275 + $0x320] sm:%s267] %v476
                %v478 = vld [vmem:[%s274 + $0x628] sm:%s267]
                %479 = vst [vmem:[%s275 + $0x328] sm:%s267] %v478
                %v480 = vld [vmem:[%s274 + $0x630] sm:%s267]
                %481 = vst [vmem:[%s275 + $0x330] sm:%s267] %v480
                %v482 = vld [vmem:[%s274 + $0x638] sm:%s267]
                %483 = vst [vmem:[%s275 + $0x338] sm:%s267] %v482
                %v484 = vld [vmem:[%s274 + $0x640] sm:%s267]
                %485 = vst [vmem:[%s275 + $0x340] sm:%s267] %v484
                %v486 = vld [vmem:[%s274 + $0x648] sm:%s267]
                %487 = vst [vmem:[%s275 + $0x348] sm:%s267] %v486
                %v488 = vld [vmem:[%s274 + $0x650] sm:%s267]
                %489 = vst [vmem:[%s275 + $0x350] sm:%s267] %v488
                %v490 = vld [vmem:[%s274 + $0x658] sm:%s267]
                %491 = vst [vmem:[%s275 + $0x358] sm:%s267] %v490
                %v492 = vld [vmem:[%s274 + $0x660] sm:%s267]
                %493 = vst [vmem:[%s275 + $0x360] sm:%s267] %v492
                %v494 = vld [vmem:[%s274 + $0x668] sm:%s267]
                %495 = vst [vmem:[%s275 + $0x368] sm:%s267] %v494
                %v496 = vld [vmem:[%s274 + $0x670] sm:%s267]
                %497 = vst [vmem:[%s275 + $0x370] sm:%s267] %v496
                %v498 = vld [vmem:[%s274 + $0x678] sm:%s267]
                %499 = vst [vmem:[%s275 + $0x378] sm:%s267] %v498
                %v500 = vld [vmem:[%s274 + $0x700] sm:%s267]
                %501 = vst [vmem:[%s275 + $0x380] sm:%s267] %v500
                %v502 = vld [vmem:[%s274 + $0x708] sm:%s267]
                %503 = vst [vmem:[%s275 + $0x388] sm:%s267] %v502
                %v504 = vld [vmem:[%s274 + $0x710] sm:%s267]
                %505 = vst [vmem:[%s275 + $0x390] sm:%s267] %v504
                %v506 = vld [vmem:[%s274 + $0x718] sm:%s267]
                %507 = vst [vmem:[%s275 + $0x398] sm:%s267] %v506
                %v508 = vld [vmem:[%s274 + $0x720] sm:%s267]
                %509 = vst [vmem:[%s275 + $0x3a0] sm:%s267] %v508
                %v510 = vld [vmem:[%s274 + $0x728] sm:%s267]
                %511 = vst [vmem:[%s275 + $0x3a8] sm:%s267] %v510
                %v512 = vld [vmem:[%s274 + $0x730] sm:%s267]
                %513 = vst [vmem:[%s275 + $0x3b0] sm:%s267] %v512
                %v514 = vld [vmem:[%s274 + $0x738] sm:%s267]
                %515 = vst [vmem:[%s275 + $0x3b8] sm:%s267] %v514
                %v516 = vld [vmem:[%s274 + $0x740] sm:%s267]
                %517 = vst [vmem:[%s275 + $0x3c0] sm:%s267] %v516
                %v518 = vld [vmem:[%s274 + $0x748] sm:%s267]
                %519 = vst [vmem:[%s275 + $0x3c8] sm:%s267] %v518
                %v520 = vld [vmem:[%s274 + $0x750] sm:%s267]
                %521 = vst [vmem:[%s275 + $0x3d0] sm:%s267] %v520
                %v522 = vld [vmem:[%s274 + $0x758] sm:%s267]
                %523 = vst [vmem:[%s275 + $0x3d8] sm:%s267] %v522
                %v524 = vld [vmem:[%s274 + $0x760] sm:%s267]
                %525 = vst [vmem:[%s275 + $0x3e0] sm:%s267] %v524
                %v526 = vld [vmem:[%s274 + $0x768] sm:%s267]
                %527 = vst [vmem:[%s275 + $0x3e8] sm:%s267] %v526
                %v528 = vld [vmem:[%s274 + $0x770] sm:%s267]
                %529 = vst [vmem:[%s275 + $0x3f0] sm:%s267] %v528
                %v530 = vld [vmem:[%s274 + $0x778] sm:%s267]
                %531 = vst [vmem:[%s275 + $0x3f8] sm:%s267] %v530
              $region57: #{tpu_custom_call.1} parent=51 // loop_footer
                %s273 = sadd.s32 1, %s269
              $region58: #{tpu_custom_call.1} parent=51 // loop_footer_branch
                %268 = sbr.rel target = $region54
              $region59: #{tpu_custom_call.1} parent=51 // loop_exit
                _
            $region52: #{tpu_custom_call.1} parent=43 // pred_fallthru
              _
          $region44: #{tpu_custom_call.1} parent=39 // pred_fallthru
            _
          %800 = vnop
        $region40: #{tpu_custom_call.1} parent=35 // pred_fallthru
          _
        // Predicated region
        $region75: #{tpu_custom_call.1} parent=35 // pred_check
          %p801 = pneg %p76
        $region76: #{tpu_custom_call.1} parent=35 // pred_check_branch
          %803 = sbr.rel (%p801) target = $region78
        $region77: #{tpu_custom_call.1} parent=35 // pred_region
          %s804 = smul.u32 8, %s23
          %p805 = scmp.lt.s32.totalorder %s804, 15
          %s806 = scalar_select %p805, %s804, 15
          %s807 = scalar_lea.vmem %s1, %s806
          %s808 = smul.u32 8, %s23
        $region78: #{tpu_custom_call.1} parent=35 // pred_fallthru
          _
      $region36: #{tpu_custom_call.1} parent=5 // pred_fallthru
        _
      %p809 = scmp.le.s32.totalorder 1, %s16
      %p810 = scmp.lt.s32.totalorder %s16, 5
      %p811 = pnand %p809, %p810
      %p812 = pneg %p811
      // Predicated region
      $region79: #{tpu_custom_call.1} parent=5 // pred_check
        _
      $region80: #{tpu_custom_call.1} parent=5 // pred_check_branch
        %814 = sbr.rel (%p811) target = $region82
      $region81: #{tpu_custom_call.1} parent=5 // pred_region
        %s815 = ssub.s32 %s16, 1
        %s816 = sand.u32 %s43, 1
        %s817 = sand.u32 %s43, 1
        %s818 = smul.addr %s817, 1024
        %s819 = scalar_lea.vmem [#allocation2], %s818
        // Predicated region
        $region83: #{tpu_custom_call.1} parent=81 // pred_check
          %p820 = pneg %p56
        $region84: #{tpu_custom_call.1} parent=81 // pred_check_branch
          %822 = sbr.rel (%p820) target = $region86
        $region85: #{tpu_custom_call.1} parent=81 // pred_region
          _
        $region86: #{tpu_custom_call.1} parent=81 // pred_fallthru
          _
        %s823 = sand.u32 %s43, 1
        %s824 = sand.u32 %s43, 1
        %s825 = smul.addr %s824, 1024
        %s826 = scalar_lea.vmem [#allocation2], %s825
        %p827 = pneg %p56
        %p828 = pneg %p53
        %s829 = smul.u32 8, %s25
        %p830 = scmp.lt.s32.totalorder %s829, 15
        %s831 = scalar_select %p830, %s829, 15
        %s832 = scalar_lea.vmem %s1, %s831
        %p833 = pneg %p82
        %p834 = pneg %p79
        %p835 = pneg %p103
        %p836 = pneg %p100
        %p837 = pneg %p124
        %p838 = pneg %p121
        %p839 = pneg %p145
        %p840 = pneg %p142
        %p841 = pneg %p166
        %p842 = pneg %p163
        %p843 = pneg %p187
        %p844 = pneg %p184
        %p845 = pneg %p213
        %p846 = pneg %p210
        %s847 = sand.u32 %s200, 1
        %s848 = scalar_lea.sflag [#allocation4], %s847
        %s849 = sand.u32 %s200, 1
        %s850 = smul.addr %s849, 64
        %s851 = scalar_lea.vmem [#allocation3], %s850
        %s852 = smul.u32 8, %s25
        %s853 = smul.u32 16, %s26
        %s854 = smul.u32 8, %s25
        %p855 = scmp.lt.s32.totalorder %s854, 15
        %s856 = scalar_select %p855, %s854, 15
        %s857 = scalar_lea.vmem %s1, %s856
        %s858 = smul.u32 8, %s25
        %p860 = scmp.eq.s32.totalorder %s26, 0
        // Predicated region
        $region87: #{tpu_custom_call.1} parent=81 // pred_check
          %p861 = pneg %p860
        $region88: #{tpu_custom_call.1} parent=81 // pred_check_branch
          %863 = sbr.rel (%p861) target = $region90
        $region89: #{tpu_custom_call.1} parent=81 // pred_region
          %864 = vst [vmem:[%s851] sm:$0xff] -inf
          %865 = vst [vmem:[%s851 + $0x8] sm:$0xff] -inf
          %866 = vst [vmem:[%s851 + $0x10] sm:$0xff] -inf
          %867 = vst [vmem:[%s851 + $0x18] sm:$0xff] -inf
          %868 = vst [vmem:[%s851 + $0x20] sm:$0xff] -inf
          %869 = vst [vmem:[%s851 + $0x28] sm:$0xff] -inf
          %870 = vst [vmem:[%s851 + $0x30] sm:$0xff] -inf
          %871 = vst [vmem:[%s851 + $0x38] sm:$0xff] -inf
        $region90: #{tpu_custom_call.1} parent=81 // pred_fallthru
          _
        %v872 = vld [vmem:[%s819] sm:$0xff]
        %v873 = vld [vmem:[%s819 + $0x8] sm:$0xff]
        %v874 = vld [vmem:[%s819 + $0x10] sm:$0xff]
        %v875 = vld [vmem:[%s819 + $0x18] sm:$0xff]
        %v876 = vld [vmem:[%s819 + $0x20] sm:$0xff]
        %v877 = vld [vmem:[%s819 + $0x28] sm:$0xff]
        %v878 = vld [vmem:[%s819 + $0x30] sm:$0xff]
        %v879 = vld [vmem:[%s819 + $0x38] sm:$0xff]
        %v880 = vld [vmem:[%s819 + $0x40] sm:$0xff]
        %v881 = vld [vmem:[%s819 + $0x48] sm:$0xff]
        %v882 = vld [vmem:[%s819 + $0x50] sm:$0xff]
        %v883 = vld [vmem:[%s819 + $0x58] sm:$0xff]
        %v884 = vld [vmem:[%s819 + $0x60] sm:$0xff]
        %v885 = vld [vmem:[%s819 + $0x68] sm:$0xff]
        %v886 = vld [vmem:[%s819 + $0x70] sm:$0xff]
        %v887 = vld [vmem:[%s819 + $0x78] sm:$0xff]
        %v888 = vld [vmem:[%s819 + $0x80] sm:$0xff]
        %v889 = vld [vmem:[%s819 + $0x88] sm:$0xff]
        %v890 = vld [vmem:[%s819 + $0x90] sm:$0xff]
        %v891 = vld [vmem:[%s819 + $0x98] sm:$0xff]
        %v892 = vld [vmem:[%s819 + $0xa0] sm:$0xff]
        %v893 = vld [vmem:[%s819 + $0xa8] sm:$0xff]
        %v894 = vld [vmem:[%s819 + $0xb0] sm:$0xff]
        %v895 = vld [vmem:[%s819 + $0xb8] sm:$0xff]
        %v896 = vld [vmem:[%s819 + $0xc0] sm:$0xff]
        %v897 = vld [vmem:[%s819 + $0xc8] sm:$0xff]
        %v898 = vld [vmem:[%s819 + $0xd0] sm:$0xff]
        %v899 = vld [vmem:[%s819 + $0xd8] sm:$0xff]
        %v900 = vld [vmem:[%s819 + $0xe0] sm:$0xff]
        %v901 = vld [vmem:[%s819 + $0xe8] sm:$0xff]
        %v902 = vld [vmem:[%s819 + $0xf0] sm:$0xff]
        %v903 = vld [vmem:[%s819 + $0xf8] sm:$0xff]
        %v904 = vld [vmem:[%s819 + $0x100] sm:$0xff]
        %v905 = vld [vmem:[%s819 + $0x108] sm:$0xff]
        %v906 = vld [vmem:[%s819 + $0x110] sm:$0xff]
        %v907 = vld [vmem:[%s819 + $0x118] sm:$0xff]
        %v908 = vld [vmem:[%s819 + $0x120] sm:$0xff]
        %v909 = vld [vmem:[%s819 + $0x128] sm:$0xff]
        %v910 = vld [vmem:[%s819 + $0x130] sm:$0xff]
        %v911 = vld [vmem:[%s819 + $0x138] sm:$0xff]
        %v912 = vld [vmem:[%s819 + $0x140] sm:$0xff]
        %v913 = vld [vmem:[%s819 + $0x148] sm:$0xff]
        %v914 = vld [vmem:[%s819 + $0x150] sm:$0xff]
        %v915 = vld [vmem:[%s819 + $0x158] sm:$0xff]
        %v916 = vld [vmem:[%s819 + $0x160] sm:$0xff]
        %v917 = vld [vmem:[%s819 + $0x168] sm:$0xff]
        %v918 = vld [vmem:[%s819 + $0x170] sm:$0xff]
        %v919 = vld [vmem:[%s819 + $0x178] sm:$0xff]
        %v920 = vld [vmem:[%s819 + $0x180] sm:$0xff]
        %v921 = vld [vmem:[%s819 + $0x188] sm:$0xff]
        %v922 = vld [vmem:[%s819 + $0x190] sm:$0xff]
        %v923 = vld [vmem:[%s819 + $0x198] sm:$0xff]
        %v924 = vld [vmem:[%s819 + $0x1a0] sm:$0xff]
        %v925 = vld [vmem:[%s819 + $0x1a8] sm:$0xff]
        %v926 = vld [vmem:[%s819 + $0x1b0] sm:$0xff]
        %v927 = vld [vmem:[%s819 + $0x1b8] sm:$0xff]
        %v928 = vld [vmem:[%s819 + $0x1c0] sm:$0xff]
        %v929 = vld [vmem:[%s819 + $0x1c8] sm:$0xff]
        %v930 = vld [vmem:[%s819 + $0x1d0] sm:$0xff]
        %v931 = vld [vmem:[%s819 + $0x1d8] sm:$0xff]
        %v932 = vld [vmem:[%s819 + $0x1e0] sm:$0xff]
        %v933 = vld [vmem:[%s819 + $0x1e8] sm:$0xff]
        %v934 = vld [vmem:[%s819 + $0x1f0] sm:$0xff]
        %v935 = vld [vmem:[%s819 + $0x1f8] sm:$0xff]
        %v936 = vld [vmem:[%s819 + $0x200] sm:$0xff]
        %v937 = vld [vmem:[%s819 + $0x208] sm:$0xff]
        %v938 = vld [vmem:[%s819 + $0x210] sm:$0xff]
        %v939 = vld [vmem:[%s819 + $0x218] sm:$0xff]
        %v940 = vld [vmem:[%s819 + $0x220] sm:$0xff]
        %v941 = vld [vmem:[%s819 + $0x228] sm:$0xff]
        %v942 = vld [vmem:[%s819 + $0x230] sm:$0xff]
        %v943 = vld [vmem:[%s819 + $0x238] sm:$0xff]
        %v944 = vld [vmem:[%s819 + $0x240] sm:$0xff]
        %v945 = vld [vmem:[%s819 + $0x248] sm:$0xff]
        %v946 = vld [vmem:[%s819 + $0x250] sm:$0xff]
        %v947 = vld [vmem:[%s819 + $0x258] sm:$0xff]
        %v948 = vld [vmem:[%s819 + $0x260] sm:$0xff]
        %v949 = vld [vmem:[%s819 + $0x268] sm:$0xff]
        %v950 = vld [vmem:[%s819 + $0x270] sm:$0xff]
        %v951 = vld [vmem:[%s819 + $0x278] sm:$0xff]
        %v952 = vld [vmem:[%s819 + $0x280] sm:$0xff]
        %v953 = vld [vmem:[%s819 + $0x288] sm:$0xff]
        %v954 = vld [vmem:[%s819 + $0x290] sm:$0xff]
        %v955 = vld [vmem:[%s819 + $0x298] sm:$0xff]
        %v956 = vld [vmem:[%s819 + $0x2a0] sm:$0xff]
        %v957 = vld [vmem:[%s819 + $0x2a8] sm:$0xff]
        %v958 = vld [vmem:[%s819 + $0x2b0] sm:$0xff]
        %v959 = vld [vmem:[%s819 + $0x2b8] sm:$0xff]
        %v960 = vld [vmem:[%s819 + $0x2c0] sm:$0xff]
        %v961 = vld [vmem:[%s819 + $0x2c8] sm:$0xff]
        %v962 = vld [vmem:[%s819 + $0x2d0] sm:$0xff]
        %v963 = vld [vmem:[%s819 + $0x2d8] sm:$0xff]
        %v964 = vld [vmem:[%s819 + $0x2e0] sm:$0xff]
        %v965 = vld [vmem:[%s819 + $0x2e8] sm:$0xff]
        %v966 = vld [vmem:[%s819 + $0x2f0] sm:$0xff]
        %v967 = vld [vmem:[%s819 + $0x2f8] sm:$0xff]
        %v968 = vld [vmem:[%s819 + $0x300] sm:$0xff]
        %v969 = vld [vmem:[%s819 + $0x308] sm:$0xff]
        %v970 = vld [vmem:[%s819 + $0x310] sm:$0xff]
        %v971 = vld [vmem:[%s819 + $0x318] sm:$0xff]
        %v972 = vld [vmem:[%s819 + $0x320] sm:$0xff]
        %v973 = vld [vmem:[%s819 + $0x328] sm:$0xff]
        %v974 = vld [vmem:[%s819 + $0x330] sm:$0xff]
        %v975 = vld [vmem:[%s819 + $0x338] sm:$0xff]
        %v976 = vld [vmem:[%s819 + $0x340] sm:$0xff]
        %v977 = vld [vmem:[%s819 + $0x348] sm:$0xff]
        %v978 = vld [vmem:[%s819 + $0x350] sm:$0xff]
        %v979 = vld [vmem:[%s819 + $0x358] sm:$0xff]
        %v980 = vld [vmem:[%s819 + $0x360] sm:$0xff]
        %v981 = vld [vmem:[%s819 + $0x368] sm:$0xff]
        %v982 = vld [vmem:[%s819 + $0x370] sm:$0xff]
        %v983 = vld [vmem:[%s819 + $0x378] sm:$0xff]
        %v984 = vld [vmem:[%s819 + $0x380] sm:$0xff]
        %v985 = vld [vmem:[%s819 + $0x388] sm:$0xff]
        %v986 = vld [vmem:[%s819 + $0x390] sm:$0xff]
        %v987 = vld [vmem:[%s819 + $0x398] sm:$0xff]
        %v988 = vld [vmem:[%s819 + $0x3a0] sm:$0xff]
        %v989 = vld [vmem:[%s819 + $0x3a8] sm:$0xff]
        %v990 = vld [vmem:[%s819 + $0x3b0] sm:$0xff]
        %v991 = vld [vmem:[%s819 + $0x3b8] sm:$0xff]
        %v992 = vld [vmem:[%s819 + $0x3c0] sm:$0xff]
        %v993 = vld [vmem:[%s819 + $0x3c8] sm:$0xff]
        %v994 = vld [vmem:[%s819 + $0x3d0] sm:$0xff]
        %v995 = vld [vmem:[%s819 + $0x3d8] sm:$0xff]
        %v996 = vld [vmem:[%s819 + $0x3e0] sm:$0xff]
        %v997 = vld [vmem:[%s819 + $0x3e8] sm:$0xff]
        %v998 = vld [vmem:[%s819 + $0x3f0] sm:$0xff]
        %v999 = vld [vmem:[%s819 + $0x3f8] sm:$0xff]
        %v1000 = vld [vmem:[%s857] sm:$0x1]
        %v1001 = vld [vmem:[%s857 + $0x1] sm:$0x1]
        %v1002 = vld [vmem:[%s857 + $0x2] sm:$0x1]
        %v1003 = vld [vmem:[%s857 + $0x3] sm:$0x1]
        %v1004 = vld [vmem:[%s857 + $0x4] sm:$0x1]
        %v1005 = vld [vmem:[%s857 + $0x5] sm:$0x1]
        %v1006 = vld [vmem:[%s857 + $0x6] sm:$0x1]
        %v1007 = vld [vmem:[%s857 + $0x7] sm:$0x1]
        %v1016 = vlaneseq
        %v1017 = vshrl.u32 %v1016, 7
        %v1018 = vsub.s32 0, %v1017
        %v1019 = vrot.slane %v1000, %v1018
        %v1020 = vlaneseq
        %v1021 = vshrl.u32 %v1020, 7
        %v1022 = vsub.s32 0, %v1021
        %v1023 = vrot.slane %v1001, %v1022
        %v1024 = vlaneseq
        %v1025 = vshrl.u32 %v1024, 7
        %v1026 = vsub.s32 0, %v1025
        %v1027 = vrot.slane %v1002, %v1026
        %v1028 = vlaneseq
        %v1029 = vshrl.u32 %v1028, 7
        %v1030 = vsub.s32 0, %v1029
        %v1031 = vrot.slane %v1003, %v1030
        %v1032 = vlaneseq
        %v1033 = vshrl.u32 %v1032, 7
        %v1034 = vsub.s32 0, %v1033
        %v1035 = vrot.slane %v1004, %v1034
        %v1036 = vlaneseq
        %v1037 = vshrl.u32 %v1036, 7
        %v1038 = vsub.s32 0, %v1037
        %v1039 = vrot.slane %v1005, %v1038
        %v1040 = vlaneseq
        %v1041 = vshrl.u32 %v1040, 7
        %v1042 = vsub.s32 0, %v1041
        %v1043 = vrot.slane %v1006, %v1042
        %v1044 = vlaneseq
        %v1045 = vshrl.u32 %v1044, 7
        %v1046 = vsub.s32 0, %v1045
        %v1047 = vrot.slane %v1007, %v1046
        %v1056 = vmul.f32 %v872, %v1019
        %v1057 = vmul.f32 %v873, %v1019
        %v1058 = vmul.f32 %v874, %v1019
        %v1059 = vmul.f32 %v875, %v1019
        %v1060 = vmul.f32 %v876, %v1019
        %v1061 = vmul.f32 %v877, %v1019
        %v1062 = vmul.f32 %v878, %v1019
        %v1063 = vmul.f32 %v879, %v1019
        %v1064 = vmul.f32 %v880, %v1019
        %v1065 = vmul.f32 %v881, %v1019
        %v1066 = vmul.f32 %v882, %v1019
        %v1067 = vmul.f32 %v883, %v1019
        %v1068 = vmul.f32 %v884, %v1019
        %v1069 = vmul.f32 %v885, %v1019
        %v1070 = vmul.f32 %v886, %v1019
        %v1071 = vmul.f32 %v887, %v1019
        %v1072 = vmul.f32 %v888, %v1023
        %v1073 = vmul.f32 %v889, %v1023
        %v1074 = vmul.f32 %v890, %v1023
        %v1075 = vmul.f32 %v891, %v1023
        %v1076 = vmul.f32 %v892, %v1023
        %v1077 = vmul.f32 %v893, %v1023
        %v1078 = vmul.f32 %v894, %v1023
        %v1079 = vmul.f32 %v895, %v1023
        %v1080 = vmul.f32 %v896, %v1023
        %v1081 = vmul.f32 %v897, %v1023
        %v1082 = vmul.f32 %v898, %v1023
        %v1083 = vmul.f32 %v899, %v1023
        %v1084 = vmul.f32 %v900, %v1023
        %v1085 = vmul.f32 %v901, %v1023
        %v1086 = vmul.f32 %v902, %v1023
        %v1087 = vmul.f32 %v903, %v1023
        %v1088 = vmul.f32 %v904, %v1027
        %v1089 = vmul.f32 %v905, %v1027
        %v1090 = vmul.f32 %v906, %v1027
        %v1091 = vmul.f32 %v907, %v1027
        %v1092 = vmul.f32 %v908, %v1027
        %v1093 = vmul.f32 %v909, %v1027
        %v1094 = vmul.f32 %v910, %v1027
        %v1095 = vmul.f32 %v911, %v1027
        %v1096 = vmul.f32 %v912, %v1027
        %v1097 = vmul.f32 %v913, %v1027
        %v1098 = vmul.f32 %v914, %v1027
        %v1099 = vmul.f32 %v915, %v1027
        %v1100 = vmul.f32 %v916, %v1027
        %v1101 = vmul.f32 %v917, %v1027
        %v1102 = vmul.f32 %v918, %v1027
        %v1103 = vmul.f32 %v919, %v1027
        %v1104 = vmul.f32 %v920, %v1031
        %v1105 = vmul.f32 %v921, %v1031
        %v1106 = vmul.f32 %v922, %v1031
        %v1107 = vmul.f32 %v923, %v1031
        %v1108 = vmul.f32 %v924, %v1031
        %v1109 = vmul.f32 %v925, %v1031
        %v1110 = vmul.f32 %v926, %v1031
        %v1111 = vmul.f32 %v927, %v1031
        %v1112 = vmul.f32 %v928, %v1031
        %v1113 = vmul.f32 %v929, %v1031
        %v1114 = vmul.f32 %v930, %v1031
        %v1115 = vmul.f32 %v931, %v1031
        %v1116 = vmul.f32 %v932, %v1031
        %v1117 = vmul.f32 %v933, %v1031
        %v1118 = vmul.f32 %v934, %v1031
        %v1119 = vmul.f32 %v935, %v1031
        %v1120 = vmul.f32 %v936, %v1035
        %v1121 = vmul.f32 %v937, %v1035
        %v1122 = vmul.f32 %v938, %v1035
        %v1123 = vmul.f32 %v939, %v1035
        %v1124 = vmul.f32 %v940, %v1035
        %v1125 = vmul.f32 %v941, %v1035
        %v1126 = vmul.f32 %v942, %v1035
        %v1127 = vmul.f32 %v943, %v1035
        %v1128 = vmul.f32 %v944, %v1035
        %v1129 = vmul.f32 %v945, %v1035
        %v1130 = vmul.f32 %v946, %v1035
        %v1131 = vmul.f32 %v947, %v1035
        %v1132 = vmul.f32 %v948, %v1035
        %v1133 = vmul.f32 %v949, %v1035
        %v1134 = vmul.f32 %v950, %v1035
        %v1135 = vmul.f32 %v951, %v1035
        %v1136 = vmul.f32 %v952, %v1039
        %v1137 = vmul.f32 %v953, %v1039
        %v1138 = vmul.f32 %v954, %v1039
        %v1139 = vmul.f32 %v955, %v1039
        %v1140 = vmul.f32 %v956, %v1039
        %v1141 = vmul.f32 %v957, %v1039
        %v1142 = vmul.f32 %v958, %v1039
        %v1143 = vmul.f32 %v959, %v1039
        %v1144 = vmul.f32 %v960, %v1039
        %v1145 = vmul.f32 %v961, %v1039
        %v1146 = vmul.f32 %v962, %v1039
        %v1147 = vmul.f32 %v963, %v1039
        %v1148 = vmul.f32 %v964, %v1039
        %v1149 = vmul.f32 %v965, %v1039
        %v1150 = vmul.f32 %v966, %v1039
        %v1151 = vmul.f32 %v967, %v1039
        %v1152 = vmul.f32 %v968, %v1043
        %v1153 = vmul.f32 %v969, %v1043
        %v1154 = vmul.f32 %v970, %v1043
        %v1155 = vmul.f32 %v971, %v1043
        %v1156 = vmul.f32 %v972, %v1043
        %v1157 = vmul.f32 %v973, %v1043
        %v1158 = vmul.f32 %v974, %v1043
        %v1159 = vmul.f32 %v975, %v1043
        %v1160 = vmul.f32 %v976, %v1043
        %v1161 = vmul.f32 %v977, %v1043
        %v1162 = vmul.f32 %v978, %v1043
        %v1163 = vmul.f32 %v979, %v1043
        %v1164 = vmul.f32 %v980, %v1043
        %v1165 = vmul.f32 %v981, %v1043
        %v1166 = vmul.f32 %v982, %v1043
        %v1167 = vmul.f32 %v983, %v1043
        %v1168 = vmul.f32 %v984, %v1047
        %v1169 = vmul.f32 %v985, %v1047
        %v1170 = vmul.f32 %v986, %v1047
        %v1171 = vmul.f32 %v987, %v1047
        %v1172 = vmul.f32 %v988, %v1047
        %v1173 = vmul.f32 %v989, %v1047
        %v1174 = vmul.f32 %v990, %v1047
        %v1175 = vmul.f32 %v991, %v1047
        %v1176 = vmul.f32 %v992, %v1047
        %v1177 = vmul.f32 %v993, %v1047
        %v1178 = vmul.f32 %v994, %v1047
        %v1179 = vmul.f32 %v995, %v1047
        %v1180 = vmul.f32 %v996, %v1047
        %v1181 = vmul.f32 %v997, %v1047
        %v1182 = vmul.f32 %v998, %v1047
        %v1183 = vmul.f32 %v999, %v1047
        %v1184 = vpack.c.bf16 %v1057, %v1056
        %v1185 = vpack.c.bf16 %v1059, %v1058
        %v1186 = vpack.c.bf16 %v1061, %v1060
        %v1187 = vpack.c.bf16 %v1063, %v1062
        %v1188 = vpack.c.bf16 %v1065, %v1064
        %v1189 = vpack.c.bf16 %v1067, %v1066
        %v1190 = vpack.c.bf16 %v1069, %v1068
        %v1191 = vpack.c.bf16 %v1071, %v1070
        %v1192 = vpack.c.bf16 %v1073, %v1072
        %v1193 = vpack.c.bf16 %v1075, %v1074
        %v1194 = vpack.c.bf16 %v1077, %v1076
        %v1195 = vpack.c.bf16 %v1079, %v1078
        %v1196 = vpack.c.bf16 %v1081, %v1080
        %v1197 = vpack.c.bf16 %v1083, %v1082
        %v1198 = vpack.c.bf16 %v1085, %v1084
        %v1199 = vpack.c.bf16 %v1087, %v1086
        %v1200 = vpack.c.bf16 %v1089, %v1088
        %v1201 = vpack.c.bf16 %v1091, %v1090
        %v1202 = vpack.c.bf16 %v1093, %v1092
        %v1203 = vpack.c.bf16 %v1095, %v1094
        %v1204 = vpack.c.bf16 %v1097, %v1096
        %v1205 = vpack.c.bf16 %v1099, %v1098
        %v1206 = vpack.c.bf16 %v1101, %v1100
        %v1207 = vpack.c.bf16 %v1103, %v1102
        %v1208 = vpack.c.bf16 %v1105, %v1104
        %v1209 = vpack.c.bf16 %v1107, %v1106
        %v1210 = vpack.c.bf16 %v1109, %v1108
        %v1211 = vpack.c.bf16 %v1111, %v1110
        %v1212 = vpack.c.bf16 %v1113, %v1112
        %v1213 = vpack.c.bf16 %v1115, %v1114
        %v1214 = vpack.c.bf16 %v1117, %v1116
        %v1215 = vpack.c.bf16 %v1119, %v1118
        %v1216 = vpack.c.bf16 %v1121, %v1120
        %v1217 = vpack.c.bf16 %v1123, %v1122
        %v1218 = vpack.c.bf16 %v1125, %v1124
        %v1219 = vpack.c.bf16 %v1127, %v1126
        %v1220 = vpack.c.bf16 %v1129, %v1128
        %v1221 = vpack.c.bf16 %v1131, %v1130
        %v1222 = vpack.c.bf16 %v1133, %v1132
        %v1223 = vpack.c.bf16 %v1135, %v1134
        %v1224 = vpack.c.bf16 %v1137, %v1136
        %v1225 = vpack.c.bf16 %v1139, %v1138
        %v1226 = vpack.c.bf16 %v1141, %v1140
        %v1227 = vpack.c.bf16 %v1143, %v1142
        %v1228 = vpack.c.bf16 %v1145, %v1144
        %v1229 = vpack.c.bf16 %v1147, %v1146
        %v1230 = vpack.c.bf16 %v1149, %v1148
        %v1231 = vpack.c.bf16 %v1151, %v1150
        %v1232 = vpack.c.bf16 %v1153, %v1152
        %v1233 = vpack.c.bf16 %v1155, %v1154
        %v1234 = vpack.c.bf16 %v1157, %v1156
        %v1235 = vpack.c.bf16 %v1159, %v1158
        %v1236 = vpack.c.bf16 %v1161, %v1160
        %v1237 = vpack.c.bf16 %v1163, %v1162
        %v1238 = vpack.c.bf16 %v1165, %v1164
        %v1239 = vpack.c.bf16 %v1167, %v1166
        %v1240 = vpack.c.bf16 %v1169, %v1168
        %v1241 = vpack.c.bf16 %v1171, %v1170
        %v1242 = vpack.c.bf16 %v1173, %v1172
        %v1243 = vpack.c.bf16 %v1175, %v1174
        %v1244 = vpack.c.bf16 %v1177, %v1176
        %v1245 = vpack.c.bf16 %v1179, %v1178
        %v1246 = vpack.c.bf16 %v1181, %v1180
        %v1247 = vpack.c.bf16 %v1183, %v1182
        %v1248 = vld [vmem:[%s2] sm:$0x7]
        %v1249 = vld [vmem:[%s3] sm:$0x1]
        %v1251 = vlaneseq
        %v1252 = vshrl.u32 %v1251, 7
        %v1253 = vsub.s32 0, %v1252
        %v1254 = vrot.slane %v1249, %v1253
        %vm1256 = vcmask 48128
        %v1258 = vsel %vm1256, %v1184, 0
        %v1261 = vsel %vm1256, %v1185, 0
        %v1264 = vsel %vm1256, %v1186, 0
        %v1267 = vsel %vm1256, %v1187, 0
        %v1270 = vsel %vm1256, %v1188, 0
        %v1273 = vsel %vm1256, %v1189, 0
        %v1276 = vsel %vm1256, %v1190, 0
        %v1279 = vsel %vm1256, %v1191, 0
        %v1282 = vsel %vm1256, %v1192, 0
        %v1285 = vsel %vm1256, %v1193, 0
        %v1288 = vsel %vm1256, %v1194, 0
        %v1291 = vsel %vm1256, %v1195, 0
        %v1294 = vsel %vm1256, %v1196, 0
        %v1297 = vsel %vm1256, %v1197, 0
        %v1300 = vsel %vm1256, %v1198, 0
        %v1303 = vsel %vm1256, %v1199, 0
        %v1306 = vsel %vm1256, %v1200, 0
        %v1309 = vsel %vm1256, %v1201, 0
        %v1312 = vsel %vm1256, %v1202, 0
        %v1315 = vsel %vm1256, %v1203, 0
        %v1318 = vsel %vm1256, %v1204, 0
        %v1321 = vsel %vm1256, %v1205, 0
        %v1324 = vsel %vm1256, %v1206, 0
        %v1327 = vsel %vm1256, %v1207, 0
        %v1330 = vsel %vm1256, %v1208, 0
        %v1333 = vsel %vm1256, %v1209, 0
        %v1336 = vsel %vm1256, %v1210, 0
        %v1339 = vsel %vm1256, %v1211, 0
        %v1342 = vsel %vm1256, %v1212, 0
        %v1345 = vsel %vm1256, %v1213, 0
        %v1348 = vsel %vm1256, %v1214, 0
        %v1351 = vsel %vm1256, %v1215, 0
        %v1354 = vsel %vm1256, %v1216, 0
        %v1357 = vsel %vm1256, %v1217, 0
        %v1360 = vsel %vm1256, %v1218, 0
        %v1363 = vsel %vm1256, %v1219, 0
        %v1366 = vsel %vm1256, %v1220, 0
        %v1369 = vsel %vm1256, %v1221, 0
        %v1372 = vsel %vm1256, %v1222, 0
        %v1375 = vsel %vm1256, %v1223, 0
        %v1378 = vsel %vm1256, %v1224, 0
        %v1381 = vsel %vm1256, %v1225, 0
        %v1384 = vsel %vm1256, %v1226, 0
        %v1387 = vsel %vm1256, %v1227, 0
        %v1390 = vsel %vm1256, %v1228, 0
        %v1393 = vsel %vm1256, %v1229, 0
        %v1396 = vsel %vm1256, %v1230, 0
        %v1399 = vsel %vm1256, %v1231, 0
        %v1402 = vsel %vm1256, %v1232, 0
        %v1405 = vsel %vm1256, %v1233, 0
        %v1408 = vsel %vm1256, %v1234, 0
        %v1411 = vsel %vm1256, %v1235, 0
        %v1414 = vsel %vm1256, %v1236, 0
        %v1417 = vsel %vm1256, %v1237, 0
        %v1420 = vsel %vm1256, %v1238, 0
        %v1423 = vsel %vm1256, %v1239, 0
        %v1426 = vsel %vm1256, %v1240, 0
        %v1429 = vsel %vm1256, %v1241, 0
        %v1432 = vsel %vm1256, %v1242, 0
        %v1435 = vsel %vm1256, %v1243, 0
        %v1438 = vsel %vm1256, %v1244, 0
        %v1441 = vsel %vm1256, %v1245, 0
        %v1444 = vsel %vm1256, %v1246, 0
        %v1447 = vsel %vm1256, %v1247, 0
        %vm1449 = vcmask 1042432
        %v1451 = vsel %vm1449, %v1248, 0
        %1453 = vmatprep.subr.bf16.mxu0 0
        %1454 = vmatpush1.bf16.msra.mxu0 0
        %1455 = vmatprep.subr.bf16.mxu0 0
        %1456 = vmatpush1.bf16.msra.mxu0 0
        %1457 = vmatprep.subr.bf16.mxu0 0
        %1458 = vmatpush1.bf16.msra.mxu0 0
        %1459 = vmatprep.subr.bf16.mxu0 0
        %1460 = vmatpush1.bf16.msra.mxu0 0
        %1461 = vmatprep.subr.bf16.mxu0 0
        %1462 = vmatpush1.bf16.msra.mxu0 0
        %1463 = vmatprep.subr.bf16.mxu0 0
        %1464 = vmatpush1.bf16.msra.mxu0 0
        %1465 = vmatprep.subr.bf16.mxu0 0
        %1466 = vmatpush1.bf16.msra.mxu0 0
        %1467 = vmatprep.subr.bf16.mxu0 0
        %1468 = vmatpush1.bf16.msra.mxu0 %v1451
        %1469 = vmatprep.subr.bf16.mxu0 0
        %1470 = vmatpush2.bf16.msra.mxu0 0
        %1471 = vmatprep.subr.bf16.mxu0 0
        %1472 = vmatpush2.bf16.msra.mxu0 0
        %1473 = vmatprep.subr.bf16.mxu0 0
        %1474 = vmatpush2.bf16.msra.mxu0 0
        %1475 = vmatprep.subr.bf16.mxu0 0
        %1476 = vmatpush2.bf16.msra.mxu0 0
        %1477 = vmatprep.subr.bf16.mxu0 0
        %1478 = vmatpush2.bf16.msra.mxu0 0
        %1479 = vmatprep.subr.bf16.mxu0 0
        %1480 = vmatpush2.bf16.msra.mxu0 0
        %1481 = vmatprep.subr.bf16.mxu0 0
        %1482 = vmatpush2.bf16.msra.mxu0 0
        %1483 = vmatprep.subr.bf16.mxu0 0
        %1484 = vmatpush2.bf16.msra.mxu0 0
        %1485 = vmatprep.mubr.bf16.mxu0 0
        %1486 = vmatmul.mubr.bf16.gmra.mxu0 %v1258
        %v1487 = vpop.f32.mrf.mxu0
        %v1488 = vadd.f32 %v1254, %v1487
        %v1489 = vpop.f32.mrf.mxu0
        %v1490 = vpop.f32.mrf.mxu0
        %v1491 = vadd.f32 %v1254, %v1490
        %v1492 = vpop.f32.mrf.mxu0
        %1493 = vmatprep.mubr.bf16.mxu0 0
        %1494 = vmatmul.mubr.bf16.gmra.mxu0 %v1261
        %v1495 = vpop.f32.mrf.mxu0
        %v1496 = vadd.f32 %v1254, %v1495
        %v1497 = vpop.f32.mrf.mxu0
        %v1498 = vpop.f32.mrf.mxu0
        %v1499 = vadd.f32 %v1254, %v1498
        %v1500 = vpop.f32.mrf.mxu0
        %1501 = vmatprep.mubr.bf16.mxu0 0
        %1502 = vmatmul.mubr.bf16.gmra.mxu0 %v1264
        %v1503 = vpop.f32.mrf.mxu0
        %v1504 = vadd.f32 %v1254, %v1503
        %v1505 = vpop.f32.mrf.mxu0
        %v1506 = vpop.f32.mrf.mxu0
        %v1507 = vadd.f32 %v1254, %v1506
        %v1508 = vpop.f32.mrf.mxu0
        %1509 = vmatprep.mubr.bf16.mxu0 0
        %1510 = vmatmul.mubr.bf16.gmra.mxu0 %v1267
        %v1511 = vpop.f32.mrf.mxu0
        %v1512 = vadd.f32 %v1254, %v1511
        %v1513 = vpop.f32.mrf.mxu0
        %v1514 = vpop.f32.mrf.mxu0
        %v1515 = vadd.f32 %v1254, %v1514
        %v1516 = vpop.f32.mrf.mxu0
        %1517 = vmatprep.mubr.bf16.mxu0 0
        %1518 = vmatmul.mubr.bf16.gmra.mxu0 %v1270
        %v1519 = vpop.f32.mrf.mxu0
        %v1520 = vadd.f32 %v1254, %v1519
        %v1521 = vpop.f32.mrf.mxu0
        %v1522 = vpop.f32.mrf.mxu0
        %v1523 = vadd.f32 %v1254, %v1522
        %v1524 = vpop.f32.mrf.mxu0
        %1525 = vmatprep.mubr.bf16.mxu0 0
        %1526 = vmatmul.mubr.bf16.gmra.mxu0 %v1273
        %v1527 = vpop.f32.mrf.mxu0
        %v1528 = vadd.f32 %v1254, %v1527
        %v1529 = vpop.f32.mrf.mxu0
        %v1530 = vpop.f32.mrf.mxu0
        %v1531 = vadd.f32 %v1254, %v1530
        %v1532 = vpop.f32.mrf.mxu0
        %1533 = vmatprep.mubr.bf16.mxu0 0
        %1534 = vmatmul.mubr.bf16.gmra.mxu0 %v1276
        %v1535 = vpop.f32.mrf.mxu0
        %v1536 = vadd.f32 %v1254, %v1535
        %v1537 = vpop.f32.mrf.mxu0
        %v1538 = vpop.f32.mrf.mxu0
        %v1539 = vadd.f32 %v1254, %v1538
        %v1540 = vpop.f32.mrf.mxu0
        %1541 = vmatprep.mubr.bf16.mxu0 0
        %1542 = vmatmul.mubr.bf16.gmra.mxu0 %v1279
        %v1543 = vpop.f32.mrf.mxu0
        %v1544 = vadd.f32 %v1254, %v1543
        %v1545 = vpop.f32.mrf.mxu0
        %v1546 = vpop.f32.mrf.mxu0
        %v1547 = vadd.f32 %v1254, %v1546
        %v1548 = vpop.f32.mrf.mxu0
        %1549 = vmatprep.mubr.bf16.mxu0 0
        %1550 = vmatmul.mubr.bf16.gmra.mxu0 %v1282
        %v1551 = vpop.f32.mrf.mxu0
        %v1552 = vadd.f32 %v1254, %v1551
        %v1553 = vpop.f32.mrf.mxu0
        %v1554 = vpop.f32.mrf.mxu0
        %v1555 = vadd.f32 %v1254, %v1554
        %v1556 = vpop.f32.mrf.mxu0
        %1557 = vmatprep.mubr.bf16.mxu0 0
        %1558 = vmatmul.mubr.bf16.gmra.mxu0 %v1285
        %v1559 = vpop.f32.mrf.mxu0
        %v1560 = vadd.f32 %v1254, %v1559
        %v1561 = vpop.f32.mrf.mxu0
        %v1562 = vpop.f32.mrf.mxu0
        %v1563 = vadd.f32 %v1254, %v1562
        %v1564 = vpop.f32.mrf.mxu0
        %1565 = vmatprep.mubr.bf16.mxu0 0
        %1566 = vmatmul.mubr.bf16.gmra.mxu0 %v1288
        %v1567 = vpop.f32.mrf.mxu0
        %v1568 = vadd.f32 %v1254, %v1567
        %v1569 = vpop.f32.mrf.mxu0
        %v1570 = vpop.f32.mrf.mxu0
        %v1571 = vadd.f32 %v1254, %v1570
        %v1572 = vpop.f32.mrf.mxu0
        %1573 = vmatprep.mubr.bf16.mxu0 0
        %1574 = vmatmul.mubr.bf16.gmra.mxu0 %v1291
        %v1575 = vpop.f32.mrf.mxu0
        %v1576 = vadd.f32 %v1254, %v1575
        %v1577 = vpop.f32.mrf.mxu0
        %v1578 = vpop.f32.mrf.mxu0
        %v1579 = vadd.f32 %v1254, %v1578
        %v1580 = vpop.f32.mrf.mxu0
        %1581 = vmatprep.mubr.bf16.mxu0 0
        %1582 = vmatmul.mubr.bf16.gmra.mxu0 %v1294
        %v1583 = vpop.f32.mrf.mxu0
        %v1584 = vadd.f32 %v1254, %v1583
        %v1585 = vpop.f32.mrf.mxu0
        %v1586 = vpop.f32.mrf.mxu0
        %v1587 = vadd.f32 %v1254, %v1586
        %v1588 = vpop.f32.mrf.mxu0
        %1589 = vmatprep.mubr.bf16.mxu0 0
        %1590 = vmatmul.mubr.bf16.gmra.mxu0 %v1297
        %v1591 = vpop.f32.mrf.mxu0
        %v1592 = vadd.f32 %v1254, %v1591
        %v1593 = vpop.f32.mrf.mxu0
        %v1594 = vpop.f32.mrf.mxu0
        %v1595 = vadd.f32 %v1254, %v1594
        %v1596 = vpop.f32.mrf.mxu0
        %1597 = vmatprep.mubr.bf16.mxu0 0
        %1598 = vmatmul.mubr.bf16.gmra.mxu0 %v1300
        %v1599 = vpop.f32.mrf.mxu0
        %v1600 = vadd.f32 %v1254, %v1599
        %v1601 = vpop.f32.mrf.mxu0
        %v1602 = vpop.f32.mrf.mxu0
        %v1603 = vadd.f32 %v1254, %v1602
        %v1604 = vpop.f32.mrf.mxu0
        %1605 = vmatprep.mubr.bf16.mxu0 0
        %1606 = vmatmul.mubr.bf16.gmra.mxu0 %v1303
        %v1607 = vpop.f32.mrf.mxu0
        %v1608 = vadd.f32 %v1254, %v1607
        %v1609 = vpop.f32.mrf.mxu0
        %v1610 = vpop.f32.mrf.mxu0
        %v1611 = vadd.f32 %v1254, %v1610
        %v1612 = vpop.f32.mrf.mxu0
        %1613 = vmatprep.mubr.bf16.mxu0 0
        %1614 = vmatmul.mubr.bf16.gmra.mxu0 %v1306
        %v1615 = vpop.f32.mrf.mxu0
        %v1616 = vadd.f32 %v1254, %v1615
        %v1617 = vpop.f32.mrf.mxu0
        %v1618 = vpop.f32.mrf.mxu0
        %v1619 = vadd.f32 %v1254, %v1618
        %v1620 = vpop.f32.mrf.mxu0
        %1621 = vmatprep.mubr.bf16.mxu0 0
        %1622 = vmatmul.mubr.bf16.gmra.mxu0 %v1309
        %v1623 = vpop.f32.mrf.mxu0
        %v1624 = vadd.f32 %v1254, %v1623
        %v1625 = vpop.f32.mrf.mxu0
        %v1626 = vpop.f32.mrf.mxu0
        %v1627 = vadd.f32 %v1254, %v1626
        %v1628 = vpop.f32.mrf.mxu0
        %1629 = vmatprep.mubr.bf16.mxu0 0
        %1630 = vmatmul.mubr.bf16.gmra.mxu0 %v1312
        %v1631 = vpop.f32.mrf.mxu0
        %v1632 = vadd.f32 %v1254, %v1631
        %v1633 = vpop.f32.mrf.mxu0
        %v1634 = vpop.f32.mrf.mxu0
        %v1635 = vadd.f32 %v1254, %v1634
        %v1636 = vpop.f32.mrf.mxu0
        %1637 = vmatprep.mubr.bf16.mxu0 0
        %1638 = vmatmul.mubr.bf16.gmra.mxu0 %v1315
        %v1639 = vpop.f32.mrf.mxu0
        %v1640 = vadd.f32 %v1254, %v1639
        %v1641 = vpop.f32.mrf.mxu0
        %v1642 = vpop.f32.mrf.mxu0
        %v1643 = vadd.f32 %v1254, %v1642
        %v1644 = vpop.f32.mrf.mxu0
        %1645 = vmatprep.mubr.bf16.mxu0 0
        %1646 = vmatmul.mubr.bf16.gmra.mxu0 %v1318
        %v1647 = vpop.f32.mrf.mxu0
        %v1648 = vadd.f32 %v1254, %v1647
        %v1649 = vpop.f32.mrf.mxu0
        %v1650 = vpop.f32.mrf.mxu0
        %v1651 = vadd.f32 %v1254, %v1650
        %v1652 = vpop.f32.mrf.mxu0
        %1653 = vmatprep.mubr.bf16.mxu0 0
        %1654 = vmatmul.mubr.bf16.gmra.mxu0 %v1321
        %v1655 = vpop.f32.mrf.mxu0
        %v1656 = vadd.f32 %v1254, %v1655
        %v1657 = vpop.f32.mrf.mxu0
        %v1658 = vpop.f32.mrf.mxu0
        %v1659 = vadd.f32 %v1254, %v1658
        %v1660 = vpop.f32.mrf.mxu0
        %1661 = vmatprep.mubr.bf16.mxu0 0
        %1662 = vmatmul.mubr.bf16.gmra.mxu0 %v1324
        %v1663 = vpop.f32.mrf.mxu0
        %v1664 = vadd.f32 %v1254, %v1663
        %v1665 = vpop.f32.mrf.mxu0
        %v1666 = vpop.f32.mrf.mxu0
        %v1667 = vadd.f32 %v1254, %v1666
        %v1668 = vpop.f32.mrf.mxu0
        %1669 = vmatprep.mubr.bf16.mxu0 0
        %1670 = vmatmul.mubr.bf16.gmra.mxu0 %v1327
        %v1671 = vpop.f32.mrf.mxu0
        %v1672 = vadd.f32 %v1254, %v1671
        %v1673 = vpop.f32.mrf.mxu0
        %v1674 = vpop.f32.mrf.mxu0
        %v1675 = vadd.f32 %v1254, %v1674
        %v1676 = vpop.f32.mrf.mxu0
        %1677 = vmatprep.mubr.bf16.mxu0 0
        %1678 = vmatmul.mubr.bf16.gmra.mxu0 %v1330
        %v1679 = vpop.f32.mrf.mxu0
        %v1680 = vadd.f32 %v1254, %v1679
        %v1681 = vpop.f32.mrf.mxu0
        %v1682 = vpop.f32.mrf.mxu0
        %v1683 = vadd.f32 %v1254, %v1682
        %v1684 = vpop.f32.mrf.mxu0
        %1685 = vmatprep.mubr.bf16.mxu0 0
        %1686 = vmatmul.mubr.bf16.gmra.mxu0 %v1333
        %v1687 = vpop.f32.mrf.mxu0
        %v1688 = vadd.f32 %v1254, %v1687
        %v1689 = vpop.f32.mrf.mxu0
        %v1690 = vpop.f32.mrf.mxu0
        %v1691 = vadd.f32 %v1254, %v1690
        %v1692 = vpop.f32.mrf.mxu0
        %1693 = vmatprep.mubr.bf16.mxu0 0
        %1694 = vmatmul.mubr.bf16.gmra.mxu0 %v1336
        %v1695 = vpop.f32.mrf.mxu0
        %v1696 = vadd.f32 %v1254, %v1695
        %v1697 = vpop.f32.mrf.mxu0
        %v1698 = vpop.f32.mrf.mxu0
        %v1699 = vadd.f32 %v1254, %v1698
        %v1700 = vpop.f32.mrf.mxu0
        %1701 = vmatprep.mubr.bf16.mxu0 0
        %1702 = vmatmul.mubr.bf16.gmra.mxu0 %v1339
        %v1703 = vpop.f32.mrf.mxu0
        %v1704 = vadd.f32 %v1254, %v1703
        %v1705 = vpop.f32.mrf.mxu0
        %v1706 = vpop.f32.mrf.mxu0
        %v1707 = vadd.f32 %v1254, %v1706
        %v1708 = vpop.f32.mrf.mxu0
        %1709 = vmatprep.mubr.bf16.mxu0 0
        %1710 = vmatmul.mubr.bf16.gmra.mxu0 %v1342
        %v1711 = vpop.f32.mrf.mxu0
        %v1712 = vadd.f32 %v1254, %v1711
        %v1713 = vpop.f32.mrf.mxu0
        %v1714 = vpop.f32.mrf.mxu0
        %v1715 = vadd.f32 %v1254, %v1714
        %v1716 = vpop.f32.mrf.mxu0
        %1717 = vmatprep.mubr.bf16.mxu0 0
        %1718 = vmatmul.mubr.bf16.gmra.mxu0 %v1345
        %v1719 = vpop.f32.mrf.mxu0
        %v1720 = vadd.f32 %v1254, %v1719
        %v1721 = vpop.f32.mrf.mxu0
        %v1722 = vpop.f32.mrf.mxu0
        %v1723 = vadd.f32 %v1254, %v1722
        %v1724 = vpop.f32.mrf.mxu0
        %1725 = vmatprep.mubr.bf16.mxu0 0
        %1726 = vmatmul.mubr.bf16.gmra.mxu0 %v1348
        %v1727 = vpop.f32.mrf.mxu0
        %v1728 = vadd.f32 %v1254, %v1727
        %v1729 = vpop.f32.mrf.mxu0
        %v1730 = vpop.f32.mrf.mxu0
        %v1731 = vadd.f32 %v1254, %v1730
        %v1732 = vpop.f32.mrf.mxu0
        %1733 = vmatprep.mubr.bf16.mxu0 0
        %1734 = vmatmul.mubr.bf16.gmra.mxu0 %v1351
        %v1735 = vpop.f32.mrf.mxu0
        %v1736 = vadd.f32 %v1254, %v1735
        %v1737 = vpop.f32.mrf.mxu0
        %v1738 = vpop.f32.mrf.mxu0
        %v1739 = vadd.f32 %v1254, %v1738
        %v1740 = vpop.f32.mrf.mxu0
        %1741 = vmatprep.mubr.bf16.mxu0 0
        %1742 = vmatmul.mubr.bf16.gmra.mxu0 %v1354
        %v1743 = vpop.f32.mrf.mxu0
        %v1744 = vadd.f32 %v1254, %v1743
        %v1745 = vpop.f32.mrf.mxu0
        %v1746 = vpop.f32.mrf.mxu0
        %v1747 = vadd.f32 %v1254, %v1746
        %v1748 = vpop.f32.mrf.mxu0
        %1749 = vmatprep.mubr.bf16.mxu0 0
        %1750 = vmatmul.mubr.bf16.gmra.mxu0 %v1357
        %v1751 = vpop.f32.mrf.mxu0
        %v1752 = vadd.f32 %v1254, %v1751
        %v1753 = vpop.f32.mrf.mxu0
        %v1754 = vpop.f32.mrf.mxu0
        %v1755 = vadd.f32 %v1254, %v1754
        %v1756 = vpop.f32.mrf.mxu0
        %1757 = vmatprep.mubr.bf16.mxu0 0
        %1758 = vmatmul.mubr.bf16.gmra.mxu0 %v1360
        %v1759 = vpop.f32.mrf.mxu0
        %v1760 = vadd.f32 %v1254, %v1759
        %v1761 = vpop.f32.mrf.mxu0
        %v1762 = vpop.f32.mrf.mxu0
        %v1763 = vadd.f32 %v1254, %v1762
        %v1764 = vpop.f32.mrf.mxu0
        %1765 = vmatprep.mubr.bf16.mxu0 0
        %1766 = vmatmul.mubr.bf16.gmra.mxu0 %v1363
        %v1767 = vpop.f32.mrf.mxu0
        %v1768 = vadd.f32 %v1254, %v1767
        %v1769 = vpop.f32.mrf.mxu0
        %v1770 = vpop.f32.mrf.mxu0
        %v1771 = vadd.f32 %v1254, %v1770
        %v1772 = vpop.f32.mrf.mxu0
        %1773 = vmatprep.mubr.bf16.mxu0 0
        %1774 = vmatmul.mubr.bf16.gmra.mxu0 %v1366
        %v1775 = vpop.f32.mrf.mxu0
        %v1776 = vadd.f32 %v1254, %v1775
        %v1777 = vpop.f32.mrf.mxu0
        %v1778 = vpop.f32.mrf.mxu0
        %v1779 = vadd.f32 %v1254, %v1778
        %v1780 = vpop.f32.mrf.mxu0
        %1781 = vmatprep.mubr.bf16.mxu0 0
        %1782 = vmatmul.mubr.bf16.gmra.mxu0 %v1369
        %v1783 = vpop.f32.mrf.mxu0
        %v1784 = vadd.f32 %v1254, %v1783
        %v1785 = vpop.f32.mrf.mxu0
        %v1786 = vpop.f32.mrf.mxu0
        %v1787 = vadd.f32 %v1254, %v1786
        %v1788 = vpop.f32.mrf.mxu0
        %1789 = vmatprep.mubr.bf16.mxu0 0
        %1790 = vmatmul.mubr.bf16.gmra.mxu0 %v1372
        %v1791 = vpop.f32.mrf.mxu0
        %v1792 = vadd.f32 %v1254, %v1791
        %v1793 = vpop.f32.mrf.mxu0
        %v1794 = vpop.f32.mrf.mxu0
        %v1795 = vadd.f32 %v1254, %v1794
        %v1796 = vpop.f32.mrf.mxu0
        %1797 = vmatprep.mubr.bf16.mxu0 0
        %1798 = vmatmul.mubr.bf16.gmra.mxu0 %v1375
        %v1799 = vpop.f32.mrf.mxu0
        %v1800 = vadd.f32 %v1254, %v1799
        %v1801 = vpop.f32.mrf.mxu0
        %v1802 = vpop.f32.mrf.mxu0
        %v1803 = vadd.f32 %v1254, %v1802
        %v1804 = vpop.f32.mrf.mxu0
        %1805 = vmatprep.mubr.bf16.mxu0 0
        %1806 = vmatmul.mubr.bf16.gmra.mxu0 %v1378
        %v1807 = vpop.f32.mrf.mxu0
        %v1808 = vadd.f32 %v1254, %v1807
        %v1809 = vpop.f32.mrf.mxu0
        %v1810 = vpop.f32.mrf.mxu0
        %v1811 = vadd.f32 %v1254, %v1810
        %v1812 = vpop.f32.mrf.mxu0
        %1813 = vmatprep.mubr.bf16.mxu0 0
        %1814 = vmatmul.mubr.bf16.gmra.mxu0 %v1381
        %v1815 = vpop.f32.mrf.mxu0
        %v1816 = vadd.f32 %v1254, %v1815
        %v1817 = vpop.f32.mrf.mxu0
        %v1818 = vpop.f32.mrf.mxu0
        %v1819 = vadd.f32 %v1254, %v1818
        %v1820 = vpop.f32.mrf.mxu0
        %1821 = vmatprep.mubr.bf16.mxu0 0
        %1822 = vmatmul.mubr.bf16.gmra.mxu0 %v1384
        %v1823 = vpop.f32.mrf.mxu0
        %v1824 = vadd.f32 %v1254, %v1823
        %v1825 = vpop.f32.mrf.mxu0
        %v1826 = vpop.f32.mrf.mxu0
        %v1827 = vadd.f32 %v1254, %v1826
        %v1828 = vpop.f32.mrf.mxu0
        %1829 = vmatprep.mubr.bf16.mxu0 0
        %1830 = vmatmul.mubr.bf16.gmra.mxu0 %v1387
        %v1831 = vpop.f32.mrf.mxu0
        %v1832 = vadd.f32 %v1254, %v1831
        %v1833 = vpop.f32.mrf.mxu0
        %v1834 = vpop.f32.mrf.mxu0
        %v1835 = vadd.f32 %v1254, %v1834
        %v1836 = vpop.f32.mrf.mxu0
        %1837 = vmatprep.mubr.bf16.mxu0 0
        %1838 = vmatmul.mubr.bf16.gmra.mxu0 %v1390
        %v1839 = vpop.f32.mrf.mxu0
        %v1840 = vadd.f32 %v1254, %v1839
        %v1841 = vpop.f32.mrf.mxu0
        %v1842 = vpop.f32.mrf.mxu0
        %v1843 = vadd.f32 %v1254, %v1842
        %v1844 = vpop.f32.mrf.mxu0
        %1845 = vmatprep.mubr.bf16.mxu0 0
        %1846 = vmatmul.mubr.bf16.gmra.mxu0 %v1393
        %v1847 = vpop.f32.mrf.mxu0
        %v1848 = vadd.f32 %v1254, %v1847
        %v1849 = vpop.f32.mrf.mxu0
        %v1850 = vpop.f32.mrf.mxu0
        %v1851 = vadd.f32 %v1254, %v1850
        %v1852 = vpop.f32.mrf.mxu0
        %1853 = vmatprep.mubr.bf16.mxu0 0
        %1854 = vmatmul.mubr.bf16.gmra.mxu0 %v1396
        %v1855 = vpop.f32.mrf.mxu0
        %v1856 = vadd.f32 %v1254, %v1855
        %v1857 = vpop.f32.mrf.mxu0
        %v1858 = vpop.f32.mrf.mxu0
        %v1859 = vadd.f32 %v1254, %v1858
        %v1860 = vpop.f32.mrf.mxu0
        %1861 = vmatprep.mubr.bf16.mxu0 0
        %1862 = vmatmul.mubr.bf16.gmra.mxu0 %v1399
        %v1863 = vpop.f32.mrf.mxu0
        %v1864 = vadd.f32 %v1254, %v1863
        %v1865 = vpop.f32.mrf.mxu0
        %v1866 = vpop.f32.mrf.mxu0
        %v1867 = vadd.f32 %v1254, %v1866
        %v1868 = vpop.f32.mrf.mxu0
        %1869 = vmatprep.mubr.bf16.mxu0 0
        %1870 = vmatmul.mubr.bf16.gmra.mxu0 %v1402
        %v1871 = vpop.f32.mrf.mxu0
        %v1872 = vadd.f32 %v1254, %v1871
        %v1873 = vpop.f32.mrf.mxu0
        %v1874 = vpop.f32.mrf.mxu0
        %v1875 = vadd.f32 %v1254, %v1874
        %v1876 = vpop.f32.mrf.mxu0
        %1877 = vmatprep.mubr.bf16.mxu0 0
        %1878 = vmatmul.mubr.bf16.gmra.mxu0 %v1405
        %v1879 = vpop.f32.mrf.mxu0
        %v1880 = vadd.f32 %v1254, %v1879
        %v1881 = vpop.f32.mrf.mxu0
        %v1882 = vpop.f32.mrf.mxu0
        %v1883 = vadd.f32 %v1254, %v1882
        %v1884 = vpop.f32.mrf.mxu0
        %1885 = vmatprep.mubr.bf16.mxu0 0
        %1886 = vmatmul.mubr.bf16.gmra.mxu0 %v1408
        %v1887 = vpop.f32.mrf.mxu0
        %v1888 = vadd.f32 %v1254, %v1887
        %v1889 = vpop.f32.mrf.mxu0
        %v1890 = vpop.f32.mrf.mxu0
        %v1891 = vadd.f32 %v1254, %v1890
        %v1892 = vpop.f32.mrf.mxu0
        %1893 = vmatprep.mubr.bf16.mxu0 0
        %1894 = vmatmul.mubr.bf16.gmra.mxu0 %v1411
        %v1895 = vpop.f32.mrf.mxu0
        %v1896 = vadd.f32 %v1254, %v1895
        %v1897 = vpop.f32.mrf.mxu0
        %v1898 = vpop.f32.mrf.mxu0
        %v1899 = vadd.f32 %v1254, %v1898
        %v1900 = vpop.f32.mrf.mxu0
        %1901 = vmatprep.mubr.bf16.mxu0 0
        %1902 = vmatmul.mubr.bf16.gmra.mxu0 %v1414
        %v1903 = vpop.f32.mrf.mxu0
        %v1904 = vadd.f32 %v1254, %v1903
        %v1905 = vpop.f32.mrf.mxu0
        %v1906 = vpop.f32.mrf.mxu0
        %v1907 = vadd.f32 %v1254, %v1906
        %v1908 = vpop.f32.mrf.mxu0
        %1909 = vmatprep.mubr.bf16.mxu0 0
        %1910 = vmatmul.mubr.bf16.gmra.mxu0 %v1417
        %v1911 = vpop.f32.mrf.mxu0
        %v1912 = vadd.f32 %v1254, %v1911
        %v1913 = vpop.f32.mrf.mxu0
        %v1914 = vpop.f32.mrf.mxu0
        %v1915 = vadd.f32 %v1254, %v1914
        %v1916 = vpop.f32.mrf.mxu0
        %1917 = vmatprep.mubr.bf16.mxu0 0
        %1918 = vmatmul.mubr.bf16.gmra.mxu0 %v1420
        %v1919 = vpop.f32.mrf.mxu0
        %v1920 = vadd.f32 %v1254, %v1919
        %v1921 = vpop.f32.mrf.mxu0
        %v1922 = vpop.f32.mrf.mxu0
        %v1923 = vadd.f32 %v1254, %v1922
        %v1924 = vpop.f32.mrf.mxu0
        %1925 = vmatprep.mubr.bf16.mxu0 0
        %1926 = vmatmul.mubr.bf16.gmra.mxu0 %v1423
        %v1927 = vpop.f32.mrf.mxu0
        %v1928 = vadd.f32 %v1254, %v1927
        %v1929 = vpop.f32.mrf.mxu0
        %v1930 = vpop.f32.mrf.mxu0
        %v1931 = vadd.f32 %v1254, %v1930
        %v1932 = vpop.f32.mrf.mxu0
        %1933 = vmatprep.mubr.bf16.mxu0 0
        %1934 = vmatmul.mubr.bf16.gmra.mxu0 %v1426
        %v1935 = vpop.f32.mrf.mxu0
        %v1936 = vadd.f32 %v1254, %v1935
        %v1937 = vpop.f32.mrf.mxu0
        %v1938 = vpop.f32.mrf.mxu0
        %v1939 = vadd.f32 %v1254, %v1938
        %v1940 = vpop.f32.mrf.mxu0
        %1941 = vmatprep.mubr.bf16.mxu0 0
        %1942 = vmatmul.mubr.bf16.gmra.mxu0 %v1429
        %v1943 = vpop.f32.mrf.mxu0
        %v1944 = vadd.f32 %v1254, %v1943
        %v1945 = vpop.f32.mrf.mxu0
        %v1946 = vpop.f32.mrf.mxu0
        %v1947 = vadd.f32 %v1254, %v1946
        %v1948 = vpop.f32.mrf.mxu0
        %1949 = vmatprep.mubr.bf16.mxu0 0
        %1950 = vmatmul.mubr.bf16.gmra.mxu0 %v1432
        %v1951 = vpop.f32.mrf.mxu0
        %v1952 = vadd.f32 %v1254, %v1951
        %v1953 = vpop.f32.mrf.mxu0
        %v1954 = vpop.f32.mrf.mxu0
        %v1955 = vadd.f32 %v1254, %v1954
        %v1956 = vpop.f32.mrf.mxu0
        %1957 = vmatprep.mubr.bf16.mxu0 0
        %1958 = vmatmul.mubr.bf16.gmra.mxu0 %v1435
        %v1959 = vpop.f32.mrf.mxu0
        %v1960 = vadd.f32 %v1254, %v1959
        %v1961 = vpop.f32.mrf.mxu0
        %v1962 = vpop.f32.mrf.mxu0
        %v1963 = vadd.f32 %v1254, %v1962
        %v1964 = vpop.f32.mrf.mxu0
        %1965 = vmatprep.mubr.bf16.mxu0 0
        %1966 = vmatmul.mubr.bf16.gmra.mxu0 %v1438
        %v1967 = vpop.f32.mrf.mxu0
        %v1968 = vadd.f32 %v1254, %v1967
        %v1969 = vpop.f32.mrf.mxu0
        %v1970 = vpop.f32.mrf.mxu0
        %v1971 = vadd.f32 %v1254, %v1970
        %v1972 = vpop.f32.mrf.mxu0
        %1973 = vmatprep.mubr.bf16.mxu0 0
        %1974 = vmatmul.mubr.bf16.gmra.mxu0 %v1441
        %v1975 = vpop.f32.mrf.mxu0
        %v1976 = vadd.f32 %v1254, %v1975
        %v1977 = vpop.f32.mrf.mxu0
        %v1978 = vpop.f32.mrf.mxu0
        %v1979 = vadd.f32 %v1254, %v1978
        %v1980 = vpop.f32.mrf.mxu0
        %1981 = vmatprep.mubr.bf16.mxu0 0
        %1982 = vmatmul.mubr.bf16.gmra.mxu0 %v1444
        %v1983 = vpop.f32.mrf.mxu0
        %v1984 = vadd.f32 %v1254, %v1983
        %v1985 = vpop.f32.mrf.mxu0
        %v1986 = vpop.f32.mrf.mxu0
        %v1987 = vadd.f32 %v1254, %v1986
        %v1988 = vpop.f32.mrf.mxu0
        %1989 = vmatprep.mubr.bf16.mxu0 0
        %1990 = vmatmul.mubr.bf16.gmra.mxu0 %v1447
        %v1991 = vpop.f32.mrf.mxu0
        %v1992 = vadd.f32 %v1254, %v1991
        %v1993 = vpop.f32.mrf.mxu0
        %v1994 = vpop.f32.mrf.mxu0
        %v1995 = vadd.f32 %v1254, %v1994
        %v1996 = vpop.f32.mrf.mxu0
        %1997 = vdwg.mxu0
        %v1998 = vmax.f32 %v1488, 0.0
        %v1999 = vmax.f32 %v1491, 0.0
        %v2000 = vmax.f32 %v1496, 0.0
        %v2001 = vmax.f32 %v1499, 0.0
        %v2002 = vmax.f32 %v1504, 0.0
        %v2003 = vmax.f32 %v1507, 0.0
        %v2004 = vmax.f32 %v1512, 0.0
        %v2005 = vmax.f32 %v1515, 0.0
        %v2006 = vmax.f32 %v1520, 0.0
        %v2007 = vmax.f32 %v1523, 0.0
        %v2008 = vmax.f32 %v1528, 0.0
        %v2009 = vmax.f32 %v1531, 0.0
        %v2010 = vmax.f32 %v1536, 0.0
        %v2011 = vmax.f32 %v1539, 0.0
        %v2012 = vmax.f32 %v1544, 0.0
        %v2013 = vmax.f32 %v1547, 0.0
        %v2014 = vmax.f32 %v1552, 0.0
        %v2015 = vmax.f32 %v1555, 0.0
        %v2016 = vmax.f32 %v1560, 0.0
        %v2017 = vmax.f32 %v1563, 0.0
        %v2018 = vmax.f32 %v1568, 0.0
        %v2019 = vmax.f32 %v1571, 0.0
        %v2020 = vmax.f32 %v1576, 0.0
        %v2021 = vmax.f32 %v1579, 0.0
        %v2022 = vmax.f32 %v1584, 0.0
        %v2023 = vmax.f32 %v1587, 0.0
        %v2024 = vmax.f32 %v1592, 0.0
        %v2025 = vmax.f32 %v1595, 0.0
        %v2026 = vmax.f32 %v1600, 0.0
        %v2027 = vmax.f32 %v1603, 0.0
        %v2028 = vmax.f32 %v1608, 0.0
        %v2029 = vmax.f32 %v1611, 0.0
        %v2030 = vmax.f32 %v1616, 0.0
        %v2031 = vmax.f32 %v1619, 0.0
        %v2032 = vmax.f32 %v1624, 0.0
        %v2033 = vmax.f32 %v1627, 0.0
        %v2034 = vmax.f32 %v1632, 0.0
        %v2035 = vmax.f32 %v1635, 0.0
        %v2036 = vmax.f32 %v1640, 0.0
        %v2037 = vmax.f32 %v1643, 0.0
        %v2038 = vmax.f32 %v1648, 0.0
        %v2039 = vmax.f32 %v1651, 0.0
        %v2040 = vmax.f32 %v1656, 0.0
        %v2041 = vmax.f32 %v1659, 0.0
        %v2042 = vmax.f32 %v1664, 0.0
        %v2043 = vmax.f32 %v1667, 0.0
        %v2044 = vmax.f32 %v1672, 0.0
        %v2045 = vmax.f32 %v1675, 0.0
        %v2046 = vmax.f32 %v1680, 0.0
        %v2047 = vmax.f32 %v1683, 0.0
        %v2048 = vmax.f32 %v1688, 0.0
        %v2049 = vmax.f32 %v1691, 0.0
        %v2050 = vmax.f32 %v1696, 0.0
        %v2051 = vmax.f32 %v1699, 0.0
        %v2052 = vmax.f32 %v1704, 0.0
        %v2053 = vmax.f32 %v1707, 0.0
        %v2054 = vmax.f32 %v1712, 0.0
        %v2055 = vmax.f32 %v1715, 0.0
        %v2056 = vmax.f32 %v1720, 0.0
        %v2057 = vmax.f32 %v1723, 0.0
        %v2058 = vmax.f32 %v1728, 0.0
        %v2059 = vmax.f32 %v1731, 0.0
        %v2060 = vmax.f32 %v1736, 0.0
        %v2061 = vmax.f32 %v1739, 0.0
        %v2062 = vmax.f32 %v1744, 0.0
        %v2063 = vmax.f32 %v1747, 0.0
        %v2064 = vmax.f32 %v1752, 0.0
        %v2065 = vmax.f32 %v1755, 0.0
        %v2066 = vmax.f32 %v1760, 0.0
        %v2067 = vmax.f32 %v1763, 0.0
        %v2068 = vmax.f32 %v1768, 0.0
        %v2069 = vmax.f32 %v1771, 0.0
        %v2070 = vmax.f32 %v1776, 0.0
        %v2071 = vmax.f32 %v1779, 0.0
        %v2072 = vmax.f32 %v1784, 0.0
        %v2073 = vmax.f32 %v1787, 0.0
        %v2074 = vmax.f32 %v1792, 0.0
        %v2075 = vmax.f32 %v1795, 0.0
        %v2076 = vmax.f32 %v1800, 0.0
        %v2077 = vmax.f32 %v1803, 0.0
        %v2078 = vmax.f32 %v1808, 0.0
        %v2079 = vmax.f32 %v1811, 0.0
        %v2080 = vmax.f32 %v1816, 0.0
        %v2081 = vmax.f32 %v1819, 0.0
        %v2082 = vmax.f32 %v1824, 0.0
        %v2083 = vmax.f32 %v1827, 0.0
        %v2084 = vmax.f32 %v1832, 0.0
        %v2085 = vmax.f32 %v1835, 0.0
        %v2086 = vmax.f32 %v1840, 0.0
        %v2087 = vmax.f32 %v1843, 0.0
        %v2088 = vmax.f32 %v1848, 0.0
        %v2089 = vmax.f32 %v1851, 0.0
        %v2090 = vmax.f32 %v1856, 0.0
        %v2091 = vmax.f32 %v1859, 0.0
        %v2092 = vmax.f32 %v1864, 0.0
        %v2093 = vmax.f32 %v1867, 0.0
        %v2094 = vmax.f32 %v1872, 0.0
        %v2095 = vmax.f32 %v1875, 0.0
        %v2096 = vmax.f32 %v1880, 0.0
        %v2097 = vmax.f32 %v1883, 0.0
        %v2098 = vmax.f32 %v1888, 0.0
        %v2099 = vmax.f32 %v1891, 0.0
        %v2100 = vmax.f32 %v1896, 0.0
        %v2101 = vmax.f32 %v1899, 0.0
        %v2102 = vmax.f32 %v1904, 0.0
        %v2103 = vmax.f32 %v1907, 0.0
        %v2104 = vmax.f32 %v1912, 0.0
        %v2105 = vmax.f32 %v1915, 0.0
        %v2106 = vmax.f32 %v1920, 0.0
        %v2107 = vmax.f32 %v1923, 0.0
        %v2108 = vmax.f32 %v1928, 0.0
        %v2109 = vmax.f32 %v1931, 0.0
        %v2110 = vmax.f32 %v1936, 0.0
        %v2111 = vmax.f32 %v1939, 0.0
        %v2112 = vmax.f32 %v1944, 0.0
        %v2113 = vmax.f32 %v1947, 0.0
        %v2114 = vmax.f32 %v1952, 0.0
        %v2115 = vmax.f32 %v1955, 0.0
        %v2116 = vmax.f32 %v1960, 0.0
        %v2117 = vmax.f32 %v1963, 0.0
        %v2118 = vmax.f32 %v1968, 0.0
        %v2119 = vmax.f32 %v1971, 0.0
        %v2120 = vmax.f32 %v1976, 0.0
        %v2121 = vmax.f32 %v1979, 0.0
        %v2122 = vmax.f32 %v1984, 0.0
        %v2123 = vmax.f32 %v1987, 0.0
        %v2124 = vmax.f32 %v1992, 0.0
        %v2125 = vmax.f32 %v1995, 0.0
        %v2126 = vpack.c.bf16 %v1999, %v1998
        %v2127 = vpack.c.bf16 %v2001, %v2000
        %v2128 = vpack.c.bf16 %v2003, %v2002
        %v2129 = vpack.c.bf16 %v2005, %v2004
        %v2130 = vpack.c.bf16 %v2007, %v2006
        %v2131 = vpack.c.bf16 %v2009, %v2008
        %v2132 = vpack.c.bf16 %v2011, %v2010
        %v2133 = vpack.c.bf16 %v2013, %v2012
        %v2134 = vpack.c.bf16 %v2015, %v2014
        %v2135 = vpack.c.bf16 %v2017, %v2016
        %v2136 = vpack.c.bf16 %v2019, %v2018
        %v2137 = vpack.c.bf16 %v2021, %v2020
        %v2138 = vpack.c.bf16 %v2023, %v2022
        %v2139 = vpack.c.bf16 %v2025, %v2024
        %v2140 = vpack.c.bf16 %v2027, %v2026
        %v2141 = vpack.c.bf16 %v2029, %v2028
        %v2142 = vpack.c.bf16 %v2031, %v2030
        %v2143 = vpack.c.bf16 %v2033, %v2032
        %v2144 = vpack.c.bf16 %v2035, %v2034
        %v2145 = vpack.c.bf16 %v2037, %v2036
        %v2146 = vpack.c.bf16 %v2039, %v2038
        %v2147 = vpack.c.bf16 %v2041, %v2040
        %v2148 = vpack.c.bf16 %v2043, %v2042
        %v2149 = vpack.c.bf16 %v2045, %v2044
        %v2150 = vpack.c.bf16 %v2047, %v2046
        %v2151 = vpack.c.bf16 %v2049, %v2048
        %v2152 = vpack.c.bf16 %v2051, %v2050
        %v2153 = vpack.c.bf16 %v2053, %v2052
        %v2154 = vpack.c.bf16 %v2055, %v2054
        %v2155 = vpack.c.bf16 %v2057, %v2056
        %v2156 = vpack.c.bf16 %v2059, %v2058
        %v2157 = vpack.c.bf16 %v2061, %v2060
        %v2158 = vpack.c.bf16 %v2063, %v2062
        %v2159 = vpack.c.bf16 %v2065, %v2064
        %v2160 = vpack.c.bf16 %v2067, %v2066
        %v2161 = vpack.c.bf16 %v2069, %v2068
        %v2162 = vpack.c.bf16 %v2071, %v2070
        %v2163 = vpack.c.bf16 %v2073, %v2072
        %v2164 = vpack.c.bf16 %v2075, %v2074
        %v2165 = vpack.c.bf16 %v2077, %v2076
        %v2166 = vpack.c.bf16 %v2079, %v2078
        %v2167 = vpack.c.bf16 %v2081, %v2080
        %v2168 = vpack.c.bf16 %v2083, %v2082
        %v2169 = vpack.c.bf16 %v2085, %v2084
        %v2170 = vpack.c.bf16 %v2087, %v2086
        %v2171 = vpack.c.bf16 %v2089, %v2088
        %v2172 = vpack.c.bf16 %v2091, %v2090
        %v2173 = vpack.c.bf16 %v2093, %v2092
        %v2174 = vpack.c.bf16 %v2095, %v2094
        %v2175 = vpack.c.bf16 %v2097, %v2096
        %v2176 = vpack.c.bf16 %v2099, %v2098
        %v2177 = vpack.c.bf16 %v2101, %v2100
        %v2178 = vpack.c.bf16 %v2103, %v2102
        %v2179 = vpack.c.bf16 %v2105, %v2104
        %v2180 = vpack.c.bf16 %v2107, %v2106
        %v2181 = vpack.c.bf16 %v2109, %v2108
        %v2182 = vpack.c.bf16 %v2111, %v2110
        %v2183 = vpack.c.bf16 %v2113, %v2112
        %v2184 = vpack.c.bf16 %v2115, %v2114
        %v2185 = vpack.c.bf16 %v2117, %v2116
        %v2186 = vpack.c.bf16 %v2119, %v2118
        %v2187 = vpack.c.bf16 %v2121, %v2120
        %v2188 = vpack.c.bf16 %v2123, %v2122
        %v2189 = vpack.c.bf16 %v2125, %v2124
        %v2190 = vld [vmem:[%s4] sm:$0xf]
        %v2191 = vld [vmem:[%s4 + $0x4] sm:$0xf]
        %v2192 = vld [vmem:[%s4 + $0x8] sm:$0xf]
        %v2193 = vld [vmem:[%s4 + $0xc] sm:$0xf]
        %v2194 = vld [vmem:[%s4 + $0x10] sm:$0xf]
        %v2195 = vld [vmem:[%s4 + $0x14] sm:$0xf]
        %v2196 = vld [vmem:[%s4 + $0x18] sm:$0xf]
        %v2197 = vld [vmem:[%s4 + $0x1c] sm:$0xf]
        %v2198 = vld [vmem:[%s5] sm:$0x1]
        %v2200 = vlaneseq
        %v2201 = vshrl.u32 %v2200, 7
        %v2202 = vsub.s32 0, %v2201
        %v2203 = vrot.slane %v2198, %v2202
        %v2213 = vunpack.c.l.b16 %v2190
        %v2214 = vunpack.c.l.b16 %v2191
        %v2215 = vunpack.c.l.b16 %v2192
        %v2216 = vunpack.c.l.b16 %v2193
        %v2217 = vunpack.c.l.b16 %v2194
        %v2218 = vunpack.c.l.b16 %v2195
        %v2219 = vunpack.c.l.b16 %v2196
        %v2220 = vunpack.c.l.b16 %v2197
        %v2221 = vpack.c.b16 %v2214, %v2213
        %v2222 = vpack.c.b16 %v2216, %v2215
        %v2223 = vpack.c.b16 %v2218, %v2217
        %v2224 = vpack.c.b16 %v2220, %v2219
        %vm2229 = vcmask 523264
        %v2231 = vsel %vm2229, %v2126, 0
        %v2234 = vsel %vm2229, %v2127, 0
        %v2237 = vsel %vm2229, %v2128, 0
        %v2240 = vsel %vm2229, %v2129, 0
        %v2243 = vsel %vm2229, %v2130, 0
        %v2246 = vsel %vm2229, %v2131, 0
        %v2249 = vsel %vm2229, %v2132, 0
        %v2252 = vsel %vm2229, %v2133, 0
        %v2255 = vsel %vm2229, %v2134, 0
        %v2258 = vsel %vm2229, %v2135, 0
        %v2261 = vsel %vm2229, %v2136, 0
        %v2264 = vsel %vm2229, %v2137, 0
        %v2267 = vsel %vm2229, %v2138, 0
        %v2270 = vsel %vm2229, %v2139, 0
        %v2273 = vsel %vm2229, %v2140, 0
        %v2276 = vsel %vm2229, %v2141, 0
        %v2279 = vsel %vm2229, %v2142, 0
        %v2282 = vsel %vm2229, %v2143, 0
        %v2285 = vsel %vm2229, %v2144, 0
        %v2288 = vsel %vm2229, %v2145, 0
        %v2291 = vsel %vm2229, %v2146, 0
        %v2294 = vsel %vm2229, %v2147, 0
        %v2297 = vsel %vm2229, %v2148, 0
        %v2300 = vsel %vm2229, %v2149, 0
        %v2303 = vsel %vm2229, %v2150, 0
        %v2306 = vsel %vm2229, %v2151, 0
        %v2309 = vsel %vm2229, %v2152, 0
        %v2312 = vsel %vm2229, %v2153, 0
        %v2315 = vsel %vm2229, %v2154, 0
        %v2318 = vsel %vm2229, %v2155, 0
        %v2321 = vsel %vm2229, %v2156, 0
        %v2324 = vsel %vm2229, %v2157, 0
        %v2327 = vsel %vm2229, %v2158, 0
        %v2330 = vsel %vm2229, %v2159, 0
        %v2333 = vsel %vm2229, %v2160, 0
        %v2336 = vsel %vm2229, %v2161, 0
        %v2339 = vsel %vm2229, %v2162, 0
        %v2342 = vsel %vm2229, %v2163, 0
        %v2345 = vsel %vm2229, %v2164, 0
        %v2348 = vsel %vm2229, %v2165, 0
        %v2351 = vsel %vm2229, %v2166, 0
        %v2354 = vsel %vm2229, %v2167, 0
        %v2357 = vsel %vm2229, %v2168, 0
        %v2360 = vsel %vm2229, %v2169, 0
        %v2363 = vsel %vm2229, %v2170, 0
        %v2366 = vsel %vm2229, %v2171, 0
        %v2369 = vsel %vm2229, %v2172, 0
        %v2372 = vsel %vm2229, %v2173, 0
        %v2375 = vsel %vm2229, %v2174, 0
        %v2378 = vsel %vm2229, %v2175, 0
        %v2381 = vsel %vm2229, %v2176, 0
        %v2384 = vsel %vm2229, %v2177, 0
        %v2387 = vsel %vm2229, %v2178, 0
        %v2390 = vsel %vm2229, %v2179, 0
        %v2393 = vsel %vm2229, %v2180, 0
        %v2396 = vsel %vm2229, %v2181, 0
        %v2399 = vsel %vm2229, %v2182, 0
        %v2402 = vsel %vm2229, %v2183, 0
        %v2405 = vsel %vm2229, %v2184, 0
        %v2408 = vsel %vm2229, %v2185, 0
        %v2411 = vsel %vm2229, %v2186, 0
        %v2414 = vsel %vm2229, %v2187, 0
        %v2417 = vsel %vm2229, %v2188, 0
        %v2420 = vsel %vm2229, %v2189, 0
        %2422 = vmatprep.subr.bf16.mxu0 0
        %2423 = vmatpush1.bf16.msra.mxu0 0
        %2424 = vmatprep.subr.bf16.mxu0 0
        %2425 = vmatpush1.bf16.msra.mxu0 0
        %2426 = vmatprep.subr.bf16.mxu0 0
        %2427 = vmatpush1.bf16.msra.mxu0 0
        %2428 = vmatprep.subr.bf16.mxu0 0
        %2429 = vmatpush1.bf16.msra.mxu0 0
        %2430 = vmatprep.subr.bf16.mxu0 0
        %2431 = vmatpush1.bf16.msra.mxu0 %v2224
        %2432 = vmatprep.subr.bf16.mxu0 0
        %2433 = vmatpush1.bf16.msra.mxu0 %v2223
        %2434 = vmatprep.subr.bf16.mxu0 0
        %2435 = vmatpush1.bf16.msra.mxu0 %v2222
        %2436 = vmatprep.subr.bf16.mxu0 0
        %2437 = vmatpush1.bf16.msra.mxu0 %v2221
        %2438 = vmatprep.subr.bf16.mxu0 0
        %2439 = vmatpush2.bf16.msra.mxu0 0
        %2440 = vmatprep.subr.bf16.mxu0 0
        %2441 = vmatpush2.bf16.msra.mxu0 0
        %2442 = vmatprep.subr.bf16.mxu0 0
        %2443 = vmatpush2.bf16.msra.mxu0 0
        %2444 = vmatprep.subr.bf16.mxu0 0
        %2445 = vmatpush2.bf16.msra.mxu0 0
        %2446 = vmatprep.subr.bf16.mxu0 0
        %2447 = vmatpush2.bf16.msra.mxu0 0
        %2448 = vmatprep.subr.bf16.mxu0 0
        %2449 = vmatpush2.bf16.msra.mxu0 0
        %2450 = vmatprep.subr.bf16.mxu0 0
        %2451 = vmatpush2.bf16.msra.mxu0 0
        %2452 = vmatprep.subr.bf16.mxu0 0
        %2453 = vmatpush2.bf16.msra.mxu0 0
        %2454 = vmatprep.mubr.bf16.mxu0 0
        %2455 = vmatmul.mubr.bf16.gmra.mxu0 %v2231
        %v2456 = vpop.f32.mrf.mxu0
        %v2457 = vadd.f32 %v2203, %v2456
        %v2458 = vpop.f32.mrf.mxu0
        %v2459 = vpop.f32.mrf.mxu0
        %v2460 = vadd.f32 %v2203, %v2459
        %v2461 = vpop.f32.mrf.mxu0
        %2462 = vmatprep.mubr.bf16.mxu0 0
        %2463 = vmatmul.mubr.bf16.gmra.mxu0 %v2234
        %v2464 = vpop.f32.mrf.mxu0
        %v2465 = vadd.f32 %v2203, %v2464
        %v2466 = vpop.f32.mrf.mxu0
        %v2467 = vpop.f32.mrf.mxu0
        %v2468 = vadd.f32 %v2203, %v2467
        %v2469 = vpop.f32.mrf.mxu0
        %2470 = vmatprep.mubr.bf16.mxu0 0
        %2471 = vmatmul.mubr.bf16.gmra.mxu0 %v2237
        %v2472 = vpop.f32.mrf.mxu0
        %v2473 = vadd.f32 %v2203, %v2472
        %v2474 = vpop.f32.mrf.mxu0
        %v2475 = vpop.f32.mrf.mxu0
        %v2476 = vadd.f32 %v2203, %v2475
        %v2477 = vpop.f32.mrf.mxu0
        %2478 = vmatprep.mubr.bf16.mxu0 0
        %2479 = vmatmul.mubr.bf16.gmra.mxu0 %v2240
        %v2480 = vpop.f32.mrf.mxu0
        %v2481 = vadd.f32 %v2203, %v2480
        %v2482 = vpop.f32.mrf.mxu0
        %v2483 = vpop.f32.mrf.mxu0
        %v2484 = vadd.f32 %v2203, %v2483
        %v2485 = vpop.f32.mrf.mxu0
        %2486 = vmatprep.mubr.bf16.mxu0 0
        %2487 = vmatmul.mubr.bf16.gmra.mxu0 %v2243
        %v2488 = vpop.f32.mrf.mxu0
        %v2489 = vadd.f32 %v2203, %v2488
        %v2490 = vpop.f32.mrf.mxu0
        %v2491 = vpop.f32.mrf.mxu0
        %v2492 = vadd.f32 %v2203, %v2491
        %v2493 = vpop.f32.mrf.mxu0
        %2494 = vmatprep.mubr.bf16.mxu0 0
        %2495 = vmatmul.mubr.bf16.gmra.mxu0 %v2246
        %v2496 = vpop.f32.mrf.mxu0
        %v2497 = vadd.f32 %v2203, %v2496
        %v2498 = vpop.f32.mrf.mxu0
        %v2499 = vpop.f32.mrf.mxu0
        %v2500 = vadd.f32 %v2203, %v2499
        %v2501 = vpop.f32.mrf.mxu0
        %2502 = vmatprep.mubr.bf16.mxu0 0
        %2503 = vmatmul.mubr.bf16.gmra.mxu0 %v2249
        %v2504 = vpop.f32.mrf.mxu0
        %v2505 = vadd.f32 %v2203, %v2504
        %v2506 = vpop.f32.mrf.mxu0
        %v2507 = vpop.f32.mrf.mxu0
        %v2508 = vadd.f32 %v2203, %v2507
        %v2509 = vpop.f32.mrf.mxu0
        %2510 = vmatprep.mubr.bf16.mxu0 0
        %2511 = vmatmul.mubr.bf16.gmra.mxu0 %v2252
        %v2512 = vpop.f32.mrf.mxu0
        %v2513 = vadd.f32 %v2203, %v2512
        %v2514 = vpop.f32.mrf.mxu0
        %v2515 = vpop.f32.mrf.mxu0
        %v2516 = vadd.f32 %v2203, %v2515
        %v2517 = vpop.f32.mrf.mxu0
        %2518 = vmatprep.mubr.bf16.mxu0 0
        %2519 = vmatmul.mubr.bf16.gmra.mxu0 %v2255
        %v2520 = vpop.f32.mrf.mxu0
        %v2521 = vadd.f32 %v2203, %v2520
        %v2522 = vpop.f32.mrf.mxu0
        %v2523 = vpop.f32.mrf.mxu0
        %v2524 = vadd.f32 %v2203, %v2523
        %v2525 = vpop.f32.mrf.mxu0
        %2526 = vmatprep.mubr.bf16.mxu0 0
        %2527 = vmatmul.mubr.bf16.gmra.mxu0 %v2258
        %v2528 = vpop.f32.mrf.mxu0
        %v2529 = vadd.f32 %v2203, %v2528
        %v2530 = vpop.f32.mrf.mxu0
        %v2531 = vpop.f32.mrf.mxu0
        %v2532 = vadd.f32 %v2203, %v2531
        %v2533 = vpop.f32.mrf.mxu0
        %2534 = vmatprep.mubr.bf16.mxu0 0
        %2535 = vmatmul.mubr.bf16.gmra.mxu0 %v2261
        %v2536 = vpop.f32.mrf.mxu0
        %v2537 = vadd.f32 %v2203, %v2536
        %v2538 = vpop.f32.mrf.mxu0
        %v2539 = vpop.f32.mrf.mxu0
        %v2540 = vadd.f32 %v2203, %v2539
        %v2541 = vpop.f32.mrf.mxu0
        %2542 = vmatprep.mubr.bf16.mxu0 0
        %2543 = vmatmul.mubr.bf16.gmra.mxu0 %v2264
        %v2544 = vpop.f32.mrf.mxu0
        %v2545 = vadd.f32 %v2203, %v2544
        %v2546 = vpop.f32.mrf.mxu0
        %v2547 = vpop.f32.mrf.mxu0
        %v2548 = vadd.f32 %v2203, %v2547
        %v2549 = vpop.f32.mrf.mxu0
        %2550 = vmatprep.mubr.bf16.mxu0 0
        %2551 = vmatmul.mubr.bf16.gmra.mxu0 %v2267
        %v2552 = vpop.f32.mrf.mxu0
        %v2553 = vadd.f32 %v2203, %v2552
        %v2554 = vpop.f32.mrf.mxu0
        %v2555 = vpop.f32.mrf.mxu0
        %v2556 = vadd.f32 %v2203, %v2555
        %v2557 = vpop.f32.mrf.mxu0
        %2558 = vmatprep.mubr.bf16.mxu0 0
        %2559 = vmatmul.mubr.bf16.gmra.mxu0 %v2270
        %v2560 = vpop.f32.mrf.mxu0
        %v2561 = vadd.f32 %v2203, %v2560
        %v2562 = vpop.f32.mrf.mxu0
        %v2563 = vpop.f32.mrf.mxu0
        %v2564 = vadd.f32 %v2203, %v2563
        %v2565 = vpop.f32.mrf.mxu0
        %2566 = vmatprep.mubr.bf16.mxu0 0
        %2567 = vmatmul.mubr.bf16.gmra.mxu0 %v2273
        %v2568 = vpop.f32.mrf.mxu0
        %v2569 = vadd.f32 %v2203, %v2568
        %v2570 = vpop.f32.mrf.mxu0
        %v2571 = vpop.f32.mrf.mxu0
        %v2572 = vadd.f32 %v2203, %v2571
        %v2573 = vpop.f32.mrf.mxu0
        %2574 = vmatprep.mubr.bf16.mxu0 0
        %2575 = vmatmul.mubr.bf16.gmra.mxu0 %v2276
        %v2576 = vpop.f32.mrf.mxu0
        %v2577 = vadd.f32 %v2203, %v2576
        %v2578 = vpop.f32.mrf.mxu0
        %v2579 = vpop.f32.mrf.mxu0
        %v2580 = vadd.f32 %v2203, %v2579
        %v2581 = vpop.f32.mrf.mxu0
        %2582 = vmatprep.mubr.bf16.mxu0 0
        %2583 = vmatmul.mubr.bf16.gmra.mxu0 %v2279
        %v2584 = vpop.f32.mrf.mxu0
        %v2585 = vadd.f32 %v2203, %v2584
        %v2586 = vpop.f32.mrf.mxu0
        %v2587 = vpop.f32.mrf.mxu0
        %v2588 = vadd.f32 %v2203, %v2587
        %v2589 = vpop.f32.mrf.mxu0
        %2590 = vmatprep.mubr.bf16.mxu0 0
        %2591 = vmatmul.mubr.bf16.gmra.mxu0 %v2282
        %v2592 = vpop.f32.mrf.mxu0
        %v2593 = vadd.f32 %v2203, %v2592
        %v2594 = vpop.f32.mrf.mxu0
        %v2595 = vpop.f32.mrf.mxu0
        %v2596 = vadd.f32 %v2203, %v2595
        %v2597 = vpop.f32.mrf.mxu0
        %2598 = vmatprep.mubr.bf16.mxu0 0
        %2599 = vmatmul.mubr.bf16.gmra.mxu0 %v2285
        %v2600 = vpop.f32.mrf.mxu0
        %v2601 = vadd.f32 %v2203, %v2600
        %v2602 = vpop.f32.mrf.mxu0
        %v2603 = vpop.f32.mrf.mxu0
        %v2604 = vadd.f32 %v2203, %v2603
        %v2605 = vpop.f32.mrf.mxu0
        %2606 = vmatprep.mubr.bf16.mxu0 0
        %2607 = vmatmul.mubr.bf16.gmra.mxu0 %v2288
        %v2608 = vpop.f32.mrf.mxu0
        %v2609 = vadd.f32 %v2203, %v2608
        %v2610 = vpop.f32.mrf.mxu0
        %v2611 = vpop.f32.mrf.mxu0
        %v2612 = vadd.f32 %v2203, %v2611
        %v2613 = vpop.f32.mrf.mxu0
        %2614 = vmatprep.mubr.bf16.mxu0 0
        %2615 = vmatmul.mubr.bf16.gmra.mxu0 %v2291
        %v2616 = vpop.f32.mrf.mxu0
        %v2617 = vadd.f32 %v2203, %v2616
        %v2618 = vpop.f32.mrf.mxu0
        %v2619 = vpop.f32.mrf.mxu0
        %v2620 = vadd.f32 %v2203, %v2619
        %v2621 = vpop.f32.mrf.mxu0
        %2622 = vmatprep.mubr.bf16.mxu0 0
        %2623 = vmatmul.mubr.bf16.gmra.mxu0 %v2294
        %v2624 = vpop.f32.mrf.mxu0
        %v2625 = vadd.f32 %v2203, %v2624
        %v2626 = vpop.f32.mrf.mxu0
        %v2627 = vpop.f32.mrf.mxu0
        %v2628 = vadd.f32 %v2203, %v2627
        %v2629 = vpop.f32.mrf.mxu0
        %2630 = vmatprep.mubr.bf16.mxu0 0
        %2631 = vmatmul.mubr.bf16.gmra.mxu0 %v2297
        %v2632 = vpop.f32.mrf.mxu0
        %v2633 = vadd.f32 %v2203, %v2632
        %v2634 = vpop.f32.mrf.mxu0
        %v2635 = vpop.f32.mrf.mxu0
        %v2636 = vadd.f32 %v2203, %v2635
        %v2637 = vpop.f32.mrf.mxu0
        %2638 = vmatprep.mubr.bf16.mxu0 0
        %2639 = vmatmul.mubr.bf16.gmra.mxu0 %v2300
        %v2640 = vpop.f32.mrf.mxu0
        %v2641 = vadd.f32 %v2203, %v2640
        %v2642 = vpop.f32.mrf.mxu0
        %v2643 = vpop.f32.mrf.mxu0
        %v2644 = vadd.f32 %v2203, %v2643
        %v2645 = vpop.f32.mrf.mxu0
        %2646 = vmatprep.mubr.bf16.mxu0 0
        %2647 = vmatmul.mubr.bf16.gmra.mxu0 %v2303
        %v2648 = vpop.f32.mrf.mxu0
        %v2649 = vadd.f32 %v2203, %v2648
        %v2650 = vpop.f32.mrf.mxu0
        %v2651 = vpop.f32.mrf.mxu0
        %v2652 = vadd.f32 %v2203, %v2651
        %v2653 = vpop.f32.mrf.mxu0
        %2654 = vmatprep.mubr.bf16.mxu0 0
        %2655 = vmatmul.mubr.bf16.gmra.mxu0 %v2306
        %v2656 = vpop.f32.mrf.mxu0
        %v2657 = vadd.f32 %v2203, %v2656
        %v2658 = vpop.f32.mrf.mxu0
        %v2659 = vpop.f32.mrf.mxu0
        %v2660 = vadd.f32 %v2203, %v2659
        %v2661 = vpop.f32.mrf.mxu0
        %2662 = vmatprep.mubr.bf16.mxu0 0
        %2663 = vmatmul.mubr.bf16.gmra.mxu0 %v2309
        %v2664 = vpop.f32.mrf.mxu0
        %v2665 = vadd.f32 %v2203, %v2664
        %v2666 = vpop.f32.mrf.mxu0
        %v2667 = vpop.f32.mrf.mxu0
        %v2668 = vadd.f32 %v2203, %v2667
        %v2669 = vpop.f32.mrf.mxu0
        %2670 = vmatprep.mubr.bf16.mxu0 0
        %2671 = vmatmul.mubr.bf16.gmra.mxu0 %v2312
        %v2672 = vpop.f32.mrf.mxu0
        %v2673 = vadd.f32 %v2203, %v2672
        %v2674 = vpop.f32.mrf.mxu0
        %v2675 = vpop.f32.mrf.mxu0
        %v2676 = vadd.f32 %v2203, %v2675
        %v2677 = vpop.f32.mrf.mxu0
        %2678 = vmatprep.mubr.bf16.mxu0 0
        %2679 = vmatmul.mubr.bf16.gmra.mxu0 %v2315
        %v2680 = vpop.f32.mrf.mxu0
        %v2681 = vadd.f32 %v2203, %v2680
        %v2682 = vpop.f32.mrf.mxu0
        %v2683 = vpop.f32.mrf.mxu0
        %v2684 = vadd.f32 %v2203, %v2683
        %v2685 = vpop.f32.mrf.mxu0
        %2686 = vmatprep.mubr.bf16.mxu0 0
        %2687 = vmatmul.mubr.bf16.gmra.mxu0 %v2318
        %v2688 = vpop.f32.mrf.mxu0
        %v2689 = vadd.f32 %v2203, %v2688
        %v2690 = vpop.f32.mrf.mxu0
        %v2691 = vpop.f32.mrf.mxu0
        %v2692 = vadd.f32 %v2203, %v2691
        %v2693 = vpop.f32.mrf.mxu0
        %2694 = vmatprep.mubr.bf16.mxu0 0
        %2695 = vmatmul.mubr.bf16.gmra.mxu0 %v2321
        %v2696 = vpop.f32.mrf.mxu0
        %v2697 = vadd.f32 %v2203, %v2696
        %v2698 = vpop.f32.mrf.mxu0
        %v2699 = vpop.f32.mrf.mxu0
        %v2700 = vadd.f32 %v2203, %v2699
        %v2701 = vpop.f32.mrf.mxu0
        %2702 = vmatprep.mubr.bf16.mxu0 0
        %2703 = vmatmul.mubr.bf16.gmra.mxu0 %v2324
        %v2704 = vpop.f32.mrf.mxu0
        %v2705 = vadd.f32 %v2203, %v2704
        %v2706 = vpop.f32.mrf.mxu0
        %v2707 = vpop.f32.mrf.mxu0
        %v2708 = vadd.f32 %v2203, %v2707
        %v2709 = vpop.f32.mrf.mxu0
        %2710 = vmatprep.mubr.bf16.mxu0 0
        %2711 = vmatmul.mubr.bf16.gmra.mxu0 %v2327
        %v2712 = vpop.f32.mrf.mxu0
        %v2713 = vadd.f32 %v2203, %v2712
        %v2714 = vpop.f32.mrf.mxu0
        %v2715 = vpop.f32.mrf.mxu0
        %v2716 = vadd.f32 %v2203, %v2715
        %v2717 = vpop.f32.mrf.mxu0
        %2718 = vmatprep.mubr.bf16.mxu0 0
        %2719 = vmatmul.mubr.bf16.gmra.mxu0 %v2330
        %v2720 = vpop.f32.mrf.mxu0
        %v2721 = vadd.f32 %v2203, %v2720
        %v2722 = vpop.f32.mrf.mxu0
        %v2723 = vpop.f32.mrf.mxu0
        %v2724 = vadd.f32 %v2203, %v2723
        %v2725 = vpop.f32.mrf.mxu0
        %2726 = vmatprep.mubr.bf16.mxu0 0
        %2727 = vmatmul.mubr.bf16.gmra.mxu0 %v2333
        %v2728 = vpop.f32.mrf.mxu0
        %v2729 = vadd.f32 %v2203, %v2728
        %v2730 = vpop.f32.mrf.mxu0
        %v2731 = vpop.f32.mrf.mxu0
        %v2732 = vadd.f32 %v2203, %v2731
        %v2733 = vpop.f32.mrf.mxu0
        %2734 = vmatprep.mubr.bf16.mxu0 0
        %2735 = vmatmul.mubr.bf16.gmra.mxu0 %v2336
        %v2736 = vpop.f32.mrf.mxu0
        %v2737 = vadd.f32 %v2203, %v2736
        %v2738 = vpop.f32.mrf.mxu0
        %v2739 = vpop.f32.mrf.mxu0
        %v2740 = vadd.f32 %v2203, %v2739
        %v2741 = vpop.f32.mrf.mxu0
        %2742 = vmatprep.mubr.bf16.mxu0 0
        %2743 = vmatmul.mubr.bf16.gmra.mxu0 %v2339
        %v2744 = vpop.f32.mrf.mxu0
        %v2745 = vadd.f32 %v2203, %v2744
        %v2746 = vpop.f32.mrf.mxu0
        %v2747 = vpop.f32.mrf.mxu0
        %v2748 = vadd.f32 %v2203, %v2747
        %v2749 = vpop.f32.mrf.mxu0
        %2750 = vmatprep.mubr.bf16.mxu0 0
        %2751 = vmatmul.mubr.bf16.gmra.mxu0 %v2342
        %v2752 = vpop.f32.mrf.mxu0
        %v2753 = vadd.f32 %v2203, %v2752
        %v2754 = vpop.f32.mrf.mxu0
        %v2755 = vpop.f32.mrf.mxu0
        %v2756 = vadd.f32 %v2203, %v2755
        %v2757 = vpop.f32.mrf.mxu0
        %2758 = vmatprep.mubr.bf16.mxu0 0
        %2759 = vmatmul.mubr.bf16.gmra.mxu0 %v2345
        %v2760 = vpop.f32.mrf.mxu0
        %v2761 = vadd.f32 %v2203, %v2760
        %v2762 = vpop.f32.mrf.mxu0
        %v2763 = vpop.f32.mrf.mxu0
        %v2764 = vadd.f32 %v2203, %v2763
        %v2765 = vpop.f32.mrf.mxu0
        %2766 = vmatprep.mubr.bf16.mxu0 0
        %2767 = vmatmul.mubr.bf16.gmra.mxu0 %v2348
        %v2768 = vpop.f32.mrf.mxu0
        %v2769 = vadd.f32 %v2203, %v2768
        %v2770 = vpop.f32.mrf.mxu0
        %v2771 = vpop.f32.mrf.mxu0
        %v2772 = vadd.f32 %v2203, %v2771
        %v2773 = vpop.f32.mrf.mxu0
        %2774 = vmatprep.mubr.bf16.mxu0 0
        %2775 = vmatmul.mubr.bf16.gmra.mxu0 %v2351
        %v2776 = vpop.f32.mrf.mxu0
        %v2777 = vadd.f32 %v2203, %v2776
        %v2778 = vpop.f32.mrf.mxu0
        %v2779 = vpop.f32.mrf.mxu0
        %v2780 = vadd.f32 %v2203, %v2779
        %v2781 = vpop.f32.mrf.mxu0
        %2782 = vmatprep.mubr.bf16.mxu0 0
        %2783 = vmatmul.mubr.bf16.gmra.mxu0 %v2354
        %v2784 = vpop.f32.mrf.mxu0
        %v2785 = vadd.f32 %v2203, %v2784
        %v2786 = vpop.f32.mrf.mxu0
        %v2787 = vpop.f32.mrf.mxu0
        %v2788 = vadd.f32 %v2203, %v2787
        %v2789 = vpop.f32.mrf.mxu0
        %2790 = vmatprep.mubr.bf16.mxu0 0
        %2791 = vmatmul.mubr.bf16.gmra.mxu0 %v2357
        %v2792 = vpop.f32.mrf.mxu0
        %v2793 = vadd.f32 %v2203, %v2792
        %v2794 = vpop.f32.mrf.mxu0
        %v2795 = vpop.f32.mrf.mxu0
        %v2796 = vadd.f32 %v2203, %v2795
        %v2797 = vpop.f32.mrf.mxu0
        %2798 = vmatprep.mubr.bf16.mxu0 0
        %2799 = vmatmul.mubr.bf16.gmra.mxu0 %v2360
        %v2800 = vpop.f32.mrf.mxu0
        %v2801 = vadd.f32 %v2203, %v2800
        %v2802 = vpop.f32.mrf.mxu0
        %v2803 = vpop.f32.mrf.mxu0
        %v2804 = vadd.f32 %v2203, %v2803
        %v2805 = vpop.f32.mrf.mxu0
        %2806 = vmatprep.mubr.bf16.mxu0 0
        %2807 = vmatmul.mubr.bf16.gmra.mxu0 %v2363
        %v2808 = vpop.f32.mrf.mxu0
        %v2809 = vadd.f32 %v2203, %v2808
        %v2810 = vpop.f32.mrf.mxu0
        %v2811 = vpop.f32.mrf.mxu0
        %v2812 = vadd.f32 %v2203, %v2811
        %v2813 = vpop.f32.mrf.mxu0
        %2814 = vmatprep.mubr.bf16.mxu0 0
        %2815 = vmatmul.mubr.bf16.gmra.mxu0 %v2366
        %v2816 = vpop.f32.mrf.mxu0
        %v2817 = vadd.f32 %v2203, %v2816
        %v2818 = vpop.f32.mrf.mxu0
        %v2819 = vpop.f32.mrf.mxu0
        %v2820 = vadd.f32 %v2203, %v2819
        %v2821 = vpop.f32.mrf.mxu0
        %2822 = vmatprep.mubr.bf16.mxu0 0
        %2823 = vmatmul.mubr.bf16.gmra.mxu0 %v2369
        %v2824 = vpop.f32.mrf.mxu0
        %v2825 = vadd.f32 %v2203, %v2824
        %v2826 = vpop.f32.mrf.mxu0
        %v2827 = vpop.f32.mrf.mxu0
        %v2828 = vadd.f32 %v2203, %v2827
        %v2829 = vpop.f32.mrf.mxu0
        %2830 = vmatprep.mubr.bf16.mxu0 0
        %2831 = vmatmul.mubr.bf16.gmra.mxu0 %v2372
        %v2832 = vpop.f32.mrf.mxu0
        %v2833 = vadd.f32 %v2203, %v2832
        %v2834 = vpop.f32.mrf.mxu0
        %v2835 = vpop.f32.mrf.mxu0
        %v2836 = vadd.f32 %v2203, %v2835
        %v2837 = vpop.f32.mrf.mxu0
        %2838 = vmatprep.mubr.bf16.mxu0 0
        %2839 = vmatmul.mubr.bf16.gmra.mxu0 %v2375
        %v2840 = vpop.f32.mrf.mxu0
        %v2841 = vadd.f32 %v2203, %v2840
        %v2842 = vpop.f32.mrf.mxu0
        %v2843 = vpop.f32.mrf.mxu0
        %v2844 = vadd.f32 %v2203, %v2843
        %v2845 = vpop.f32.mrf.mxu0
        %2846 = vmatprep.mubr.bf16.mxu0 0
        %2847 = vmatmul.mubr.bf16.gmra.mxu0 %v2378
        %v2848 = vpop.f32.mrf.mxu0
        %v2849 = vadd.f32 %v2203, %v2848
        %v2850 = vpop.f32.mrf.mxu0
        %v2851 = vpop.f32.mrf.mxu0
        %v2852 = vadd.f32 %v2203, %v2851
        %v2853 = vpop.f32.mrf.mxu0
        %2854 = vmatprep.mubr.bf16.mxu0 0
        %2855 = vmatmul.mubr.bf16.gmra.mxu0 %v2381
        %v2856 = vpop.f32.mrf.mxu0
        %v2857 = vadd.f32 %v2203, %v2856
        %v2858 = vpop.f32.mrf.mxu0
        %v2859 = vpop.f32.mrf.mxu0
        %v2860 = vadd.f32 %v2203, %v2859
        %v2861 = vpop.f32.mrf.mxu0
        %2862 = vmatprep.mubr.bf16.mxu0 0
        %2863 = vmatmul.mubr.bf16.gmra.mxu0 %v2384
        %v2864 = vpop.f32.mrf.mxu0
        %v2865 = vadd.f32 %v2203, %v2864
        %v2866 = vpop.f32.mrf.mxu0
        %v2867 = vpop.f32.mrf.mxu0
        %v2868 = vadd.f32 %v2203, %v2867
        %v2869 = vpop.f32.mrf.mxu0
        %2870 = vmatprep.mubr.bf16.mxu0 0
        %2871 = vmatmul.mubr.bf16.gmra.mxu0 %v2387
        %v2872 = vpop.f32.mrf.mxu0
        %v2873 = vadd.f32 %v2203, %v2872
        %v2874 = vpop.f32.mrf.mxu0
        %v2875 = vpop.f32.mrf.mxu0
        %v2876 = vadd.f32 %v2203, %v2875
        %v2877 = vpop.f32.mrf.mxu0
        %2878 = vmatprep.mubr.bf16.mxu0 0
        %2879 = vmatmul.mubr.bf16.gmra.mxu0 %v2390
        %v2880 = vpop.f32.mrf.mxu0
        %v2881 = vadd.f32 %v2203, %v2880
        %v2882 = vpop.f32.mrf.mxu0
        %v2883 = vpop.f32.mrf.mxu0
        %v2884 = vadd.f32 %v2203, %v2883
        %v2885 = vpop.f32.mrf.mxu0
        %2886 = vmatprep.mubr.bf16.mxu0 0
        %2887 = vmatmul.mubr.bf16.gmra.mxu0 %v2393
        %v2888 = vpop.f32.mrf.mxu0
        %v2889 = vadd.f32 %v2203, %v2888
        %v2890 = vpop.f32.mrf.mxu0
        %v2891 = vpop.f32.mrf.mxu0
        %v2892 = vadd.f32 %v2203, %v2891
        %v2893 = vpop.f32.mrf.mxu0
        %2894 = vmatprep.mubr.bf16.mxu0 0
        %2895 = vmatmul.mubr.bf16.gmra.mxu0 %v2396
        %v2896 = vpop.f32.mrf.mxu0
        %v2897 = vadd.f32 %v2203, %v2896
        %v2898 = vpop.f32.mrf.mxu0
        %v2899 = vpop.f32.mrf.mxu0
        %v2900 = vadd.f32 %v2203, %v2899
        %v2901 = vpop.f32.mrf.mxu0
        %2902 = vmatprep.mubr.bf16.mxu0 0
        %2903 = vmatmul.mubr.bf16.gmra.mxu0 %v2399
        %v2904 = vpop.f32.mrf.mxu0
        %v2905 = vadd.f32 %v2203, %v2904
        %v2906 = vpop.f32.mrf.mxu0
        %v2907 = vpop.f32.mrf.mxu0
        %v2908 = vadd.f32 %v2203, %v2907
        %v2909 = vpop.f32.mrf.mxu0
        %2910 = vmatprep.mubr.bf16.mxu0 0
        %2911 = vmatmul.mubr.bf16.gmra.mxu0 %v2402
        %v2912 = vpop.f32.mrf.mxu0
        %v2913 = vadd.f32 %v2203, %v2912
        %v2914 = vpop.f32.mrf.mxu0
        %v2915 = vpop.f32.mrf.mxu0
        %v2916 = vadd.f32 %v2203, %v2915
        %v2917 = vpop.f32.mrf.mxu0
        %2918 = vmatprep.mubr.bf16.mxu0 0
        %2919 = vmatmul.mubr.bf16.gmra.mxu0 %v2405
        %v2920 = vpop.f32.mrf.mxu0
        %v2921 = vadd.f32 %v2203, %v2920
        %v2922 = vpop.f32.mrf.mxu0
        %v2923 = vpop.f32.mrf.mxu0
        %v2924 = vadd.f32 %v2203, %v2923
        %v2925 = vpop.f32.mrf.mxu0
        %2926 = vmatprep.mubr.bf16.mxu0 0
        %2927 = vmatmul.mubr.bf16.gmra.mxu0 %v2408
        %v2928 = vpop.f32.mrf.mxu0
        %v2929 = vadd.f32 %v2203, %v2928
        %v2930 = vpop.f32.mrf.mxu0
        %v2931 = vpop.f32.mrf.mxu0
        %v2932 = vadd.f32 %v2203, %v2931
        %v2933 = vpop.f32.mrf.mxu0
        %2934 = vmatprep.mubr.bf16.mxu0 0
        %2935 = vmatmul.mubr.bf16.gmra.mxu0 %v2411
        %v2936 = vpop.f32.mrf.mxu0
        %v2937 = vadd.f32 %v2203, %v2936
        %v2938 = vpop.f32.mrf.mxu0
        %v2939 = vpop.f32.mrf.mxu0
        %v2940 = vadd.f32 %v2203, %v2939
        %v2941 = vpop.f32.mrf.mxu0
        %2942 = vmatprep.mubr.bf16.mxu0 0
        %2943 = vmatmul.mubr.bf16.gmra.mxu0 %v2414
        %v2944 = vpop.f32.mrf.mxu0
        %v2945 = vadd.f32 %v2203, %v2944
        %v2946 = vpop.f32.mrf.mxu0
        %v2947 = vpop.f32.mrf.mxu0
        %v2948 = vadd.f32 %v2203, %v2947
        %v2949 = vpop.f32.mrf.mxu0
        %2950 = vmatprep.mubr.bf16.mxu0 0
        %2951 = vmatmul.mubr.bf16.gmra.mxu0 %v2417
        %v2952 = vpop.f32.mrf.mxu0
        %v2953 = vadd.f32 %v2203, %v2952
        %v2954 = vpop.f32.mrf.mxu0
        %v2955 = vpop.f32.mrf.mxu0
        %v2956 = vadd.f32 %v2203, %v2955
        %v2957 = vpop.f32.mrf.mxu0
        %2958 = vmatprep.mubr.bf16.mxu0 0
        %2959 = vmatmul.mubr.bf16.gmra.mxu0 %v2420
        %v2960 = vpop.f32.mrf.mxu0
        %v2961 = vadd.f32 %v2203, %v2960
        %v2962 = vpop.f32.mrf.mxu0
        %v2963 = vpop.f32.mrf.mxu0
        %v2964 = vadd.f32 %v2203, %v2963
        %v2965 = vpop.f32.mrf.mxu0
        %2966 = vdwg.mxu0
        %v2967 = vmax.f32 %v2457, 0.0
        %v2968 = vmax.f32 %v2460, 0.0
        %v2969 = vmax.f32 %v2465, 0.0
        %v2970 = vmax.f32 %v2468, 0.0
        %v2971 = vmax.f32 %v2473, 0.0
        %v2972 = vmax.f32 %v2476, 0.0
        %v2973 = vmax.f32 %v2481, 0.0
        %v2974 = vmax.f32 %v2484, 0.0
        %v2975 = vmax.f32 %v2489, 0.0
        %v2976 = vmax.f32 %v2492, 0.0
        %v2977 = vmax.f32 %v2497, 0.0
        %v2978 = vmax.f32 %v2500, 0.0
        %v2979 = vmax.f32 %v2505, 0.0
        %v2980 = vmax.f32 %v2508, 0.0
        %v2981 = vmax.f32 %v2513, 0.0
        %v2982 = vmax.f32 %v2516, 0.0
        %v2983 = vmax.f32 %v2521, 0.0
        %v2984 = vmax.f32 %v2524, 0.0
        %v2985 = vmax.f32 %v2529, 0.0
        %v2986 = vmax.f32 %v2532, 0.0
        %v2987 = vmax.f32 %v2537, 0.0
        %v2988 = vmax.f32 %v2540, 0.0
        %v2989 = vmax.f32 %v2545, 0.0
        %v2990 = vmax.f32 %v2548, 0.0
        %v2991 = vmax.f32 %v2553, 0.0
        %v2992 = vmax.f32 %v2556, 0.0
        %v2993 = vmax.f32 %v2561, 0.0
        %v2994 = vmax.f32 %v2564, 0.0
        %v2995 = vmax.f32 %v2569, 0.0
        %v2996 = vmax.f32 %v2572, 0.0
        %v2997 = vmax.f32 %v2577, 0.0
        %v2998 = vmax.f32 %v2580, 0.0
        %v2999 = vmax.f32 %v2585, 0.0
        %v3000 = vmax.f32 %v2588, 0.0
        %v3001 = vmax.f32 %v2593, 0.0
        %v3002 = vmax.f32 %v2596, 0.0
        %v3003 = vmax.f32 %v2601, 0.0
        %v3004 = vmax.f32 %v2604, 0.0
        %v3005 = vmax.f32 %v2609, 0.0
        %v3006 = vmax.f32 %v2612, 0.0
        %v3007 = vmax.f32 %v2617, 0.0
        %v3008 = vmax.f32 %v2620, 0.0
        %v3009 = vmax.f32 %v2625, 0.0
        %v3010 = vmax.f32 %v2628, 0.0
        %v3011 = vmax.f32 %v2633, 0.0
        %v3012 = vmax.f32 %v2636, 0.0
        %v3013 = vmax.f32 %v2641, 0.0
        %v3014 = vmax.f32 %v2644, 0.0
        %v3015 = vmax.f32 %v2649, 0.0
        %v3016 = vmax.f32 %v2652, 0.0
        %v3017 = vmax.f32 %v2657, 0.0
        %v3018 = vmax.f32 %v2660, 0.0
        %v3019 = vmax.f32 %v2665, 0.0
        %v3020 = vmax.f32 %v2668, 0.0
        %v3021 = vmax.f32 %v2673, 0.0
        %v3022 = vmax.f32 %v2676, 0.0
        %v3023 = vmax.f32 %v2681, 0.0
        %v3024 = vmax.f32 %v2684, 0.0
        %v3025 = vmax.f32 %v2689, 0.0
        %v3026 = vmax.f32 %v2692, 0.0
        %v3027 = vmax.f32 %v2697, 0.0
        %v3028 = vmax.f32 %v2700, 0.0
        %v3029 = vmax.f32 %v2705, 0.0
        %v3030 = vmax.f32 %v2708, 0.0
        %v3031 = vmax.f32 %v2713, 0.0
        %v3032 = vmax.f32 %v2716, 0.0
        %v3033 = vmax.f32 %v2721, 0.0
        %v3034 = vmax.f32 %v2724, 0.0
        %v3035 = vmax.f32 %v2729, 0.0
        %v3036 = vmax.f32 %v2732, 0.0
        %v3037 = vmax.f32 %v2737, 0.0
        %v3038 = vmax.f32 %v2740, 0.0
        %v3039 = vmax.f32 %v2745, 0.0
        %v3040 = vmax.f32 %v2748, 0.0
        %v3041 = vmax.f32 %v2753, 0.0
        %v3042 = vmax.f32 %v2756, 0.0
        %v3043 = vmax.f32 %v2761, 0.0
        %v3044 = vmax.f32 %v2764, 0.0
        %v3045 = vmax.f32 %v2769, 0.0
        %v3046 = vmax.f32 %v2772, 0.0
        %v3047 = vmax.f32 %v2777, 0.0
        %v3048 = vmax.f32 %v2780, 0.0
        %v3049 = vmax.f32 %v2785, 0.0
        %v3050 = vmax.f32 %v2788, 0.0
        %v3051 = vmax.f32 %v2793, 0.0
        %v3052 = vmax.f32 %v2796, 0.0
        %v3053 = vmax.f32 %v2801, 0.0
        %v3054 = vmax.f32 %v2804, 0.0
        %v3055 = vmax.f32 %v2809, 0.0
        %v3056 = vmax.f32 %v2812, 0.0
        %v3057 = vmax.f32 %v2817, 0.0
        %v3058 = vmax.f32 %v2820, 0.0
        %v3059 = vmax.f32 %v2825, 0.0
        %v3060 = vmax.f32 %v2828, 0.0
        %v3061 = vmax.f32 %v2833, 0.0
        %v3062 = vmax.f32 %v2836, 0.0
        %v3063 = vmax.f32 %v2841, 0.0
        %v3064 = vmax.f32 %v2844, 0.0
        %v3065 = vmax.f32 %v2849, 0.0
        %v3066 = vmax.f32 %v2852, 0.0
        %v3067 = vmax.f32 %v2857, 0.0
        %v3068 = vmax.f32 %v2860, 0.0
        %v3069 = vmax.f32 %v2865, 0.0
        %v3070 = vmax.f32 %v2868, 0.0
        %v3071 = vmax.f32 %v2873, 0.0
        %v3072 = vmax.f32 %v2876, 0.0
        %v3073 = vmax.f32 %v2881, 0.0
        %v3074 = vmax.f32 %v2884, 0.0
        %v3075 = vmax.f32 %v2889, 0.0
        %v3076 = vmax.f32 %v2892, 0.0
        %v3077 = vmax.f32 %v2897, 0.0
        %v3078 = vmax.f32 %v2900, 0.0
        %v3079 = vmax.f32 %v2905, 0.0
        %v3080 = vmax.f32 %v2908, 0.0
        %v3081 = vmax.f32 %v2913, 0.0
        %v3082 = vmax.f32 %v2916, 0.0
        %v3083 = vmax.f32 %v2921, 0.0
        %v3084 = vmax.f32 %v2924, 0.0
        %v3085 = vmax.f32 %v2929, 0.0
        %v3086 = vmax.f32 %v2932, 0.0
        %v3087 = vmax.f32 %v2937, 0.0
        %v3088 = vmax.f32 %v2940, 0.0
        %v3089 = vmax.f32 %v2945, 0.0
        %v3090 = vmax.f32 %v2948, 0.0
        %v3091 = vmax.f32 %v2953, 0.0
        %v3092 = vmax.f32 %v2956, 0.0
        %v3093 = vmax.f32 %v2961, 0.0
        %v3094 = vmax.f32 %v2964, 0.0
        %v3095 = vpack.c.bf16 %v2968, %v2967
        %v3096 = vpack.c.bf16 %v2970, %v2969
        %v3097 = vpack.c.bf16 %v2972, %v2971
        %v3098 = vpack.c.bf16 %v2974, %v2973
        %v3099 = vpack.c.bf16 %v2976, %v2975
        %v3100 = vpack.c.bf16 %v2978, %v2977
        %v3101 = vpack.c.bf16 %v2980, %v2979
        %v3102 = vpack.c.bf16 %v2982, %v2981
        %v3103 = vpack.c.bf16 %v2984, %v2983
        %v3104 = vpack.c.bf16 %v2986, %v2985
        %v3105 = vpack.c.bf16 %v2988, %v2987
        %v3106 = vpack.c.bf16 %v2990, %v2989
        %v3107 = vpack.c.bf16 %v2992, %v2991
        %v3108 = vpack.c.bf16 %v2994, %v2993
        %v3109 = vpack.c.bf16 %v2996, %v2995
        %v3110 = vpack.c.bf16 %v2998, %v2997
        %v3111 = vpack.c.bf16 %v3000, %v2999
        %v3112 = vpack.c.bf16 %v3002, %v3001
        %v3113 = vpack.c.bf16 %v3004, %v3003
        %v3114 = vpack.c.bf16 %v3006, %v3005
        %v3115 = vpack.c.bf16 %v3008, %v3007
        %v3116 = vpack.c.bf16 %v3010, %v3009
        %v3117 = vpack.c.bf16 %v3012, %v3011
        %v3118 = vpack.c.bf16 %v3014, %v3013
        %v3119 = vpack.c.bf16 %v3016, %v3015
        %v3120 = vpack.c.bf16 %v3018, %v3017
        %v3121 = vpack.c.bf16 %v3020, %v3019
        %v3122 = vpack.c.bf16 %v3022, %v3021
        %v3123 = vpack.c.bf16 %v3024, %v3023
        %v3124 = vpack.c.bf16 %v3026, %v3025
        %v3125 = vpack.c.bf16 %v3028, %v3027
        %v3126 = vpack.c.bf16 %v3030, %v3029
        %v3127 = vpack.c.bf16 %v3032, %v3031
        %v3128 = vpack.c.bf16 %v3034, %v3033
        %v3129 = vpack.c.bf16 %v3036, %v3035
        %v3130 = vpack.c.bf16 %v3038, %v3037
        %v3131 = vpack.c.bf16 %v3040, %v3039
        %v3132 = vpack.c.bf16 %v3042, %v3041
        %v3133 = vpack.c.bf16 %v3044, %v3043
        %v3134 = vpack.c.bf16 %v3046, %v3045
        %v3135 = vpack.c.bf16 %v3048, %v3047
        %v3136 = vpack.c.bf16 %v3050, %v3049
        %v3137 = vpack.c.bf16 %v3052, %v3051
        %v3138 = vpack.c.bf16 %v3054, %v3053
        %v3139 = vpack.c.bf16 %v3056, %v3055
        %v3140 = vpack.c.bf16 %v3058, %v3057
        %v3141 = vpack.c.bf16 %v3060, %v3059
        %v3142 = vpack.c.bf16 %v3062, %v3061
        %v3143 = vpack.c.bf16 %v3064, %v3063
        %v3144 = vpack.c.bf16 %v3066, %v3065
        %v3145 = vpack.c.bf16 %v3068, %v3067
        %v3146 = vpack.c.bf16 %v3070, %v3069
        %v3147 = vpack.c.bf16 %v3072, %v3071
        %v3148 = vpack.c.bf16 %v3074, %v3073
        %v3149 = vpack.c.bf16 %v3076, %v3075
        %v3150 = vpack.c.bf16 %v3078, %v3077
        %v3151 = vpack.c.bf16 %v3080, %v3079
        %v3152 = vpack.c.bf16 %v3082, %v3081
        %v3153 = vpack.c.bf16 %v3084, %v3083
        %v3154 = vpack.c.bf16 %v3086, %v3085
        %v3155 = vpack.c.bf16 %v3088, %v3087
        %v3156 = vpack.c.bf16 %v3090, %v3089
        %v3157 = vpack.c.bf16 %v3092, %v3091
        %v3158 = vpack.c.bf16 %v3094, %v3093
        %v3159 = vld [vmem:[%s6] sm:$0xff]
        %v3160 = vld [vmem:[%s6 + $0x8] sm:$0xff]
        %v3161 = vld [vmem:[%s6 + $0x20] sm:$0xff]
        %v3162 = vld [vmem:[%s6 + $0x28] sm:$0xff]
        %v3163 = vld [vmem:[%s6 + $0x40] sm:$0xff]
        %v3164 = vld [vmem:[%s6 + $0x48] sm:$0xff]
        %v3165 = vld [vmem:[%s6 + $0x60] sm:$0xff]
        %v3166 = vld [vmem:[%s6 + $0x68] sm:$0xff]
        %v3167 = vld [vmem:[%s6 + $0x80] sm:$0xff]
        %v3168 = vld [vmem:[%s6 + $0x88] sm:$0xff]
        %v3169 = vld [vmem:[%s6 + $0xa0] sm:$0xff]
        %v3170 = vld [vmem:[%s6 + $0xa8] sm:$0xff]
        %v3171 = vld [vmem:[%s6 + $0xc0] sm:$0xff]
        %v3172 = vld [vmem:[%s6 + $0xc8] sm:$0xff]
        %v3173 = vld [vmem:[%s6 + $0xe0] sm:$0xff]
        %v3174 = vld [vmem:[%s6 + $0xe8] sm:$0xff]
        %v3175 = vld [vmem:[%s6 + $0x100] sm:$0xff]
        %v3176 = vld [vmem:[%s6 + $0x108] sm:$0xff]
        %v3177 = vld [vmem:[%s6 + $0x120] sm:$0xff]
        %v3178 = vld [vmem:[%s6 + $0x128] sm:$0xff]
        %v3179 = vld [vmem:[%s6 + $0x140] sm:$0xff]
        %v3180 = vld [vmem:[%s6 + $0x148] sm:$0xff]
        %v3181 = vld [vmem:[%s6 + $0x160] sm:$0xff]
        %v3182 = vld [vmem:[%s6 + $0x168] sm:$0xff]
        %v3183 = vld [vmem:[%s6 + $0x180] sm:$0xff]
        %v3184 = vld [vmem:[%s6 + $0x188] sm:$0xff]
        %v3185 = vld [vmem:[%s6 + $0x1a0] sm:$0xff]
        %v3186 = vld [vmem:[%s6 + $0x1a8] sm:$0xff]
        %v3187 = vld [vmem:[%s6 + $0x1c0] sm:$0xff]
        %v3188 = vld [vmem:[%s6 + $0x1c8] sm:$0xff]
        %v3189 = vld [vmem:[%s6 + $0x1e0] sm:$0xff]
        %v3190 = vld [vmem:[%s6 + $0x1e8] sm:$0xff]
        %v3223 = vunpack.c.l.b16 %v3159
        %v3224 = vunpack.c.h.b16 %v3159
        %v3225 = vunpack.c.l.b16 %v3160
        %v3226 = vunpack.c.h.b16 %v3160
        %v3227 = vunpack.c.l.b16 %v3161
        %v3228 = vunpack.c.h.b16 %v3161
        %v3229 = vunpack.c.l.b16 %v3162
        %v3230 = vunpack.c.h.b16 %v3162
        %v3231 = vunpack.c.l.b16 %v3163
        %v3232 = vunpack.c.h.b16 %v3163
        %v3233 = vunpack.c.l.b16 %v3164
        %v3234 = vunpack.c.h.b16 %v3164
        %v3235 = vunpack.c.l.b16 %v3165
        %v3236 = vunpack.c.h.b16 %v3165
        %v3237 = vunpack.c.l.b16 %v3166
        %v3238 = vunpack.c.h.b16 %v3166
        %v3239 = vunpack.c.l.b16 %v3167
        %v3240 = vunpack.c.h.b16 %v3167
        %v3241 = vunpack.c.l.b16 %v3168
        %v3242 = vunpack.c.h.b16 %v3168
        %v3243 = vunpack.c.l.b16 %v3169
        %v3244 = vunpack.c.h.b16 %v3169
        %v3245 = vunpack.c.l.b16 %v3170
        %v3246 = vunpack.c.h.b16 %v3170
        %v3247 = vunpack.c.l.b16 %v3171
        %v3248 = vunpack.c.h.b16 %v3171
        %v3249 = vunpack.c.l.b16 %v3172
        %v3250 = vunpack.c.h.b16 %v3172
        %v3251 = vunpack.c.l.b16 %v3173
        %v3252 = vunpack.c.h.b16 %v3173
        %v3253 = vunpack.c.l.b16 %v3174
        %v3254 = vunpack.c.h.b16 %v3174
        %v3255 = vunpack.c.l.b16 %v3175
        %v3256 = vunpack.c.h.b16 %v3175
        %v3257 = vunpack.c.l.b16 %v3176
        %v3258 = vunpack.c.h.b16 %v3176
        %v3259 = vunpack.c.l.b16 %v3177
        %v3260 = vunpack.c.h.b16 %v3177
        %v3261 = vunpack.c.l.b16 %v3178
        %v3262 = vunpack.c.h.b16 %v3178
        %v3263 = vunpack.c.l.b16 %v3179
        %v3264 = vunpack.c.h.b16 %v3179
        %v3265 = vunpack.c.l.b16 %v3180
        %v3266 = vunpack.c.h.b16 %v3180
        %v3267 = vunpack.c.l.b16 %v3181
        %v3268 = vunpack.c.h.b16 %v3181
        %v3269 = vunpack.c.l.b16 %v3182
        %v3270 = vunpack.c.h.b16 %v3182
        %v3271 = vunpack.c.l.b16 %v3183
        %v3272 = vunpack.c.h.b16 %v3183
        %v3273 = vunpack.c.l.b16 %v3184
        %v3274 = vunpack.c.h.b16 %v3184
        %v3275 = vunpack.c.l.b16 %v3185
        %v3276 = vunpack.c.h.b16 %v3185
        %v3277 = vunpack.c.l.b16 %v3186
        %v3278 = vunpack.c.h.b16 %v3186
        %v3279 = vunpack.c.l.b16 %v3187
        %v3280 = vunpack.c.h.b16 %v3187
        %v3281 = vunpack.c.l.b16 %v3188
        %v3282 = vunpack.c.h.b16 %v3188
        %v3283 = vunpack.c.l.b16 %v3189
        %v3284 = vunpack.c.h.b16 %v3189
        %v3285 = vunpack.c.l.b16 %v3190
        %v3286 = vunpack.c.h.b16 %v3190
        %v3287 = vpack.c.b16 %v3227, %v3223
        %v3288 = vpack.c.b16 %v3228, %v3224
        %v3289 = vpack.c.b16 %v3229, %v3225
        %v3290 = vpack.c.b16 %v3230, %v3226
        %v3291 = vpack.c.b16 %v3235, %v3231
        %v3292 = vpack.c.b16 %v3236, %v3232
        %v3293 = vpack.c.b16 %v3237, %v3233
        %v3294 = vpack.c.b16 %v3238, %v3234
        %v3295 = vpack.c.b16 %v3243, %v3239
        %v3296 = vpack.c.b16 %v3244, %v3240
        %v3297 = vpack.c.b16 %v3245, %v3241
        %v3298 = vpack.c.b16 %v3246, %v3242
        %v3299 = vpack.c.b16 %v3251, %v3247
        %v3300 = vpack.c.b16 %v3252, %v3248
        %v3301 = vpack.c.b16 %v3253, %v3249
        %v3302 = vpack.c.b16 %v3254, %v3250
        %v3303 = vpack.c.b16 %v3259, %v3255
        %v3304 = vpack.c.b16 %v3260, %v3256
        %v3305 = vpack.c.b16 %v3261, %v3257
        %v3306 = vpack.c.b16 %v3262, %v3258
        %v3307 = vpack.c.b16 %v3267, %v3263
        %v3308 = vpack.c.b16 %v3268, %v3264
        %v3309 = vpack.c.b16 %v3269, %v3265
        %v3310 = vpack.c.b16 %v3270, %v3266
        %v3311 = vpack.c.b16 %v3275, %v3271
        %v3312 = vpack.c.b16 %v3276, %v3272
        %v3313 = vpack.c.b16 %v3277, %v3273
        %v3314 = vpack.c.b16 %v3278, %v3274
        %v3315 = vpack.c.b16 %v3283, %v3279
        %v3316 = vpack.c.b16 %v3284, %v3280
        %v3317 = vpack.c.b16 %v3285, %v3281
        %v3318 = vpack.c.b16 %v3286, %v3282
        %3351 = vmatprep.subr.bf16.mxu0 %v3316
        %3352 = vmatpush1.bf16.msra.mxu0 %v3315
        %3353 = vmatprep.subr.bf16.mxu0 %v3312
        %3354 = vmatpush1.bf16.msra.mxu0 %v3311
        %3355 = vmatprep.subr.bf16.mxu0 %v3308
        %3356 = vmatpush1.bf16.msra.mxu0 %v3307
        %3357 = vmatprep.subr.bf16.mxu0 %v3304
        %3358 = vmatpush1.bf16.msra.mxu0 %v3303
        %3359 = vmatprep.subr.bf16.mxu0 %v3300
        %3360 = vmatpush1.bf16.msra.mxu0 %v3299
        %3361 = vmatprep.subr.bf16.mxu0 %v3296
        %3362 = vmatpush1.bf16.msra.mxu0 %v3295
        %3363 = vmatprep.subr.bf16.mxu0 %v3292
        %3364 = vmatpush1.bf16.msra.mxu0 %v3291
        %3365 = vmatprep.subr.bf16.mxu0 %v3288
        %3366 = vmatpush1.bf16.msra.mxu0 %v3287
        %3367 = vmatprep.subr.bf16.mxu0 0
        %3368 = vmatpush2.bf16.msra.mxu0 0
        %3369 = vmatprep.subr.bf16.mxu0 0
        %3370 = vmatpush2.bf16.msra.mxu0 0
        %3371 = vmatprep.subr.bf16.mxu0 0
        %3372 = vmatpush2.bf16.msra.mxu0 0
        %3373 = vmatprep.subr.bf16.mxu0 0
        %3374 = vmatpush2.bf16.msra.mxu0 0
        %3375 = vmatprep.subr.bf16.mxu0 0
        %3376 = vmatpush2.bf16.msra.mxu0 0
        %3377 = vmatprep.subr.bf16.mxu0 0
        %3378 = vmatpush2.bf16.msra.mxu0 0
        %3379 = vmatprep.subr.bf16.mxu0 0
        %3380 = vmatpush2.bf16.msra.mxu0 0
        %3381 = vmatprep.subr.bf16.mxu0 0
        %3382 = vmatpush2.bf16.msra.mxu0 0
        %3383 = vmatprep.mubr.bf16.mxu0 0
        %3384 = vmatmul.mubr.bf16.gmra.mxu0 %v3095
        %v3385 = vpop.f32.mrf.mxu0
        %v3386 = vadd.f32 0.0, %v3385
        %v3387 = vpop.f32.mrf.mxu0
        %v3388 = vadd.f32 0.0, %v3387
        %v3389 = vpop.f32.mrf.mxu0
        %v3390 = vadd.f32 0.0, %v3389
        %v3391 = vpop.f32.mrf.mxu0
        %v3392 = vadd.f32 0.0, %v3391
        %3393 = vmatprep.mubr.bf16.mxu0 0
        %3394 = vmatmul.mubr.bf16.gmra.mxu0 %v3096
        %v3395 = vpop.f32.mrf.mxu0
        %v3396 = vadd.f32 0.0, %v3395
        %v3397 = vpop.f32.mrf.mxu0
        %v3398 = vadd.f32 0.0, %v3397
        %v3399 = vpop.f32.mrf.mxu0
        %v3400 = vadd.f32 0.0, %v3399
        %v3401 = vpop.f32.mrf.mxu0
        %v3402 = vadd.f32 0.0, %v3401
        %3403 = vmatprep.mubr.bf16.mxu0 0
        %3404 = vmatmul.mubr.bf16.gmra.mxu0 %v3097
        %v3405 = vpop.f32.mrf.mxu0
        %v3406 = vadd.f32 0.0, %v3405
        %v3407 = vpop.f32.mrf.mxu0
        %v3408 = vadd.f32 0.0, %v3407
        %v3409 = vpop.f32.mrf.mxu0
        %v3410 = vadd.f32 0.0, %v3409
        %v3411 = vpop.f32.mrf.mxu0
        %v3412 = vadd.f32 0.0, %v3411
        %3413 = vmatprep.mubr.bf16.mxu0 0
        %3414 = vmatmul.mubr.bf16.gmra.mxu0 %v3098
        %v3415 = vpop.f32.mrf.mxu0
        %v3416 = vadd.f32 0.0, %v3415
        %v3417 = vpop.f32.mrf.mxu0
        %v3418 = vadd.f32 0.0, %v3417
        %v3419 = vpop.f32.mrf.mxu0
        %v3420 = vadd.f32 0.0, %v3419
        %v3421 = vpop.f32.mrf.mxu0
        %v3422 = vadd.f32 0.0, %v3421
        %3423 = vmatprep.mubr.bf16.mxu0 0
        %3424 = vmatmul.mubr.bf16.gmra.mxu0 %v3099
        %v3425 = vpop.f32.mrf.mxu0
        %v3426 = vadd.f32 0.0, %v3425
        %v3427 = vpop.f32.mrf.mxu0
        %v3428 = vadd.f32 0.0, %v3427
        %v3429 = vpop.f32.mrf.mxu0
        %v3430 = vadd.f32 0.0, %v3429
        %v3431 = vpop.f32.mrf.mxu0
        %v3432 = vadd.f32 0.0, %v3431
        %3433 = vmatprep.mubr.bf16.mxu0 0
        %3434 = vmatmul.mubr.bf16.gmra.mxu0 %v3100
        %v3435 = vpop.f32.mrf.mxu0
        %v3436 = vadd.f32 0.0, %v3435
        %v3437 = vpop.f32.mrf.mxu0
        %v3438 = vadd.f32 0.0, %v3437
        %v3439 = vpop.f32.mrf.mxu0
        %v3440 = vadd.f32 0.0, %v3439
        %v3441 = vpop.f32.mrf.mxu0
        %v3442 = vadd.f32 0.0, %v3441
        %3443 = vmatprep.mubr.bf16.mxu0 0
        %3444 = vmatmul.mubr.bf16.gmra.mxu0 %v3101
        %v3445 = vpop.f32.mrf.mxu0
        %v3446 = vadd.f32 0.0, %v3445
        %v3447 = vpop.f32.mrf.mxu0
        %v3448 = vadd.f32 0.0, %v3447
        %v3449 = vpop.f32.mrf.mxu0
        %v3450 = vadd.f32 0.0, %v3449
        %v3451 = vpop.f32.mrf.mxu0
        %v3452 = vadd.f32 0.0, %v3451
        %3453 = vmatprep.mubr.bf16.mxu0 0
        %3454 = vmatmul.mubr.bf16.gmra.mxu0 %v3102
        %v3455 = vpop.f32.mrf.mxu0
        %v3456 = vadd.f32 0.0, %v3455
        %v3457 = vpop.f32.mrf.mxu0
        %v3458 = vadd.f32 0.0, %v3457
        %v3459 = vpop.f32.mrf.mxu0
        %v3460 = vadd.f32 0.0, %v3459
        %v3461 = vpop.f32.mrf.mxu0
        %v3462 = vadd.f32 0.0, %v3461
        %3463 = vmatprep.mubr.bf16.mxu0 0
        %3464 = vmatmul.mubr.bf16.gmra.mxu0 %v3103
        %v3465 = vpop.f32.mrf.mxu0
        %v3466 = vadd.f32 0.0, %v3465
        %v3467 = vpop.f32.mrf.mxu0
        %v3468 = vadd.f32 0.0, %v3467
        %v3469 = vpop.f32.mrf.mxu0
        %v3470 = vadd.f32 0.0, %v3469
        %v3471 = vpop.f32.mrf.mxu0
        %v3472 = vadd.f32 0.0, %v3471
        %3473 = vmatprep.mubr.bf16.mxu0 0
        %3474 = vmatmul.mubr.bf16.gmra.mxu0 %v3104
        %v3475 = vpop.f32.mrf.mxu0
        %v3476 = vadd.f32 0.0, %v3475
        %v3477 = vpop.f32.mrf.mxu0
        %v3478 = vadd.f32 0.0, %v3477
        %v3479 = vpop.f32.mrf.mxu0
        %v3480 = vadd.f32 0.0, %v3479
        %v3481 = vpop.f32.mrf.mxu0
        %v3482 = vadd.f32 0.0, %v3481
        %3483 = vmatprep.mubr.bf16.mxu0 0
        %3484 = vmatmul.mubr.bf16.gmra.mxu0 %v3105
        %v3485 = vpop.f32.mrf.mxu0
        %v3486 = vadd.f32 0.0, %v3485
        %v3487 = vpop.f32.mrf.mxu0
        %v3488 = vadd.f32 0.0, %v3487
        %v3489 = vpop.f32.mrf.mxu0
        %v3490 = vadd.f32 0.0, %v3489
        %v3491 = vpop.f32.mrf.mxu0
        %v3492 = vadd.f32 0.0, %v3491
        %3493 = vmatprep.mubr.bf16.mxu0 0
        %3494 = vmatmul.mubr.bf16.gmra.mxu0 %v3106
        %v3495 = vpop.f32.mrf.mxu0
        %v3496 = vadd.f32 0.0, %v3495
        %v3497 = vpop.f32.mrf.mxu0
        %v3498 = vadd.f32 0.0, %v3497
        %v3499 = vpop.f32.mrf.mxu0
        %v3500 = vadd.f32 0.0, %v3499
        %v3501 = vpop.f32.mrf.mxu0
        %v3502 = vadd.f32 0.0, %v3501
        %3503 = vmatprep.mubr.bf16.mxu0 0
        %3504 = vmatmul.mubr.bf16.gmra.mxu0 %v3107
        %v3505 = vpop.f32.mrf.mxu0
        %v3506 = vadd.f32 0.0, %v3505
        %v3507 = vpop.f32.mrf.mxu0
        %v3508 = vadd.f32 0.0, %v3507
        %v3509 = vpop.f32.mrf.mxu0
        %v3510 = vadd.f32 0.0, %v3509
        %v3511 = vpop.f32.mrf.mxu0
        %v3512 = vadd.f32 0.0, %v3511
        %3513 = vmatprep.mubr.bf16.mxu0 0
        %3514 = vmatmul.mubr.bf16.gmra.mxu0 %v3108
        %v3515 = vpop.f32.mrf.mxu0
        %v3516 = vadd.f32 0.0, %v3515
        %v3517 = vpop.f32.mrf.mxu0
        %v3518 = vadd.f32 0.0, %v3517
        %v3519 = vpop.f32.mrf.mxu0
        %v3520 = vadd.f32 0.0, %v3519
        %v3521 = vpop.f32.mrf.mxu0
        %v3522 = vadd.f32 0.0, %v3521
        %3523 = vmatprep.mubr.bf16.mxu0 0
        %3524 = vmatmul.mubr.bf16.gmra.mxu0 %v3109
        %v3525 = vpop.f32.mrf.mxu0
        %v3526 = vadd.f32 0.0, %v3525
        %v3527 = vpop.f32.mrf.mxu0
        %v3528 = vadd.f32 0.0, %v3527
        %v3529 = vpop.f32.mrf.mxu0
        %v3530 = vadd.f32 0.0, %v3529
        %v3531 = vpop.f32.mrf.mxu0
        %v3532 = vadd.f32 0.0, %v3531
        %3533 = vmatprep.mubr.bf16.mxu0 0
        %3534 = vmatmul.mubr.bf16.gmra.mxu0 %v3110
        %v3535 = vpop.f32.mrf.mxu0
        %v3536 = vadd.f32 0.0, %v3535
        %v3537 = vpop.f32.mrf.mxu0
        %v3538 = vadd.f32 0.0, %v3537
        %v3539 = vpop.f32.mrf.mxu0
        %v3540 = vadd.f32 0.0, %v3539
        %v3541 = vpop.f32.mrf.mxu0
        %v3542 = vadd.f32 0.0, %v3541
        %3543 = vmatprep.mubr.bf16.mxu0 0
        %3544 = vmatmul.mubr.bf16.gmra.mxu0 %v3111
        %v3545 = vpop.f32.mrf.mxu0
        %v3546 = vadd.f32 0.0, %v3545
        %v3547 = vpop.f32.mrf.mxu0
        %v3548 = vadd.f32 0.0, %v3547
        %v3549 = vpop.f32.mrf.mxu0
        %v3550 = vadd.f32 0.0, %v3549
        %v3551 = vpop.f32.mrf.mxu0
        %v3552 = vadd.f32 0.0, %v3551
        %3553 = vmatprep.mubr.bf16.mxu0 0
        %3554 = vmatmul.mubr.bf16.gmra.mxu0 %v3112
        %v3555 = vpop.f32.mrf.mxu0
        %v3556 = vadd.f32 0.0, %v3555
        %v3557 = vpop.f32.mrf.mxu0
        %v3558 = vadd.f32 0.0, %v3557
        %v3559 = vpop.f32.mrf.mxu0
        %v3560 = vadd.f32 0.0, %v3559
        %v3561 = vpop.f32.mrf.mxu0
        %v3562 = vadd.f32 0.0, %v3561
        %3563 = vmatprep.mubr.bf16.mxu0 0
        %3564 = vmatmul.mubr.bf16.gmra.mxu0 %v3113
        %v3565 = vpop.f32.mrf.mxu0
        %v3566 = vadd.f32 0.0, %v3565
        %v3567 = vpop.f32.mrf.mxu0
        %v3568 = vadd.f32 0.0, %v3567
        %v3569 = vpop.f32.mrf.mxu0
        %v3570 = vadd.f32 0.0, %v3569
        %v3571 = vpop.f32.mrf.mxu0
        %v3572 = vadd.f32 0.0, %v3571
        %3573 = vmatprep.mubr.bf16.mxu0 0
        %3574 = vmatmul.mubr.bf16.gmra.mxu0 %v3114
        %v3575 = vpop.f32.mrf.mxu0
        %v3576 = vadd.f32 0.0, %v3575
        %v3577 = vpop.f32.mrf.mxu0
        %v3578 = vadd.f32 0.0, %v3577
        %v3579 = vpop.f32.mrf.mxu0
        %v3580 = vadd.f32 0.0, %v3579
        %v3581 = vpop.f32.mrf.mxu0
        %v3582 = vadd.f32 0.0, %v3581
        %3583 = vmatprep.mubr.bf16.mxu0 0
        %3584 = vmatmul.mubr.bf16.gmra.mxu0 %v3115
        %v3585 = vpop.f32.mrf.mxu0
        %v3586 = vadd.f32 0.0, %v3585
        %v3587 = vpop.f32.mrf.mxu0
        %v3588 = vadd.f32 0.0, %v3587
        %v3589 = vpop.f32.mrf.mxu0
        %v3590 = vadd.f32 0.0, %v3589
        %v3591 = vpop.f32.mrf.mxu0
        %v3592 = vadd.f32 0.0, %v3591
        %3593 = vmatprep.mubr.bf16.mxu0 0
        %3594 = vmatmul.mubr.bf16.gmra.mxu0 %v3116
        %v3595 = vpop.f32.mrf.mxu0
        %v3596 = vadd.f32 0.0, %v3595
        %v3597 = vpop.f32.mrf.mxu0
        %v3598 = vadd.f32 0.0, %v3597
        %v3599 = vpop.f32.mrf.mxu0
        %v3600 = vadd.f32 0.0, %v3599
        %v3601 = vpop.f32.mrf.mxu0
        %v3602 = vadd.f32 0.0, %v3601
        %3603 = vmatprep.mubr.bf16.mxu0 0
        %3604 = vmatmul.mubr.bf16.gmra.mxu0 %v3117
        %v3605 = vpop.f32.mrf.mxu0
        %v3606 = vadd.f32 0.0, %v3605
        %v3607 = vpop.f32.mrf.mxu0
        %v3608 = vadd.f32 0.0, %v3607
        %v3609 = vpop.f32.mrf.mxu0
        %v3610 = vadd.f32 0.0, %v3609
        %v3611 = vpop.f32.mrf.mxu0
        %v3612 = vadd.f32 0.0, %v3611
        %3613 = vmatprep.mubr.bf16.mxu0 0
        %3614 = vmatmul.mubr.bf16.gmra.mxu0 %v3118
        %v3615 = vpop.f32.mrf.mxu0
        %v3616 = vadd.f32 0.0, %v3615
        %v3617 = vpop.f32.mrf.mxu0
        %v3618 = vadd.f32 0.0, %v3617
        %v3619 = vpop.f32.mrf.mxu0
        %v3620 = vadd.f32 0.0, %v3619
        %v3621 = vpop.f32.mrf.mxu0
        %v3622 = vadd.f32 0.0, %v3621
        %3623 = vmatprep.mubr.bf16.mxu0 0
        %3624 = vmatmul.mubr.bf16.gmra.mxu0 %v3119
        %v3625 = vpop.f32.mrf.mxu0
        %v3626 = vadd.f32 0.0, %v3625
        %v3627 = vpop.f32.mrf.mxu0
        %v3628 = vadd.f32 0.0, %v3627
        %v3629 = vpop.f32.mrf.mxu0
        %v3630 = vadd.f32 0.0, %v3629
        %v3631 = vpop.f32.mrf.mxu0
        %v3632 = vadd.f32 0.0, %v3631
        %3633 = vmatprep.mubr.bf16.mxu0 0
        %3634 = vmatmul.mubr.bf16.gmra.mxu0 %v3120
        %v3635 = vpop.f32.mrf.mxu0
        %v3636 = vadd.f32 0.0, %v3635
        %v3637 = vpop.f32.mrf.mxu0
        %v3638 = vadd.f32 0.0, %v3637
        %v3639 = vpop.f32.mrf.mxu0
        %v3640 = vadd.f32 0.0, %v3639
        %v3641 = vpop.f32.mrf.mxu0
        %v3642 = vadd.f32 0.0, %v3641
        %3643 = vmatprep.mubr.bf16.mxu0 0
        %3644 = vmatmul.mubr.bf16.gmra.mxu0 %v3121
        %v3645 = vpop.f32.mrf.mxu0
        %v3646 = vadd.f32 0.0, %v3645
        %v3647 = vpop.f32.mrf.mxu0
        %v3648 = vadd.f32 0.0, %v3647
        %v3649 = vpop.f32.mrf.mxu0
        %v3650 = vadd.f32 0.0, %v3649
        %v3651 = vpop.f32.mrf.mxu0
        %v3652 = vadd.f32 0.0, %v3651
        %3653 = vmatprep.mubr.bf16.mxu0 0
        %3654 = vmatmul.mubr.bf16.gmra.mxu0 %v3122
        %v3655 = vpop.f32.mrf.mxu0
        %v3656 = vadd.f32 0.0, %v3655
        %v3657 = vpop.f32.mrf.mxu0
        %v3658 = vadd.f32 0.0, %v3657
        %v3659 = vpop.f32.mrf.mxu0
        %v3660 = vadd.f32 0.0, %v3659
        %v3661 = vpop.f32.mrf.mxu0
        %v3662 = vadd.f32 0.0, %v3661
        %3663 = vmatprep.mubr.bf16.mxu0 0
        %3664 = vmatmul.mubr.bf16.gmra.mxu0 %v3123
        %v3665 = vpop.f32.mrf.mxu0
        %v3666 = vadd.f32 0.0, %v3665
        %v3667 = vpop.f32.mrf.mxu0
        %v3668 = vadd.f32 0.0, %v3667
        %v3669 = vpop.f32.mrf.mxu0
        %v3670 = vadd.f32 0.0, %v3669
        %v3671 = vpop.f32.mrf.mxu0
        %v3672 = vadd.f32 0.0, %v3671
        %3673 = vmatprep.mubr.bf16.mxu0 0
        %3674 = vmatmul.mubr.bf16.gmra.mxu0 %v3124
        %v3675 = vpop.f32.mrf.mxu0
        %v3676 = vadd.f32 0.0, %v3675
        %v3677 = vpop.f32.mrf.mxu0
        %v3678 = vadd.f32 0.0, %v3677
        %v3679 = vpop.f32.mrf.mxu0
        %v3680 = vadd.f32 0.0, %v3679
        %v3681 = vpop.f32.mrf.mxu0
        %v3682 = vadd.f32 0.0, %v3681
        %3683 = vmatprep.mubr.bf16.mxu0 0
        %3684 = vmatmul.mubr.bf16.gmra.mxu0 %v3125
        %v3685 = vpop.f32.mrf.mxu0
        %v3686 = vadd.f32 0.0, %v3685
        %v3687 = vpop.f32.mrf.mxu0
        %v3688 = vadd.f32 0.0, %v3687
        %v3689 = vpop.f32.mrf.mxu0
        %v3690 = vadd.f32 0.0, %v3689
        %v3691 = vpop.f32.mrf.mxu0
        %v3692 = vadd.f32 0.0, %v3691
        %3693 = vmatprep.mubr.bf16.mxu0 0
        %3694 = vmatmul.mubr.bf16.gmra.mxu0 %v3126
        %v3695 = vpop.f32.mrf.mxu0
        %v3696 = vadd.f32 0.0, %v3695
        %v3697 = vpop.f32.mrf.mxu0
        %v3698 = vadd.f32 0.0, %v3697
        %v3699 = vpop.f32.mrf.mxu0
        %v3700 = vadd.f32 0.0, %v3699
        %v3701 = vpop.f32.mrf.mxu0
        %v3702 = vadd.f32 0.0, %v3701
        %3703 = vmatprep.mubr.bf16.mxu0 0
        %3704 = vmatmul.mubr.bf16.gmra.mxu0 %v3127
        %v3705 = vpop.f32.mrf.mxu0
        %v3706 = vadd.f32 0.0, %v3705
        %v3707 = vpop.f32.mrf.mxu0
        %v3708 = vadd.f32 0.0, %v3707
        %v3709 = vpop.f32.mrf.mxu0
        %v3710 = vadd.f32 0.0, %v3709
        %v3711 = vpop.f32.mrf.mxu0
        %v3712 = vadd.f32 0.0, %v3711
        %3713 = vmatprep.mubr.bf16.mxu0 0
        %3714 = vmatmul.mubr.bf16.gmra.mxu0 %v3128
        %v3715 = vpop.f32.mrf.mxu0
        %v3716 = vadd.f32 0.0, %v3715
        %v3717 = vpop.f32.mrf.mxu0
        %v3718 = vadd.f32 0.0, %v3717
        %v3719 = vpop.f32.mrf.mxu0
        %v3720 = vadd.f32 0.0, %v3719
        %v3721 = vpop.f32.mrf.mxu0
        %v3722 = vadd.f32 0.0, %v3721
        %3723 = vmatprep.mubr.bf16.mxu0 0
        %3724 = vmatmul.mubr.bf16.gmra.mxu0 %v3129
        %v3725 = vpop.f32.mrf.mxu0
        %v3726 = vadd.f32 0.0, %v3725
        %v3727 = vpop.f32.mrf.mxu0
        %v3728 = vadd.f32 0.0, %v3727
        %v3729 = vpop.f32.mrf.mxu0
        %v3730 = vadd.f32 0.0, %v3729
        %v3731 = vpop.f32.mrf.mxu0
        %v3732 = vadd.f32 0.0, %v3731
        %3733 = vmatprep.mubr.bf16.mxu0 0
        %3734 = vmatmul.mubr.bf16.gmra.mxu0 %v3130
        %v3735 = vpop.f32.mrf.mxu0
        %v3736 = vadd.f32 0.0, %v3735
        %v3737 = vpop.f32.mrf.mxu0
        %v3738 = vadd.f32 0.0, %v3737
        %v3739 = vpop.f32.mrf.mxu0
        %v3740 = vadd.f32 0.0, %v3739
        %v3741 = vpop.f32.mrf.mxu0
        %v3742 = vadd.f32 0.0, %v3741
        %3743 = vmatprep.mubr.bf16.mxu0 0
        %3744 = vmatmul.mubr.bf16.gmra.mxu0 %v3131
        %v3745 = vpop.f32.mrf.mxu0
        %v3746 = vadd.f32 0.0, %v3745
        %v3747 = vpop.f32.mrf.mxu0
        %v3748 = vadd.f32 0.0, %v3747
        %v3749 = vpop.f32.mrf.mxu0
        %v3750 = vadd.f32 0.0, %v3749
        %v3751 = vpop.f32.mrf.mxu0
        %v3752 = vadd.f32 0.0, %v3751
        %3753 = vmatprep.mubr.bf16.mxu0 0
        %3754 = vmatmul.mubr.bf16.gmra.mxu0 %v3132
        %v3755 = vpop.f32.mrf.mxu0
        %v3756 = vadd.f32 0.0, %v3755
        %v3757 = vpop.f32.mrf.mxu0
        %v3758 = vadd.f32 0.0, %v3757
        %v3759 = vpop.f32.mrf.mxu0
        %v3760 = vadd.f32 0.0, %v3759
        %v3761 = vpop.f32.mrf.mxu0
        %v3762 = vadd.f32 0.0, %v3761
        %3763 = vmatprep.mubr.bf16.mxu0 0
        %3764 = vmatmul.mubr.bf16.gmra.mxu0 %v3133
        %v3765 = vpop.f32.mrf.mxu0
        %v3766 = vadd.f32 0.0, %v3765
        %v3767 = vpop.f32.mrf.mxu0
        %v3768 = vadd.f32 0.0, %v3767
        %v3769 = vpop.f32.mrf.mxu0
        %v3770 = vadd.f32 0.0, %v3769
        %v3771 = vpop.f32.mrf.mxu0
        %v3772 = vadd.f32 0.0, %v3771
        %3773 = vmatprep.mubr.bf16.mxu0 0
        %3774 = vmatmul.mubr.bf16.gmra.mxu0 %v3134
        %v3775 = vpop.f32.mrf.mxu0
        %v3776 = vadd.f32 0.0, %v3775
        %v3777 = vpop.f32.mrf.mxu0
        %v3778 = vadd.f32 0.0, %v3777
        %v3779 = vpop.f32.mrf.mxu0
        %v3780 = vadd.f32 0.0, %v3779
        %v3781 = vpop.f32.mrf.mxu0
        %v3782 = vadd.f32 0.0, %v3781
        %3783 = vmatprep.mubr.bf16.mxu0 0
        %3784 = vmatmul.mubr.bf16.gmra.mxu0 %v3135
        %v3785 = vpop.f32.mrf.mxu0
        %v3786 = vadd.f32 0.0, %v3785
        %v3787 = vpop.f32.mrf.mxu0
        %v3788 = vadd.f32 0.0, %v3787
        %v3789 = vpop.f32.mrf.mxu0
        %v3790 = vadd.f32 0.0, %v3789
        %v3791 = vpop.f32.mrf.mxu0
        %v3792 = vadd.f32 0.0, %v3791
        %3793 = vmatprep.mubr.bf16.mxu0 0
        %3794 = vmatmul.mubr.bf16.gmra.mxu0 %v3136
        %v3795 = vpop.f32.mrf.mxu0
        %v3796 = vadd.f32 0.0, %v3795
        %v3797 = vpop.f32.mrf.mxu0
        %v3798 = vadd.f32 0.0, %v3797
        %v3799 = vpop.f32.mrf.mxu0
        %v3800 = vadd.f32 0.0, %v3799
        %v3801 = vpop.f32.mrf.mxu0
        %v3802 = vadd.f32 0.0, %v3801
        %3803 = vmatprep.mubr.bf16.mxu0 0
        %3804 = vmatmul.mubr.bf16.gmra.mxu0 %v3137
        %v3805 = vpop.f32.mrf.mxu0
        %v3806 = vadd.f32 0.0, %v3805
        %v3807 = vpop.f32.mrf.mxu0
        %v3808 = vadd.f32 0.0, %v3807
        %v3809 = vpop.f32.mrf.mxu0
        %v3810 = vadd.f32 0.0, %v3809
        %v3811 = vpop.f32.mrf.mxu0
        %v3812 = vadd.f32 0.0, %v3811
        %3813 = vmatprep.mubr.bf16.mxu0 0
        %3814 = vmatmul.mubr.bf16.gmra.mxu0 %v3138
        %v3815 = vpop.f32.mrf.mxu0
        %v3816 = vadd.f32 0.0, %v3815
        %v3817 = vpop.f32.mrf.mxu0
        %v3818 = vadd.f32 0.0, %v3817
        %v3819 = vpop.f32.mrf.mxu0
        %v3820 = vadd.f32 0.0, %v3819
        %v3821 = vpop.f32.mrf.mxu0
        %v3822 = vadd.f32 0.0, %v3821
        %3823 = vmatprep.mubr.bf16.mxu0 0
        %3824 = vmatmul.mubr.bf16.gmra.mxu0 %v3139
        %v3825 = vpop.f32.mrf.mxu0
        %v3826 = vadd.f32 0.0, %v3825
        %v3827 = vpop.f32.mrf.mxu0
        %v3828 = vadd.f32 0.0, %v3827
        %v3829 = vpop.f32.mrf.mxu0
        %v3830 = vadd.f32 0.0, %v3829
        %v3831 = vpop.f32.mrf.mxu0
        %v3832 = vadd.f32 0.0, %v3831
        %3833 = vmatprep.mubr.bf16.mxu0 0
        %3834 = vmatmul.mubr.bf16.gmra.mxu0 %v3140
        %v3835 = vpop.f32.mrf.mxu0
        %v3836 = vadd.f32 0.0, %v3835
        %v3837 = vpop.f32.mrf.mxu0
        %v3838 = vadd.f32 0.0, %v3837
        %v3839 = vpop.f32.mrf.mxu0
        %v3840 = vadd.f32 0.0, %v3839
        %v3841 = vpop.f32.mrf.mxu0
        %v3842 = vadd.f32 0.0, %v3841
        %3843 = vmatprep.mubr.bf16.mxu0 0
        %3844 = vmatmul.mubr.bf16.gmra.mxu0 %v3141
        %v3845 = vpop.f32.mrf.mxu0
        %v3846 = vadd.f32 0.0, %v3845
        %v3847 = vpop.f32.mrf.mxu0
        %v3848 = vadd.f32 0.0, %v3847
        %v3849 = vpop.f32.mrf.mxu0
        %v3850 = vadd.f32 0.0, %v3849
        %v3851 = vpop.f32.mrf.mxu0
        %v3852 = vadd.f32 0.0, %v3851
        %3853 = vmatprep.mubr.bf16.mxu0 0
        %3854 = vmatmul.mubr.bf16.gmra.mxu0 %v3142
        %v3855 = vpop.f32.mrf.mxu0
        %v3856 = vadd.f32 0.0, %v3855
        %v3857 = vpop.f32.mrf.mxu0
        %v3858 = vadd.f32 0.0, %v3857
        %v3859 = vpop.f32.mrf.mxu0
        %v3860 = vadd.f32 0.0, %v3859
        %v3861 = vpop.f32.mrf.mxu0
        %v3862 = vadd.f32 0.0, %v3861
        %3863 = vmatprep.mubr.bf16.mxu0 0
        %3864 = vmatmul.mubr.bf16.gmra.mxu0 %v3143
        %v3865 = vpop.f32.mrf.mxu0
        %v3866 = vadd.f32 0.0, %v3865
        %v3867 = vpop.f32.mrf.mxu0
        %v3868 = vadd.f32 0.0, %v3867
        %v3869 = vpop.f32.mrf.mxu0
        %v3870 = vadd.f32 0.0, %v3869
        %v3871 = vpop.f32.mrf.mxu0
        %v3872 = vadd.f32 0.0, %v3871
        %3873 = vmatprep.mubr.bf16.mxu0 0
        %3874 = vmatmul.mubr.bf16.gmra.mxu0 %v3144
        %v3875 = vpop.f32.mrf.mxu0
        %v3876 = vadd.f32 0.0, %v3875
        %v3877 = vpop.f32.mrf.mxu0
        %v3878 = vadd.f32 0.0, %v3877
        %v3879 = vpop.f32.mrf.mxu0
        %v3880 = vadd.f32 0.0, %v3879
        %v3881 = vpop.f32.mrf.mxu0
        %v3882 = vadd.f32 0.0, %v3881
        %3883 = vmatprep.mubr.bf16.mxu0 0
        %3884 = vmatmul.mubr.bf16.gmra.mxu0 %v3145
        %v3885 = vpop.f32.mrf.mxu0
        %v3886 = vadd.f32 0.0, %v3885
        %v3887 = vpop.f32.mrf.mxu0
        %v3888 = vadd.f32 0.0, %v3887
        %v3889 = vpop.f32.mrf.mxu0
        %v3890 = vadd.f32 0.0, %v3889
        %v3891 = vpop.f32.mrf.mxu0
        %v3892 = vadd.f32 0.0, %v3891
        %3893 = vmatprep.mubr.bf16.mxu0 0
        %3894 = vmatmul.mubr.bf16.gmra.mxu0 %v3146
        %v3895 = vpop.f32.mrf.mxu0
        %v3896 = vadd.f32 0.0, %v3895
        %v3897 = vpop.f32.mrf.mxu0
        %v3898 = vadd.f32 0.0, %v3897
        %v3899 = vpop.f32.mrf.mxu0
        %v3900 = vadd.f32 0.0, %v3899
        %v3901 = vpop.f32.mrf.mxu0
        %v3902 = vadd.f32 0.0, %v3901
        %3903 = vmatprep.mubr.bf16.mxu0 0
        %3904 = vmatmul.mubr.bf16.gmra.mxu0 %v3147
        %v3905 = vpop.f32.mrf.mxu0
        %v3906 = vadd.f32 0.0, %v3905
        %v3907 = vpop.f32.mrf.mxu0
        %v3908 = vadd.f32 0.0, %v3907
        %v3909 = vpop.f32.mrf.mxu0
        %v3910 = vadd.f32 0.0, %v3909
        %v3911 = vpop.f32.mrf.mxu0
        %v3912 = vadd.f32 0.0, %v3911
        %3913 = vmatprep.mubr.bf16.mxu0 0
        %3914 = vmatmul.mubr.bf16.gmra.mxu0 %v3148
        %v3915 = vpop.f32.mrf.mxu0
        %v3916 = vadd.f32 0.0, %v3915
        %v3917 = vpop.f32.mrf.mxu0
        %v3918 = vadd.f32 0.0, %v3917
        %v3919 = vpop.f32.mrf.mxu0
        %v3920 = vadd.f32 0.0, %v3919
        %v3921 = vpop.f32.mrf.mxu0
        %v3922 = vadd.f32 0.0, %v3921
        %3923 = vmatprep.mubr.bf16.mxu0 0
        %3924 = vmatmul.mubr.bf16.gmra.mxu0 %v3149
        %v3925 = vpop.f32.mrf.mxu0
        %v3926 = vadd.f32 0.0, %v3925
        %v3927 = vpop.f32.mrf.mxu0
        %v3928 = vadd.f32 0.0, %v3927
        %v3929 = vpop.f32.mrf.mxu0
        %v3930 = vadd.f32 0.0, %v3929
        %v3931 = vpop.f32.mrf.mxu0
        %v3932 = vadd.f32 0.0, %v3931
        %3933 = vmatprep.mubr.bf16.mxu0 0
        %3934 = vmatmul.mubr.bf16.gmra.mxu0 %v3150
        %v3935 = vpop.f32.mrf.mxu0
        %v3936 = vadd.f32 0.0, %v3935
        %v3937 = vpop.f32.mrf.mxu0
        %v3938 = vadd.f32 0.0, %v3937
        %v3939 = vpop.f32.mrf.mxu0
        %v3940 = vadd.f32 0.0, %v3939
        %v3941 = vpop.f32.mrf.mxu0
        %v3942 = vadd.f32 0.0, %v3941
        %3943 = vmatprep.mubr.bf16.mxu0 0
        %3944 = vmatmul.mubr.bf16.gmra.mxu0 %v3151
        %v3945 = vpop.f32.mrf.mxu0
        %v3946 = vadd.f32 0.0, %v3945
        %v3947 = vpop.f32.mrf.mxu0
        %v3948 = vadd.f32 0.0, %v3947
        %v3949 = vpop.f32.mrf.mxu0
        %v3950 = vadd.f32 0.0, %v3949
        %v3951 = vpop.f32.mrf.mxu0
        %v3952 = vadd.f32 0.0, %v3951
        %3953 = vmatprep.mubr.bf16.mxu0 0
        %3954 = vmatmul.mubr.bf16.gmra.mxu0 %v3152
        %v3955 = vpop.f32.mrf.mxu0
        %v3956 = vadd.f32 0.0, %v3955
        %v3957 = vpop.f32.mrf.mxu0
        %v3958 = vadd.f32 0.0, %v3957
        %v3959 = vpop.f32.mrf.mxu0
        %v3960 = vadd.f32 0.0, %v3959
        %v3961 = vpop.f32.mrf.mxu0
        %v3962 = vadd.f32 0.0, %v3961
        %3963 = vmatprep.mubr.bf16.mxu0 0
        %3964 = vmatmul.mubr.bf16.gmra.mxu0 %v3153
        %v3965 = vpop.f32.mrf.mxu0
        %v3966 = vadd.f32 0.0, %v3965
        %v3967 = vpop.f32.mrf.mxu0
        %v3968 = vadd.f32 0.0, %v3967
        %v3969 = vpop.f32.mrf.mxu0
        %v3970 = vadd.f32 0.0, %v3969
        %v3971 = vpop.f32.mrf.mxu0
        %v3972 = vadd.f32 0.0, %v3971
        %3973 = vmatprep.mubr.bf16.mxu0 0
        %3974 = vmatmul.mubr.bf16.gmra.mxu0 %v3154
        %v3975 = vpop.f32.mrf.mxu0
        %v3976 = vadd.f32 0.0, %v3975
        %v3977 = vpop.f32.mrf.mxu0
        %v3978 = vadd.f32 0.0, %v3977
        %v3979 = vpop.f32.mrf.mxu0
        %v3980 = vadd.f32 0.0, %v3979
        %v3981 = vpop.f32.mrf.mxu0
        %v3982 = vadd.f32 0.0, %v3981
        %3983 = vmatprep.mubr.bf16.mxu0 0
        %3984 = vmatmul.mubr.bf16.gmra.mxu0 %v3155
        %v3985 = vpop.f32.mrf.mxu0
        %v3986 = vadd.f32 0.0, %v3985
        %v3987 = vpop.f32.mrf.mxu0
        %v3988 = vadd.f32 0.0, %v3987
        %v3989 = vpop.f32.mrf.mxu0
        %v3990 = vadd.f32 0.0, %v3989
        %v3991 = vpop.f32.mrf.mxu0
        %v3992 = vadd.f32 0.0, %v3991
        %3993 = vmatprep.mubr.bf16.mxu0 0
        %3994 = vmatmul.mubr.bf16.gmra.mxu0 %v3156
        %v3995 = vpop.f32.mrf.mxu0
        %v3996 = vadd.f32 0.0, %v3995
        %v3997 = vpop.f32.mrf.mxu0
        %v3998 = vadd.f32 0.0, %v3997
        %v3999 = vpop.f32.mrf.mxu0
        %v4000 = vadd.f32 0.0, %v3999
        %v4001 = vpop.f32.mrf.mxu0
        %v4002 = vadd.f32 0.0, %v4001
        %4003 = vmatprep.mubr.bf16.mxu0 0
        %4004 = vmatmul.mubr.bf16.gmra.mxu0 %v3157
        %v4005 = vpop.f32.mrf.mxu0
        %v4006 = vadd.f32 0.0, %v4005
        %v4007 = vpop.f32.mrf.mxu0
        %v4008 = vadd.f32 0.0, %v4007
        %v4009 = vpop.f32.mrf.mxu0
        %v4010 = vadd.f32 0.0, %v4009
        %v4011 = vpop.f32.mrf.mxu0
        %v4012 = vadd.f32 0.0, %v4011
        %4013 = vmatprep.mubr.bf16.mxu0 0
        %4014 = vmatmul.mubr.bf16.gmra.mxu0 %v3158
        %v4015 = vpop.f32.mrf.mxu0
        %v4016 = vadd.f32 0.0, %v4015
        %v4017 = vpop.f32.mrf.mxu0
        %v4018 = vadd.f32 0.0, %v4017
        %v4019 = vpop.f32.mrf.mxu0
        %v4020 = vadd.f32 0.0, %v4019
        %v4021 = vpop.f32.mrf.mxu0
        %v4022 = vadd.f32 0.0, %v4021
        %4023 = vdwg.mxu0
        %4024 = vmatprep.subr.bf16.mxu0 %v3318
        %4025 = vmatpush1.bf16.msra.mxu0 %v3317
        %4026 = vmatprep.subr.bf16.mxu0 %v3314
        %4027 = vmatpush1.bf16.msra.mxu0 %v3313
        %4028 = vmatprep.subr.bf16.mxu0 %v3310
        %4029 = vmatpush1.bf16.msra.mxu0 %v3309
        %4030 = vmatprep.subr.bf16.mxu0 %v3306
        %4031 = vmatpush1.bf16.msra.mxu0 %v3305
        %4032 = vmatprep.subr.bf16.mxu0 %v3302
        %4033 = vmatpush1.bf16.msra.mxu0 %v3301
        %4034 = vmatprep.subr.bf16.mxu0 %v3298
        %4035 = vmatpush1.bf16.msra.mxu0 %v3297
        %4036 = vmatprep.subr.bf16.mxu0 %v3294
        %4037 = vmatpush1.bf16.msra.mxu0 %v3293
        %4038 = vmatprep.subr.bf16.mxu0 %v3290
        %4039 = vmatpush1.bf16.msra.mxu0 %v3289
        %4040 = vmatprep.subr.bf16.mxu0 0
        %4041 = vmatpush2.bf16.msra.mxu0 0
        %4042 = vmatprep.subr.bf16.mxu0 0
        %4043 = vmatpush2.bf16.msra.mxu0 0
        %4044 = vmatprep.subr.bf16.mxu0 0
        %4045 = vmatpush2.bf16.msra.mxu0 0
        %4046 = vmatprep.subr.bf16.mxu0 0
        %4047 = vmatpush2.bf16.msra.mxu0 0
        %4048 = vmatprep.subr.bf16.mxu0 0
        %4049 = vmatpush2.bf16.msra.mxu0 0
        %4050 = vmatprep.subr.bf16.mxu0 0
        %4051 = vmatpush2.bf16.msra.mxu0 0
        %4052 = vmatprep.subr.bf16.mxu0 0
        %4053 = vmatpush2.bf16.msra.mxu0 0
        %4054 = vmatprep.subr.bf16.mxu0 0
        %4055 = vmatpush2.bf16.msra.mxu0 0
        %4056 = vmatprep.mubr.bf16.mxu0 0
        %4057 = vmatmul.mubr.bf16.gmra.mxu0 %v3095
        %v4058 = vpop.f32.mrf.mxu0
        %v4059 = vadd.f32 0.0, %v4058
        %v4060 = vpop.f32.mrf.mxu0
        %v4061 = vadd.f32 0.0, %v4060
        %v4062 = vpop.f32.mrf.mxu0
        %v4063 = vadd.f32 0.0, %v4062
        %v4064 = vpop.f32.mrf.mxu0
        %v4065 = vadd.f32 0.0, %v4064
        %4066 = vmatprep.mubr.bf16.mxu0 0
        %4067 = vmatmul.mubr.bf16.gmra.mxu0 %v3096
        %v4068 = vpop.f32.mrf.mxu0
        %v4069 = vadd.f32 0.0, %v4068
        %v4070 = vpop.f32.mrf.mxu0
        %v4071 = vadd.f32 0.0, %v4070
        %v4072 = vpop.f32.mrf.mxu0
        %v4073 = vadd.f32 0.0, %v4072
        %v4074 = vpop.f32.mrf.mxu0
        %v4075 = vadd.f32 0.0, %v4074
        %4076 = vmatprep.mubr.bf16.mxu0 0
        %4077 = vmatmul.mubr.bf16.gmra.mxu0 %v3097
        %v4078 = vpop.f32.mrf.mxu0
        %v4079 = vadd.f32 0.0, %v4078
        %v4080 = vpop.f32.mrf.mxu0
        %v4081 = vadd.f32 0.0, %v4080
        %v4082 = vpop.f32.mrf.mxu0
        %v4083 = vadd.f32 0.0, %v4082
        %v4084 = vpop.f32.mrf.mxu0
        %v4085 = vadd.f32 0.0, %v4084
        %4086 = vmatprep.mubr.bf16.mxu0 0
        %4087 = vmatmul.mubr.bf16.gmra.mxu0 %v3098
        %v4088 = vpop.f32.mrf.mxu0
        %v4089 = vadd.f32 0.0, %v4088
        %v4090 = vpop.f32.mrf.mxu0
        %v4091 = vadd.f32 0.0, %v4090
        %v4092 = vpop.f32.mrf.mxu0
        %v4093 = vadd.f32 0.0, %v4092
        %v4094 = vpop.f32.mrf.mxu0
        %v4095 = vadd.f32 0.0, %v4094
        %4096 = vmatprep.mubr.bf16.mxu0 0
        %4097 = vmatmul.mubr.bf16.gmra.mxu0 %v3099
        %v4098 = vpop.f32.mrf.mxu0
        %v4099 = vadd.f32 0.0, %v4098
        %v4100 = vpop.f32.mrf.mxu0
        %v4101 = vadd.f32 0.0, %v4100
        %v4102 = vpop.f32.mrf.mxu0
        %v4103 = vadd.f32 0.0, %v4102
        %v4104 = vpop.f32.mrf.mxu0
        %v4105 = vadd.f32 0.0, %v4104
        %4106 = vmatprep.mubr.bf16.mxu0 0
        %4107 = vmatmul.mubr.bf16.gmra.mxu0 %v3100
        %v4108 = vpop.f32.mrf.mxu0
        %v4109 = vadd.f32 0.0, %v4108
        %v4110 = vpop.f32.mrf.mxu0
        %v4111 = vadd.f32 0.0, %v4110
        %v4112 = vpop.f32.mrf.mxu0
        %v4113 = vadd.f32 0.0, %v4112
        %v4114 = vpop.f32.mrf.mxu0
        %v4115 = vadd.f32 0.0, %v4114
        %4116 = vmatprep.mubr.bf16.mxu0 0
        %4117 = vmatmul.mubr.bf16.gmra.mxu0 %v3101
        %v4118 = vpop.f32.mrf.mxu0
        %v4119 = vadd.f32 0.0, %v4118
        %v4120 = vpop.f32.mrf.mxu0
        %v4121 = vadd.f32 0.0, %v4120
        %v4122 = vpop.f32.mrf.mxu0
        %v4123 = vadd.f32 0.0, %v4122
        %v4124 = vpop.f32.mrf.mxu0
        %v4125 = vadd.f32 0.0, %v4124
        %4126 = vmatprep.mubr.bf16.mxu0 0
        %4127 = vmatmul.mubr.bf16.gmra.mxu0 %v3102
        %v4128 = vpop.f32.mrf.mxu0
        %v4129 = vadd.f32 0.0, %v4128
        %v4130 = vpop.f32.mrf.mxu0
        %v4131 = vadd.f32 0.0, %v4130
        %v4132 = vpop.f32.mrf.mxu0
        %v4133 = vadd.f32 0.0, %v4132
        %v4134 = vpop.f32.mrf.mxu0
        %v4135 = vadd.f32 0.0, %v4134
        %4136 = vmatprep.mubr.bf16.mxu0 0
        %4137 = vmatmul.mubr.bf16.gmra.mxu0 %v3103
        %v4138 = vpop.f32.mrf.mxu0
        %v4139 = vadd.f32 0.0, %v4138
        %v4140 = vpop.f32.mrf.mxu0
        %v4141 = vadd.f32 0.0, %v4140
        %v4142 = vpop.f32.mrf.mxu0
        %v4143 = vadd.f32 0.0, %v4142
        %v4144 = vpop.f32.mrf.mxu0
        %v4145 = vadd.f32 0.0, %v4144
        %4146 = vmatprep.mubr.bf16.mxu0 0
        %4147 = vmatmul.mubr.bf16.gmra.mxu0 %v3104
        %v4148 = vpop.f32.mrf.mxu0
        %v4149 = vadd.f32 0.0, %v4148
        %v4150 = vpop.f32.mrf.mxu0
        %v4151 = vadd.f32 0.0, %v4150
        %v4152 = vpop.f32.mrf.mxu0
        %v4153 = vadd.f32 0.0, %v4152
        %v4154 = vpop.f32.mrf.mxu0
        %v4155 = vadd.f32 0.0, %v4154
        %4156 = vmatprep.mubr.bf16.mxu0 0
        %4157 = vmatmul.mubr.bf16.gmra.mxu0 %v3105
        %v4158 = vpop.f32.mrf.mxu0
        %v4159 = vadd.f32 0.0, %v4158
        %v4160 = vpop.f32.mrf.mxu0
        %v4161 = vadd.f32 0.0, %v4160
        %v4162 = vpop.f32.mrf.mxu0
        %v4163 = vadd.f32 0.0, %v4162
        %v4164 = vpop.f32.mrf.mxu0
        %v4165 = vadd.f32 0.0, %v4164
        %4166 = vmatprep.mubr.bf16.mxu0 0
        %4167 = vmatmul.mubr.bf16.gmra.mxu0 %v3106
        %v4168 = vpop.f32.mrf.mxu0
        %v4169 = vadd.f32 0.0, %v4168
        %v4170 = vpop.f32.mrf.mxu0
        %v4171 = vadd.f32 0.0, %v4170
        %v4172 = vpop.f32.mrf.mxu0
        %v4173 = vadd.f32 0.0, %v4172
        %v4174 = vpop.f32.mrf.mxu0
        %v4175 = vadd.f32 0.0, %v4174
        %4176 = vmatprep.mubr.bf16.mxu0 0
        %4177 = vmatmul.mubr.bf16.gmra.mxu0 %v3107
        %v4178 = vpop.f32.mrf.mxu0
        %v4179 = vadd.f32 0.0, %v4178
        %v4180 = vpop.f32.mrf.mxu0
        %v4181 = vadd.f32 0.0, %v4180
        %v4182 = vpop.f32.mrf.mxu0
        %v4183 = vadd.f32 0.0, %v4182
        %v4184 = vpop.f32.mrf.mxu0
        %v4185 = vadd.f32 0.0, %v4184
        %4186 = vmatprep.mubr.bf16.mxu0 0
        %4187 = vmatmul.mubr.bf16.gmra.mxu0 %v3108
        %v4188 = vpop.f32.mrf.mxu0
        %v4189 = vadd.f32 0.0, %v4188
        %v4190 = vpop.f32.mrf.mxu0
        %v4191 = vadd.f32 0.0, %v4190
        %v4192 = vpop.f32.mrf.mxu0
        %v4193 = vadd.f32 0.0, %v4192
        %v4194 = vpop.f32.mrf.mxu0
        %v4195 = vadd.f32 0.0, %v4194
        %4196 = vmatprep.mubr.bf16.mxu0 0
        %4197 = vmatmul.mubr.bf16.gmra.mxu0 %v3109
        %v4198 = vpop.f32.mrf.mxu0
        %v4199 = vadd.f32 0.0, %v4198
        %v4200 = vpop.f32.mrf.mxu0
        %v4201 = vadd.f32 0.0, %v4200
        %v4202 = vpop.f32.mrf.mxu0
        %v4203 = vadd.f32 0.0, %v4202
        %v4204 = vpop.f32.mrf.mxu0
        %v4205 = vadd.f32 0.0, %v4204
        %4206 = vmatprep.mubr.bf16.mxu0 0
        %4207 = vmatmul.mubr.bf16.gmra.mxu0 %v3110
        %v4208 = vpop.f32.mrf.mxu0
        %v4209 = vadd.f32 0.0, %v4208
        %v4210 = vpop.f32.mrf.mxu0
        %v4211 = vadd.f32 0.0, %v4210
        %v4212 = vpop.f32.mrf.mxu0
        %v4213 = vadd.f32 0.0, %v4212
        %v4214 = vpop.f32.mrf.mxu0
        %v4215 = vadd.f32 0.0, %v4214
        %4216 = vmatprep.mubr.bf16.mxu0 0
        %4217 = vmatmul.mubr.bf16.gmra.mxu0 %v3111
        %v4218 = vpop.f32.mrf.mxu0
        %v4219 = vadd.f32 0.0, %v4218
        %v4220 = vpop.f32.mrf.mxu0
        %v4221 = vadd.f32 0.0, %v4220
        %v4222 = vpop.f32.mrf.mxu0
        %v4223 = vadd.f32 0.0, %v4222
        %v4224 = vpop.f32.mrf.mxu0
        %v4225 = vadd.f32 0.0, %v4224
        %4226 = vmatprep.mubr.bf16.mxu0 0
        %4227 = vmatmul.mubr.bf16.gmra.mxu0 %v3112
        %v4228 = vpop.f32.mrf.mxu0
        %v4229 = vadd.f32 0.0, %v4228
        %v4230 = vpop.f32.mrf.mxu0
        %v4231 = vadd.f32 0.0, %v4230
        %v4232 = vpop.f32.mrf.mxu0
        %v4233 = vadd.f32 0.0, %v4232
        %v4234 = vpop.f32.mrf.mxu0
        %v4235 = vadd.f32 0.0, %v4234
        %4236 = vmatprep.mubr.bf16.mxu0 0
        %4237 = vmatmul.mubr.bf16.gmra.mxu0 %v3113
        %v4238 = vpop.f32.mrf.mxu0
        %v4239 = vadd.f32 0.0, %v4238
        %v4240 = vpop.f32.mrf.mxu0
        %v4241 = vadd.f32 0.0, %v4240
        %v4242 = vpop.f32.mrf.mxu0
        %v4243 = vadd.f32 0.0, %v4242
        %v4244 = vpop.f32.mrf.mxu0
        %v4245 = vadd.f32 0.0, %v4244
        %4246 = vmatprep.mubr.bf16.mxu0 0
        %4247 = vmatmul.mubr.bf16.gmra.mxu0 %v3114
        %v4248 = vpop.f32.mrf.mxu0
        %v4249 = vadd.f32 0.0, %v4248
        %v4250 = vpop.f32.mrf.mxu0
        %v4251 = vadd.f32 0.0, %v4250
        %v4252 = vpop.f32.mrf.mxu0
        %v4253 = vadd.f32 0.0, %v4252
        %v4254 = vpop.f32.mrf.mxu0
        %v4255 = vadd.f32 0.0, %v4254
        %4256 = vmatprep.mubr.bf16.mxu0 0
        %4257 = vmatmul.mubr.bf16.gmra.mxu0 %v3115
        %v4258 = vpop.f32.mrf.mxu0
        %v4259 = vadd.f32 0.0, %v4258
        %v4260 = vpop.f32.mrf.mxu0
        %v4261 = vadd.f32 0.0, %v4260
        %v4262 = vpop.f32.mrf.mxu0
        %v4263 = vadd.f32 0.0, %v4262
        %v4264 = vpop.f32.mrf.mxu0
        %v4265 = vadd.f32 0.0, %v4264
        %4266 = vmatprep.mubr.bf16.mxu0 0
        %4267 = vmatmul.mubr.bf16.gmra.mxu0 %v3116
        %v4268 = vpop.f32.mrf.mxu0
        %v4269 = vadd.f32 0.0, %v4268
        %v4270 = vpop.f32.mrf.mxu0
        %v4271 = vadd.f32 0.0, %v4270
        %v4272 = vpop.f32.mrf.mxu0
        %v4273 = vadd.f32 0.0, %v4272
        %v4274 = vpop.f32.mrf.mxu0
        %v4275 = vadd.f32 0.0, %v4274
        %4276 = vmatprep.mubr.bf16.mxu0 0
        %4277 = vmatmul.mubr.bf16.gmra.mxu0 %v3117
        %v4278 = vpop.f32.mrf.mxu0
        %v4279 = vadd.f32 0.0, %v4278
        %v4280 = vpop.f32.mrf.mxu0
        %v4281 = vadd.f32 0.0, %v4280
        %v4282 = vpop.f32.mrf.mxu0
        %v4283 = vadd.f32 0.0, %v4282
        %v4284 = vpop.f32.mrf.mxu0
        %v4285 = vadd.f32 0.0, %v4284
        %4286 = vmatprep.mubr.bf16.mxu0 0
        %4287 = vmatmul.mubr.bf16.gmra.mxu0 %v3118
        %v4288 = vpop.f32.mrf.mxu0
        %v4289 = vadd.f32 0.0, %v4288
        %v4290 = vpop.f32.mrf.mxu0
        %v4291 = vadd.f32 0.0, %v4290
        %v4292 = vpop.f32.mrf.mxu0
        %v4293 = vadd.f32 0.0, %v4292
        %v4294 = vpop.f32.mrf.mxu0
        %v4295 = vadd.f32 0.0, %v4294
        %4296 = vmatprep.mubr.bf16.mxu0 0
        %4297 = vmatmul.mubr.bf16.gmra.mxu0 %v3119
        %v4298 = vpop.f32.mrf.mxu0
        %v4299 = vadd.f32 0.0, %v4298
        %v4300 = vpop.f32.mrf.mxu0
        %v4301 = vadd.f32 0.0, %v4300
        %v4302 = vpop.f32.mrf.mxu0
        %v4303 = vadd.f32 0.0, %v4302
        %v4304 = vpop.f32.mrf.mxu0
        %v4305 = vadd.f32 0.0, %v4304
        %4306 = vmatprep.mubr.bf16.mxu0 0
        %4307 = vmatmul.mubr.bf16.gmra.mxu0 %v3120
        %v4308 = vpop.f32.mrf.mxu0
        %v4309 = vadd.f32 0.0, %v4308
        %v4310 = vpop.f32.mrf.mxu0
        %v4311 = vadd.f32 0.0, %v4310
        %v4312 = vpop.f32.mrf.mxu0
        %v4313 = vadd.f32 0.0, %v4312
        %v4314 = vpop.f32.mrf.mxu0
        %v4315 = vadd.f32 0.0, %v4314
        %4316 = vmatprep.mubr.bf16.mxu0 0
        %4317 = vmatmul.mubr.bf16.gmra.mxu0 %v3121
        %v4318 = vpop.f32.mrf.mxu0
        %v4319 = vadd.f32 0.0, %v4318
        %v4320 = vpop.f32.mrf.mxu0
        %v4321 = vadd.f32 0.0, %v4320
        %v4322 = vpop.f32.mrf.mxu0
        %v4323 = vadd.f32 0.0, %v4322
        %v4324 = vpop.f32.mrf.mxu0
        %v4325 = vadd.f32 0.0, %v4324
        %4326 = vmatprep.mubr.bf16.mxu0 0
        %4327 = vmatmul.mubr.bf16.gmra.mxu0 %v3122
        %v4328 = vpop.f32.mrf.mxu0
        %v4329 = vadd.f32 0.0, %v4328
        %v4330 = vpop.f32.mrf.mxu0
        %v4331 = vadd.f32 0.0, %v4330
        %v4332 = vpop.f32.mrf.mxu0
        %v4333 = vadd.f32 0.0, %v4332
        %v4334 = vpop.f32.mrf.mxu0
        %v4335 = vadd.f32 0.0, %v4334
        %4336 = vmatprep.mubr.bf16.mxu0 0
        %4337 = vmatmul.mubr.bf16.gmra.mxu0 %v3123
        %v4338 = vpop.f32.mrf.mxu0
        %v4339 = vadd.f32 0.0, %v4338
        %v4340 = vpop.f32.mrf.mxu0
        %v4341 = vadd.f32 0.0, %v4340
        %v4342 = vpop.f32.mrf.mxu0
        %v4343 = vadd.f32 0.0, %v4342
        %v4344 = vpop.f32.mrf.mxu0
        %v4345 = vadd.f32 0.0, %v4344
        %4346 = vmatprep.mubr.bf16.mxu0 0
        %4347 = vmatmul.mubr.bf16.gmra.mxu0 %v3124
        %v4348 = vpop.f32.mrf.mxu0
        %v4349 = vadd.f32 0.0, %v4348
        %v4350 = vpop.f32.mrf.mxu0
        %v4351 = vadd.f32 0.0, %v4350
        %v4352 = vpop.f32.mrf.mxu0
        %v4353 = vadd.f32 0.0, %v4352
        %v4354 = vpop.f32.mrf.mxu0
        %v4355 = vadd.f32 0.0, %v4354
        %4356 = vmatprep.mubr.bf16.mxu0 0
        %4357 = vmatmul.mubr.bf16.gmra.mxu0 %v3125
        %v4358 = vpop.f32.mrf.mxu0
        %v4359 = vadd.f32 0.0, %v4358
        %v4360 = vpop.f32.mrf.mxu0
        %v4361 = vadd.f32 0.0, %v4360
        %v4362 = vpop.f32.mrf.mxu0
        %v4363 = vadd.f32 0.0, %v4362
        %v4364 = vpop.f32.mrf.mxu0
        %v4365 = vadd.f32 0.0, %v4364
        %4366 = vmatprep.mubr.bf16.mxu0 0
        %4367 = vmatmul.mubr.bf16.gmra.mxu0 %v3126
        %v4368 = vpop.f32.mrf.mxu0
        %v4369 = vadd.f32 0.0, %v4368
        %v4370 = vpop.f32.mrf.mxu0
        %v4371 = vadd.f32 0.0, %v4370
        %v4372 = vpop.f32.mrf.mxu0
        %v4373 = vadd.f32 0.0, %v4372
        %v4374 = vpop.f32.mrf.mxu0
        %v4375 = vadd.f32 0.0, %v4374
        %4376 = vmatprep.mubr.bf16.mxu0 0
        %4377 = vmatmul.mubr.bf16.gmra.mxu0 %v3127
        %v4378 = vpop.f32.mrf.mxu0
        %v4379 = vadd.f32 0.0, %v4378
        %v4380 = vpop.f32.mrf.mxu0
        %v4381 = vadd.f32 0.0, %v4380
        %v4382 = vpop.f32.mrf.mxu0
        %v4383 = vadd.f32 0.0, %v4382
        %v4384 = vpop.f32.mrf.mxu0
        %v4385 = vadd.f32 0.0, %v4384
        %4386 = vmatprep.mubr.bf16.mxu0 0
        %4387 = vmatmul.mubr.bf16.gmra.mxu0 %v3128
        %v4388 = vpop.f32.mrf.mxu0
        %v4389 = vadd.f32 0.0, %v4388
        %v4390 = vpop.f32.mrf.mxu0
        %v4391 = vadd.f32 0.0, %v4390
        %v4392 = vpop.f32.mrf.mxu0
        %v4393 = vadd.f32 0.0, %v4392
        %v4394 = vpop.f32.mrf.mxu0
        %v4395 = vadd.f32 0.0, %v4394
        %4396 = vmatprep.mubr.bf16.mxu0 0
        %4397 = vmatmul.mubr.bf16.gmra.mxu0 %v3129
        %v4398 = vpop.f32.mrf.mxu0
        %v4399 = vadd.f32 0.0, %v4398
        %v4400 = vpop.f32.mrf.mxu0
        %v4401 = vadd.f32 0.0, %v4400
        %v4402 = vpop.f32.mrf.mxu0
        %v4403 = vadd.f32 0.0, %v4402
        %v4404 = vpop.f32.mrf.mxu0
        %v4405 = vadd.f32 0.0, %v4404
        %4406 = vmatprep.mubr.bf16.mxu0 0
        %4407 = vmatmul.mubr.bf16.gmra.mxu0 %v3130
        %v4408 = vpop.f32.mrf.mxu0
        %v4409 = vadd.f32 0.0, %v4408
        %v4410 = vpop.f32.mrf.mxu0
        %v4411 = vadd.f32 0.0, %v4410
        %v4412 = vpop.f32.mrf.mxu0
        %v4413 = vadd.f32 0.0, %v4412
        %v4414 = vpop.f32.mrf.mxu0
        %v4415 = vadd.f32 0.0, %v4414
        %4416 = vmatprep.mubr.bf16.mxu0 0
        %4417 = vmatmul.mubr.bf16.gmra.mxu0 %v3131
        %v4418 = vpop.f32.mrf.mxu0
        %v4419 = vadd.f32 0.0, %v4418
        %v4420 = vpop.f32.mrf.mxu0
        %v4421 = vadd.f32 0.0, %v4420
        %v4422 = vpop.f32.mrf.mxu0
        %v4423 = vadd.f32 0.0, %v4422
        %v4424 = vpop.f32.mrf.mxu0
        %v4425 = vadd.f32 0.0, %v4424
        %4426 = vmatprep.mubr.bf16.mxu0 0
        %4427 = vmatmul.mubr.bf16.gmra.mxu0 %v3132
        %v4428 = vpop.f32.mrf.mxu0
        %v4429 = vadd.f32 0.0, %v4428
        %v4430 = vpop.f32.mrf.mxu0
        %v4431 = vadd.f32 0.0, %v4430
        %v4432 = vpop.f32.mrf.mxu0
        %v4433 = vadd.f32 0.0, %v4432
        %v4434 = vpop.f32.mrf.mxu0
        %v4435 = vadd.f32 0.0, %v4434
        %4436 = vmatprep.mubr.bf16.mxu0 0
        %4437 = vmatmul.mubr.bf16.gmra.mxu0 %v3133
        %v4438 = vpop.f32.mrf.mxu0
        %v4439 = vadd.f32 0.0, %v4438
        %v4440 = vpop.f32.mrf.mxu0
        %v4441 = vadd.f32 0.0, %v4440
        %v4442 = vpop.f32.mrf.mxu0
        %v4443 = vadd.f32 0.0, %v4442
        %v4444 = vpop.f32.mrf.mxu0
        %v4445 = vadd.f32 0.0, %v4444
        %4446 = vmatprep.mubr.bf16.mxu0 0
        %4447 = vmatmul.mubr.bf16.gmra.mxu0 %v3134
        %v4448 = vpop.f32.mrf.mxu0
        %v4449 = vadd.f32 0.0, %v4448
        %v4450 = vpop.f32.mrf.mxu0
        %v4451 = vadd.f32 0.0, %v4450
        %v4452 = vpop.f32.mrf.mxu0
        %v4453 = vadd.f32 0.0, %v4452
        %v4454 = vpop.f32.mrf.mxu0
        %v4455 = vadd.f32 0.0, %v4454
        %4456 = vmatprep.mubr.bf16.mxu0 0
        %4457 = vmatmul.mubr.bf16.gmra.mxu0 %v3135
        %v4458 = vpop.f32.mrf.mxu0
        %v4459 = vadd.f32 0.0, %v4458
        %v4460 = vpop.f32.mrf.mxu0
        %v4461 = vadd.f32 0.0, %v4460
        %v4462 = vpop.f32.mrf.mxu0
        %v4463 = vadd.f32 0.0, %v4462
        %v4464 = vpop.f32.mrf.mxu0
        %v4465 = vadd.f32 0.0, %v4464
        %4466 = vmatprep.mubr.bf16.mxu0 0
        %4467 = vmatmul.mubr.bf16.gmra.mxu0 %v3136
        %v4468 = vpop.f32.mrf.mxu0
        %v4469 = vadd.f32 0.0, %v4468
        %v4470 = vpop.f32.mrf.mxu0
        %v4471 = vadd.f32 0.0, %v4470
        %v4472 = vpop.f32.mrf.mxu0
        %v4473 = vadd.f32 0.0, %v4472
        %v4474 = vpop.f32.mrf.mxu0
        %v4475 = vadd.f32 0.0, %v4474
        %4476 = vmatprep.mubr.bf16.mxu0 0
        %4477 = vmatmul.mubr.bf16.gmra.mxu0 %v3137
        %v4478 = vpop.f32.mrf.mxu0
        %v4479 = vadd.f32 0.0, %v4478
        %v4480 = vpop.f32.mrf.mxu0
        %v4481 = vadd.f32 0.0, %v4480
        %v4482 = vpop.f32.mrf.mxu0
        %v4483 = vadd.f32 0.0, %v4482
        %v4484 = vpop.f32.mrf.mxu0
        %v4485 = vadd.f32 0.0, %v4484
        %4486 = vmatprep.mubr.bf16.mxu0 0
        %4487 = vmatmul.mubr.bf16.gmra.mxu0 %v3138
        %v4488 = vpop.f32.mrf.mxu0
        %v4489 = vadd.f32 0.0, %v4488
        %v4490 = vpop.f32.mrf.mxu0
        %v4491 = vadd.f32 0.0, %v4490
        %v4492 = vpop.f32.mrf.mxu0
        %v4493 = vadd.f32 0.0, %v4492
        %v4494 = vpop.f32.mrf.mxu0
        %v4495 = vadd.f32 0.0, %v4494
        %4496 = vmatprep.mubr.bf16.mxu0 0
        %4497 = vmatmul.mubr.bf16.gmra.mxu0 %v3139
        %v4498 = vpop.f32.mrf.mxu0
        %v4499 = vadd.f32 0.0, %v4498
        %v4500 = vpop.f32.mrf.mxu0
        %v4501 = vadd.f32 0.0, %v4500
        %v4502 = vpop.f32.mrf.mxu0
        %v4503 = vadd.f32 0.0, %v4502
        %v4504 = vpop.f32.mrf.mxu0
        %v4505 = vadd.f32 0.0, %v4504
        %4506 = vmatprep.mubr.bf16.mxu0 0
        %4507 = vmatmul.mubr.bf16.gmra.mxu0 %v3140
        %v4508 = vpop.f32.mrf.mxu0
        %v4509 = vadd.f32 0.0, %v4508
        %v4510 = vpop.f32.mrf.mxu0
        %v4511 = vadd.f32 0.0, %v4510
        %v4512 = vpop.f32.mrf.mxu0
        %v4513 = vadd.f32 0.0, %v4512
        %v4514 = vpop.f32.mrf.mxu0
        %v4515 = vadd.f32 0.0, %v4514
        %4516 = vmatprep.mubr.bf16.mxu0 0
        %4517 = vmatmul.mubr.bf16.gmra.mxu0 %v3141
        %v4518 = vpop.f32.mrf.mxu0
        %v4519 = vadd.f32 0.0, %v4518
        %v4520 = vpop.f32.mrf.mxu0
        %v4521 = vadd.f32 0.0, %v4520
        %v4522 = vpop.f32.mrf.mxu0
        %v4523 = vadd.f32 0.0, %v4522
        %v4524 = vpop.f32.mrf.mxu0
        %v4525 = vadd.f32 0.0, %v4524
        %4526 = vmatprep.mubr.bf16.mxu0 0
        %4527 = vmatmul.mubr.bf16.gmra.mxu0 %v3142
        %v4528 = vpop.f32.mrf.mxu0
        %v4529 = vadd.f32 0.0, %v4528
        %v4530 = vpop.f32.mrf.mxu0
        %v4531 = vadd.f32 0.0, %v4530
        %v4532 = vpop.f32.mrf.mxu0
        %v4533 = vadd.f32 0.0, %v4532
        %v4534 = vpop.f32.mrf.mxu0
        %v4535 = vadd.f32 0.0, %v4534
        %4536 = vmatprep.mubr.bf16.mxu0 0
        %4537 = vmatmul.mubr.bf16.gmra.mxu0 %v3143
        %v4538 = vpop.f32.mrf.mxu0
        %v4539 = vadd.f32 0.0, %v4538
        %v4540 = vpop.f32.mrf.mxu0
        %v4541 = vadd.f32 0.0, %v4540
        %v4542 = vpop.f32.mrf.mxu0
        %v4543 = vadd.f32 0.0, %v4542
        %v4544 = vpop.f32.mrf.mxu0
        %v4545 = vadd.f32 0.0, %v4544
        %4546 = vmatprep.mubr.bf16.mxu0 0
        %4547 = vmatmul.mubr.bf16.gmra.mxu0 %v3144
        %v4548 = vpop.f32.mrf.mxu0
        %v4549 = vadd.f32 0.0, %v4548
        %v4550 = vpop.f32.mrf.mxu0
        %v4551 = vadd.f32 0.0, %v4550
        %v4552 = vpop.f32.mrf.mxu0
        %v4553 = vadd.f32 0.0, %v4552
        %v4554 = vpop.f32.mrf.mxu0
        %v4555 = vadd.f32 0.0, %v4554
        %4556 = vmatprep.mubr.bf16.mxu0 0
        %4557 = vmatmul.mubr.bf16.gmra.mxu0 %v3145
        %v4558 = vpop.f32.mrf.mxu0
        %v4559 = vadd.f32 0.0, %v4558
        %v4560 = vpop.f32.mrf.mxu0
        %v4561 = vadd.f32 0.0, %v4560
        %v4562 = vpop.f32.mrf.mxu0
        %v4563 = vadd.f32 0.0, %v4562
        %v4564 = vpop.f32.mrf.mxu0
        %v4565 = vadd.f32 0.0, %v4564
        %4566 = vmatprep.mubr.bf16.mxu0 0
        %4567 = vmatmul.mubr.bf16.gmra.mxu0 %v3146
        %v4568 = vpop.f32.mrf.mxu0
        %v4569 = vadd.f32 0.0, %v4568
        %v4570 = vpop.f32.mrf.mxu0
        %v4571 = vadd.f32 0.0, %v4570
        %v4572 = vpop.f32.mrf.mxu0
        %v4573 = vadd.f32 0.0, %v4572
        %v4574 = vpop.f32.mrf.mxu0
        %v4575 = vadd.f32 0.0, %v4574
        %4576 = vmatprep.mubr.bf16.mxu0 0
        %4577 = vmatmul.mubr.bf16.gmra.mxu0 %v3147
        %v4578 = vpop.f32.mrf.mxu0
        %v4579 = vadd.f32 0.0, %v4578
        %v4580 = vpop.f32.mrf.mxu0
        %v4581 = vadd.f32 0.0, %v4580
        %v4582 = vpop.f32.mrf.mxu0
        %v4583 = vadd.f32 0.0, %v4582
        %v4584 = vpop.f32.mrf.mxu0
        %v4585 = vadd.f32 0.0, %v4584
        %4586 = vmatprep.mubr.bf16.mxu0 0
        %4587 = vmatmul.mubr.bf16.gmra.mxu0 %v3148
        %v4588 = vpop.f32.mrf.mxu0
        %v4589 = vadd.f32 0.0, %v4588
        %v4590 = vpop.f32.mrf.mxu0
        %v4591 = vadd.f32 0.0, %v4590
        %v4592 = vpop.f32.mrf.mxu0
        %v4593 = vadd.f32 0.0, %v4592
        %v4594 = vpop.f32.mrf.mxu0
        %v4595 = vadd.f32 0.0, %v4594
        %4596 = vmatprep.mubr.bf16.mxu0 0
        %4597 = vmatmul.mubr.bf16.gmra.mxu0 %v3149
        %v4598 = vpop.f32.mrf.mxu0
        %v4599 = vadd.f32 0.0, %v4598
        %v4600 = vpop.f32.mrf.mxu0
        %v4601 = vadd.f32 0.0, %v4600
        %v4602 = vpop.f32.mrf.mxu0
        %v4603 = vadd.f32 0.0, %v4602
        %v4604 = vpop.f32.mrf.mxu0
        %v4605 = vadd.f32 0.0, %v4604
        %4606 = vmatprep.mubr.bf16.mxu0 0
        %4607 = vmatmul.mubr.bf16.gmra.mxu0 %v3150
        %v4608 = vpop.f32.mrf.mxu0
        %v4609 = vadd.f32 0.0, %v4608
        %v4610 = vpop.f32.mrf.mxu0
        %v4611 = vadd.f32 0.0, %v4610
        %v4612 = vpop.f32.mrf.mxu0
        %v4613 = vadd.f32 0.0, %v4612
        %v4614 = vpop.f32.mrf.mxu0
        %v4615 = vadd.f32 0.0, %v4614
        %4616 = vmatprep.mubr.bf16.mxu0 0
        %4617 = vmatmul.mubr.bf16.gmra.mxu0 %v3151
        %v4618 = vpop.f32.mrf.mxu0
        %v4619 = vadd.f32 0.0, %v4618
        %v4620 = vpop.f32.mrf.mxu0
        %v4621 = vadd.f32 0.0, %v4620
        %v4622 = vpop.f32.mrf.mxu0
        %v4623 = vadd.f32 0.0, %v4622
        %v4624 = vpop.f32.mrf.mxu0
        %v4625 = vadd.f32 0.0, %v4624
        %4626 = vmatprep.mubr.bf16.mxu0 0
        %4627 = vmatmul.mubr.bf16.gmra.mxu0 %v3152
        %v4628 = vpop.f32.mrf.mxu0
        %v4629 = vadd.f32 0.0, %v4628
        %v4630 = vpop.f32.mrf.mxu0
        %v4631 = vadd.f32 0.0, %v4630
        %v4632 = vpop.f32.mrf.mxu0
        %v4633 = vadd.f32 0.0, %v4632
        %v4634 = vpop.f32.mrf.mxu0
        %v4635 = vadd.f32 0.0, %v4634
        %4636 = vmatprep.mubr.bf16.mxu0 0
        %4637 = vmatmul.mubr.bf16.gmra.mxu0 %v3153
        %v4638 = vpop.f32.mrf.mxu0
        %v4639 = vadd.f32 0.0, %v4638
        %v4640 = vpop.f32.mrf.mxu0
        %v4641 = vadd.f32 0.0, %v4640
        %v4642 = vpop.f32.mrf.mxu0
        %v4643 = vadd.f32 0.0, %v4642
        %v4644 = vpop.f32.mrf.mxu0
        %v4645 = vadd.f32 0.0, %v4644
        %4646 = vmatprep.mubr.bf16.mxu0 0
        %4647 = vmatmul.mubr.bf16.gmra.mxu0 %v3154
        %v4648 = vpop.f32.mrf.mxu0
        %v4649 = vadd.f32 0.0, %v4648
        %v4650 = vpop.f32.mrf.mxu0
        %v4651 = vadd.f32 0.0, %v4650
        %v4652 = vpop.f32.mrf.mxu0
        %v4653 = vadd.f32 0.0, %v4652
        %v4654 = vpop.f32.mrf.mxu0
        %v4655 = vadd.f32 0.0, %v4654
        %4656 = vmatprep.mubr.bf16.mxu0 0
        %4657 = vmatmul.mubr.bf16.gmra.mxu0 %v3155
        %v4658 = vpop.f32.mrf.mxu0
        %v4659 = vadd.f32 0.0, %v4658
        %v4660 = vpop.f32.mrf.mxu0
        %v4661 = vadd.f32 0.0, %v4660
        %v4662 = vpop.f32.mrf.mxu0
        %v4663 = vadd.f32 0.0, %v4662
        %v4664 = vpop.f32.mrf.mxu0
        %v4665 = vadd.f32 0.0, %v4664
        %4666 = vmatprep.mubr.bf16.mxu0 0
        %4667 = vmatmul.mubr.bf16.gmra.mxu0 %v3156
        %v4668 = vpop.f32.mrf.mxu0
        %v4669 = vadd.f32 0.0, %v4668
        %v4670 = vpop.f32.mrf.mxu0
        %v4671 = vadd.f32 0.0, %v4670
        %v4672 = vpop.f32.mrf.mxu0
        %v4673 = vadd.f32 0.0, %v4672
        %v4674 = vpop.f32.mrf.mxu0
        %v4675 = vadd.f32 0.0, %v4674
        %4676 = vmatprep.mubr.bf16.mxu0 0
        %4677 = vmatmul.mubr.bf16.gmra.mxu0 %v3157
        %v4678 = vpop.f32.mrf.mxu0
        %v4679 = vadd.f32 0.0, %v4678
        %v4680 = vpop.f32.mrf.mxu0
        %v4681 = vadd.f32 0.0, %v4680
        %v4682 = vpop.f32.mrf.mxu0
        %v4683 = vadd.f32 0.0, %v4682
        %v4684 = vpop.f32.mrf.mxu0
        %v4685 = vadd.f32 0.0, %v4684
        %4686 = vmatprep.mubr.bf16.mxu0 0
        %4687 = vmatmul.mubr.bf16.gmra.mxu0 %v3158
        %v4688 = vpop.f32.mrf.mxu0
        %v4689 = vadd.f32 0.0, %v4688
        %v4690 = vpop.f32.mrf.mxu0
        %v4691 = vadd.f32 0.0, %v4690
        %v4692 = vpop.f32.mrf.mxu0
        %v4693 = vadd.f32 0.0, %v4692
        %v4694 = vpop.f32.mrf.mxu0
        %v4695 = vadd.f32 0.0, %v4694
        %4696 = vdwg.mxu0
        %v4697 = vmax.f32 %v3386, %v3390
        %v4698 = vmax.f32 %v4697, %v3396
        %v4699 = vmax.f32 %v4698, %v3400
        %v4700 = vmax.f32 %v4699, %v3406
        %v4701 = vmax.f32 %v4700, %v3410
        %v4702 = vmax.f32 %v4701, %v3416
        %v4703 = vmax.f32 %v4702, %v3420
        %v4704 = vmax.f32 %v4703, %v3426
        %v4705 = vmax.f32 %v4704, %v3430
        %v4706 = vmax.f32 %v4705, %v3436
        %v4707 = vmax.f32 %v4706, %v3440
        %v4708 = vmax.f32 %v4707, %v3446
        %v4709 = vmax.f32 %v4708, %v3450
        %v4710 = vmax.f32 %v4709, %v3456
        %v4711 = vmax.f32 %v4710, %v3460
        %v4712 = vrot.slane %v4711, 4
        %v4713 = vmax.f32 %v4711, %v4712
        %v4714 = vrot.slane %v4713, 2
        %v4715 = vmax.f32 %v4713, %v4714
        %v4716 = vrot.slane %v4715, 1
        %v4717 = vmax.f32 %v4715, %v4716
        %v4718 = vmax.f32 %v3388, %v3392
        %v4719 = vmax.f32 %v4718, %v3398
        %v4720 = vmax.f32 %v4719, %v3402
        %v4721 = vmax.f32 %v4720, %v3408
        %v4722 = vmax.f32 %v4721, %v3412
        %v4723 = vmax.f32 %v4722, %v3418
        %v4724 = vmax.f32 %v4723, %v3422
        %v4725 = vmax.f32 %v4724, %v3428
        %v4726 = vmax.f32 %v4725, %v3432
        %v4727 = vmax.f32 %v4726, %v3438
        %v4728 = vmax.f32 %v4727, %v3442
        %v4729 = vmax.f32 %v4728, %v3448
        %v4730 = vmax.f32 %v4729, %v3452
        %v4731 = vmax.f32 %v4730, %v3458
        %v4732 = vmax.f32 %v4731, %v3462
        %v4733 = vrot.slane %v4732, 4
        %v4734 = vmax.f32 %v4732, %v4733
        %v4735 = vrot.slane %v4734, 2
        %v4736 = vmax.f32 %v4734, %v4735
        %v4737 = vrot.slane %v4736, 1
        %v4738 = vmax.f32 %v4736, %v4737
        %v4739 = vmax.f32 %v4059, %v4063
        %v4740 = vmax.f32 %v4739, %v4069
        %v4741 = vmax.f32 %v4740, %v4073
        %v4742 = vmax.f32 %v4741, %v4079
        %v4743 = vmax.f32 %v4742, %v4083
        %v4744 = vmax.f32 %v4743, %v4089
        %v4745 = vmax.f32 %v4744, %v4093
        %v4746 = vmax.f32 %v4745, %v4099
        %v4747 = vmax.f32 %v4746, %v4103
        %v4748 = vmax.f32 %v4747, %v4109
        %v4749 = vmax.f32 %v4748, %v4113
        %v4750 = vmax.f32 %v4749, %v4119
        %v4751 = vmax.f32 %v4750, %v4123
        %v4752 = vmax.f32 %v4751, %v4129
        %v4753 = vmax.f32 %v4752, %v4133
        %v4754 = vrot.slane %v4753, 4
        %v4755 = vmax.f32 %v4753, %v4754
        %v4756 = vrot.slane %v4755, 2
        %v4757 = vmax.f32 %v4755, %v4756
        %v4758 = vrot.slane %v4757, 1
        %v4759 = vmax.f32 %v4757, %v4758
        %v4760 = vmax.f32 %v4061, %v4065
        %v4761 = vmax.f32 %v4760, %v4071
        %v4762 = vmax.f32 %v4761, %v4075
        %v4763 = vmax.f32 %v4762, %v4081
        %v4764 = vmax.f32 %v4763, %v4085
        %v4765 = vmax.f32 %v4764, %v4091
        %v4766 = vmax.f32 %v4765, %v4095
        %v4767 = vmax.f32 %v4766, %v4101
        %v4768 = vmax.f32 %v4767, %v4105
        %v4769 = vmax.f32 %v4768, %v4111
        %v4770 = vmax.f32 %v4769, %v4115
        %v4771 = vmax.f32 %v4770, %v4121
        %v4772 = vmax.f32 %v4771, %v4125
        %v4773 = vmax.f32 %v4772, %v4131
        %v4774 = vmax.f32 %v4773, %v4135
        %v4775 = vrot.slane %v4774, 4
        %v4776 = vmax.f32 %v4774, %v4775
        %v4777 = vrot.slane %v4776, 2
        %v4778 = vmax.f32 %v4776, %v4777
        %v4779 = vrot.slane %v4778, 1
        %v4780 = vmax.f32 %v4778, %v4779
        %v4781 = vmax.f32 %v3466, %v3470
        %v4782 = vmax.f32 %v4781, %v3476
        %v4783 = vmax.f32 %v4782, %v3480
        %v4784 = vmax.f32 %v4783, %v3486
        %v4785 = vmax.f32 %v4784, %v3490
        %v4786 = vmax.f32 %v4785, %v3496
        %v4787 = vmax.f32 %v4786, %v3500
        %v4788 = vmax.f32 %v4787, %v3506
        %v4789 = vmax.f32 %v4788, %v3510
        %v4790 = vmax.f32 %v4789, %v3516
        %v4791 = vmax.f32 %v4790, %v3520
        %v4792 = vmax.f32 %v4791, %v3526
        %v4793 = vmax.f32 %v4792, %v3530
        %v4794 = vmax.f32 %v4793, %v3536
        %v4795 = vmax.f32 %v4794, %v3540
        %v4796 = vrot.slane %v4795, 4
        %v4797 = vmax.f32 %v4795, %v4796
        %v4798 = vrot.slane %v4797, 2
        %v4799 = vmax.f32 %v4797, %v4798
        %v4800 = vrot.slane %v4799, 1
        %v4801 = vmax.f32 %v4799, %v4800
        %v4802 = vmax.f32 %v3468, %v3472
        %v4803 = vmax.f32 %v4802, %v3478
        %v4804 = vmax.f32 %v4803, %v3482
        %v4805 = vmax.f32 %v4804, %v3488
        %v4806 = vmax.f32 %v4805, %v3492
        %v4807 = vmax.f32 %v4806, %v3498
        %v4808 = vmax.f32 %v4807, %v3502
        %v4809 = vmax.f32 %v4808, %v3508
        %v4810 = vmax.f32 %v4809, %v3512
        %v4811 = vmax.f32 %v4810, %v3518
        %v4812 = vmax.f32 %v4811, %v3522
        %v4813 = vmax.f32 %v4812, %v3528
        %v4814 = vmax.f32 %v4813, %v3532
        %v4815 = vmax.f32 %v4814, %v3538
        %v4816 = vmax.f32 %v4815, %v3542
        %v4817 = vrot.slane %v4816, 4
        %v4818 = vmax.f32 %v4816, %v4817
        %v4819 = vrot.slane %v4818, 2
        %v4820 = vmax.f32 %v4818, %v4819
        %v4821 = vrot.slane %v4820, 1
        %v4822 = vmax.f32 %v4820, %v4821
        %v4823 = vmax.f32 %v4139, %v4143
        %v4824 = vmax.f32 %v4823, %v4149
        %v4825 = vmax.f32 %v4824, %v4153
        %v4826 = vmax.f32 %v4825, %v4159
        %v4827 = vmax.f32 %v4826, %v4163
        %v4828 = vmax.f32 %v4827, %v4169
        %v4829 = vmax.f32 %v4828, %v4173
        %v4830 = vmax.f32 %v4829, %v4179
        %v4831 = vmax.f32 %v4830, %v4183
        %v4832 = vmax.f32 %v4831, %v4189
        %v4833 = vmax.f32 %v4832, %v4193
        %v4834 = vmax.f32 %v4833, %v4199
        %v4835 = vmax.f32 %v4834, %v4203
        %v4836 = vmax.f32 %v4835, %v4209
        %v4837 = vmax.f32 %v4836, %v4213
        %v4838 = vrot.slane %v4837, 4
        %v4839 = vmax.f32 %v4837, %v4838
        %v4840 = vrot.slane %v4839, 2
        %v4841 = vmax.f32 %v4839, %v4840
        %v4842 = vrot.slane %v4841, 1
        %v4843 = vmax.f32 %v4841, %v4842
        %v4844 = vmax.f32 %v4141, %v4145
        %v4845 = vmax.f32 %v4844, %v4151
        %v4846 = vmax.f32 %v4845, %v4155
        %v4847 = vmax.f32 %v4846, %v4161
        %v4848 = vmax.f32 %v4847, %v4165
        %v4849 = vmax.f32 %v4848, %v4171
        %v4850 = vmax.f32 %v4849, %v4175
        %v4851 = vmax.f32 %v4850, %v4181
        %v4852 = vmax.f32 %v4851, %v4185
        %v4853 = vmax.f32 %v4852, %v4191
        %v4854 = vmax.f32 %v4853, %v4195
        %v4855 = vmax.f32 %v4854, %v4201
        %v4856 = vmax.f32 %v4855, %v4205
        %v4857 = vmax.f32 %v4856, %v4211
        %v4858 = vmax.f32 %v4857, %v4215
        %v4859 = vrot.slane %v4858, 4
        %v4860 = vmax.f32 %v4858, %v4859
        %v4861 = vrot.slane %v4860, 2
        %v4862 = vmax.f32 %v4860, %v4861
        %v4863 = vrot.slane %v4862, 1
        %v4864 = vmax.f32 %v4862, %v4863
        %v4865 = vmax.f32 %v3546, %v3550
        %v4866 = vmax.f32 %v4865, %v3556
        %v4867 = vmax.f32 %v4866, %v3560
        %v4868 = vmax.f32 %v4867, %v3566
        %v4869 = vmax.f32 %v4868, %v3570
        %v4870 = vmax.f32 %v4869, %v3576
        %v4871 = vmax.f32 %v4870, %v3580
        %v4872 = vmax.f32 %v4871, %v3586
        %v4873 = vmax.f32 %v4872, %v3590
        %v4874 = vmax.f32 %v4873, %v3596
        %v4875 = vmax.f32 %v4874, %v3600
        %v4876 = vmax.f32 %v4875, %v3606
        %v4877 = vmax.f32 %v4876, %v3610
        %v4878 = vmax.f32 %v4877, %v3616
        %v4879 = vmax.f32 %v4878, %v3620
        %v4880 = vrot.slane %v4879, 4
        %v4881 = vmax.f32 %v4879, %v4880
        %v4882 = vrot.slane %v4881, 2
        %v4883 = vmax.f32 %v4881, %v4882
        %v4884 = vrot.slane %v4883, 1
        %v4885 = vmax.f32 %v4883, %v4884
        %v4886 = vmax.f32 %v3548, %v3552
        %v4887 = vmax.f32 %v4886, %v3558
        %v4888 = vmax.f32 %v4887, %v3562
        %v4889 = vmax.f32 %v4888, %v3568
        %v4890 = vmax.f32 %v4889, %v3572
        %v4891 = vmax.f32 %v4890, %v3578
        %v4892 = vmax.f32 %v4891, %v3582
        %v4893 = vmax.f32 %v4892, %v3588
        %v4894 = vmax.f32 %v4893, %v3592
        %v4895 = vmax.f32 %v4894, %v3598
        %v4896 = vmax.f32 %v4895, %v3602
        %v4897 = vmax.f32 %v4896, %v3608
        %v4898 = vmax.f32 %v4897, %v3612
        %v4899 = vmax.f32 %v4898, %v3618
        %v4900 = vmax.f32 %v4899, %v3622
        %v4901 = vrot.slane %v4900, 4
        %v4902 = vmax.f32 %v4900, %v4901
        %v4903 = vrot.slane %v4902, 2
        %v4904 = vmax.f32 %v4902, %v4903
        %v4905 = vrot.slane %v4904, 1
        %v4906 = vmax.f32 %v4904, %v4905
        %v4907 = vmax.f32 %v4219, %v4223
        %v4908 = vmax.f32 %v4907, %v4229
        %v4909 = vmax.f32 %v4908, %v4233
        %v4910 = vmax.f32 %v4909, %v4239
        %v4911 = vmax.f32 %v4910, %v4243
        %v4912 = vmax.f32 %v4911, %v4249
        %v4913 = vmax.f32 %v4912, %v4253
        %v4914 = vmax.f32 %v4913, %v4259
        %v4915 = vmax.f32 %v4914, %v4263
        %v4916 = vmax.f32 %v4915, %v4269
        %v4917 = vmax.f32 %v4916, %v4273
        %v4918 = vmax.f32 %v4917, %v4279
        %v4919 = vmax.f32 %v4918, %v4283
        %v4920 = vmax.f32 %v4919, %v4289
        %v4921 = vmax.f32 %v4920, %v4293
        %v4922 = vrot.slane %v4921, 4
        %v4923 = vmax.f32 %v4921, %v4922
        %v4924 = vrot.slane %v4923, 2
        %v4925 = vmax.f32 %v4923, %v4924
        %v4926 = vrot.slane %v4925, 1
        %v4927 = vmax.f32 %v4925, %v4926
        %v4928 = vmax.f32 %v4221, %v4225
        %v4929 = vmax.f32 %v4928, %v4231
        %v4930 = vmax.f32 %v4929, %v4235
        %v4931 = vmax.f32 %v4930, %v4241
        %v4932 = vmax.f32 %v4931, %v4245
        %v4933 = vmax.f32 %v4932, %v4251
        %v4934 = vmax.f32 %v4933, %v4255
        %v4935 = vmax.f32 %v4934, %v4261
        %v4936 = vmax.f32 %v4935, %v4265
        %v4937 = vmax.f32 %v4936, %v4271
        %v4938 = vmax.f32 %v4937, %v4275
        %v4939 = vmax.f32 %v4938, %v4281
        %v4940 = vmax.f32 %v4939, %v4285
        %v4941 = vmax.f32 %v4940, %v4291
        %v4942 = vmax.f32 %v4941, %v4295
        %v4943 = vrot.slane %v4942, 4
        %v4944 = vmax.f32 %v4942, %v4943
        %v4945 = vrot.slane %v4944, 2
        %v4946 = vmax.f32 %v4944, %v4945
        %v4947 = vrot.slane %v4946, 1
        %v4948 = vmax.f32 %v4946, %v4947
        %v4949 = vmax.f32 %v3626, %v3630
        %v4950 = vmax.f32 %v4949, %v3636
        %v4951 = vmax.f32 %v4950, %v3640
        %v4952 = vmax.f32 %v4951, %v3646
        %v4953 = vmax.f32 %v4952, %v3650
        %v4954 = vmax.f32 %v4953, %v3656
        %v4955 = vmax.f32 %v4954, %v3660
        %v4956 = vmax.f32 %v4955, %v3666
        %v4957 = vmax.f32 %v4956, %v3670
        %v4958 = vmax.f32 %v4957, %v3676
        %v4959 = vmax.f32 %v4958, %v3680
        %v4960 = vmax.f32 %v4959, %v3686
        %v4961 = vmax.f32 %v4960, %v3690
        %v4962 = vmax.f32 %v4961, %v3696
        %v4963 = vmax.f32 %v4962, %v3700
        %v4964 = vrot.slane %v4963, 4
        %v4965 = vmax.f32 %v4963, %v4964
        %v4966 = vrot.slane %v4965, 2
        %v4967 = vmax.f32 %v4965, %v4966
        %v4968 = vrot.slane %v4967, 1
        %v4969 = vmax.f32 %v4967, %v4968
        %v4970 = vmax.f32 %v3628, %v3632
        %v4971 = vmax.f32 %v4970, %v3638
        %v4972 = vmax.f32 %v4971, %v3642
        %v4973 = vmax.f32 %v4972, %v3648
        %v4974 = vmax.f32 %v4973, %v3652
        %v4975 = vmax.f32 %v4974, %v3658
        %v4976 = vmax.f32 %v4975, %v3662
        %v4977 = vmax.f32 %v4976, %v3668
        %v4978 = vmax.f32 %v4977, %v3672
        %v4979 = vmax.f32 %v4978, %v3678
        %v4980 = vmax.f32 %v4979, %v3682
        %v4981 = vmax.f32 %v4980, %v3688
        %v4982 = vmax.f32 %v4981, %v3692
        %v4983 = vmax.f32 %v4982, %v3698
        %v4984 = vmax.f32 %v4983, %v3702
        %v4985 = vrot.slane %v4984, 4
        %v4986 = vmax.f32 %v4984, %v4985
        %v4987 = vrot.slane %v4986, 2
        %v4988 = vmax.f32 %v4986, %v4987
        %v4989 = vrot.slane %v4988, 1
        %v4990 = vmax.f32 %v4988, %v4989
        %v4991 = vmax.f32 %v4299, %v4303
        %v4992 = vmax.f32 %v4991, %v4309
        %v4993 = vmax.f32 %v4992, %v4313
        %v4994 = vmax.f32 %v4993, %v4319
        %v4995 = vmax.f32 %v4994, %v4323
        %v4996 = vmax.f32 %v4995, %v4329
        %v4997 = vmax.f32 %v4996, %v4333
        %v4998 = vmax.f32 %v4997, %v4339
        %v4999 = vmax.f32 %v4998, %v4343
        %v5000 = vmax.f32 %v4999, %v4349
        %v5001 = vmax.f32 %v5000, %v4353
        %v5002 = vmax.f32 %v5001, %v4359
        %v5003 = vmax.f32 %v5002, %v4363
        %v5004 = vmax.f32 %v5003, %v4369
        %v5005 = vmax.f32 %v5004, %v4373
        %v5006 = vrot.slane %v5005, 4
        %v5007 = vmax.f32 %v5005, %v5006
        %v5008 = vrot.slane %v5007, 2
        %v5009 = vmax.f32 %v5007, %v5008
        %v5010 = vrot.slane %v5009, 1
        %v5011 = vmax.f32 %v5009, %v5010
        %v5012 = vmax.f32 %v4301, %v4305
        %v5013 = vmax.f32 %v5012, %v4311
        %v5014 = vmax.f32 %v5013, %v4315
        %v5015 = vmax.f32 %v5014, %v4321
        %v5016 = vmax.f32 %v5015, %v4325
        %v5017 = vmax.f32 %v5016, %v4331
        %v5018 = vmax.f32 %v5017, %v4335
        %v5019 = vmax.f32 %v5018, %v4341
        %v5020 = vmax.f32 %v5019, %v4345
        %v5021 = vmax.f32 %v5020, %v4351
        %v5022 = vmax.f32 %v5021, %v4355
        %v5023 = vmax.f32 %v5022, %v4361
        %v5024 = vmax.f32 %v5023, %v4365
        %v5025 = vmax.f32 %v5024, %v4371
        %v5026 = vmax.f32 %v5025, %v4375
        %v5027 = vrot.slane %v5026, 4
        %v5028 = vmax.f32 %v5026, %v5027
        %v5029 = vrot.slane %v5028, 2
        %v5030 = vmax.f32 %v5028, %v5029
        %v5031 = vrot.slane %v5030, 1
        %v5032 = vmax.f32 %v5030, %v5031
        %v5033 = vmax.f32 %v3706, %v3710
        %v5034 = vmax.f32 %v5033, %v3716
        %v5035 = vmax.f32 %v5034, %v3720
        %v5036 = vmax.f32 %v5035, %v3726
        %v5037 = vmax.f32 %v5036, %v3730
        %v5038 = vmax.f32 %v5037, %v3736
        %v5039 = vmax.f32 %v5038, %v3740
        %v5040 = vmax.f32 %v5039, %v3746
        %v5041 = vmax.f32 %v5040, %v3750
        %v5042 = vmax.f32 %v5041, %v3756
        %v5043 = vmax.f32 %v5042, %v3760
        %v5044 = vmax.f32 %v5043, %v3766
        %v5045 = vmax.f32 %v5044, %v3770
        %v5046 = vmax.f32 %v5045, %v3776
        %v5047 = vmax.f32 %v5046, %v3780
        %v5048 = vrot.slane %v5047, 4
        %v5049 = vmax.f32 %v5047, %v5048
        %v5050 = vrot.slane %v5049, 2
        %v5051 = vmax.f32 %v5049, %v5050
        %v5052 = vrot.slane %v5051, 1
        %v5053 = vmax.f32 %v5051, %v5052
        %v5054 = vmax.f32 %v3708, %v3712
        %v5055 = vmax.f32 %v5054, %v3718
        %v5056 = vmax.f32 %v5055, %v3722
        %v5057 = vmax.f32 %v5056, %v3728
        %v5058 = vmax.f32 %v5057, %v3732
        %v5059 = vmax.f32 %v5058, %v3738
        %v5060 = vmax.f32 %v5059, %v3742
        %v5061 = vmax.f32 %v5060, %v3748
        %v5062 = vmax.f32 %v5061, %v3752
        %v5063 = vmax.f32 %v5062, %v3758
        %v5064 = vmax.f32 %v5063, %v3762
        %v5065 = vmax.f32 %v5064, %v3768
        %v5066 = vmax.f32 %v5065, %v3772
        %v5067 = vmax.f32 %v5066, %v3778
        %v5068 = vmax.f32 %v5067, %v3782
        %v5069 = vrot.slane %v5068, 4
        %v5070 = vmax.f32 %v5068, %v5069
        %v5071 = vrot.slane %v5070, 2
        %v5072 = vmax.f32 %v5070, %v5071
        %v5073 = vrot.slane %v5072, 1
        %v5074 = vmax.f32 %v5072, %v5073
        %v5075 = vmax.f32 %v4379, %v4383
        %v5076 = vmax.f32 %v5075, %v4389
        %v5077 = vmax.f32 %v5076, %v4393
        %v5078 = vmax.f32 %v5077, %v4399
        %v5079 = vmax.f32 %v5078, %v4403
        %v5080 = vmax.f32 %v5079, %v4409
        %v5081 = vmax.f32 %v5080, %v4413
        %v5082 = vmax.f32 %v5081, %v4419
        %v5083 = vmax.f32 %v5082, %v4423
        %v5084 = vmax.f32 %v5083, %v4429
        %v5085 = vmax.f32 %v5084, %v4433
        %v5086 = vmax.f32 %v5085, %v4439
        %v5087 = vmax.f32 %v5086, %v4443
        %v5088 = vmax.f32 %v5087, %v4449
        %v5089 = vmax.f32 %v5088, %v4453
        %v5090 = vrot.slane %v5089, 4
        %v5091 = vmax.f32 %v5089, %v5090
        %v5092 = vrot.slane %v5091, 2
        %v5093 = vmax.f32 %v5091, %v5092
        %v5094 = vrot.slane %v5093, 1
        %v5095 = vmax.f32 %v5093, %v5094
        %v5096 = vmax.f32 %v4381, %v4385
        %v5097 = vmax.f32 %v5096, %v4391
        %v5098 = vmax.f32 %v5097, %v4395
        %v5099 = vmax.f32 %v5098, %v4401
        %v5100 = vmax.f32 %v5099, %v4405
        %v5101 = vmax.f32 %v5100, %v4411
        %v5102 = vmax.f32 %v5101, %v4415
        %v5103 = vmax.f32 %v5102, %v4421
        %v5104 = vmax.f32 %v5103, %v4425
        %v5105 = vmax.f32 %v5104, %v4431
        %v5106 = vmax.f32 %v5105, %v4435
        %v5107 = vmax.f32 %v5106, %v4441
        %v5108 = vmax.f32 %v5107, %v4445
        %v5109 = vmax.f32 %v5108, %v4451
        %v5110 = vmax.f32 %v5109, %v4455
        %v5111 = vrot.slane %v5110, 4
        %v5112 = vmax.f32 %v5110, %v5111
        %v5113 = vrot.slane %v5112, 2
        %v5114 = vmax.f32 %v5112, %v5113
        %v5115 = vrot.slane %v5114, 1
        %v5116 = vmax.f32 %v5114, %v5115
        %v5117 = vmax.f32 %v3786, %v3790
        %v5118 = vmax.f32 %v5117, %v3796
        %v5119 = vmax.f32 %v5118, %v3800
        %v5120 = vmax.f32 %v5119, %v3806
        %v5121 = vmax.f32 %v5120, %v3810
        %v5122 = vmax.f32 %v5121, %v3816
        %v5123 = vmax.f32 %v5122, %v3820
        %v5124 = vmax.f32 %v5123, %v3826
        %v5125 = vmax.f32 %v5124, %v3830
        %v5126 = vmax.f32 %v5125, %v3836
        %v5127 = vmax.f32 %v5126, %v3840
        %v5128 = vmax.f32 %v5127, %v3846
        %v5129 = vmax.f32 %v5128, %v3850
        %v5130 = vmax.f32 %v5129, %v3856
        %v5131 = vmax.f32 %v5130, %v3860
        %v5132 = vrot.slane %v5131, 4
        %v5133 = vmax.f32 %v5131, %v5132
        %v5134 = vrot.slane %v5133, 2
        %v5135 = vmax.f32 %v5133, %v5134
        %v5136 = vrot.slane %v5135, 1
        %v5137 = vmax.f32 %v5135, %v5136
        %v5138 = vmax.f32 %v3788, %v3792
        %v5139 = vmax.f32 %v5138, %v3798
        %v5140 = vmax.f32 %v5139, %v3802
        %v5141 = vmax.f32 %v5140, %v3808
        %v5142 = vmax.f32 %v5141, %v3812
        %v5143 = vmax.f32 %v5142, %v3818
        %v5144 = vmax.f32 %v5143, %v3822
        %v5145 = vmax.f32 %v5144, %v3828
        %v5146 = vmax.f32 %v5145, %v3832
        %v5147 = vmax.f32 %v5146, %v3838
        %v5148 = vmax.f32 %v5147, %v3842
        %v5149 = vmax.f32 %v5148, %v3848
        %v5150 = vmax.f32 %v5149, %v3852
        %v5151 = vmax.f32 %v5150, %v3858
        %v5152 = vmax.f32 %v5151, %v3862
        %v5153 = vrot.slane %v5152, 4
        %v5154 = vmax.f32 %v5152, %v5153
        %v5155 = vrot.slane %v5154, 2
        %v5156 = vmax.f32 %v5154, %v5155
        %v5157 = vrot.slane %v5156, 1
        %v5158 = vmax.f32 %v5156, %v5157
        %v5159 = vmax.f32 %v4459, %v4463
        %v5160 = vmax.f32 %v5159, %v4469
        %v5161 = vmax.f32 %v5160, %v4473
        %v5162 = vmax.f32 %v5161, %v4479
        %v5163 = vmax.f32 %v5162, %v4483
        %v5164 = vmax.f32 %v5163, %v4489
        %v5165 = vmax.f32 %v5164, %v4493
        %v5166 = vmax.f32 %v5165, %v4499
        %v5167 = vmax.f32 %v5166, %v4503
        %v5168 = vmax.f32 %v5167, %v4509
        %v5169 = vmax.f32 %v5168, %v4513
        %v5170 = vmax.f32 %v5169, %v4519
        %v5171 = vmax.f32 %v5170, %v4523
        %v5172 = vmax.f32 %v5171, %v4529
        %v5173 = vmax.f32 %v5172, %v4533
        %v5174 = vrot.slane %v5173, 4
        %v5175 = vmax.f32 %v5173, %v5174
        %v5176 = vrot.slane %v5175, 2
        %v5177 = vmax.f32 %v5175, %v5176
        %v5178 = vrot.slane %v5177, 1
        %v5179 = vmax.f32 %v5177, %v5178
        %v5180 = vmax.f32 %v4461, %v4465
        %v5181 = vmax.f32 %v5180, %v4471
        %v5182 = vmax.f32 %v5181, %v4475
        %v5183 = vmax.f32 %v5182, %v4481
        %v5184 = vmax.f32 %v5183, %v4485
        %v5185 = vmax.f32 %v5184, %v4491
        %v5186 = vmax.f32 %v5185, %v4495
        %v5187 = vmax.f32 %v5186, %v4501
        %v5188 = vmax.f32 %v5187, %v4505
        %v5189 = vmax.f32 %v5188, %v4511
        %v5190 = vmax.f32 %v5189, %v4515
        %v5191 = vmax.f32 %v5190, %v4521
        %v5192 = vmax.f32 %v5191, %v4525
        %v5193 = vmax.f32 %v5192, %v4531
        %v5194 = vmax.f32 %v5193, %v4535
        %v5195 = vrot.slane %v5194, 4
        %v5196 = vmax.f32 %v5194, %v5195
        %v5197 = vrot.slane %v5196, 2
        %v5198 = vmax.f32 %v5196, %v5197
        %v5199 = vrot.slane %v5198, 1
        %v5200 = vmax.f32 %v5198, %v5199
        %v5201 = vmax.f32 %v3866, %v3870
        %v5202 = vmax.f32 %v5201, %v3876
        %v5203 = vmax.f32 %v5202, %v3880
        %v5204 = vmax.f32 %v5203, %v3886
        %v5205 = vmax.f32 %v5204, %v3890
        %v5206 = vmax.f32 %v5205, %v3896
        %v5207 = vmax.f32 %v5206, %v3900
        %v5208 = vmax.f32 %v5207, %v3906
        %v5209 = vmax.f32 %v5208, %v3910
        %v5210 = vmax.f32 %v5209, %v3916
        %v5211 = vmax.f32 %v5210, %v3920
        %v5212 = vmax.f32 %v5211, %v3926
        %v5213 = vmax.f32 %v5212, %v3930
        %v5214 = vmax.f32 %v5213, %v3936
        %v5215 = vmax.f32 %v5214, %v3940
        %v5216 = vrot.slane %v5215, 4
        %v5217 = vmax.f32 %v5215, %v5216
        %v5218 = vrot.slane %v5217, 2
        %v5219 = vmax.f32 %v5217, %v5218
        %v5220 = vrot.slane %v5219, 1
        %v5221 = vmax.f32 %v5219, %v5220
        %v5222 = vmax.f32 %v3868, %v3872
        %v5223 = vmax.f32 %v5222, %v3878
        %v5224 = vmax.f32 %v5223, %v3882
        %v5225 = vmax.f32 %v5224, %v3888
        %v5226 = vmax.f32 %v5225, %v3892
        %v5227 = vmax.f32 %v5226, %v3898
        %v5228 = vmax.f32 %v5227, %v3902
        %v5229 = vmax.f32 %v5228, %v3908
        %v5230 = vmax.f32 %v5229, %v3912
        %v5231 = vmax.f32 %v5230, %v3918
        %v5232 = vmax.f32 %v5231, %v3922
        %v5233 = vmax.f32 %v5232, %v3928
        %v5234 = vmax.f32 %v5233, %v3932
        %v5235 = vmax.f32 %v5234, %v3938
        %v5236 = vmax.f32 %v5235, %v3942
        %v5237 = vrot.slane %v5236, 4
        %v5238 = vmax.f32 %v5236, %v5237
        %v5239 = vrot.slane %v5238, 2
        %v5240 = vmax.f32 %v5238, %v5239
        %v5241 = vrot.slane %v5240, 1
        %v5242 = vmax.f32 %v5240, %v5241
        %v5243 = vmax.f32 %v4539, %v4543
        %v5244 = vmax.f32 %v5243, %v4549
        %v5245 = vmax.f32 %v5244, %v4553
        %v5246 = vmax.f32 %v5245, %v4559
        %v5247 = vmax.f32 %v5246, %v4563
        %v5248 = vmax.f32 %v5247, %v4569
        %v5249 = vmax.f32 %v5248, %v4573
        %v5250 = vmax.f32 %v5249, %v4579
        %v5251 = vmax.f32 %v5250, %v4583
        %v5252 = vmax.f32 %v5251, %v4589
        %v5253 = vmax.f32 %v5252, %v4593
        %v5254 = vmax.f32 %v5253, %v4599
        %v5255 = vmax.f32 %v5254, %v4603
        %v5256 = vmax.f32 %v5255, %v4609
        %v5257 = vmax.f32 %v5256, %v4613
        %v5258 = vrot.slane %v5257, 4
        %v5259 = vmax.f32 %v5257, %v5258
        %v5260 = vrot.slane %v5259, 2
        %v5261 = vmax.f32 %v5259, %v5260
        %v5262 = vrot.slane %v5261, 1
        %v5263 = vmax.f32 %v5261, %v5262
        %v5264 = vmax.f32 %v4541, %v4545
        %v5265 = vmax.f32 %v5264, %v4551
        %v5266 = vmax.f32 %v5265, %v4555
        %v5267 = vmax.f32 %v5266, %v4561
        %v5268 = vmax.f32 %v5267, %v4565
        %v5269 = vmax.f32 %v5268, %v4571
        %v5270 = vmax.f32 %v5269, %v4575
        %v5271 = vmax.f32 %v5270, %v4581
        %v5272 = vmax.f32 %v5271, %v4585
        %v5273 = vmax.f32 %v5272, %v4591
        %v5274 = vmax.f32 %v5273, %v4595
        %v5275 = vmax.f32 %v5274, %v4601
        %v5276 = vmax.f32 %v5275, %v4605
        %v5277 = vmax.f32 %v5276, %v4611
        %v5278 = vmax.f32 %v5277, %v4615
        %v5279 = vrot.slane %v5278, 4
        %v5280 = vmax.f32 %v5278, %v5279
        %v5281 = vrot.slane %v5280, 2
        %v5282 = vmax.f32 %v5280, %v5281
        %v5283 = vrot.slane %v5282, 1
        %v5284 = vmax.f32 %v5282, %v5283
        %v5285 = vmax.f32 %v3946, %v3950
        %v5286 = vmax.f32 %v5285, %v3956
        %v5287 = vmax.f32 %v5286, %v3960
        %v5288 = vmax.f32 %v5287, %v3966
        %v5289 = vmax.f32 %v5288, %v3970
        %v5290 = vmax.f32 %v5289, %v3976
        %v5291 = vmax.f32 %v5290, %v3980
        %v5292 = vmax.f32 %v5291, %v3986
        %v5293 = vmax.f32 %v5292, %v3990
        %v5294 = vmax.f32 %v5293, %v3996
        %v5295 = vmax.f32 %v5294, %v4000
        %v5296 = vmax.f32 %v5295, %v4006
        %v5297 = vmax.f32 %v5296, %v4010
        %v5298 = vmax.f32 %v5297, %v4016
        %v5299 = vmax.f32 %v5298, %v4020
        %v5300 = vrot.slane %v5299, 4
        %v5301 = vmax.f32 %v5299, %v5300
        %v5302 = vrot.slane %v5301, 2
        %v5303 = vmax.f32 %v5301, %v5302
        %v5304 = vrot.slane %v5303, 1
        %v5305 = vmax.f32 %v5303, %v5304
        %v5306 = vmax.f32 %v3948, %v3952
        %v5307 = vmax.f32 %v5306, %v3958
        %v5308 = vmax.f32 %v5307, %v3962
        %v5309 = vmax.f32 %v5308, %v3968
        %v5310 = vmax.f32 %v5309, %v3972
        %v5311 = vmax.f32 %v5310, %v3978
        %v5312 = vmax.f32 %v5311, %v3982
        %v5313 = vmax.f32 %v5312, %v3988
        %v5314 = vmax.f32 %v5313, %v3992
        %v5315 = vmax.f32 %v5314, %v3998
        %v5316 = vmax.f32 %v5315, %v4002
        %v5317 = vmax.f32 %v5316, %v4008
        %v5318 = vmax.f32 %v5317, %v4012
        %v5319 = vmax.f32 %v5318, %v4018
        %v5320 = vmax.f32 %v5319, %v4022
        %v5321 = vrot.slane %v5320, 4
        %v5322 = vmax.f32 %v5320, %v5321
        %v5323 = vrot.slane %v5322, 2
        %v5324 = vmax.f32 %v5322, %v5323
        %v5325 = vrot.slane %v5324, 1
        %v5326 = vmax.f32 %v5324, %v5325
        %v5327 = vmax.f32 %v4619, %v4623
        %v5328 = vmax.f32 %v5327, %v4629
        %v5329 = vmax.f32 %v5328, %v4633
        %v5330 = vmax.f32 %v5329, %v4639
        %v5331 = vmax.f32 %v5330, %v4643
        %v5332 = vmax.f32 %v5331, %v4649
        %v5333 = vmax.f32 %v5332, %v4653
        %v5334 = vmax.f32 %v5333, %v4659
        %v5335 = vmax.f32 %v5334, %v4663
        %v5336 = vmax.f32 %v5335, %v4669
        %v5337 = vmax.f32 %v5336, %v4673
        %v5338 = vmax.f32 %v5337, %v4679
        %v5339 = vmax.f32 %v5338, %v4683
        %v5340 = vmax.f32 %v5339, %v4689
        %v5341 = vmax.f32 %v5340, %v4693
        %v5342 = vrot.slane %v5341, 4
        %v5343 = vmax.f32 %v5341, %v5342
        %v5344 = vrot.slane %v5343, 2
        %v5345 = vmax.f32 %v5343, %v5344
        %v5346 = vrot.slane %v5345, 1
        %v5347 = vmax.f32 %v5345, %v5346
        %v5348 = vmax.f32 %v4621, %v4625
        %v5349 = vmax.f32 %v5348, %v4631
        %v5350 = vmax.f32 %v5349, %v4635
        %v5351 = vmax.f32 %v5350, %v4641
        %v5352 = vmax.f32 %v5351, %v4645
        %v5353 = vmax.f32 %v5352, %v4651
        %v5354 = vmax.f32 %v5353, %v4655
        %v5355 = vmax.f32 %v5354, %v4661
        %v5356 = vmax.f32 %v5355, %v4665
        %v5357 = vmax.f32 %v5356, %v4671
        %v5358 = vmax.f32 %v5357, %v4675
        %v5359 = vmax.f32 %v5358, %v4681
        %v5360 = vmax.f32 %v5359, %v4685
        %v5361 = vmax.f32 %v5360, %v4691
        %v5362 = vmax.f32 %v5361, %v4695
        %v5363 = vrot.slane %v5362, 4
        %v5364 = vmax.f32 %v5362, %v5363
        %v5365 = vrot.slane %v5364, 2
        %v5366 = vmax.f32 %v5364, %v5365
        %v5367 = vrot.slane %v5366, 1
        %v5368 = vmax.f32 %v5366, %v5367
        %v5369 = vld [vmem:[%s851] sm:$0xff]
        %v5370 = vld [vmem:[%s851 + $0x8] sm:$0xff]
        %v5371 = vld [vmem:[%s851 + $0x10] sm:$0xff]
        %v5372 = vld [vmem:[%s851 + $0x18] sm:$0xff]
        %vm5405 = vcmask 1041409
        %v5406 = vsel %vm5405, %v4801, %v4717
        %vm5407 = vcmask 1042434
        %v5408 = vsel %vm5407, %v4885, %v5406
        %vm5409 = vcmask 1043459
        %v5410 = vsel %vm5409, %v4969, %v5408
        %vm5411 = vcmask 1044484
        %v5412 = vsel %vm5411, %v5053, %v5410
        %vm5413 = vcmask 1045509
        %v5414 = vsel %vm5413, %v5137, %v5412
        %vm5415 = vcmask 1046534
        %v5416 = vsel %vm5415, %v5221, %v5414
        %vm5417 = vcmask 1047559
        %v5418 = vsel %vm5417, %v5305, %v5416
        %v5419 = vsel %vm5405, %v4822, %v4738
        %v5420 = vsel %vm5407, %v4906, %v5419
        %v5421 = vsel %vm5409, %v4990, %v5420
        %v5422 = vsel %vm5411, %v5074, %v5421
        %v5423 = vsel %vm5413, %v5158, %v5422
        %v5424 = vsel %vm5415, %v5242, %v5423
        %v5425 = vsel %vm5417, %v5326, %v5424
        %v5426 = vsel %vm5405, %v4843, %v4759
        %v5427 = vsel %vm5407, %v4927, %v5426
        %v5428 = vsel %vm5409, %v5011, %v5427
        %v5429 = vsel %vm5411, %v5095, %v5428
        %v5430 = vsel %vm5413, %v5179, %v5429
        %v5431 = vsel %vm5415, %v5263, %v5430
        %v5432 = vsel %vm5417, %v5347, %v5431
        %v5433 = vsel %vm5405, %v4864, %v4780
        %v5434 = vsel %vm5407, %v4948, %v5433
        %v5435 = vsel %vm5409, %v5032, %v5434
        %v5436 = vsel %vm5411, %v5116, %v5435
        %v5437 = vsel %vm5413, %v5200, %v5436
        %v5438 = vsel %vm5415, %v5284, %v5437
        %v5439 = vsel %vm5417, %v5368, %v5438
        %v5444 = vmax.f32 %v5369, %v5418
        %v5445 = vmax.f32 %v5370, %v5425
        %v5446 = vmax.f32 %v5371, %v5432
        %v5447 = vmax.f32 %v5372, %v5439
        %5448 = vst [vmem:[%s851] sm:$0xff] %v5444
        %5449 = vst [vmem:[%s851 + $0x8] sm:$0xff] %v5445
        %5450 = vst [vmem:[%s851 + $0x10] sm:$0xff] %v5446
        %5451 = vst [vmem:[%s851 + $0x18] sm:$0xff] %v5447
        %v5452 = vld [vmem:[%s6 + $0x10] sm:$0xff]
        %v5453 = vld [vmem:[%s6 + $0x18] sm:$0xff]
        %v5454 = vld [vmem:[%s6 + $0x30] sm:$0xff]
        %v5455 = vld [vmem:[%s6 + $0x38] sm:$0xff]
        %v5456 = vld [vmem:[%s6 + $0x50] sm:$0xff]
        %v5457 = vld [vmem:[%s6 + $0x58] sm:$0xff]
        %v5458 = vld [vmem:[%s6 + $0x70] sm:$0xff]
        %v5459 = vld [vmem:[%s6 + $0x78] sm:$0xff]
        %v5460 = vld [vmem:[%s6 + $0x90] sm:$0xff]
        %v5461 = vld [vmem:[%s6 + $0x98] sm:$0xff]
        %v5462 = vld [vmem:[%s6 + $0xb0] sm:$0xff]
        %v5463 = vld [vmem:[%s6 + $0xb8] sm:$0xff]
        %v5464 = vld [vmem:[%s6 + $0xd0] sm:$0xff]
        %v5465 = vld [vmem:[%s6 + $0xd8] sm:$0xff]
        %v5466 = vld [vmem:[%s6 + $0xf0] sm:$0xff]
        %v5467 = vld [vmem:[%s6 + $0xf8] sm:$0xff]
        %v5468 = vld [vmem:[%s6 + $0x110] sm:$0xff]
        %v5469 = vld [vmem:[%s6 + $0x118] sm:$0xff]
        %v5470 = vld [vmem:[%s6 + $0x130] sm:$0xff]
        %v5471 = vld [vmem:[%s6 + $0x138] sm:$0xff]
        %v5472 = vld [vmem:[%s6 + $0x150] sm:$0xff]
        %v5473 = vld [vmem:[%s6 + $0x158] sm:$0xff]
        %v5474 = vld [vmem:[%s6 + $0x170] sm:$0xff]
        %v5475 = vld [vmem:[%s6 + $0x178] sm:$0xff]
        %v5476 = vld [vmem:[%s6 + $0x190] sm:$0xff]
        %v5477 = vld [vmem:[%s6 + $0x198] sm:$0xff]
        %v5478 = vld [vmem:[%s6 + $0x1b0] sm:$0xff]
        %v5479 = vld [vmem:[%s6 + $0x1b8] sm:$0xff]
        %v5480 = vld [vmem:[%s6 + $0x1d0] sm:$0xff]
        %v5481 = vld [vmem:[%s6 + $0x1d8] sm:$0xff]
        %v5482 = vld [vmem:[%s6 + $0x1f0] sm:$0xff]
        %v5483 = vld [vmem:[%s6 + $0x1f8] sm:$0xff]
        %v5516 = vunpack.c.l.b16 %v5452
        %v5517 = vunpack.c.h.b16 %v5452
        %v5518 = vunpack.c.l.b16 %v5453
        %v5519 = vunpack.c.h.b16 %v5453
        %v5520 = vunpack.c.l.b16 %v5454
        %v5521 = vunpack.c.h.b16 %v5454
        %v5522 = vunpack.c.l.b16 %v5455
        %v5523 = vunpack.c.h.b16 %v5455
        %v5524 = vunpack.c.l.b16 %v5456
        %v5525 = vunpack.c.h.b16 %v5456
        %v5526 = vunpack.c.l.b16 %v5457
        %v5527 = vunpack.c.h.b16 %v5457
        %v5528 = vunpack.c.l.b16 %v5458
        %v5529 = vunpack.c.h.b16 %v5458
        %v5530 = vunpack.c.l.b16 %v5459
        %v5531 = vunpack.c.h.b16 %v5459
        %v5532 = vunpack.c.l.b16 %v5460
        %v5533 = vunpack.c.h.b16 %v5460
        %v5534 = vunpack.c.l.b16 %v5461
        %v5535 = vunpack.c.h.b16 %v5461
        %v5536 = vunpack.c.l.b16 %v5462
        %v5537 = vunpack.c.h.b16 %v5462
        %v5538 = vunpack.c.l.b16 %v5463
        %v5539 = vunpack.c.h.b16 %v5463
        %v5540 = vunpack.c.l.b16 %v5464
        %v5541 = vunpack.c.h.b16 %v5464
        %v5542 = vunpack.c.l.b16 %v5465
        %v5543 = vunpack.c.h.b16 %v5465
        %v5544 = vunpack.c.l.b16 %v5466
        %v5545 = vunpack.c.h.b16 %v5466
        %v5546 = vunpack.c.l.b16 %v5467
        %v5547 = vunpack.c.h.b16 %v5467
        %v5548 = vunpack.c.l.b16 %v5468
        %v5549 = vunpack.c.h.b16 %v5468
        %v5550 = vunpack.c.l.b16 %v5469
        %v5551 = vunpack.c.h.b16 %v5469
        %v5552 = vunpack.c.l.b16 %v5470
        %v5553 = vunpack.c.h.b16 %v5470
        %v5554 = vunpack.c.l.b16 %v5471
        %v5555 = vunpack.c.h.b16 %v5471
        %v5556 = vunpack.c.l.b16 %v5472
        %v5557 = vunpack.c.h.b16 %v5472
        %v5558 = vunpack.c.l.b16 %v5473
        %v5559 = vunpack.c.h.b16 %v5473
        %v5560 = vunpack.c.l.b16 %v5474
        %v5561 = vunpack.c.h.b16 %v5474
        %v5562 = vunpack.c.l.b16 %v5475
        %v5563 = vunpack.c.h.b16 %v5475
        %v5564 = vunpack.c.l.b16 %v5476
        %v5565 = vunpack.c.h.b16 %v5476
        %v5566 = vunpack.c.l.b16 %v5477
        %v5567 = vunpack.c.h.b16 %v5477
        %v5568 = vunpack.c.l.b16 %v5478
        %v5569 = vunpack.c.h.b16 %v5478
        %v5570 = vunpack.c.l.b16 %v5479
        %v5571 = vunpack.c.h.b16 %v5479
        %v5572 = vunpack.c.l.b16 %v5480
        %v5573 = vunpack.c.h.b16 %v5480
        %v5574 = vunpack.c.l.b16 %v5481
        %v5575 = vunpack.c.h.b16 %v5481
        %v5576 = vunpack.c.l.b16 %v5482
        %v5577 = vunpack.c.h.b16 %v5482
        %v5578 = vunpack.c.l.b16 %v5483
        %v5579 = vunpack.c.h.b16 %v5483
        %v5580 = vpack.c.b16 %v5520, %v5516
        %v5581 = vpack.c.b16 %v5521, %v5517
        %v5582 = vpack.c.b16 %v5522, %v5518
        %v5583 = vpack.c.b16 %v5523, %v5519
        %v5584 = vpack.c.b16 %v5528, %v5524
        %v5585 = vpack.c.b16 %v5529, %v5525
        %v5586 = vpack.c.b16 %v5530, %v5526
        %v5587 = vpack.c.b16 %v5531, %v5527
        %v5588 = vpack.c.b16 %v5536, %v5532
        %v5589 = vpack.c.b16 %v5537, %v5533
        %v5590 = vpack.c.b16 %v5538, %v5534
        %v5591 = vpack.c.b16 %v5539, %v5535
        %v5592 = vpack.c.b16 %v5544, %v5540
        %v5593 = vpack.c.b16 %v5545, %v5541
        %v5594 = vpack.c.b16 %v5546, %v5542
        %v5595 = vpack.c.b16 %v5547, %v5543
        %v5596 = vpack.c.b16 %v5552, %v5548
        %v5597 = vpack.c.b16 %v5553, %v5549
        %v5598 = vpack.c.b16 %v5554, %v5550
        %v5599 = vpack.c.b16 %v5555, %v5551
        %v5600 = vpack.c.b16 %v5560, %v5556
        %v5601 = vpack.c.b16 %v5561, %v5557
        %v5602 = vpack.c.b16 %v5562, %v5558
        %v5603 = vpack.c.b16 %v5563, %v5559
        %v5604 = vpack.c.b16 %v5568, %v5564
        %v5605 = vpack.c.b16 %v5569, %v5565
        %v5606 = vpack.c.b16 %v5570, %v5566
        %v5607 = vpack.c.b16 %v5571, %v5567
        %v5608 = vpack.c.b16 %v5576, %v5572
        %v5609 = vpack.c.b16 %v5577, %v5573
        %v5610 = vpack.c.b16 %v5578, %v5574
        %v5611 = vpack.c.b16 %v5579, %v5575
        %5644 = vmatprep.subr.bf16.mxu0 %v5609
        %5645 = vmatpush1.bf16.msra.mxu0 %v5608
        %5646 = vmatprep.subr.bf16.mxu0 %v5605
        %5647 = vmatpush1.bf16.msra.mxu0 %v5604
        %5648 = vmatprep.subr.bf16.mxu0 %v5601
        %5649 = vmatpush1.bf16.msra.mxu0 %v5600
        %5650 = vmatprep.subr.bf16.mxu0 %v5597
        %5651 = vmatpush1.bf16.msra.mxu0 %v5596
        %5652 = vmatprep.subr.bf16.mxu0 %v5593
        %5653 = vmatpush1.bf16.msra.mxu0 %v5592
        %5654 = vmatprep.subr.bf16.mxu0 %v5589
        %5655 = vmatpush1.bf16.msra.mxu0 %v5588
        %5656 = vmatprep.subr.bf16.mxu0 %v5585
        %5657 = vmatpush1.bf16.msra.mxu0 %v5584
        %5658 = vmatprep.subr.bf16.mxu0 %v5581
        %5659 = vmatpush1.bf16.msra.mxu0 %v5580
        %5660 = vmatprep.subr.bf16.mxu0 0
        %5661 = vmatpush2.bf16.msra.mxu0 0
        %5662 = vmatprep.subr.bf16.mxu0 0
        %5663 = vmatpush2.bf16.msra.mxu0 0
        %5664 = vmatprep.subr.bf16.mxu0 0
        %5665 = vmatpush2.bf16.msra.mxu0 0
        %5666 = vmatprep.subr.bf16.mxu0 0
        %5667 = vmatpush2.bf16.msra.mxu0 0
        %5668 = vmatprep.subr.bf16.mxu0 0
        %5669 = vmatpush2.bf16.msra.mxu0 0
        %5670 = vmatprep.subr.bf16.mxu0 0
        %5671 = vmatpush2.bf16.msra.mxu0 0
        %5672 = vmatprep.subr.bf16.mxu0 0
        %5673 = vmatpush2.bf16.msra.mxu0 0
        %5674 = vmatprep.subr.bf16.mxu0 0
        %5675 = vmatpush2.bf16.msra.mxu0 0
        %5676 = vmatprep.mubr.bf16.mxu0 0
        %5677 = vmatmul.mubr.bf16.gmra.mxu0 %v3095
        %v5678 = vpop.f32.mrf.mxu0
        %v5679 = vadd.f32 0.0, %v5678
        %v5680 = vpop.f32.mrf.mxu0
        %v5681 = vadd.f32 0.0, %v5680
        %v5682 = vpop.f32.mrf.mxu0
        %v5683 = vadd.f32 0.0, %v5682
        %v5684 = vpop.f32.mrf.mxu0
        %v5685 = vadd.f32 0.0, %v5684
        %5686 = vmatprep.mubr.bf16.mxu0 0
        %5687 = vmatmul.mubr.bf16.gmra.mxu0 %v3096
        %v5688 = vpop.f32.mrf.mxu0
        %v5689 = vadd.f32 0.0, %v5688
        %v5690 = vpop.f32.mrf.mxu0
        %v5691 = vadd.f32 0.0, %v5690
        %v5692 = vpop.f32.mrf.mxu0
        %v5693 = vadd.f32 0.0, %v5692
        %v5694 = vpop.f32.mrf.mxu0
        %v5695 = vadd.f32 0.0, %v5694
        %5696 = vmatprep.mubr.bf16.mxu0 0
        %5697 = vmatmul.mubr.bf16.gmra.mxu0 %v3097
        %v5698 = vpop.f32.mrf.mxu0
        %v5699 = vadd.f32 0.0, %v5698
        %v5700 = vpop.f32.mrf.mxu0
        %v5701 = vadd.f32 0.0, %v5700
        %v5702 = vpop.f32.mrf.mxu0
        %v5703 = vadd.f32 0.0, %v5702
        %v5704 = vpop.f32.mrf.mxu0
        %v5705 = vadd.f32 0.0, %v5704
        %5706 = vmatprep.mubr.bf16.mxu0 0
        %5707 = vmatmul.mubr.bf16.gmra.mxu0 %v3098
        %v5708 = vpop.f32.mrf.mxu0
        %v5709 = vadd.f32 0.0, %v5708
        %v5710 = vpop.f32.mrf.mxu0
        %v5711 = vadd.f32 0.0, %v5710
        %v5712 = vpop.f32.mrf.mxu0
        %v5713 = vadd.f32 0.0, %v5712
        %v5714 = vpop.f32.mrf.mxu0
        %v5715 = vadd.f32 0.0, %v5714
        %5716 = vmatprep.mubr.bf16.mxu0 0
        %5717 = vmatmul.mubr.bf16.gmra.mxu0 %v3099
        %v5718 = vpop.f32.mrf.mxu0
        %v5719 = vadd.f32 0.0, %v5718
        %v5720 = vpop.f32.mrf.mxu0
        %v5721 = vadd.f32 0.0, %v5720
        %v5722 = vpop.f32.mrf.mxu0
        %v5723 = vadd.f32 0.0, %v5722
        %v5724 = vpop.f32.mrf.mxu0
        %v5725 = vadd.f32 0.0, %v5724
        %5726 = vmatprep.mubr.bf16.mxu0 0
        %5727 = vmatmul.mubr.bf16.gmra.mxu0 %v3100
        %v5728 = vpop.f32.mrf.mxu0
        %v5729 = vadd.f32 0.0, %v5728
        %v5730 = vpop.f32.mrf.mxu0
        %v5731 = vadd.f32 0.0, %v5730
        %v5732 = vpop.f32.mrf.mxu0
        %v5733 = vadd.f32 0.0, %v5732
        %v5734 = vpop.f32.mrf.mxu0
        %v5735 = vadd.f32 0.0, %v5734
        %5736 = vmatprep.mubr.bf16.mxu0 0
        %5737 = vmatmul.mubr.bf16.gmra.mxu0 %v3101
        %v5738 = vpop.f32.mrf.mxu0
        %v5739 = vadd.f32 0.0, %v5738
        %v5740 = vpop.f32.mrf.mxu0
        %v5741 = vadd.f32 0.0, %v5740
        %v5742 = vpop.f32.mrf.mxu0
        %v5743 = vadd.f32 0.0, %v5742
        %v5744 = vpop.f32.mrf.mxu0
        %v5745 = vadd.f32 0.0, %v5744
        %5746 = vmatprep.mubr.bf16.mxu0 0
        %5747 = vmatmul.mubr.bf16.gmra.mxu0 %v3102
        %v5748 = vpop.f32.mrf.mxu0
        %v5749 = vadd.f32 0.0, %v5748
        %v5750 = vpop.f32.mrf.mxu0
        %v5751 = vadd.f32 0.0, %v5750
        %v5752 = vpop.f32.mrf.mxu0
        %v5753 = vadd.f32 0.0, %v5752
        %v5754 = vpop.f32.mrf.mxu0
        %v5755 = vadd.f32 0.0, %v5754
        %5756 = vmatprep.mubr.bf16.mxu0 0
        %5757 = vmatmul.mubr.bf16.gmra.mxu0 %v3103
        %v5758 = vpop.f32.mrf.mxu0
        %v5759 = vadd.f32 0.0, %v5758
        %v5760 = vpop.f32.mrf.mxu0
        %v5761 = vadd.f32 0.0, %v5760
        %v5762 = vpop.f32.mrf.mxu0
        %v5763 = vadd.f32 0.0, %v5762
        %v5764 = vpop.f32.mrf.mxu0
        %v5765 = vadd.f32 0.0, %v5764
        %5766 = vmatprep.mubr.bf16.mxu0 0
        %5767 = vmatmul.mubr.bf16.gmra.mxu0 %v3104
        %v5768 = vpop.f32.mrf.mxu0
        %v5769 = vadd.f32 0.0, %v5768
        %v5770 = vpop.f32.mrf.mxu0
        %v5771 = vadd.f32 0.0, %v5770
        %v5772 = vpop.f32.mrf.mxu0
        %v5773 = vadd.f32 0.0, %v5772
        %v5774 = vpop.f32.mrf.mxu0
        %v5775 = vadd.f32 0.0, %v5774
        %5776 = vmatprep.mubr.bf16.mxu0 0
        %5777 = vmatmul.mubr.bf16.gmra.mxu0 %v3105
        %v5778 = vpop.f32.mrf.mxu0
        %v5779 = vadd.f32 0.0, %v5778
        %v5780 = vpop.f32.mrf.mxu0
        %v5781 = vadd.f32 0.0, %v5780
        %v5782 = vpop.f32.mrf.mxu0
        %v5783 = vadd.f32 0.0, %v5782
        %v5784 = vpop.f32.mrf.mxu0
        %v5785 = vadd.f32 0.0, %v5784
        %5786 = vmatprep.mubr.bf16.mxu0 0
        %5787 = vmatmul.mubr.bf16.gmra.mxu0 %v3106
        %v5788 = vpop.f32.mrf.mxu0
        %v5789 = vadd.f32 0.0, %v5788
        %v5790 = vpop.f32.mrf.mxu0
        %v5791 = vadd.f32 0.0, %v5790
        %v5792 = vpop.f32.mrf.mxu0
        %v5793 = vadd.f32 0.0, %v5792
        %v5794 = vpop.f32.mrf.mxu0
        %v5795 = vadd.f32 0.0, %v5794
        %5796 = vmatprep.mubr.bf16.mxu0 0
        %5797 = vmatmul.mubr.bf16.gmra.mxu0 %v3107
        %v5798 = vpop.f32.mrf.mxu0
        %v5799 = vadd.f32 0.0, %v5798
        %v5800 = vpop.f32.mrf.mxu0
        %v5801 = vadd.f32 0.0, %v5800
        %v5802 = vpop.f32.mrf.mxu0
        %v5803 = vadd.f32 0.0, %v5802
        %v5804 = vpop.f32.mrf.mxu0
        %v5805 = vadd.f32 0.0, %v5804
        %5806 = vmatprep.mubr.bf16.mxu0 0
        %5807 = vmatmul.mubr.bf16.gmra.mxu0 %v3108
        %v5808 = vpop.f32.mrf.mxu0
        %v5809 = vadd.f32 0.0, %v5808
        %v5810 = vpop.f32.mrf.mxu0
        %v5811 = vadd.f32 0.0, %v5810
        %v5812 = vpop.f32.mrf.mxu0
        %v5813 = vadd.f32 0.0, %v5812
        %v5814 = vpop.f32.mrf.mxu0
        %v5815 = vadd.f32 0.0, %v5814
        %5816 = vmatprep.mubr.bf16.mxu0 0
        %5817 = vmatmul.mubr.bf16.gmra.mxu0 %v3109
        %v5818 = vpop.f32.mrf.mxu0
        %v5819 = vadd.f32 0.0, %v5818
        %v5820 = vpop.f32.mrf.mxu0
        %v5821 = vadd.f32 0.0, %v5820
        %v5822 = vpop.f32.mrf.mxu0
        %v5823 = vadd.f32 0.0, %v5822
        %v5824 = vpop.f32.mrf.mxu0
        %v5825 = vadd.f32 0.0, %v5824
        %5826 = vmatprep.mubr.bf16.mxu0 0
        %5827 = vmatmul.mubr.bf16.gmra.mxu0 %v3110
        %v5828 = vpop.f32.mrf.mxu0
        %v5829 = vadd.f32 0.0, %v5828
        %v5830 = vpop.f32.mrf.mxu0
        %v5831 = vadd.f32 0.0, %v5830
        %v5832 = vpop.f32.mrf.mxu0
        %v5833 = vadd.f32 0.0, %v5832
        %v5834 = vpop.f32.mrf.mxu0
        %v5835 = vadd.f32 0.0, %v5834
        %5836 = vmatprep.mubr.bf16.mxu0 0
        %5837 = vmatmul.mubr.bf16.gmra.mxu0 %v3111
        %v5838 = vpop.f32.mrf.mxu0
        %v5839 = vadd.f32 0.0, %v5838
        %v5840 = vpop.f32.mrf.mxu0
        %v5841 = vadd.f32 0.0, %v5840
        %v5842 = vpop.f32.mrf.mxu0
        %v5843 = vadd.f32 0.0, %v5842
        %v5844 = vpop.f32.mrf.mxu0
        %v5845 = vadd.f32 0.0, %v5844
        %5846 = vmatprep.mubr.bf16.mxu0 0
        %5847 = vmatmul.mubr.bf16.gmra.mxu0 %v3112
        %v5848 = vpop.f32.mrf.mxu0
        %v5849 = vadd.f32 0.0, %v5848
        %v5850 = vpop.f32.mrf.mxu0
        %v5851 = vadd.f32 0.0, %v5850
        %v5852 = vpop.f32.mrf.mxu0
        %v5853 = vadd.f32 0.0, %v5852
        %v5854 = vpop.f32.mrf.mxu0
        %v5855 = vadd.f32 0.0, %v5854
        %5856 = vmatprep.mubr.bf16.mxu0 0
        %5857 = vmatmul.mubr.bf16.gmra.mxu0 %v3113
        %v5858 = vpop.f32.mrf.mxu0
        %v5859 = vadd.f32 0.0, %v5858
        %v5860 = vpop.f32.mrf.mxu0
        %v5861 = vadd.f32 0.0, %v5860
        %v5862 = vpop.f32.mrf.mxu0
        %v5863 = vadd.f32 0.0, %v5862
        %v5864 = vpop.f32.mrf.mxu0
        %v5865 = vadd.f32 0.0, %v5864
        %5866 = vmatprep.mubr.bf16.mxu0 0
        %5867 = vmatmul.mubr.bf16.gmra.mxu0 %v3114
        %v5868 = vpop.f32.mrf.mxu0
        %v5869 = vadd.f32 0.0, %v5868
        %v5870 = vpop.f32.mrf.mxu0
        %v5871 = vadd.f32 0.0, %v5870
        %v5872 = vpop.f32.mrf.mxu0
        %v5873 = vadd.f32 0.0, %v5872
        %v5874 = vpop.f32.mrf.mxu0
        %v5875 = vadd.f32 0.0, %v5874
        %5876 = vmatprep.mubr.bf16.mxu0 0
        %5877 = vmatmul.mubr.bf16.gmra.mxu0 %v3115
        %v5878 = vpop.f32.mrf.mxu0
        %v5879 = vadd.f32 0.0, %v5878
        %v5880 = vpop.f32.mrf.mxu0
        %v5881 = vadd.f32 0.0, %v5880
        %v5882 = vpop.f32.mrf.mxu0
        %v5883 = vadd.f32 0.0, %v5882
        %v5884 = vpop.f32.mrf.mxu0
        %v5885 = vadd.f32 0.0, %v5884
        %5886 = vmatprep.mubr.bf16.mxu0 0
        %5887 = vmatmul.mubr.bf16.gmra.mxu0 %v3116
        %v5888 = vpop.f32.mrf.mxu0
        %v5889 = vadd.f32 0.0, %v5888
        %v5890 = vpop.f32.mrf.mxu0
        %v5891 = vadd.f32 0.0, %v5890
        %v5892 = vpop.f32.mrf.mxu0
        %v5893 = vadd.f32 0.0, %v5892
        %v5894 = vpop.f32.mrf.mxu0
        %v5895 = vadd.f32 0.0, %v5894
        %5896 = vmatprep.mubr.bf16.mxu0 0
        %5897 = vmatmul.mubr.bf16.gmra.mxu0 %v3117
        %v5898 = vpop.f32.mrf.mxu0
        %v5899 = vadd.f32 0.0, %v5898
        %v5900 = vpop.f32.mrf.mxu0
        %v5901 = vadd.f32 0.0, %v5900
        %v5902 = vpop.f32.mrf.mxu0
        %v5903 = vadd.f32 0.0, %v5902
        %v5904 = vpop.f32.mrf.mxu0
        %v5905 = vadd.f32 0.0, %v5904
        %5906 = vmatprep.mubr.bf16.mxu0 0
        %5907 = vmatmul.mubr.bf16.gmra.mxu0 %v3118
        %v5908 = vpop.f32.mrf.mxu0
        %v5909 = vadd.f32 0.0, %v5908
        %v5910 = vpop.f32.mrf.mxu0
        %v5911 = vadd.f32 0.0, %v5910
        %v5912 = vpop.f32.mrf.mxu0
        %v5913 = vadd.f32 0.0, %v5912
        %v5914 = vpop.f32.mrf.mxu0
        %v5915 = vadd.f32 0.0, %v5914
        %5916 = vmatprep.mubr.bf16.mxu0 0
        %5917 = vmatmul.mubr.bf16.gmra.mxu0 %v3119
        %v5918 = vpop.f32.mrf.mxu0
        %v5919 = vadd.f32 0.0, %v5918
        %v5920 = vpop.f32.mrf.mxu0
        %v5921 = vadd.f32 0.0, %v5920
        %v5922 = vpop.f32.mrf.mxu0
        %v5923 = vadd.f32 0.0, %v5922
        %v5924 = vpop.f32.mrf.mxu0
        %v5925 = vadd.f32 0.0, %v5924
        %5926 = vmatprep.mubr.bf16.mxu0 0
        %5927 = vmatmul.mubr.bf16.gmra.mxu0 %v3120
        %v5928 = vpop.f32.mrf.mxu0
        %v5929 = vadd.f32 0.0, %v5928
        %v5930 = vpop.f32.mrf.mxu0
        %v5931 = vadd.f32 0.0, %v5930
        %v5932 = vpop.f32.mrf.mxu0
        %v5933 = vadd.f32 0.0, %v5932
        %v5934 = vpop.f32.mrf.mxu0
        %v5935 = vadd.f32 0.0, %v5934
        %5936 = vmatprep.mubr.bf16.mxu0 0
        %5937 = vmatmul.mubr.bf16.gmra.mxu0 %v3121
        %v5938 = vpop.f32.mrf.mxu0
        %v5939 = vadd.f32 0.0, %v5938
        %v5940 = vpop.f32.mrf.mxu0
        %v5941 = vadd.f32 0.0, %v5940
        %v5942 = vpop.f32.mrf.mxu0
        %v5943 = vadd.f32 0.0, %v5942
        %v5944 = vpop.f32.mrf.mxu0
        %v5945 = vadd.f32 0.0, %v5944
        %5946 = vmatprep.mubr.bf16.mxu0 0
        %5947 = vmatmul.mubr.bf16.gmra.mxu0 %v3122
        %v5948 = vpop.f32.mrf.mxu0
        %v5949 = vadd.f32 0.0, %v5948
        %v5950 = vpop.f32.mrf.mxu0
        %v5951 = vadd.f32 0.0, %v5950
        %v5952 = vpop.f32.mrf.mxu0
        %v5953 = vadd.f32 0.0, %v5952
        %v5954 = vpop.f32.mrf.mxu0
        %v5955 = vadd.f32 0.0, %v5954
        %5956 = vmatprep.mubr.bf16.mxu0 0
        %5957 = vmatmul.mubr.bf16.gmra.mxu0 %v3123
        %v5958 = vpop.f32.mrf.mxu0
        %v5959 = vadd.f32 0.0, %v5958
        %v5960 = vpop.f32.mrf.mxu0
        %v5961 = vadd.f32 0.0, %v5960
        %v5962 = vpop.f32.mrf.mxu0
        %v5963 = vadd.f32 0.0, %v5962
        %v5964 = vpop.f32.mrf.mxu0
        %v5965 = vadd.f32 0.0, %v5964
        %5966 = vmatprep.mubr.bf16.mxu0 0
        %5967 = vmatmul.mubr.bf16.gmra.mxu0 %v3124
        %v5968 = vpop.f32.mrf.mxu0
        %v5969 = vadd.f32 0.0, %v5968
        %v5970 = vpop.f32.mrf.mxu0
        %v5971 = vadd.f32 0.0, %v5970
        %v5972 = vpop.f32.mrf.mxu0
        %v5973 = vadd.f32 0.0, %v5972
        %v5974 = vpop.f32.mrf.mxu0
        %v5975 = vadd.f32 0.0, %v5974
        %5976 = vmatprep.mubr.bf16.mxu0 0
        %5977 = vmatmul.mubr.bf16.gmra.mxu0 %v3125
        %v5978 = vpop.f32.mrf.mxu0
        %v5979 = vadd.f32 0.0, %v5978
        %v5980 = vpop.f32.mrf.mxu0
        %v5981 = vadd.f32 0.0, %v5980
        %v5982 = vpop.f32.mrf.mxu0
        %v5983 = vadd.f32 0.0, %v5982
        %v5984 = vpop.f32.mrf.mxu0
        %v5985 = vadd.f32 0.0, %v5984
        %5986 = vmatprep.mubr.bf16.mxu0 0
        %5987 = vmatmul.mubr.bf16.gmra.mxu0 %v3126
        %v5988 = vpop.f32.mrf.mxu0
        %v5989 = vadd.f32 0.0, %v5988
        %v5990 = vpop.f32.mrf.mxu0
        %v5991 = vadd.f32 0.0, %v5990
        %v5992 = vpop.f32.mrf.mxu0
        %v5993 = vadd.f32 0.0, %v5992
        %v5994 = vpop.f32.mrf.mxu0
        %v5995 = vadd.f32 0.0, %v5994
        %5996 = vmatprep.mubr.bf16.mxu0 0
        %5997 = vmatmul.mubr.bf16.gmra.mxu0 %v3127
        %v5998 = vpop.f32.mrf.mxu0
        %v5999 = vadd.f32 0.0, %v5998
        %v6000 = vpop.f32.mrf.mxu0
        %v6001 = vadd.f32 0.0, %v6000
        %v6002 = vpop.f32.mrf.mxu0
        %v6003 = vadd.f32 0.0, %v6002
        %v6004 = vpop.f32.mrf.mxu0
        %v6005 = vadd.f32 0.0, %v6004
        %6006 = vmatprep.mubr.bf16.mxu0 0
        %6007 = vmatmul.mubr.bf16.gmra.mxu0 %v3128
        %v6008 = vpop.f32.mrf.mxu0
        %v6009 = vadd.f32 0.0, %v6008
        %v6010 = vpop.f32.mrf.mxu0
        %v6011 = vadd.f32 0.0, %v6010
        %v6012 = vpop.f32.mrf.mxu0
        %v6013 = vadd.f32 0.0, %v6012
        %v6014 = vpop.f32.mrf.mxu0
        %v6015 = vadd.f32 0.0, %v6014
        %6016 = vmatprep.mubr.bf16.mxu0 0
        %6017 = vmatmul.mubr.bf16.gmra.mxu0 %v3129
        %v6018 = vpop.f32.mrf.mxu0
        %v6019 = vadd.f32 0.0, %v6018
        %v6020 = vpop.f32.mrf.mxu0
        %v6021 = vadd.f32 0.0, %v6020
        %v6022 = vpop.f32.mrf.mxu0
        %v6023 = vadd.f32 0.0, %v6022
        %v6024 = vpop.f32.mrf.mxu0
        %v6025 = vadd.f32 0.0, %v6024
        %6026 = vmatprep.mubr.bf16.mxu0 0
        %6027 = vmatmul.mubr.bf16.gmra.mxu0 %v3130
        %v6028 = vpop.f32.mrf.mxu0
        %v6029 = vadd.f32 0.0, %v6028
        %v6030 = vpop.f32.mrf.mxu0
        %v6031 = vadd.f32 0.0, %v6030
        %v6032 = vpop.f32.mrf.mxu0
        %v6033 = vadd.f32 0.0, %v6032
        %v6034 = vpop.f32.mrf.mxu0
        %v6035 = vadd.f32 0.0, %v6034
        %6036 = vmatprep.mubr.bf16.mxu0 0
        %6037 = vmatmul.mubr.bf16.gmra.mxu0 %v3131
        %v6038 = vpop.f32.mrf.mxu0
        %v6039 = vadd.f32 0.0, %v6038
        %v6040 = vpop.f32.mrf.mxu0
        %v6041 = vadd.f32 0.0, %v6040
        %v6042 = vpop.f32.mrf.mxu0
        %v6043 = vadd.f32 0.0, %v6042
        %v6044 = vpop.f32.mrf.mxu0
        %v6045 = vadd.f32 0.0, %v6044
        %6046 = vmatprep.mubr.bf16.mxu0 0
        %6047 = vmatmul.mubr.bf16.gmra.mxu0 %v3132
        %v6048 = vpop.f32.mrf.mxu0
        %v6049 = vadd.f32 0.0, %v6048
        %v6050 = vpop.f32.mrf.mxu0
        %v6051 = vadd.f32 0.0, %v6050
        %v6052 = vpop.f32.mrf.mxu0
        %v6053 = vadd.f32 0.0, %v6052
        %v6054 = vpop.f32.mrf.mxu0
        %v6055 = vadd.f32 0.0, %v6054
        %6056 = vmatprep.mubr.bf16.mxu0 0
        %6057 = vmatmul.mubr.bf16.gmra.mxu0 %v3133
        %v6058 = vpop.f32.mrf.mxu0
        %v6059 = vadd.f32 0.0, %v6058
        %v6060 = vpop.f32.mrf.mxu0
        %v6061 = vadd.f32 0.0, %v6060
        %v6062 = vpop.f32.mrf.mxu0
        %v6063 = vadd.f32 0.0, %v6062
        %v6064 = vpop.f32.mrf.mxu0
        %v6065 = vadd.f32 0.0, %v6064
        %6066 = vmatprep.mubr.bf16.mxu0 0
        %6067 = vmatmul.mubr.bf16.gmra.mxu0 %v3134
        %v6068 = vpop.f32.mrf.mxu0
        %v6069 = vadd.f32 0.0, %v6068
        %v6070 = vpop.f32.mrf.mxu0
        %v6071 = vadd.f32 0.0, %v6070
        %v6072 = vpop.f32.mrf.mxu0
        %v6073 = vadd.f32 0.0, %v6072
        %v6074 = vpop.f32.mrf.mxu0
        %v6075 = vadd.f32 0.0, %v6074
        %6076 = vmatprep.mubr.bf16.mxu0 0
        %6077 = vmatmul.mubr.bf16.gmra.mxu0 %v3135
        %v6078 = vpop.f32.mrf.mxu0
        %v6079 = vadd.f32 0.0, %v6078
        %v6080 = vpop.f32.mrf.mxu0
        %v6081 = vadd.f32 0.0, %v6080
        %v6082 = vpop.f32.mrf.mxu0
        %v6083 = vadd.f32 0.0, %v6082
        %v6084 = vpop.f32.mrf.mxu0
        %v6085 = vadd.f32 0.0, %v6084
        %6086 = vmatprep.mubr.bf16.mxu0 0
        %6087 = vmatmul.mubr.bf16.gmra.mxu0 %v3136
        %v6088 = vpop.f32.mrf.mxu0
        %v6089 = vadd.f32 0.0, %v6088
        %v6090 = vpop.f32.mrf.mxu0
        %v6091 = vadd.f32 0.0, %v6090
        %v6092 = vpop.f32.mrf.mxu0
        %v6093 = vadd.f32 0.0, %v6092
        %v6094 = vpop.f32.mrf.mxu0
        %v6095 = vadd.f32 0.0, %v6094
        %6096 = vmatprep.mubr.bf16.mxu0 0
        %6097 = vmatmul.mubr.bf16.gmra.mxu0 %v3137
        %v6098 = vpop.f32.mrf.mxu0
        %v6099 = vadd.f32 0.0, %v6098
        %v6100 = vpop.f32.mrf.mxu0
        %v6101 = vadd.f32 0.0, %v6100
        %v6102 = vpop.f32.mrf.mxu0
        %v6103 = vadd.f32 0.0, %v6102
        %v6104 = vpop.f32.mrf.mxu0
        %v6105 = vadd.f32 0.0, %v6104
        %6106 = vmatprep.mubr.bf16.mxu0 0
        %6107 = vmatmul.mubr.bf16.gmra.mxu0 %v3138
        %v6108 = vpop.f32.mrf.mxu0
        %v6109 = vadd.f32 0.0, %v6108
        %v6110 = vpop.f32.mrf.mxu0
        %v6111 = vadd.f32 0.0, %v6110
        %v6112 = vpop.f32.mrf.mxu0
        %v6113 = vadd.f32 0.0, %v6112
        %v6114 = vpop.f32.mrf.mxu0
        %v6115 = vadd.f32 0.0, %v6114
        %6116 = vmatprep.mubr.bf16.mxu0 0
        %6117 = vmatmul.mubr.bf16.gmra.mxu0 %v3139
        %v6118 = vpop.f32.mrf.mxu0
        %v6119 = vadd.f32 0.0, %v6118
        %v6120 = vpop.f32.mrf.mxu0
        %v6121 = vadd.f32 0.0, %v6120
        %v6122 = vpop.f32.mrf.mxu0
        %v6123 = vadd.f32 0.0, %v6122
        %v6124 = vpop.f32.mrf.mxu0
        %v6125 = vadd.f32 0.0, %v6124
        %6126 = vmatprep.mubr.bf16.mxu0 0
        %6127 = vmatmul.mubr.bf16.gmra.mxu0 %v3140
        %v6128 = vpop.f32.mrf.mxu0
        %v6129 = vadd.f32 0.0, %v6128
        %v6130 = vpop.f32.mrf.mxu0
        %v6131 = vadd.f32 0.0, %v6130
        %v6132 = vpop.f32.mrf.mxu0
        %v6133 = vadd.f32 0.0, %v6132
        %v6134 = vpop.f32.mrf.mxu0
        %v6135 = vadd.f32 0.0, %v6134
        %6136 = vmatprep.mubr.bf16.mxu0 0
        %6137 = vmatmul.mubr.bf16.gmra.mxu0 %v3141
        %v6138 = vpop.f32.mrf.mxu0
        %v6139 = vadd.f32 0.0, %v6138
        %v6140 = vpop.f32.mrf.mxu0
        %v6141 = vadd.f32 0.0, %v6140
        %v6142 = vpop.f32.mrf.mxu0
        %v6143 = vadd.f32 0.0, %v6142
        %v6144 = vpop.f32.mrf.mxu0
        %v6145 = vadd.f32 0.0, %v6144
        %6146 = vmatprep.mubr.bf16.mxu0 0
        %6147 = vmatmul.mubr.bf16.gmra.mxu0 %v3142
        %v6148 = vpop.f32.mrf.mxu0
        %v6149 = vadd.f32 0.0, %v6148
        %v6150 = vpop.f32.mrf.mxu0
        %v6151 = vadd.f32 0.0, %v6150
        %v6152 = vpop.f32.mrf.mxu0
        %v6153 = vadd.f32 0.0, %v6152
        %v6154 = vpop.f32.mrf.mxu0
        %v6155 = vadd.f32 0.0, %v6154
        %6156 = vmatprep.mubr.bf16.mxu0 0
        %6157 = vmatmul.mubr.bf16.gmra.mxu0 %v3143
        %v6158 = vpop.f32.mrf.mxu0
        %v6159 = vadd.f32 0.0, %v6158
        %v6160 = vpop.f32.mrf.mxu0
        %v6161 = vadd.f32 0.0, %v6160
        %v6162 = vpop.f32.mrf.mxu0
        %v6163 = vadd.f32 0.0, %v6162
        %v6164 = vpop.f32.mrf.mxu0
        %v6165 = vadd.f32 0.0, %v6164
        %6166 = vmatprep.mubr.bf16.mxu0 0
        %6167 = vmatmul.mubr.bf16.gmra.mxu0 %v3144
        %v6168 = vpop.f32.mrf.mxu0
        %v6169 = vadd.f32 0.0, %v6168
        %v6170 = vpop.f32.mrf.mxu0
        %v6171 = vadd.f32 0.0, %v6170
        %v6172 = vpop.f32.mrf.mxu0
        %v6173 = vadd.f32 0.0, %v6172
        %v6174 = vpop.f32.mrf.mxu0
        %v6175 = vadd.f32 0.0, %v6174
        %6176 = vmatprep.mubr.bf16.mxu0 0
        %6177 = vmatmul.mubr.bf16.gmra.mxu0 %v3145
        %v6178 = vpop.f32.mrf.mxu0
        %v6179 = vadd.f32 0.0, %v6178
        %v6180 = vpop.f32.mrf.mxu0
        %v6181 = vadd.f32 0.0, %v6180
        %v6182 = vpop.f32.mrf.mxu0
        %v6183 = vadd.f32 0.0, %v6182
        %v6184 = vpop.f32.mrf.mxu0
        %v6185 = vadd.f32 0.0, %v6184
        %6186 = vmatprep.mubr.bf16.mxu0 0
        %6187 = vmatmul.mubr.bf16.gmra.mxu0 %v3146
        %v6188 = vpop.f32.mrf.mxu0
        %v6189 = vadd.f32 0.0, %v6188
        %v6190 = vpop.f32.mrf.mxu0
        %v6191 = vadd.f32 0.0, %v6190
        %v6192 = vpop.f32.mrf.mxu0
        %v6193 = vadd.f32 0.0, %v6192
        %v6194 = vpop.f32.mrf.mxu0
        %v6195 = vadd.f32 0.0, %v6194
        %6196 = vmatprep.mubr.bf16.mxu0 0
        %6197 = vmatmul.mubr.bf16.gmra.mxu0 %v3147
        %v6198 = vpop.f32.mrf.mxu0
        %v6199 = vadd.f32 0.0, %v6198
        %v6200 = vpop.f32.mrf.mxu0
        %v6201 = vadd.f32 0.0, %v6200
        %v6202 = vpop.f32.mrf.mxu0
        %v6203 = vadd.f32 0.0, %v6202
        %v6204 = vpop.f32.mrf.mxu0
        %v6205 = vadd.f32 0.0, %v6204
        %6206 = vmatprep.mubr.bf16.mxu0 0
        %6207 = vmatmul.mubr.bf16.gmra.mxu0 %v3148
        %v6208 = vpop.f32.mrf.mxu0
        %v6209 = vadd.f32 0.0, %v6208
        %v6210 = vpop.f32.mrf.mxu0
        %v6211 = vadd.f32 0.0, %v6210
        %v6212 = vpop.f32.mrf.mxu0
        %v6213 = vadd.f32 0.0, %v6212
        %v6214 = vpop.f32.mrf.mxu0
        %v6215 = vadd.f32 0.0, %v6214
        %6216 = vmatprep.mubr.bf16.mxu0 0
        %6217 = vmatmul.mubr.bf16.gmra.mxu0 %v3149
        %v6218 = vpop.f32.mrf.mxu0
        %v6219 = vadd.f32 0.0, %v6218
        %v6220 = vpop.f32.mrf.mxu0
        %v6221 = vadd.f32 0.0, %v6220
        %v6222 = vpop.f32.mrf.mxu0
        %v6223 = vadd.f32 0.0, %v6222
        %v6224 = vpop.f32.mrf.mxu0
        %v6225 = vadd.f32 0.0, %v6224
        %6226 = vmatprep.mubr.bf16.mxu0 0
        %6227 = vmatmul.mubr.bf16.gmra.mxu0 %v3150
        %v6228 = vpop.f32.mrf.mxu0
        %v6229 = vadd.f32 0.0, %v6228
        %v6230 = vpop.f32.mrf.mxu0
        %v6231 = vadd.f32 0.0, %v6230
        %v6232 = vpop.f32.mrf.mxu0
        %v6233 = vadd.f32 0.0, %v6232
        %v6234 = vpop.f32.mrf.mxu0
        %v6235 = vadd.f32 0.0, %v6234
        %6236 = vmatprep.mubr.bf16.mxu0 0
        %6237 = vmatmul.mubr.bf16.gmra.mxu0 %v3151
        %v6238 = vpop.f32.mrf.mxu0
        %v6239 = vadd.f32 0.0, %v6238
        %v6240 = vpop.f32.mrf.mxu0
        %v6241 = vadd.f32 0.0, %v6240
        %v6242 = vpop.f32.mrf.mxu0
        %v6243 = vadd.f32 0.0, %v6242
        %v6244 = vpop.f32.mrf.mxu0
        %v6245 = vadd.f32 0.0, %v6244
        %6246 = vmatprep.mubr.bf16.mxu0 0
        %6247 = vmatmul.mubr.bf16.gmra.mxu0 %v3152
        %v6248 = vpop.f32.mrf.mxu0
        %v6249 = vadd.f32 0.0, %v6248
        %v6250 = vpop.f32.mrf.mxu0
        %v6251 = vadd.f32 0.0, %v6250
        %v6252 = vpop.f32.mrf.mxu0
        %v6253 = vadd.f32 0.0, %v6252
        %v6254 = vpop.f32.mrf.mxu0
        %v6255 = vadd.f32 0.0, %v6254
        %6256 = vmatprep.mubr.bf16.mxu0 0
        %6257 = vmatmul.mubr.bf16.gmra.mxu0 %v3153
        %v6258 = vpop.f32.mrf.mxu0
        %v6259 = vadd.f32 0.0, %v6258
        %v6260 = vpop.f32.mrf.mxu0
        %v6261 = vadd.f32 0.0, %v6260
        %v6262 = vpop.f32.mrf.mxu0
        %v6263 = vadd.f32 0.0, %v6262
        %v6264 = vpop.f32.mrf.mxu0
        %v6265 = vadd.f32 0.0, %v6264
        %6266 = vmatprep.mubr.bf16.mxu0 0
        %6267 = vmatmul.mubr.bf16.gmra.mxu0 %v3154
        %v6268 = vpop.f32.mrf.mxu0
        %v6269 = vadd.f32 0.0, %v6268
        %v6270 = vpop.f32.mrf.mxu0
        %v6271 = vadd.f32 0.0, %v6270
        %v6272 = vpop.f32.mrf.mxu0
        %v6273 = vadd.f32 0.0, %v6272
        %v6274 = vpop.f32.mrf.mxu0
        %v6275 = vadd.f32 0.0, %v6274
        %6276 = vmatprep.mubr.bf16.mxu0 0
        %6277 = vmatmul.mubr.bf16.gmra.mxu0 %v3155
        %v6278 = vpop.f32.mrf.mxu0
        %v6279 = vadd.f32 0.0, %v6278
        %v6280 = vpop.f32.mrf.mxu0
        %v6281 = vadd.f32 0.0, %v6280
        %v6282 = vpop.f32.mrf.mxu0
        %v6283 = vadd.f32 0.0, %v6282
        %v6284 = vpop.f32.mrf.mxu0
        %v6285 = vadd.f32 0.0, %v6284
        %6286 = vmatprep.mubr.bf16.mxu0 0
        %6287 = vmatmul.mubr.bf16.gmra.mxu0 %v3156
        %v6288 = vpop.f32.mrf.mxu0
        %v6289 = vadd.f32 0.0, %v6288
        %v6290 = vpop.f32.mrf.mxu0
        %v6291 = vadd.f32 0.0, %v6290
        %v6292 = vpop.f32.mrf.mxu0
        %v6293 = vadd.f32 0.0, %v6292
        %v6294 = vpop.f32.mrf.mxu0
        %v6295 = vadd.f32 0.0, %v6294
        %6296 = vmatprep.mubr.bf16.mxu0 0
        %6297 = vmatmul.mubr.bf16.gmra.mxu0 %v3157
        %v6298 = vpop.f32.mrf.mxu0
        %v6299 = vadd.f32 0.0, %v6298
        %v6300 = vpop.f32.mrf.mxu0
        %v6301 = vadd.f32 0.0, %v6300
        %v6302 = vpop.f32.mrf.mxu0
        %v6303 = vadd.f32 0.0, %v6302
        %v6304 = vpop.f32.mrf.mxu0
        %v6305 = vadd.f32 0.0, %v6304
        %6306 = vmatprep.mubr.bf16.mxu0 0
        %6307 = vmatmul.mubr.bf16.gmra.mxu0 %v3158
        %v6308 = vpop.f32.mrf.mxu0
        %v6309 = vadd.f32 0.0, %v6308
        %v6310 = vpop.f32.mrf.mxu0
        %v6311 = vadd.f32 0.0, %v6310
        %v6312 = vpop.f32.mrf.mxu0
        %v6313 = vadd.f32 0.0, %v6312
        %v6314 = vpop.f32.mrf.mxu0
        %v6315 = vadd.f32 0.0, %v6314
        %6316 = vdwg.mxu0
        %6317 = vmatprep.subr.bf16.mxu0 %v5611
        %6318 = vmatpush1.bf16.msra.mxu0 %v5610
        %6319 = vmatprep.subr.bf16.mxu0 %v5607
        %6320 = vmatpush1.bf16.msra.mxu0 %v5606
        %6321 = vmatprep.subr.bf16.mxu0 %v5603
        %6322 = vmatpush1.bf16.msra.mxu0 %v5602
        %6323 = vmatprep.subr.bf16.mxu0 %v5599
        %6324 = vmatpush1.bf16.msra.mxu0 %v5598
        %6325 = vmatprep.subr.bf16.mxu0 %v5595
        %6326 = vmatpush1.bf16.msra.mxu0 %v5594
        %6327 = vmatprep.subr.bf16.mxu0 %v5591
        %6328 = vmatpush1.bf16.msra.mxu0 %v5590
        %6329 = vmatprep.subr.bf16.mxu0 %v5587
        %6330 = vmatpush1.bf16.msra.mxu0 %v5586
        %6331 = vmatprep.subr.bf16.mxu0 %v5583
        %6332 = vmatpush1.bf16.msra.mxu0 %v5582
        %6333 = vmatprep.subr.bf16.mxu0 0
        %6334 = vmatpush2.bf16.msra.mxu0 0
        %6335 = vmatprep.subr.bf16.mxu0 0
        %6336 = vmatpush2.bf16.msra.mxu0 0
        %6337 = vmatprep.subr.bf16.mxu0 0
        %6338 = vmatpush2.bf16.msra.mxu0 0
        %6339 = vmatprep.subr.bf16.mxu0 0
        %6340 = vmatpush2.bf16.msra.mxu0 0
        %6341 = vmatprep.subr.bf16.mxu0 0
        %6342 = vmatpush2.bf16.msra.mxu0 0
        %6343 = vmatprep.subr.bf16.mxu0 0
        %6344 = vmatpush2.bf16.msra.mxu0 0
        %6345 = vmatprep.subr.bf16.mxu0 0
        %6346 = vmatpush2.bf16.msra.mxu0 0
        %6347 = vmatprep.subr.bf16.mxu0 0
        %6348 = vmatpush2.bf16.msra.mxu0 0
        %6349 = vmatprep.mubr.bf16.mxu0 0
        %6350 = vmatmul.mubr.bf16.gmra.mxu0 %v3095
        %v6351 = vpop.f32.mrf.mxu0
        %v6352 = vadd.f32 0.0, %v6351
        %v6353 = vpop.f32.mrf.mxu0
        %v6354 = vadd.f32 0.0, %v6353
        %v6355 = vpop.f32.mrf.mxu0
        %v6356 = vadd.f32 0.0, %v6355
        %v6357 = vpop.f32.mrf.mxu0
        %v6358 = vadd.f32 0.0, %v6357
        %6359 = vmatprep.mubr.bf16.mxu0 0
        %6360 = vmatmul.mubr.bf16.gmra.mxu0 %v3096
        %v6361 = vpop.f32.mrf.mxu0
        %v6362 = vadd.f32 0.0, %v6361
        %v6363 = vpop.f32.mrf.mxu0
        %v6364 = vadd.f32 0.0, %v6363
        %v6365 = vpop.f32.mrf.mxu0
        %v6366 = vadd.f32 0.0, %v6365
        %v6367 = vpop.f32.mrf.mxu0
        %v6368 = vadd.f32 0.0, %v6367
        %6369 = vmatprep.mubr.bf16.mxu0 0
        %6370 = vmatmul.mubr.bf16.gmra.mxu0 %v3097
        %v6371 = vpop.f32.mrf.mxu0
        %v6372 = vadd.f32 0.0, %v6371
        %v6373 = vpop.f32.mrf.mxu0
        %v6374 = vadd.f32 0.0, %v6373
        %v6375 = vpop.f32.mrf.mxu0
        %v6376 = vadd.f32 0.0, %v6375
        %v6377 = vpop.f32.mrf.mxu0
        %v6378 = vadd.f32 0.0, %v6377
        %6379 = vmatprep.mubr.bf16.mxu0 0
        %6380 = vmatmul.mubr.bf16.gmra.mxu0 %v3098
        %v6381 = vpop.f32.mrf.mxu0
        %v6382 = vadd.f32 0.0, %v6381
        %v6383 = vpop.f32.mrf.mxu0
        %v6384 = vadd.f32 0.0, %v6383
        %v6385 = vpop.f32.mrf.mxu0
        %v6386 = vadd.f32 0.0, %v6385
        %v6387 = vpop.f32.mrf.mxu0
        %v6388 = vadd.f32 0.0, %v6387
        %6389 = vmatprep.mubr.bf16.mxu0 0
        %6390 = vmatmul.mubr.bf16.gmra.mxu0 %v3099
        %v6391 = vpop.f32.mrf.mxu0
        %v6392 = vadd.f32 0.0, %v6391
        %v6393 = vpop.f32.mrf.mxu0
        %v6394 = vadd.f32 0.0, %v6393
        %v6395 = vpop.f32.mrf.mxu0
        %v6396 = vadd.f32 0.0, %v6395
        %v6397 = vpop.f32.mrf.mxu0
        %v6398 = vadd.f32 0.0, %v6397
        %6399 = vmatprep.mubr.bf16.mxu0 0
        %6400 = vmatmul.mubr.bf16.gmra.mxu0 %v3100
        %v6401 = vpop.f32.mrf.mxu0
        %v6402 = vadd.f32 0.0, %v6401
        %v6403 = vpop.f32.mrf.mxu0
        %v6404 = vadd.f32 0.0, %v6403
        %v6405 = vpop.f32.mrf.mxu0
        %v6406 = vadd.f32 0.0, %v6405
        %v6407 = vpop.f32.mrf.mxu0
        %v6408 = vadd.f32 0.0, %v6407
        %6409 = vmatprep.mubr.bf16.mxu0 0
        %6410 = vmatmul.mubr.bf16.gmra.mxu0 %v3101
        %v6411 = vpop.f32.mrf.mxu0
        %v6412 = vadd.f32 0.0, %v6411
        %v6413 = vpop.f32.mrf.mxu0
        %v6414 = vadd.f32 0.0, %v6413
        %v6415 = vpop.f32.mrf.mxu0
        %v6416 = vadd.f32 0.0, %v6415
        %v6417 = vpop.f32.mrf.mxu0
        %v6418 = vadd.f32 0.0, %v6417
        %6419 = vmatprep.mubr.bf16.mxu0 0
        %6420 = vmatmul.mubr.bf16.gmra.mxu0 %v3102
        %v6421 = vpop.f32.mrf.mxu0
        %v6422 = vadd.f32 0.0, %v6421
        %v6423 = vpop.f32.mrf.mxu0
        %v6424 = vadd.f32 0.0, %v6423
        %v6425 = vpop.f32.mrf.mxu0
        %v6426 = vadd.f32 0.0, %v6425
        %v6427 = vpop.f32.mrf.mxu0
        %v6428 = vadd.f32 0.0, %v6427
        %6429 = vmatprep.mubr.bf16.mxu0 0
        %6430 = vmatmul.mubr.bf16.gmra.mxu0 %v3103
        %v6431 = vpop.f32.mrf.mxu0
        %v6432 = vadd.f32 0.0, %v6431
        %v6433 = vpop.f32.mrf.mxu0
        %v6434 = vadd.f32 0.0, %v6433
        %v6435 = vpop.f32.mrf.mxu0
        %v6436 = vadd.f32 0.0, %v6435
        %v6437 = vpop.f32.mrf.mxu0
        %v6438 = vadd.f32 0.0, %v6437
        %6439 = vmatprep.mubr.bf16.mxu0 0
        %6440 = vmatmul.mubr.bf16.gmra.mxu0 %v3104
        %v6441 = vpop.f32.mrf.mxu0
        %v6442 = vadd.f32 0.0, %v6441
        %v6443 = vpop.f32.mrf.mxu0
        %v6444 = vadd.f32 0.0, %v6443
        %v6445 = vpop.f32.mrf.mxu0
        %v6446 = vadd.f32 0.0, %v6445
        %v6447 = vpop.f32.mrf.mxu0
        %v6448 = vadd.f32 0.0, %v6447
        %6449 = vmatprep.mubr.bf16.mxu0 0
        %6450 = vmatmul.mubr.bf16.gmra.mxu0 %v3105
        %v6451 = vpop.f32.mrf.mxu0
        %v6452 = vadd.f32 0.0, %v6451
        %v6453 = vpop.f32.mrf.mxu0
        %v6454 = vadd.f32 0.0, %v6453
        %v6455 = vpop.f32.mrf.mxu0
        %v6456 = vadd.f32 0.0, %v6455
        %v6457 = vpop.f32.mrf.mxu0
        %v6458 = vadd.f32 0.0, %v6457
        %6459 = vmatprep.mubr.bf16.mxu0 0
        %6460 = vmatmul.mubr.bf16.gmra.mxu0 %v3106
        %v6461 = vpop.f32.mrf.mxu0
        %v6462 = vadd.f32 0.0, %v6461
        %v6463 = vpop.f32.mrf.mxu0
        %v6464 = vadd.f32 0.0, %v6463
        %v6465 = vpop.f32.mrf.mxu0
        %v6466 = vadd.f32 0.0, %v6465
        %v6467 = vpop.f32.mrf.mxu0
        %v6468 = vadd.f32 0.0, %v6467
        %6469 = vmatprep.mubr.bf16.mxu0 0
        %6470 = vmatmul.mubr.bf16.gmra.mxu0 %v3107
        %v6471 = vpop.f32.mrf.mxu0
        %v6472 = vadd.f32 0.0, %v6471
        %v6473 = vpop.f32.mrf.mxu0
        %v6474 = vadd.f32 0.0, %v6473
        %v6475 = vpop.f32.mrf.mxu0
        %v6476 = vadd.f32 0.0, %v6475
        %v6477 = vpop.f32.mrf.mxu0
        %v6478 = vadd.f32 0.0, %v6477
        %6479 = vmatprep.mubr.bf16.mxu0 0
        %6480 = vmatmul.mubr.bf16.gmra.mxu0 %v3108
        %v6481 = vpop.f32.mrf.mxu0
        %v6482 = vadd.f32 0.0, %v6481
        %v6483 = vpop.f32.mrf.mxu0
        %v6484 = vadd.f32 0.0, %v6483
        %v6485 = vpop.f32.mrf.mxu0
        %v6486 = vadd.f32 0.0, %v6485
        %v6487 = vpop.f32.mrf.mxu0
        %v6488 = vadd.f32 0.0, %v6487
        %6489 = vmatprep.mubr.bf16.mxu0 0
        %6490 = vmatmul.mubr.bf16.gmra.mxu0 %v3109
        %v6491 = vpop.f32.mrf.mxu0
        %v6492 = vadd.f32 0.0, %v6491
        %v6493 = vpop.f32.mrf.mxu0
        %v6494 = vadd.f32 0.0, %v6493
        %v6495 = vpop.f32.mrf.mxu0
        %v6496 = vadd.f32 0.0, %v6495
        %v6497 = vpop.f32.mrf.mxu0
        %v6498 = vadd.f32 0.0, %v6497
        %6499 = vmatprep.mubr.bf16.mxu0 0
        %6500 = vmatmul.mubr.bf16.gmra.mxu0 %v3110
        %v6501 = vpop.f32.mrf.mxu0
        %v6502 = vadd.f32 0.0, %v6501
        %v6503 = vpop.f32.mrf.mxu0
        %v6504 = vadd.f32 0.0, %v6503
        %v6505 = vpop.f32.mrf.mxu0
        %v6506 = vadd.f32 0.0, %v6505
        %v6507 = vpop.f32.mrf.mxu0
        %v6508 = vadd.f32 0.0, %v6507
        %6509 = vmatprep.mubr.bf16.mxu0 0
        %6510 = vmatmul.mubr.bf16.gmra.mxu0 %v3111
        %v6511 = vpop.f32.mrf.mxu0
        %v6512 = vadd.f32 0.0, %v6511
        %v6513 = vpop.f32.mrf.mxu0
        %v6514 = vadd.f32 0.0, %v6513
        %v6515 = vpop.f32.mrf.mxu0
        %v6516 = vadd.f32 0.0, %v6515
        %v6517 = vpop.f32.mrf.mxu0
        %v6518 = vadd.f32 0.0, %v6517
        %6519 = vmatprep.mubr.bf16.mxu0 0
        %6520 = vmatmul.mubr.bf16.gmra.mxu0 %v3112
        %v6521 = vpop.f32.mrf.mxu0
        %v6522 = vadd.f32 0.0, %v6521
        %v6523 = vpop.f32.mrf.mxu0
        %v6524 = vadd.f32 0.0, %v6523
        %v6525 = vpop.f32.mrf.mxu0
        %v6526 = vadd.f32 0.0, %v6525
        %v6527 = vpop.f32.mrf.mxu0
        %v6528 = vadd.f32 0.0, %v6527
        %6529 = vmatprep.mubr.bf16.mxu0 0
        %6530 = vmatmul.mubr.bf16.gmra.mxu0 %v3113
        %v6531 = vpop.f32.mrf.mxu0
        %v6532 = vadd.f32 0.0, %v6531
        %v6533 = vpop.f32.mrf.mxu0
        %v6534 = vadd.f32 0.0, %v6533
        %v6535 = vpop.f32.mrf.mxu0
        %v6536 = vadd.f32 0.0, %v6535
        %v6537 = vpop.f32.mrf.mxu0
        %v6538 = vadd.f32 0.0, %v6537
        %6539 = vmatprep.mubr.bf16.mxu0 0
        %6540 = vmatmul.mubr.bf16.gmra.mxu0 %v3114
        %v6541 = vpop.f32.mrf.mxu0
        %v6542 = vadd.f32 0.0, %v6541
        %v6543 = vpop.f32.mrf.mxu0
        %v6544 = vadd.f32 0.0, %v6543
        %v6545 = vpop.f32.mrf.mxu0
        %v6546 = vadd.f32 0.0, %v6545
        %v6547 = vpop.f32.mrf.mxu0
        %v6548 = vadd.f32 0.0, %v6547
        %6549 = vmatprep.mubr.bf16.mxu0 0
        %6550 = vmatmul.mubr.bf16.gmra.mxu0 %v3115
        %v6551 = vpop.f32.mrf.mxu0
        %v6552 = vadd.f32 0.0, %v6551
        %v6553 = vpop.f32.mrf.mxu0
        %v6554 = vadd.f32 0.0, %v6553
        %v6555 = vpop.f32.mrf.mxu0
        %v6556 = vadd.f32 0.0, %v6555
        %v6557 = vpop.f32.mrf.mxu0
        %v6558 = vadd.f32 0.0, %v6557
        %6559 = vmatprep.mubr.bf16.mxu0 0
        %6560 = vmatmul.mubr.bf16.gmra.mxu0 %v3116
        %v6561 = vpop.f32.mrf.mxu0
        %v6562 = vadd.f32 0.0, %v6561
        %v6563 = vpop.f32.mrf.mxu0
        %v6564 = vadd.f32 0.0, %v6563
        %v6565 = vpop.f32.mrf.mxu0
        %v6566 = vadd.f32 0.0, %v6565
        %v6567 = vpop.f32.mrf.mxu0
        %v6568 = vadd.f32 0.0, %v6567
        %6569 = vmatprep.mubr.bf16.mxu0 0
        %6570 = vmatmul.mubr.bf16.gmra.mxu0 %v3117
        %v6571 = vpop.f32.mrf.mxu0
        %v6572 = vadd.f32 0.0, %v6571
        %v6573 = vpop.f32.mrf.mxu0
        %v6574 = vadd.f32 0.0, %v6573
        %v6575 = vpop.f32.mrf.mxu0
        %v6576 = vadd.f32 0.0, %v6575
        %v6577 = vpop.f32.mrf.mxu0
        %v6578 = vadd.f32 0.0, %v6577
        %6579 = vmatprep.mubr.bf16.mxu0 0
        %6580 = vmatmul.mubr.bf16.gmra.mxu0 %v3118
        %v6581 = vpop.f32.mrf.mxu0
        %v6582 = vadd.f32 0.0, %v6581
        %v6583 = vpop.f32.mrf.mxu0
        %v6584 = vadd.f32 0.0, %v6583
        %v6585 = vpop.f32.mrf.mxu0
        %v6586 = vadd.f32 0.0, %v6585
        %v6587 = vpop.f32.mrf.mxu0
        %v6588 = vadd.f32 0.0, %v6587
        %6589 = vmatprep.mubr.bf16.mxu0 0
        %6590 = vmatmul.mubr.bf16.gmra.mxu0 %v3119
        %v6591 = vpop.f32.mrf.mxu0
        %v6592 = vadd.f32 0.0, %v6591
        %v6593 = vpop.f32.mrf.mxu0
        %v6594 = vadd.f32 0.0, %v6593
        %v6595 = vpop.f32.mrf.mxu0
        %v6596 = vadd.f32 0.0, %v6595
        %v6597 = vpop.f32.mrf.mxu0
        %v6598 = vadd.f32 0.0, %v6597
        %6599 = vmatprep.mubr.bf16.mxu0 0
        %6600 = vmatmul.mubr.bf16.gmra.mxu0 %v3120
        %v6601 = vpop.f32.mrf.mxu0
        %v6602 = vadd.f32 0.0, %v6601
        %v6603 = vpop.f32.mrf.mxu0
        %v6604 = vadd.f32 0.0, %v6603
        %v6605 = vpop.f32.mrf.mxu0
        %v6606 = vadd.f32 0.0, %v6605
        %v6607 = vpop.f32.mrf.mxu0
        %v6608 = vadd.f32 0.0, %v6607
        %6609 = vmatprep.mubr.bf16.mxu0 0
        %6610 = vmatmul.mubr.bf16.gmra.mxu0 %v3121
        %v6611 = vpop.f32.mrf.mxu0
        %v6612 = vadd.f32 0.0, %v6611
        %v6613 = vpop.f32.mrf.mxu0
        %v6614 = vadd.f32 0.0, %v6613
        %v6615 = vpop.f32.mrf.mxu0
        %v6616 = vadd.f32 0.0, %v6615
        %v6617 = vpop.f32.mrf.mxu0
        %v6618 = vadd.f32 0.0, %v6617
        %6619 = vmatprep.mubr.bf16.mxu0 0
        %6620 = vmatmul.mubr.bf16.gmra.mxu0 %v3122
        %v6621 = vpop.f32.mrf.mxu0
        %v6622 = vadd.f32 0.0, %v6621
        %v6623 = vpop.f32.mrf.mxu0
        %v6624 = vadd.f32 0.0, %v6623
        %v6625 = vpop.f32.mrf.mxu0
        %v6626 = vadd.f32 0.0, %v6625
        %v6627 = vpop.f32.mrf.mxu0
        %v6628 = vadd.f32 0.0, %v6627
        %6629 = vmatprep.mubr.bf16.mxu0 0
        %6630 = vmatmul.mubr.bf16.gmra.mxu0 %v3123
        %v6631 = vpop.f32.mrf.mxu0
        %v6632 = vadd.f32 0.0, %v6631
        %v6633 = vpop.f32.mrf.mxu0
        %v6634 = vadd.f32 0.0, %v6633
        %v6635 = vpop.f32.mrf.mxu0
        %v6636 = vadd.f32 0.0, %v6635
        %v6637 = vpop.f32.mrf.mxu0
        %v6638 = vadd.f32 0.0, %v6637
        %6639 = vmatprep.mubr.bf16.mxu0 0
        %6640 = vmatmul.mubr.bf16.gmra.mxu0 %v3124
        %v6641 = vpop.f32.mrf.mxu0
        %v6642 = vadd.f32 0.0, %v6641
        %v6643 = vpop.f32.mrf.mxu0
        %v6644 = vadd.f32 0.0, %v6643
        %v6645 = vpop.f32.mrf.mxu0
        %v6646 = vadd.f32 0.0, %v6645
        %v6647 = vpop.f32.mrf.mxu0
        %v6648 = vadd.f32 0.0, %v6647
        %6649 = vmatprep.mubr.bf16.mxu0 0
        %6650 = vmatmul.mubr.bf16.gmra.mxu0 %v3125
        %v6651 = vpop.f32.mrf.mxu0
        %v6652 = vadd.f32 0.0, %v6651
        %v6653 = vpop.f32.mrf.mxu0
        %v6654 = vadd.f32 0.0, %v6653
        %v6655 = vpop.f32.mrf.mxu0
        %v6656 = vadd.f32 0.0, %v6655
        %v6657 = vpop.f32.mrf.mxu0
        %v6658 = vadd.f32 0.0, %v6657
        %6659 = vmatprep.mubr.bf16.mxu0 0
        %6660 = vmatmul.mubr.bf16.gmra.mxu0 %v3126
        %v6661 = vpop.f32.mrf.mxu0
        %v6662 = vadd.f32 0.0, %v6661
        %v6663 = vpop.f32.mrf.mxu0
        %v6664 = vadd.f32 0.0, %v6663
        %v6665 = vpop.f32.mrf.mxu0
        %v6666 = vadd.f32 0.0, %v6665
        %v6667 = vpop.f32.mrf.mxu0
        %v6668 = vadd.f32 0.0, %v6667
        %6669 = vmatprep.mubr.bf16.mxu0 0
        %6670 = vmatmul.mubr.bf16.gmra.mxu0 %v3127
        %v6671 = vpop.f32.mrf.mxu0
        %v6672 = vadd.f32 0.0, %v6671
        %v6673 = vpop.f32.mrf.mxu0
        %v6674 = vadd.f32 0.0, %v6673
        %v6675 = vpop.f32.mrf.mxu0
        %v6676 = vadd.f32 0.0, %v6675
        %v6677 = vpop.f32.mrf.mxu0
        %v6678 = vadd.f32 0.0, %v6677
        %6679 = vmatprep.mubr.bf16.mxu0 0
        %6680 = vmatmul.mubr.bf16.gmra.mxu0 %v3128
        %v6681 = vpop.f32.mrf.mxu0
        %v6682 = vadd.f32 0.0, %v6681
        %v6683 = vpop.f32.mrf.mxu0
        %v6684 = vadd.f32 0.0, %v6683
        %v6685 = vpop.f32.mrf.mxu0
        %v6686 = vadd.f32 0.0, %v6685
        %v6687 = vpop.f32.mrf.mxu0
        %v6688 = vadd.f32 0.0, %v6687
        %6689 = vmatprep.mubr.bf16.mxu0 0
        %6690 = vmatmul.mubr.bf16.gmra.mxu0 %v3129
        %v6691 = vpop.f32.mrf.mxu0
        %v6692 = vadd.f32 0.0, %v6691
        %v6693 = vpop.f32.mrf.mxu0
        %v6694 = vadd.f32 0.0, %v6693
        %v6695 = vpop.f32.mrf.mxu0
        %v6696 = vadd.f32 0.0, %v6695
        %v6697 = vpop.f32.mrf.mxu0
        %v6698 = vadd.f32 0.0, %v6697
        %6699 = vmatprep.mubr.bf16.mxu0 0
        %6700 = vmatmul.mubr.bf16.gmra.mxu0 %v3130
        %v6701 = vpop.f32.mrf.mxu0
        %v6702 = vadd.f32 0.0, %v6701
        %v6703 = vpop.f32.mrf.mxu0
        %v6704 = vadd.f32 0.0, %v6703
        %v6705 = vpop.f32.mrf.mxu0
        %v6706 = vadd.f32 0.0, %v6705
        %v6707 = vpop.f32.mrf.mxu0
        %v6708 = vadd.f32 0.0, %v6707
        %6709 = vmatprep.mubr.bf16.mxu0 0
        %6710 = vmatmul.mubr.bf16.gmra.mxu0 %v3131
        %v6711 = vpop.f32.mrf.mxu0
        %v6712 = vadd.f32 0.0, %v6711
        %v6713 = vpop.f32.mrf.mxu0
        %v6714 = vadd.f32 0.0, %v6713
        %v6715 = vpop.f32.mrf.mxu0
        %v6716 = vadd.f32 0.0, %v6715
        %v6717 = vpop.f32.mrf.mxu0
        %v6718 = vadd.f32 0.0, %v6717
        %6719 = vmatprep.mubr.bf16.mxu0 0
        %6720 = vmatmul.mubr.bf16.gmra.mxu0 %v3132
        %v6721 = vpop.f32.mrf.mxu0
        %v6722 = vadd.f32 0.0, %v6721
        %v6723 = vpop.f32.mrf.mxu0
        %v6724 = vadd.f32 0.0, %v6723
        %v6725 = vpop.f32.mrf.mxu0
        %v6726 = vadd.f32 0.0, %v6725
        %v6727 = vpop.f32.mrf.mxu0
        %v6728 = vadd.f32 0.0, %v6727
        %6729 = vmatprep.mubr.bf16.mxu0 0
        %6730 = vmatmul.mubr.bf16.gmra.mxu0 %v3133
        %v6731 = vpop.f32.mrf.mxu0
        %v6732 = vadd.f32 0.0, %v6731
        %v6733 = vpop.f32.mrf.mxu0
        %v6734 = vadd.f32 0.0, %v6733
        %v6735 = vpop.f32.mrf.mxu0
        %v6736 = vadd.f32 0.0, %v6735
        %v6737 = vpop.f32.mrf.mxu0
        %v6738 = vadd.f32 0.0, %v6737
        %6739 = vmatprep.mubr.bf16.mxu0 0
        %6740 = vmatmul.mubr.bf16.gmra.mxu0 %v3134
        %v6741 = vpop.f32.mrf.mxu0
        %v6742 = vadd.f32 0.0, %v6741
        %v6743 = vpop.f32.mrf.mxu0
        %v6744 = vadd.f32 0.0, %v6743
        %v6745 = vpop.f32.mrf.mxu0
        %v6746 = vadd.f32 0.0, %v6745
        %v6747 = vpop.f32.mrf.mxu0
        %v6748 = vadd.f32 0.0, %v6747
        %6749 = vmatprep.mubr.bf16.mxu0 0
        %6750 = vmatmul.mubr.bf16.gmra.mxu0 %v3135
        %v6751 = vpop.f32.mrf.mxu0
        %v6752 = vadd.f32 0.0, %v6751
        %v6753 = vpop.f32.mrf.mxu0
        %v6754 = vadd.f32 0.0, %v6753
        %v6755 = vpop.f32.mrf.mxu0
        %v6756 = vadd.f32 0.0, %v6755
        %v6757 = vpop.f32.mrf.mxu0
        %v6758 = vadd.f32 0.0, %v6757
        %6759 = vmatprep.mubr.bf16.mxu0 0
        %6760 = vmatmul.mubr.bf16.gmra.mxu0 %v3136
        %v6761 = vpop.f32.mrf.mxu0
        %v6762 = vadd.f32 0.0, %v6761
        %v6763 = vpop.f32.mrf.mxu0
        %v6764 = vadd.f32 0.0, %v6763
        %v6765 = vpop.f32.mrf.mxu0
        %v6766 = vadd.f32 0.0, %v6765
        %v6767 = vpop.f32.mrf.mxu0
        %v6768 = vadd.f32 0.0, %v6767
        %6769 = vmatprep.mubr.bf16.mxu0 0
        %6770 = vmatmul.mubr.bf16.gmra.mxu0 %v3137
        %v6771 = vpop.f32.mrf.mxu0
        %v6772 = vadd.f32 0.0, %v6771
        %v6773 = vpop.f32.mrf.mxu0
        %v6774 = vadd.f32 0.0, %v6773
        %v6775 = vpop.f32.mrf.mxu0
        %v6776 = vadd.f32 0.0, %v6775
        %v6777 = vpop.f32.mrf.mxu0
        %v6778 = vadd.f32 0.0, %v6777
        %6779 = vmatprep.mubr.bf16.mxu0 0
        %6780 = vmatmul.mubr.bf16.gmra.mxu0 %v3138
        %v6781 = vpop.f32.mrf.mxu0
        %v6782 = vadd.f32 0.0, %v6781
        %v6783 = vpop.f32.mrf.mxu0
        %v6784 = vadd.f32 0.0, %v6783
        %v6785 = vpop.f32.mrf.mxu0
        %v6786 = vadd.f32 0.0, %v6785
        %v6787 = vpop.f32.mrf.mxu0
        %v6788 = vadd.f32 0.0, %v6787
        %6789 = vmatprep.mubr.bf16.mxu0 0
        %6790 = vmatmul.mubr.bf16.gmra.mxu0 %v3139
        %v6791 = vpop.f32.mrf.mxu0
        %v6792 = vadd.f32 0.0, %v6791
        %v6793 = vpop.f32.mrf.mxu0
        %v6794 = vadd.f32 0.0, %v6793
        %v6795 = vpop.f32.mrf.mxu0
        %v6796 = vadd.f32 0.0, %v6795
        %v6797 = vpop.f32.mrf.mxu0
        %v6798 = vadd.f32 0.0, %v6797
        %6799 = vmatprep.mubr.bf16.mxu0 0
        %6800 = vmatmul.mubr.bf16.gmra.mxu0 %v3140
        %v6801 = vpop.f32.mrf.mxu0
        %v6802 = vadd.f32 0.0, %v6801
        %v6803 = vpop.f32.mrf.mxu0
        %v6804 = vadd.f32 0.0, %v6803
        %v6805 = vpop.f32.mrf.mxu0
        %v6806 = vadd.f32 0.0, %v6805
        %v6807 = vpop.f32.mrf.mxu0
        %v6808 = vadd.f32 0.0, %v6807
        %6809 = vmatprep.mubr.bf16.mxu0 0
        %6810 = vmatmul.mubr.bf16.gmra.mxu0 %v3141
        %v6811 = vpop.f32.mrf.mxu0
        %v6812 = vadd.f32 0.0, %v6811
        %v6813 = vpop.f32.mrf.mxu0
        %v6814 = vadd.f32 0.0, %v6813
        %v6815 = vpop.f32.mrf.mxu0
        %v6816 = vadd.f32 0.0, %v6815
        %v6817 = vpop.f32.mrf.mxu0
        %v6818 = vadd.f32 0.0, %v6817
        %6819 = vmatprep.mubr.bf16.mxu0 0
        %6820 = vmatmul.mubr.bf16.gmra.mxu0 %v3142
        %v6821 = vpop.f32.mrf.mxu0
        %v6822 = vadd.f32 0.0, %v6821
        %v6823 = vpop.f32.mrf.mxu0
        %v6824 = vadd.f32 0.0, %v6823
        %v6825 = vpop.f32.mrf.mxu0
        %v6826 = vadd.f32 0.0, %v6825
        %v6827 = vpop.f32.mrf.mxu0
        %v6828 = vadd.f32 0.0, %v6827
        %6829 = vmatprep.mubr.bf16.mxu0 0
        %6830 = vmatmul.mubr.bf16.gmra.mxu0 %v3143
        %v6831 = vpop.f32.mrf.mxu0
        %v6832 = vadd.f32 0.0, %v6831
        %v6833 = vpop.f32.mrf.mxu0
        %v6834 = vadd.f32 0.0, %v6833
        %v6835 = vpop.f32.mrf.mxu0
        %v6836 = vadd.f32 0.0, %v6835
        %v6837 = vpop.f32.mrf.mxu0
        %v6838 = vadd.f32 0.0, %v6837
        %6839 = vmatprep.mubr.bf16.mxu0 0
        %6840 = vmatmul.mubr.bf16.gmra.mxu0 %v3144
        %v6841 = vpop.f32.mrf.mxu0
        %v6842 = vadd.f32 0.0, %v6841
        %v6843 = vpop.f32.mrf.mxu0
        %v6844 = vadd.f32 0.0, %v6843
        %v6845 = vpop.f32.mrf.mxu0
        %v6846 = vadd.f32 0.0, %v6845
        %v6847 = vpop.f32.mrf.mxu0
        %v6848 = vadd.f32 0.0, %v6847
        %6849 = vmatprep.mubr.bf16.mxu0 0
        %6850 = vmatmul.mubr.bf16.gmra.mxu0 %v3145
        %v6851 = vpop.f32.mrf.mxu0
        %v6852 = vadd.f32 0.0, %v6851
        %v6853 = vpop.f32.mrf.mxu0
        %v6854 = vadd.f32 0.0, %v6853
        %v6855 = vpop.f32.mrf.mxu0
        %v6856 = vadd.f32 0.0, %v6855
        %v6857 = vpop.f32.mrf.mxu0
        %v6858 = vadd.f32 0.0, %v6857
        %6859 = vmatprep.mubr.bf16.mxu0 0
        %6860 = vmatmul.mubr.bf16.gmra.mxu0 %v3146
        %v6861 = vpop.f32.mrf.mxu0
        %v6862 = vadd.f32 0.0, %v6861
        %v6863 = vpop.f32.mrf.mxu0
        %v6864 = vadd.f32 0.0, %v6863
        %v6865 = vpop.f32.mrf.mxu0
        %v6866 = vadd.f32 0.0, %v6865
        %v6867 = vpop.f32.mrf.mxu0
        %v6868 = vadd.f32 0.0, %v6867
        %6869 = vmatprep.mubr.bf16.mxu0 0
        %6870 = vmatmul.mubr.bf16.gmra.mxu0 %v3147
        %v6871 = vpop.f32.mrf.mxu0
        %v6872 = vadd.f32 0.0, %v6871
        %v6873 = vpop.f32.mrf.mxu0
        %v6874 = vadd.f32 0.0, %v6873
        %v6875 = vpop.f32.mrf.mxu0
        %v6876 = vadd.f32 0.0, %v6875
        %v6877 = vpop.f32.mrf.mxu0
        %v6878 = vadd.f32 0.0, %v6877
        %6879 = vmatprep.mubr.bf16.mxu0 0
        %6880 = vmatmul.mubr.bf16.gmra.mxu0 %v3148
        %v6881 = vpop.f32.mrf.mxu0
        %v6882 = vadd.f32 0.0, %v6881
        %v6883 = vpop.f32.mrf.mxu0
        %v6884 = vadd.f32 0.0, %v6883
        %v6885 = vpop.f32.mrf.mxu0
        %v6886 = vadd.f32 0.0, %v6885
        %v6887 = vpop.f32.mrf.mxu0
        %v6888 = vadd.f32 0.0, %v6887
        %6889 = vmatprep.mubr.bf16.mxu0 0
        %6890 = vmatmul.mubr.bf16.gmra.mxu0 %v3149
        %v6891 = vpop.f32.mrf.mxu0
        %v6892 = vadd.f32 0.0, %v6891
        %v6893 = vpop.f32.mrf.mxu0
        %v6894 = vadd.f32 0.0, %v6893
        %v6895 = vpop.f32.mrf.mxu0
        %v6896 = vadd.f32 0.0, %v6895
        %v6897 = vpop.f32.mrf.mxu0
        %v6898 = vadd.f32 0.0, %v6897
        %6899 = vmatprep.mubr.bf16.mxu0 0
        %6900 = vmatmul.mubr.bf16.gmra.mxu0 %v3150
        %v6901 = vpop.f32.mrf.mxu0
        %v6902 = vadd.f32 0.0, %v6901
        %v6903 = vpop.f32.mrf.mxu0
        %v6904 = vadd.f32 0.0, %v6903
        %v6905 = vpop.f32.mrf.mxu0
        %v6906 = vadd.f32 0.0, %v6905
        %v6907 = vpop.f32.mrf.mxu0
        %v6908 = vadd.f32 0.0, %v6907
        %6909 = vmatprep.mubr.bf16.mxu0 0
        %6910 = vmatmul.mubr.bf16.gmra.mxu0 %v3151
        %v6911 = vpop.f32.mrf.mxu0
        %v6912 = vadd.f32 0.0, %v6911
        %v6913 = vpop.f32.mrf.mxu0
        %v6914 = vadd.f32 0.0, %v6913
        %v6915 = vpop.f32.mrf.mxu0
        %v6916 = vadd.f32 0.0, %v6915
        %v6917 = vpop.f32.mrf.mxu0
        %v6918 = vadd.f32 0.0, %v6917
        %6919 = vmatprep.mubr.bf16.mxu0 0
        %6920 = vmatmul.mubr.bf16.gmra.mxu0 %v3152
        %v6921 = vpop.f32.mrf.mxu0
        %v6922 = vadd.f32 0.0, %v6921
        %v6923 = vpop.f32.mrf.mxu0
        %v6924 = vadd.f32 0.0, %v6923
        %v6925 = vpop.f32.mrf.mxu0
        %v6926 = vadd.f32 0.0, %v6925
        %v6927 = vpop.f32.mrf.mxu0
        %v6928 = vadd.f32 0.0, %v6927
        %6929 = vmatprep.mubr.bf16.mxu0 0
        %6930 = vmatmul.mubr.bf16.gmra.mxu0 %v3153
        %v6931 = vpop.f32.mrf.mxu0
        %v6932 = vadd.f32 0.0, %v6931
        %v6933 = vpop.f32.mrf.mxu0
        %v6934 = vadd.f32 0.0, %v6933
        %v6935 = vpop.f32.mrf.mxu0
        %v6936 = vadd.f32 0.0, %v6935
        %v6937 = vpop.f32.mrf.mxu0
        %v6938 = vadd.f32 0.0, %v6937
        %6939 = vmatprep.mubr.bf16.mxu0 0
        %6940 = vmatmul.mubr.bf16.gmra.mxu0 %v3154
        %v6941 = vpop.f32.mrf.mxu0
        %v6942 = vadd.f32 0.0, %v6941
        %v6943 = vpop.f32.mrf.mxu0
        %v6944 = vadd.f32 0.0, %v6943
        %v6945 = vpop.f32.mrf.mxu0
        %v6946 = vadd.f32 0.0, %v6945
        %v6947 = vpop.f32.mrf.mxu0
        %v6948 = vadd.f32 0.0, %v6947
        %6949 = vmatprep.mubr.bf16.mxu0 0
        %6950 = vmatmul.mubr.bf16.gmra.mxu0 %v3155
        %v6951 = vpop.f32.mrf.mxu0
        %v6952 = vadd.f32 0.0, %v6951
        %v6953 = vpop.f32.mrf.mxu0
        %v6954 = vadd.f32 0.0, %v6953
        %v6955 = vpop.f32.mrf.mxu0
        %v6956 = vadd.f32 0.0, %v6955
        %v6957 = vpop.f32.mrf.mxu0
        %v6958 = vadd.f32 0.0, %v6957
        %6959 = vmatprep.mubr.bf16.mxu0 0
        %6960 = vmatmul.mubr.bf16.gmra.mxu0 %v3156
        %v6961 = vpop.f32.mrf.mxu0
        %v6962 = vadd.f32 0.0, %v6961
        %v6963 = vpop.f32.mrf.mxu0
        %v6964 = vadd.f32 0.0, %v6963
        %v6965 = vpop.f32.mrf.mxu0
        %v6966 = vadd.f32 0.0, %v6965
        %v6967 = vpop.f32.mrf.mxu0
        %v6968 = vadd.f32 0.0, %v6967
        %6969 = vmatprep.mubr.bf16.mxu0 0
        %6970 = vmatmul.mubr.bf16.gmra.mxu0 %v3157
        %v6971 = vpop.f32.mrf.mxu0
        %v6972 = vadd.f32 0.0, %v6971
        %v6973 = vpop.f32.mrf.mxu0
        %v6974 = vadd.f32 0.0, %v6973
        %v6975 = vpop.f32.mrf.mxu0
        %v6976 = vadd.f32 0.0, %v6975
        %v6977 = vpop.f32.mrf.mxu0
        %v6978 = vadd.f32 0.0, %v6977
        %6979 = vmatprep.mubr.bf16.mxu0 0
        %6980 = vmatmul.mubr.bf16.gmra.mxu0 %v3158
        %v6981 = vpop.f32.mrf.mxu0
        %v6982 = vadd.f32 0.0, %v6981
        %v6983 = vpop.f32.mrf.mxu0
        %v6984 = vadd.f32 0.0, %v6983
        %v6985 = vpop.f32.mrf.mxu0
        %v6986 = vadd.f32 0.0, %v6985
        %v6987 = vpop.f32.mrf.mxu0
        %v6988 = vadd.f32 0.0, %v6987
        %6989 = vdwg.mxu0
        %v6990 = vmax.f32 %v5679, %v5683
        %v6991 = vmax.f32 %v6990, %v5689
        %v6992 = vmax.f32 %v6991, %v5693
        %v6993 = vmax.f32 %v6992, %v5699
        %v6994 = vmax.f32 %v6993, %v5703
        %v6995 = vmax.f32 %v6994, %v5709
        %v6996 = vmax.f32 %v6995, %v5713
        %v6997 = vmax.f32 %v6996, %v5719
        %v6998 = vmax.f32 %v6997, %v5723
        %v6999 = vmax.f32 %v6998, %v5729
        %v7000 = vmax.f32 %v6999, %v5733
        %v7001 = vmax.f32 %v7000, %v5739
        %v7002 = vmax.f32 %v7001, %v5743
        %v7003 = vmax.f32 %v7002, %v5749
        %v7004 = vmax.f32 %v7003, %v5753
        %v7005 = vrot.slane %v7004, 4
        %v7006 = vmax.f32 %v7004, %v7005
        %v7007 = vrot.slane %v7006, 2
        %v7008 = vmax.f32 %v7006, %v7007
        %v7009 = vrot.slane %v7008, 1
        %v7010 = vmax.f32 %v7008, %v7009
        %v7011 = vmax.f32 %v5681, %v5685
        %v7012 = vmax.f32 %v7011, %v5691
        %v7013 = vmax.f32 %v7012, %v5695
        %v7014 = vmax.f32 %v7013, %v5701
        %v7015 = vmax.f32 %v7014, %v5705
        %v7016 = vmax.f32 %v7015, %v5711
        %v7017 = vmax.f32 %v7016, %v5715
        %v7018 = vmax.f32 %v7017, %v5721
        %v7019 = vmax.f32 %v7018, %v5725
        %v7020 = vmax.f32 %v7019, %v5731
        %v7021 = vmax.f32 %v7020, %v5735
        %v7022 = vmax.f32 %v7021, %v5741
        %v7023 = vmax.f32 %v7022, %v5745
        %v7024 = vmax.f32 %v7023, %v5751
        %v7025 = vmax.f32 %v7024, %v5755
        %v7026 = vrot.slane %v7025, 4
        %v7027 = vmax.f32 %v7025, %v7026
        %v7028 = vrot.slane %v7027, 2
        %v7029 = vmax.f32 %v7027, %v7028
        %v7030 = vrot.slane %v7029, 1
        %v7031 = vmax.f32 %v7029, %v7030
        %v7032 = vmax.f32 %v6352, %v6356
        %v7033 = vmax.f32 %v7032, %v6362
        %v7034 = vmax.f32 %v7033, %v6366
        %v7035 = vmax.f32 %v7034, %v6372
        %v7036 = vmax.f32 %v7035, %v6376
        %v7037 = vmax.f32 %v7036, %v6382
        %v7038 = vmax.f32 %v7037, %v6386
        %v7039 = vmax.f32 %v7038, %v6392
        %v7040 = vmax.f32 %v7039, %v6396
        %v7041 = vmax.f32 %v7040, %v6402
        %v7042 = vmax.f32 %v7041, %v6406
        %v7043 = vmax.f32 %v7042, %v6412
        %v7044 = vmax.f32 %v7043, %v6416
        %v7045 = vmax.f32 %v7044, %v6422
        %v7046 = vmax.f32 %v7045, %v6426
        %v7047 = vrot.slane %v7046, 4
        %v7048 = vmax.f32 %v7046, %v7047
        %v7049 = vrot.slane %v7048, 2
        %v7050 = vmax.f32 %v7048, %v7049
        %v7051 = vrot.slane %v7050, 1
        %v7052 = vmax.f32 %v7050, %v7051
        %v7053 = vmax.f32 %v6354, %v6358
        %v7054 = vmax.f32 %v7053, %v6364
        %v7055 = vmax.f32 %v7054, %v6368
        %v7056 = vmax.f32 %v7055, %v6374
        %v7057 = vmax.f32 %v7056, %v6378
        %v7058 = vmax.f32 %v7057, %v6384
        %v7059 = vmax.f32 %v7058, %v6388
        %v7060 = vmax.f32 %v7059, %v6394
        %v7061 = vmax.f32 %v7060, %v6398
        %v7062 = vmax.f32 %v7061, %v6404
        %v7063 = vmax.f32 %v7062, %v6408
        %v7064 = vmax.f32 %v7063, %v6414
        %v7065 = vmax.f32 %v7064, %v6418
        %v7066 = vmax.f32 %v7065, %v6424
        %v7067 = vmax.f32 %v7066, %v6428
        %v7068 = vrot.slane %v7067, 4
        %v7069 = vmax.f32 %v7067, %v7068
        %v7070 = vrot.slane %v7069, 2
        %v7071 = vmax.f32 %v7069, %v7070
        %v7072 = vrot.slane %v7071, 1
        %v7073 = vmax.f32 %v7071, %v7072
        %v7074 = vmax.f32 %v5759, %v5763
        %v7075 = vmax.f32 %v7074, %v5769
        %v7076 = vmax.f32 %v7075, %v5773
        %v7077 = vmax.f32 %v7076, %v5779
        %v7078 = vmax.f32 %v7077, %v5783
        %v7079 = vmax.f32 %v7078, %v5789
        %v7080 = vmax.f32 %v7079, %v5793
        %v7081 = vmax.f32 %v7080, %v5799
        %v7082 = vmax.f32 %v7081, %v5803
        %v7083 = vmax.f32 %v7082, %v5809
        %v7084 = vmax.f32 %v7083, %v5813
        %v7085 = vmax.f32 %v7084, %v5819
        %v7086 = vmax.f32 %v7085, %v5823
        %v7087 = vmax.f32 %v7086, %v5829
        %v7088 = vmax.f32 %v7087, %v5833
        %v7089 = vrot.slane %v7088, 4
        %v7090 = vmax.f32 %v7088, %v7089
        %v7091 = vrot.slane %v7090, 2
        %v7092 = vmax.f32 %v7090, %v7091
        %v7093 = vrot.slane %v7092, 1
        %v7094 = vmax.f32 %v7092, %v7093
        %v7095 = vmax.f32 %v5761, %v5765
        %v7096 = vmax.f32 %v7095, %v5771
        %v7097 = vmax.f32 %v7096, %v5775
        %v7098 = vmax.f32 %v7097, %v5781
        %v7099 = vmax.f32 %v7098, %v5785
        %v7100 = vmax.f32 %v7099, %v5791
        %v7101 = vmax.f32 %v7100, %v5795
        %v7102 = vmax.f32 %v7101, %v5801
        %v7103 = vmax.f32 %v7102, %v5805
        %v7104 = vmax.f32 %v7103, %v5811
        %v7105 = vmax.f32 %v7104, %v5815
        %v7106 = vmax.f32 %v7105, %v5821
        %v7107 = vmax.f32 %v7106, %v5825
        %v7108 = vmax.f32 %v7107, %v5831
        %v7109 = vmax.f32 %v7108, %v5835
        %v7110 = vrot.slane %v7109, 4
        %v7111 = vmax.f32 %v7109, %v7110
        %v7112 = vrot.slane %v7111, 2
        %v7113 = vmax.f32 %v7111, %v7112
        %v7114 = vrot.slane %v7113, 1
        %v7115 = vmax.f32 %v7113, %v7114
        %v7116 = vmax.f32 %v6432, %v6436
        %v7117 = vmax.f32 %v7116, %v6442
        %v7118 = vmax.f32 %v7117, %v6446
        %v7119 = vmax.f32 %v7118, %v6452
        %v7120 = vmax.f32 %v7119, %v6456
        %v7121 = vmax.f32 %v7120, %v6462
        %v7122 = vmax.f32 %v7121, %v6466
        %v7123 = vmax.f32 %v7122, %v6472
        %v7124 = vmax.f32 %v7123, %v6476
        %v7125 = vmax.f32 %v7124, %v6482
        %v7126 = vmax.f32 %v7125, %v6486
        %v7127 = vmax.f32 %v7126, %v6492
        %v7128 = vmax.f32 %v7127, %v6496
        %v7129 = vmax.f32 %v7128, %v6502
        %v7130 = vmax.f32 %v7129, %v6506
        %v7131 = vrot.slane %v7130, 4
        %v7132 = vmax.f32 %v7130, %v7131
        %v7133 = vrot.slane %v7132, 2
        %v7134 = vmax.f32 %v7132, %v7133
        %v7135 = vrot.slane %v7134, 1
        %v7136 = vmax.f32 %v7134, %v7135
        %v7137 = vmax.f32 %v6434, %v6438
        %v7138 = vmax.f32 %v7137, %v6444
        %v7139 = vmax.f32 %v7138, %v6448
        %v7140 = vmax.f32 %v7139, %v6454
        %v7141 = vmax.f32 %v7140, %v6458
        %v7142 = vmax.f32 %v7141, %v6464
        %v7143 = vmax.f32 %v7142, %v6468
        %v7144 = vmax.f32 %v7143, %v6474
        %v7145 = vmax.f32 %v7144, %v6478
        %v7146 = vmax.f32 %v7145, %v6484
        %v7147 = vmax.f32 %v7146, %v6488
        %v7148 = vmax.f32 %v7147, %v6494
        %v7149 = vmax.f32 %v7148, %v6498
        %v7150 = vmax.f32 %v7149, %v6504
        %v7151 = vmax.f32 %v7150, %v6508
        %v7152 = vrot.slane %v7151, 4
        %v7153 = vmax.f32 %v7151, %v7152
        %v7154 = vrot.slane %v7153, 2
        %v7155 = vmax.f32 %v7153, %v7154
        %v7156 = vrot.slane %v7155, 1
        %v7157 = vmax.f32 %v7155, %v7156
        %v7158 = vmax.f32 %v5839, %v5843
        %v7159 = vmax.f32 %v7158, %v5849
        %v7160 = vmax.f32 %v7159, %v5853
        %v7161 = vmax.f32 %v7160, %v5859
        %v7162 = vmax.f32 %v7161, %v5863
        %v7163 = vmax.f32 %v7162, %v5869
        %v7164 = vmax.f32 %v7163, %v5873
        %v7165 = vmax.f32 %v7164, %v5879
        %v7166 = vmax.f32 %v7165, %v5883
        %v7167 = vmax.f32 %v7166, %v5889
        %v7168 = vmax.f32 %v7167, %v5893
        %v7169 = vmax.f32 %v7168, %v5899
        %v7170 = vmax.f32 %v7169, %v5903
        %v7171 = vmax.f32 %v7170, %v5909
        %v7172 = vmax.f32 %v7171, %v5913
        %v7173 = vrot.slane %v7172, 4
        %v7174 = vmax.f32 %v7172, %v7173
        %v7175 = vrot.slane %v7174, 2
        %v7176 = vmax.f32 %v7174, %v7175
        %v7177 = vrot.slane %v7176, 1
        %v7178 = vmax.f32 %v7176, %v7177
        %v7179 = vmax.f32 %v5841, %v5845
        %v7180 = vmax.f32 %v7179, %v5851
        %v7181 = vmax.f32 %v7180, %v5855
        %v7182 = vmax.f32 %v7181, %v5861
        %v7183 = vmax.f32 %v7182, %v5865
        %v7184 = vmax.f32 %v7183, %v5871
        %v7185 = vmax.f32 %v7184, %v5875
        %v7186 = vmax.f32 %v7185, %v5881
        %v7187 = vmax.f32 %v7186, %v5885
        %v7188 = vmax.f32 %v7187, %v5891
        %v7189 = vmax.f32 %v7188, %v5895
        %v7190 = vmax.f32 %v7189, %v5901
        %v7191 = vmax.f32 %v7190, %v5905
        %v7192 = vmax.f32 %v7191, %v5911
        %v7193 = vmax.f32 %v7192, %v5915
        %v7194 = vrot.slane %v7193, 4
        %v7195 = vmax.f32 %v7193, %v7194
        %v7196 = vrot.slane %v7195, 2
        %v7197 = vmax.f32 %v7195, %v7196
        %v7198 = vrot.slane %v7197, 1
        %v7199 = vmax.f32 %v7197, %v7198
        %v7200 = vmax.f32 %v6512, %v6516
        %v7201 = vmax.f32 %v7200, %v6522
        %v7202 = vmax.f32 %v7201, %v6526
        %v7203 = vmax.f32 %v7202, %v6532
        %v7204 = vmax.f32 %v7203, %v6536
        %v7205 = vmax.f32 %v7204, %v6542
        %v7206 = vmax.f32 %v7205, %v6546
        %v7207 = vmax.f32 %v7206, %v6552
        %v7208 = vmax.f32 %v7207, %v6556
        %v7209 = vmax.f32 %v7208, %v6562
        %v7210 = vmax.f32 %v7209, %v6566
        %v7211 = vmax.f32 %v7210, %v6572
        %v7212 = vmax.f32 %v7211, %v6576
        %v7213 = vmax.f32 %v7212, %v6582
        %v7214 = vmax.f32 %v7213, %v6586
        %v7215 = vrot.slane %v7214, 4
        %v7216 = vmax.f32 %v7214, %v7215
        %v7217 = vrot.slane %v7216, 2
        %v7218 = vmax.f32 %v7216, %v7217
        %v7219 = vrot.slane %v7218, 1
        %v7220 = vmax.f32 %v7218, %v7219
        %v7221 = vmax.f32 %v6514, %v6518
        %v7222 = vmax.f32 %v7221, %v6524
        %v7223 = vmax.f32 %v7222, %v6528
        %v7224 = vmax.f32 %v7223, %v6534
        %v7225 = vmax.f32 %v7224, %v6538
        %v7226 = vmax.f32 %v7225, %v6544
        %v7227 = vmax.f32 %v7226, %v6548
        %v7228 = vmax.f32 %v7227, %v6554
        %v7229 = vmax.f32 %v7228, %v6558
        %v7230 = vmax.f32 %v7229, %v6564
        %v7231 = vmax.f32 %v7230, %v6568
        %v7232 = vmax.f32 %v7231, %v6574
        %v7233 = vmax.f32 %v7232, %v6578
        %v7234 = vmax.f32 %v7233, %v6584
        %v7235 = vmax.f32 %v7234, %v6588
        %v7236 = vrot.slane %v7235, 4
        %v7237 = vmax.f32 %v7235, %v7236
        %v7238 = vrot.slane %v7237, 2
        %v7239 = vmax.f32 %v7237, %v7238
        %v7240 = vrot.slane %v7239, 1
        %v7241 = vmax.f32 %v7239, %v7240
        %v7242 = vmax.f32 %v5919, %v5923
        %v7243 = vmax.f32 %v7242, %v5929
        %v7244 = vmax.f32 %v7243, %v5933
        %v7245 = vmax.f32 %v7244, %v5939
        %v7246 = vmax.f32 %v7245, %v5943
        %v7247 = vmax.f32 %v7246, %v5949
        %v7248 = vmax.f32 %v7247, %v5953
        %v7249 = vmax.f32 %v7248, %v5959
        %v7250 = vmax.f32 %v7249, %v5963
        %v7251 = vmax.f32 %v7250, %v5969
        %v7252 = vmax.f32 %v7251, %v5973
        %v7253 = vmax.f32 %v7252, %v5979
        %v7254 = vmax.f32 %v7253, %v5983
        %v7255 = vmax.f32 %v7254, %v5989
        %v7256 = vmax.f32 %v7255, %v5993
        %v7257 = vrot.slane %v7256, 4
        %v7258 = vmax.f32 %v7256, %v7257
        %v7259 = vrot.slane %v7258, 2
        %v7260 = vmax.f32 %v7258, %v7259
        %v7261 = vrot.slane %v7260, 1
        %v7262 = vmax.f32 %v7260, %v7261
        %v7263 = vmax.f32 %v5921, %v5925
        %v7264 = vmax.f32 %v7263, %v5931
        %v7265 = vmax.f32 %v7264, %v5935
        %v7266 = vmax.f32 %v7265, %v5941
        %v7267 = vmax.f32 %v7266, %v5945
        %v7268 = vmax.f32 %v7267, %v5951
        %v7269 = vmax.f32 %v7268, %v5955
        %v7270 = vmax.f32 %v7269, %v5961
        %v7271 = vmax.f32 %v7270, %v5965
        %v7272 = vmax.f32 %v7271, %v5971
        %v7273 = vmax.f32 %v7272, %v5975
        %v7274 = vmax.f32 %v7273, %v5981
        %v7275 = vmax.f32 %v7274, %v5985
        %v7276 = vmax.f32 %v7275, %v5991
        %v7277 = vmax.f32 %v7276, %v5995
        %v7278 = vrot.slane %v7277, 4
        %v7279 = vmax.f32 %v7277, %v7278
        %v7280 = vrot.slane %v7279, 2
        %v7281 = vmax.f32 %v7279, %v7280
        %v7282 = vrot.slane %v7281, 1
        %v7283 = vmax.f32 %v7281, %v7282
        %v7284 = vmax.f32 %v6592, %v6596
        %v7285 = vmax.f32 %v7284, %v6602
        %v7286 = vmax.f32 %v7285, %v6606
        %v7287 = vmax.f32 %v7286, %v6612
        %v7288 = vmax.f32 %v7287, %v6616
        %v7289 = vmax.f32 %v7288, %v6622
        %v7290 = vmax.f32 %v7289, %v6626
        %v7291 = vmax.f32 %v7290, %v6632
        %v7292 = vmax.f32 %v7291, %v6636
        %v7293 = vmax.f32 %v7292, %v6642
        %v7294 = vmax.f32 %v7293, %v6646
        %v7295 = vmax.f32 %v7294, %v6652
        %v7296 = vmax.f32 %v7295, %v6656
        %v7297 = vmax.f32 %v7296, %v6662
        %v7298 = vmax.f32 %v7297, %v6666
        %v7299 = vrot.slane %v7298, 4
        %v7300 = vmax.f32 %v7298, %v7299
        %v7301 = vrot.slane %v7300, 2
        %v7302 = vmax.f32 %v7300, %v7301
        %v7303 = vrot.slane %v7302, 1
        %v7304 = vmax.f32 %v7302, %v7303
        %v7305 = vmax.f32 %v6594, %v6598
        %v7306 = vmax.f32 %v7305, %v6604
        %v7307 = vmax.f32 %v7306, %v6608
        %v7308 = vmax.f32 %v7307, %v6614
        %v7309 = vmax.f32 %v7308, %v6618
        %v7310 = vmax.f32 %v7309, %v6624
        %v7311 = vmax.f32 %v7310, %v6628
        %v7312 = vmax.f32 %v7311, %v6634
        %v7313 = vmax.f32 %v7312, %v6638
        %v7314 = vmax.f32 %v7313, %v6644
        %v7315 = vmax.f32 %v7314, %v6648
        %v7316 = vmax.f32 %v7315, %v6654
        %v7317 = vmax.f32 %v7316, %v6658
        %v7318 = vmax.f32 %v7317, %v6664
        %v7319 = vmax.f32 %v7318, %v6668
        %v7320 = vrot.slane %v7319, 4
        %v7321 = vmax.f32 %v7319, %v7320
        %v7322 = vrot.slane %v7321, 2
        %v7323 = vmax.f32 %v7321, %v7322
        %v7324 = vrot.slane %v7323, 1
        %v7325 = vmax.f32 %v7323, %v7324
        %v7326 = vmax.f32 %v5999, %v6003
        %v7327 = vmax.f32 %v7326, %v6009
        %v7328 = vmax.f32 %v7327, %v6013
        %v7329 = vmax.f32 %v7328, %v6019
        %v7330 = vmax.f32 %v7329, %v6023
        %v7331 = vmax.f32 %v7330, %v6029
        %v7332 = vmax.f32 %v7331, %v6033
        %v7333 = vmax.f32 %v7332, %v6039
        %v7334 = vmax.f32 %v7333, %v6043
        %v7335 = vmax.f32 %v7334, %v6049
        %v7336 = vmax.f32 %v7335, %v6053
        %v7337 = vmax.f32 %v7336, %v6059
        %v7338 = vmax.f32 %v7337, %v6063
        %v7339 = vmax.f32 %v7338, %v6069
        %v7340 = vmax.f32 %v7339, %v6073
        %v7341 = vrot.slane %v7340, 4
        %v7342 = vmax.f32 %v7340, %v7341
        %v7343 = vrot.slane %v7342, 2
        %v7344 = vmax.f32 %v7342, %v7343
        %v7345 = vrot.slane %v7344, 1
        %v7346 = vmax.f32 %v7344, %v7345
        %v7347 = vmax.f32 %v6001, %v6005
        %v7348 = vmax.f32 %v7347, %v6011
        %v7349 = vmax.f32 %v7348, %v6015
        %v7350 = vmax.f32 %v7349, %v6021
        %v7351 = vmax.f32 %v7350, %v6025
        %v7352 = vmax.f32 %v7351, %v6031
        %v7353 = vmax.f32 %v7352, %v6035
        %v7354 = vmax.f32 %v7353, %v6041
        %v7355 = vmax.f32 %v7354, %v6045
        %v7356 = vmax.f32 %v7355, %v6051
        %v7357 = vmax.f32 %v7356, %v6055
        %v7358 = vmax.f32 %v7357, %v6061
        %v7359 = vmax.f32 %v7358, %v6065
        %v7360 = vmax.f32 %v7359, %v6071
        %v7361 = vmax.f32 %v7360, %v6075
        %v7362 = vrot.slane %v7361, 4
        %v7363 = vmax.f32 %v7361, %v7362
        %v7364 = vrot.slane %v7363, 2
        %v7365 = vmax.f32 %v7363, %v7364
        %v7366 = vrot.slane %v7365, 1
        %v7367 = vmax.f32 %v7365, %v7366
        %v7368 = vmax.f32 %v6672, %v6676
        %v7369 = vmax.f32 %v7368, %v6682
        %v7370 = vmax.f32 %v7369, %v6686
        %v7371 = vmax.f32 %v7370, %v6692
        %v7372 = vmax.f32 %v7371, %v6696
        %v7373 = vmax.f32 %v7372, %v6702
        %v7374 = vmax.f32 %v7373, %v6706
        %v7375 = vmax.f32 %v7374, %v6712
        %v7376 = vmax.f32 %v7375, %v6716
        %v7377 = vmax.f32 %v7376, %v6722
        %v7378 = vmax.f32 %v7377, %v6726
        %v7379 = vmax.f32 %v7378, %v6732
        %v7380 = vmax.f32 %v7379, %v6736
        %v7381 = vmax.f32 %v7380, %v6742
        %v7382 = vmax.f32 %v7381, %v6746
        %v7383 = vrot.slane %v7382, 4
        %v7384 = vmax.f32 %v7382, %v7383
        %v7385 = vrot.slane %v7384, 2
        %v7386 = vmax.f32 %v7384, %v7385
        %v7387 = vrot.slane %v7386, 1
        %v7388 = vmax.f32 %v7386, %v7387
        %v7389 = vmax.f32 %v6674, %v6678
        %v7390 = vmax.f32 %v7389, %v6684
        %v7391 = vmax.f32 %v7390, %v6688
        %v7392 = vmax.f32 %v7391, %v6694
        %v7393 = vmax.f32 %v7392, %v6698
        %v7394 = vmax.f32 %v7393, %v6704
        %v7395 = vmax.f32 %v7394, %v6708
        %v7396 = vmax.f32 %v7395, %v6714
        %v7397 = vmax.f32 %v7396, %v6718
        %v7398 = vmax.f32 %v7397, %v6724
        %v7399 = vmax.f32 %v7398, %v6728
        %v7400 = vmax.f32 %v7399, %v6734
        %v7401 = vmax.f32 %v7400, %v6738
        %v7402 = vmax.f32 %v7401, %v6744
        %v7403 = vmax.f32 %v7402, %v6748
        %v7404 = vrot.slane %v7403, 4
        %v7405 = vmax.f32 %v7403, %v7404
        %v7406 = vrot.slane %v7405, 2
        %v7407 = vmax.f32 %v7405, %v7406
        %v7408 = vrot.slane %v7407, 1
        %v7409 = vmax.f32 %v7407, %v7408
        %v7410 = vmax.f32 %v6079, %v6083
        %v7411 = vmax.f32 %v7410, %v6089
        %v7412 = vmax.f32 %v7411, %v6093
        %v7413 = vmax.f32 %v7412, %v6099
        %v7414 = vmax.f32 %v7413, %v6103
        %v7415 = vmax.f32 %v7414, %v6109
        %v7416 = vmax.f32 %v7415, %v6113
        %v7417 = vmax.f32 %v7416, %v6119
        %v7418 = vmax.f32 %v7417, %v6123
        %v7419 = vmax.f32 %v7418, %v6129
        %v7420 = vmax.f32 %v7419, %v6133
        %v7421 = vmax.f32 %v7420, %v6139
        %v7422 = vmax.f32 %v7421, %v6143
        %v7423 = vmax.f32 %v7422, %v6149
        %v7424 = vmax.f32 %v7423, %v6153
        %v7425 = vrot.slane %v7424, 4
        %v7426 = vmax.f32 %v7424, %v7425
        %v7427 = vrot.slane %v7426, 2
        %v7428 = vmax.f32 %v7426, %v7427
        %v7429 = vrot.slane %v7428, 1
        %v7430 = vmax.f32 %v7428, %v7429
        %v7431 = vmax.f32 %v6081, %v6085
        %v7432 = vmax.f32 %v7431, %v6091
        %v7433 = vmax.f32 %v7432, %v6095
        %v7434 = vmax.f32 %v7433, %v6101
        %v7435 = vmax.f32 %v7434, %v6105
        %v7436 = vmax.f32 %v7435, %v6111
        %v7437 = vmax.f32 %v7436, %v6115
        %v7438 = vmax.f32 %v7437, %v6121
        %v7439 = vmax.f32 %v7438, %v6125
        %v7440 = vmax.f32 %v7439, %v6131
        %v7441 = vmax.f32 %v7440, %v6135
        %v7442 = vmax.f32 %v7441, %v6141
        %v7443 = vmax.f32 %v7442, %v6145
        %v7444 = vmax.f32 %v7443, %v6151
        %v7445 = vmax.f32 %v7444, %v6155
        %v7446 = vrot.slane %v7445, 4
        %v7447 = vmax.f32 %v7445, %v7446
        %v7448 = vrot.slane %v7447, 2
        %v7449 = vmax.f32 %v7447, %v7448
        %v7450 = vrot.slane %v7449, 1
        %v7451 = vmax.f32 %v7449, %v7450
        %v7452 = vmax.f32 %v6752, %v6756
        %v7453 = vmax.f32 %v7452, %v6762
        %v7454 = vmax.f32 %v7453, %v6766
        %v7455 = vmax.f32 %v7454, %v6772
        %v7456 = vmax.f32 %v7455, %v6776
        %v7457 = vmax.f32 %v7456, %v6782
        %v7458 = vmax.f32 %v7457, %v6786
        %v7459 = vmax.f32 %v7458, %v6792
        %v7460 = vmax.f32 %v7459, %v6796
        %v7461 = vmax.f32 %v7460, %v6802
        %v7462 = vmax.f32 %v7461, %v6806
        %v7463 = vmax.f32 %v7462, %v6812
        %v7464 = vmax.f32 %v7463, %v6816
        %v7465 = vmax.f32 %v7464, %v6822
        %v7466 = vmax.f32 %v7465, %v6826
        %v7467 = vrot.slane %v7466, 4
        %v7468 = vmax.f32 %v7466, %v7467
        %v7469 = vrot.slane %v7468, 2
        %v7470 = vmax.f32 %v7468, %v7469
        %v7471 = vrot.slane %v7470, 1
        %v7472 = vmax.f32 %v7470, %v7471
        %v7473 = vmax.f32 %v6754, %v6758
        %v7474 = vmax.f32 %v7473, %v6764
        %v7475 = vmax.f32 %v7474, %v6768
        %v7476 = vmax.f32 %v7475, %v6774
        %v7477 = vmax.f32 %v7476, %v6778
        %v7478 = vmax.f32 %v7477, %v6784
        %v7479 = vmax.f32 %v7478, %v6788
        %v7480 = vmax.f32 %v7479, %v6794
        %v7481 = vmax.f32 %v7480, %v6798
        %v7482 = vmax.f32 %v7481, %v6804
        %v7483 = vmax.f32 %v7482, %v6808
        %v7484 = vmax.f32 %v7483, %v6814
        %v7485 = vmax.f32 %v7484, %v6818
        %v7486 = vmax.f32 %v7485, %v6824
        %v7487 = vmax.f32 %v7486, %v6828
        %v7488 = vrot.slane %v7487, 4
        %v7489 = vmax.f32 %v7487, %v7488
        %v7490 = vrot.slane %v7489, 2
        %v7491 = vmax.f32 %v7489, %v7490
        %v7492 = vrot.slane %v7491, 1
        %v7493 = vmax.f32 %v7491, %v7492
        %v7494 = vmax.f32 %v6159, %v6163
        %v7495 = vmax.f32 %v7494, %v6169
        %v7496 = vmax.f32 %v7495, %v6173
        %v7497 = vmax.f32 %v7496, %v6179
        %v7498 = vmax.f32 %v7497, %v6183
        %v7499 = vmax.f32 %v7498, %v6189
        %v7500 = vmax.f32 %v7499, %v6193
        %v7501 = vmax.f32 %v7500, %v6199
        %v7502 = vmax.f32 %v7501, %v6203
        %v7503 = vmax.f32 %v7502, %v6209
        %v7504 = vmax.f32 %v7503, %v6213
        %v7505 = vmax.f32 %v7504, %v6219
        %v7506 = vmax.f32 %v7505, %v6223
        %v7507 = vmax.f32 %v7506, %v6229
        %v7508 = vmax.f32 %v7507, %v6233
        %v7509 = vrot.slane %v7508, 4
        %v7510 = vmax.f32 %v7508, %v7509
        %v7511 = vrot.slane %v7510, 2
        %v7512 = vmax.f32 %v7510, %v7511
        %v7513 = vrot.slane %v7512, 1
        %v7514 = vmax.f32 %v7512, %v7513
        %v7515 = vmax.f32 %v6161, %v6165
        %v7516 = vmax.f32 %v7515, %v6171
        %v7517 = vmax.f32 %v7516, %v6175
        %v7518 = vmax.f32 %v7517, %v6181
        %v7519 = vmax.f32 %v7518, %v6185
        %v7520 = vmax.f32 %v7519, %v6191
        %v7521 = vmax.f32 %v7520, %v6195
        %v7522 = vmax.f32 %v7521, %v6201
        %v7523 = vmax.f32 %v7522, %v6205
        %v7524 = vmax.f32 %v7523, %v6211
        %v7525 = vmax.f32 %v7524, %v6215
        %v7526 = vmax.f32 %v7525, %v6221
        %v7527 = vmax.f32 %v7526, %v6225
        %v7528 = vmax.f32 %v7527, %v6231
        %v7529 = vmax.f32 %v7528, %v6235
        %v7530 = vrot.slane %v7529, 4
        %v7531 = vmax.f32 %v7529, %v7530
        %v7532 = vrot.slane %v7531, 2
        %v7533 = vmax.f32 %v7531, %v7532
        %v7534 = vrot.slane %v7533, 1
        %v7535 = vmax.f32 %v7533, %v7534
        %v7536 = vmax.f32 %v6832, %v6836
        %v7537 = vmax.f32 %v7536, %v6842
        %v7538 = vmax.f32 %v7537, %v6846
        %v7539 = vmax.f32 %v7538, %v6852
        %v7540 = vmax.f32 %v7539, %v6856
        %v7541 = vmax.f32 %v7540, %v6862
        %v7542 = vmax.f32 %v7541, %v6866
        %v7543 = vmax.f32 %v7542, %v6872
        %v7544 = vmax.f32 %v7543, %v6876
        %v7545 = vmax.f32 %v7544, %v6882
        %v7546 = vmax.f32 %v7545, %v6886
        %v7547 = vmax.f32 %v7546, %v6892
        %v7548 = vmax.f32 %v7547, %v6896
        %v7549 = vmax.f32 %v7548, %v6902
        %v7550 = vmax.f32 %v7549, %v6906
        %v7551 = vrot.slane %v7550, 4
        %v7552 = vmax.f32 %v7550, %v7551
        %v7553 = vrot.slane %v7552, 2
        %v7554 = vmax.f32 %v7552, %v7553
        %v7555 = vrot.slane %v7554, 1
        %v7556 = vmax.f32 %v7554, %v7555
        %v7557 = vmax.f32 %v6834, %v6838
        %v7558 = vmax.f32 %v7557, %v6844
        %v7559 = vmax.f32 %v7558, %v6848
        %v7560 = vmax.f32 %v7559, %v6854
        %v7561 = vmax.f32 %v7560, %v6858
        %v7562 = vmax.f32 %v7561, %v6864
        %v7563 = vmax.f32 %v7562, %v6868
        %v7564 = vmax.f32 %v7563, %v6874
        %v7565 = vmax.f32 %v7564, %v6878
        %v7566 = vmax.f32 %v7565, %v6884
        %v7567 = vmax.f32 %v7566, %v6888
        %v7568 = vmax.f32 %v7567, %v6894
        %v7569 = vmax.f32 %v7568, %v6898
        %v7570 = vmax.f32 %v7569, %v6904
        %v7571 = vmax.f32 %v7570, %v6908
        %v7572 = vrot.slane %v7571, 4
        %v7573 = vmax.f32 %v7571, %v7572
        %v7574 = vrot.slane %v7573, 2
        %v7575 = vmax.f32 %v7573, %v7574
        %v7576 = vrot.slane %v7575, 1
        %v7577 = vmax.f32 %v7575, %v7576
        %v7578 = vmax.f32 %v6239, %v6243
        %v7579 = vmax.f32 %v7578, %v6249
        %v7580 = vmax.f32 %v7579, %v6253
        %v7581 = vmax.f32 %v7580, %v6259
        %v7582 = vmax.f32 %v7581, %v6263
        %v7583 = vmax.f32 %v7582, %v6269
        %v7584 = vmax.f32 %v7583, %v6273
        %v7585 = vmax.f32 %v7584, %v6279
        %v7586 = vmax.f32 %v7585, %v6283
        %v7587 = vmax.f32 %v7586, %v6289
        %v7588 = vmax.f32 %v7587, %v6293
        %v7589 = vmax.f32 %v7588, %v6299
        %v7590 = vmax.f32 %v7589, %v6303
        %v7591 = vmax.f32 %v7590, %v6309
        %v7592 = vmax.f32 %v7591, %v6313
        %v7593 = vrot.slane %v7592, 4
        %v7594 = vmax.f32 %v7592, %v7593
        %v7595 = vrot.slane %v7594, 2
        %v7596 = vmax.f32 %v7594, %v7595
        %v7597 = vrot.slane %v7596, 1
        %v7598 = vmax.f32 %v7596, %v7597
        %v7599 = vmax.f32 %v6241, %v6245
        %v7600 = vmax.f32 %v7599, %v6251
        %v7601 = vmax.f32 %v7600, %v6255
        %v7602 = vmax.f32 %v7601, %v6261
        %v7603 = vmax.f32 %v7602, %v6265
        %v7604 = vmax.f32 %v7603, %v6271
        %v7605 = vmax.f32 %v7604, %v6275
        %v7606 = vmax.f32 %v7605, %v6281
        %v7607 = vmax.f32 %v7606, %v6285
        %v7608 = vmax.f32 %v7607, %v6291
        %v7609 = vmax.f32 %v7608, %v6295
        %v7610 = vmax.f32 %v7609, %v6301
        %v7611 = vmax.f32 %v7610, %v6305
        %v7612 = vmax.f32 %v7611, %v6311
        %v7613 = vmax.f32 %v7612, %v6315
        %v7614 = vrot.slane %v7613, 4
        %v7615 = vmax.f32 %v7613, %v7614
        %v7616 = vrot.slane %v7615, 2
        %v7617 = vmax.f32 %v7615, %v7616
        %v7618 = vrot.slane %v7617, 1
        %v7619 = vmax.f32 %v7617, %v7618
        %v7620 = vmax.f32 %v6912, %v6916
        %v7621 = vmax.f32 %v7620, %v6922
        %v7622 = vmax.f32 %v7621, %v6926
        %v7623 = vmax.f32 %v7622, %v6932
        %v7624 = vmax.f32 %v7623, %v6936
        %v7625 = vmax.f32 %v7624, %v6942
        %v7626 = vmax.f32 %v7625, %v6946
        %v7627 = vmax.f32 %v7626, %v6952
        %v7628 = vmax.f32 %v7627, %v6956
        %v7629 = vmax.f32 %v7628, %v6962
        %v7630 = vmax.f32 %v7629, %v6966
        %v7631 = vmax.f32 %v7630, %v6972
        %v7632 = vmax.f32 %v7631, %v6976
        %v7633 = vmax.f32 %v7632, %v6982
        %v7634 = vmax.f32 %v7633, %v6986
        %v7635 = vrot.slane %v7634, 4
        %v7636 = vmax.f32 %v7634, %v7635
        %v7637 = vrot.slane %v7636, 2
        %v7638 = vmax.f32 %v7636, %v7637
        %v7639 = vrot.slane %v7638, 1
        %v7640 = vmax.f32 %v7638, %v7639
        %v7641 = vmax.f32 %v6914, %v6918
        %v7642 = vmax.f32 %v7641, %v6924
        %v7643 = vmax.f32 %v7642, %v6928
        %v7644 = vmax.f32 %v7643, %v6934
        %v7645 = vmax.f32 %v7644, %v6938
        %v7646 = vmax.f32 %v7645, %v6944
        %v7647 = vmax.f32 %v7646, %v6948
        %v7648 = vmax.f32 %v7647, %v6954
        %v7649 = vmax.f32 %v7648, %v6958
        %v7650 = vmax.f32 %v7649, %v6964
        %v7651 = vmax.f32 %v7650, %v6968
        %v7652 = vmax.f32 %v7651, %v6974
        %v7653 = vmax.f32 %v7652, %v6978
        %v7654 = vmax.f32 %v7653, %v6984
        %v7655 = vmax.f32 %v7654, %v6988
        %v7656 = vrot.slane %v7655, 4
        %v7657 = vmax.f32 %v7655, %v7656
        %v7658 = vrot.slane %v7657, 2
        %v7659 = vmax.f32 %v7657, %v7658
        %v7660 = vrot.slane %v7659, 1
        %v7661 = vmax.f32 %v7659, %v7660
        %v7662 = vld [vmem:[%s851 + $0x20] sm:$0xff]
        %v7663 = vld [vmem:[%s851 + $0x28] sm:$0xff]
        %v7664 = vld [vmem:[%s851 + $0x30] sm:$0xff]
        %v7665 = vld [vmem:[%s851 + $0x38] sm:$0xff]
        %v7698 = vsel %vm5405, %v7094, %v7010
        %v7699 = vsel %vm5407, %v7178, %v7698
        %v7700 = vsel %vm5409, %v7262, %v7699
        %v7701 = vsel %vm5411, %v7346, %v7700
        %v7702 = vsel %vm5413, %v7430, %v7701
        %v7703 = vsel %vm5415, %v7514, %v7702
        %v7704 = vsel %vm5417, %v7598, %v7703
        %v7705 = vsel %vm5405, %v7115, %v7031
        %v7706 = vsel %vm5407, %v7199, %v7705
        %v7707 = vsel %vm5409, %v7283, %v7706
        %v7708 = vsel %vm5411, %v7367, %v7707
        %v7709 = vsel %vm5413, %v7451, %v7708
        %v7710 = vsel %vm5415, %v7535, %v7709
        %v7711 = vsel %vm5417, %v7619, %v7710
        %v7712 = vsel %vm5405, %v7136, %v7052
        %v7713 = vsel %vm5407, %v7220, %v7712
        %v7714 = vsel %vm5409, %v7304, %v7713
        %v7715 = vsel %vm5411, %v7388, %v7714
        %v7716 = vsel %vm5413, %v7472, %v7715
        %v7717 = vsel %vm5415, %v7556, %v7716
        %v7718 = vsel %vm5417, %v7640, %v7717
        %v7719 = vsel %vm5405, %v7157, %v7073
        %v7720 = vsel %vm5407, %v7241, %v7719
        %v7721 = vsel %vm5409, %v7325, %v7720
        %v7722 = vsel %vm5411, %v7409, %v7721
        %v7723 = vsel %vm5413, %v7493, %v7722
        %v7724 = vsel %vm5415, %v7577, %v7723
        %v7725 = vsel %vm5417, %v7661, %v7724
        %v7730 = vmax.f32 %v7662, %v7704
        %v7731 = vmax.f32 %v7663, %v7711
        %v7732 = vmax.f32 %v7664, %v7718
        %v7733 = vmax.f32 %v7665, %v7725
        %7734 = vst [vmem:[%s851 + $0x20] sm:$0xff] %v7730
        %7735 = vst [vmem:[%s851 + $0x28] sm:$0xff] %v7731
        %7736 = vst [vmem:[%s851 + $0x30] sm:$0xff] %v7732
        %7737 = vst [vmem:[%s851 + $0x38] sm:$0xff] %v7733
        %s7738 = sand.u32 %s200, 1
        %s7739 = scalar_lea.sflag [#allocation4], %s7738
        %s7740 = sand.u32 %s200, 1
        %s7741 = smul.addr %s7740, 64
        %s7742 = scalar_lea.vmem [#allocation3], %s7741
        // Predicated region
        $region91: #{tpu_custom_call.1} parent=81 // pred_check
          %p7743 = pneg %p210
        $region92: #{tpu_custom_call.1} parent=81 // pred_check_branch
          %7745 = sbr.rel (%p7743) target = $region94
        $region93: #{tpu_custom_call.1} parent=81 // pred_region
          %s7747 = ssub.s32 1024, 1024
          %7748 = vsyncadd %s7739, %s7747
          %s7749 = smul.addr %s25, 8
          %s7750 = smul.addr %s7749, 128
          %s7751 = scalar_lea.hbm %s7, %s7750
          %s7753 = sshll.u32 %s7742, 4
          %s7754 = int_to_ptr.vmem [resolvable:$true] %s7753
          %7756 = dma.vmem_to_hbm [thread:$0]  %s7754, 1024, %s7751, %s7739
        $region94: #{tpu_custom_call.1} parent=81 // pred_fallthru
          _
      $region82: #{tpu_custom_call.1} parent=5 // pred_fallthru
        _
      %p7757 = scmp.le.s32.totalorder 2, %s16
      // Predicated region
      $region95: #{tpu_custom_call.1} parent=5 // pred_check
        %p7758 = pneg %p7757
      $region96: #{tpu_custom_call.1} parent=5 // pred_check_branch
        %7760 = sbr.rel (%p7758) target = $region98
      $region97: #{tpu_custom_call.1} parent=5 // pred_region
        %s7761 = ssub.s32 %s16, 2
        // Predicated region
        $region99: #{tpu_custom_call.1} parent=97 // pred_check
          %p7762 = pneg %p216
        $region100: #{tpu_custom_call.1} parent=97 // pred_check_branch
          %7764 = sbr.rel (%p7762) target = $region102
        $region101: #{tpu_custom_call.1} parent=97 // pred_region
          %s7765 = sand.u32 %s201, 1
          %s7766 = scalar_lea.sflag [#allocation4], %s7765
          %s7767 = sand.u32 %s201, 1
          %s7768 = smul.addr %s7767, 64
          %s7769 = scalar_lea.vmem [#allocation3], %s7768
          %7770 = dma.done %s7766, 1024
        $region102: #{tpu_custom_call.1} parent=97 // pred_fallthru
          _
      $region98: #{tpu_custom_call.1} parent=5 // pred_fallthru
        _
    $region6: #{tpu_custom_call.1} parent=1 // loop_footer
      %s20 = sadd.s32 1, %s16
    $region7: #{tpu_custom_call.1} parent=1 // loop_footer_branch
      %15 = sbr.rel target = $region3
    $region8: #{tpu_custom_call.1} parent=1 // loop_exit
      _
    %7771 = vsyncpa [#allocation4], 1
    %s7772 = scalar_lea.sflag [#allocation4], 1
    %7773 = vsyncpa %s7772, 1

</llo_original>
